<compile_context>
chip_gen: v6e
topology: v6e:2x2x1
jax: 0.10.0
libtpu: 0.0.40
codegen_flags: <defaults>
</compile_context>

<pallas_src>
import functools

import jax
import jax.numpy as jnp
import numpy as np
from jax import lax
from jax.experimental import pallas as pl
from jax.experimental.pallas import tpu as pltpu

BLOCK_OUT_CHANNELS = (16, 32, 96, 256)
CONDITIONING_CHANNELS = 3


# ----------------------------------------------------------------------------
# Kernel A (full im2col path): one (tm, K) x (K, Cout) matmul + bias (+ SiLU).
#   x_ref: (1, tm, K)    bf16
#   w_ref: (K, Cout)     bf16
#   b_ref: (1, Cout)     f32
#   o_ref: (1, tm, Cout) bf16 (intermediates) / f32 (final layer)
# ----------------------------------------------------------------------------
def _matmul_bias_act_kernel(x_ref, w_ref, b_ref, o_ref, *, apply_silu):
    acc = jnp.dot(x_ref[0], w_ref[...], preferred_element_type=jnp.float32)
    acc = acc + b_ref[...]
    if apply_silu:
        acc = acc * jax.nn.sigmoid(acc)          # f32 SiLU (EUP)
    o_ref[0] = acc.astype(o_ref.dtype)


# ----------------------------------------------------------------------------
# Kernel B (kw im2col path): 3 contiguous aligned (M, 3*Cin) slabs -> 3 matmuls.
#   x_ref: (1, n_phases, rows*out_w, 3*Cin) bf16
#   w_ref: (3, 3*Cin, Cout)                 bf16
#   b_ref: (1, Cout)                        f32
#   o_ref: (1, out_h*out_w, Cout)
# ----------------------------------------------------------------------------
def _conv_kw_kernel(x_ref, w_ref, b_ref, o_ref, *, stride, out_w, apply_silu):
    m = o_ref.shape[1]                            # out_h * out_w
    acc = None
    for t in range(3):                            # fully unrolled
        # Static offsets; multiples of 8 guaranteed by the wrapper heuristic.
        lhs = x_ref[0, t % stride, pl.ds((t // stride) * out_w, m), :]
        part = jnp.dot(lhs, w_ref[t], preferred_element_type=jnp.float32)
        acc = part if acc is None else acc + part
    acc = acc + b_ref[...]                        # hoisted: once per image
    if apply_silu:
        acc = acc * jax.nn.sigmoid(acc)
    o_ref[0] = acc.astype(o_ref.dtype)


def _pick_tile_m(m):
    """Largest candidate tile along M that strictly divides M (else whole M)."""
    for tm in (4096, 2048, 1024, 512):
        if m > tm and m % tm == 0:
            return tm
    return m


# ----------------------------------------------------------------------------
# Wrapper: one conv layer = layout glue (pad / im2col / phase split, pure XLA)
# + one pallas_call.
# ----------------------------------------------------------------------------
def conv3x3(x, w, b, *, stride, apply_silu, out_dtype=None):
    """x: (N, H, W, Cin) NHWC; w: (3, 3, Cin, Cout) HWIO; b: (Cout,)."""
    n, h, wd, cin = x.shape
    cout = w.shape[-1]
    s = stride
    out_h, out_w = h // s, wd // s
    m = out_h * out_w
    if out_dtype is None:
        out_dtype = x.dtype

    x_pad = jnp.pad(x.astype(jnp.bfloat16), ((0, 0), (1, 1), (1, 1), (0, 0)))
    b2 = b.reshape(1, cout).astype(jnp.float32)

    # Full 9-tap im2col when the contraction dim would be tiny, or when the
    # kw-path sublane slice offsets (multiples of out_w) would be unaligned.
    use_full = (3 * cin < 128) or (out_w % 8 != 0)

    if use_full:
        taps = [x_pad[:, kh::s, kw::s, :][:, :out_h, :out_w, :]
                for kh in range(3) for kw in range(3)]
        xk = jnp.concatenate(taps, axis=-1).reshape(n, m, 9 * cin)
        wk = w.reshape(9 * cin, cout).astype(jnp.bfloat16)
        tm = _pick_tile_m(m)
        kernel = functools.partial(_matmul_bias_act_kernel,
                                   apply_silu=apply_silu)
        out = pl.pallas_call(
            kernel,
            out_shape=jax.ShapeDtypeStruct((n, m, cout), out_dtype),
            grid=(n, m // tm),
            in_specs=[
                pl.BlockSpec((1, tm, 9 * cin), lambda i, j: (i, j, 0)),
                pl.BlockSpec((9 * cin, cout), lambda i, j: (0, 0)),
                pl.BlockSpec((1, cout), lambda i, j: (0, 0)),
            ],
            out_specs=pl.BlockSpec((1, tm, cout), lambda i, j: (i, j, 0)),
            compiler_params=pltpu.CompilerParams(
                dimension_semantics=("parallel", "parallel")),
        )(xk, wk, b2)
    else:
        # kw-im2col: concat the 3 kw taps along channels (layout glue) ...
        taps_w = [x_pad[:, :, kw::s, :][:, :, :out_w, :] for kw in range(3)]
        xw = jnp.concatenate(taps_w, axis=-1)        # (N, H+2, out_w, 3*Cin)
        # ... split rows into stride phases, then flatten (rows, out_w) -> M'
        if s == 1:
            xh = xw[:, None]                         # (N, 1, H+2, out_w, 3C)
        else:
            xh = jnp.stack([xw[:, p::s] for p in range(s)], axis=1)
        n_ph, rows = xh.shape[1], xh.shape[2]
        xk = xh.reshape(n, n_ph, rows * out_w, 3 * cin)
        wk = w.reshape(3, 3 * cin, cout).astype(jnp.bfloat16)
        rows_flat = rows * out_w
        kernel = functools.partial(_conv_kw_kernel, stride=s, out_w=out_w,
                                   apply_silu=apply_silu)
        out = pl.pallas_call(
            kernel,
            out_shape=jax.ShapeDtypeStruct((n, m, cout), out_dtype),
            grid=(n,),
            in_specs=[
                pl.BlockSpec((1, n_ph, rows_flat, 3 * cin),
                             lambda i: (i, 0, 0, 0)),
                pl.BlockSpec((3, 3 * cin, cout), lambda i: (0, 0, 0)),
                pl.BlockSpec((1, cout), lambda i: (0, 0)),
            ],
            out_specs=pl.BlockSpec((1, m, cout), lambda i: (i, 0, 0)),
            compiler_params=pltpu.CompilerParams(
                dimension_semantics=("parallel",)),
        )(xk, wk, b2)

    return out.reshape(n, out_h, out_w, cout)


# ----------------------------------------------------------------------------
# Module: parameter construction + forward (conv_in -> blocks -> conv_out).
# ----------------------------------------------------------------------------
def layer_specs(cond_emb_ch, cond_ch=CONDITIONING_CHANNELS,
                block_out=BLOCK_OUT_CHANNELS):
    specs = [(cond_ch, block_out[0], 1)]                       # conv_in
    for i in range(len(block_out) - 1):
        specs.append((block_out[i], block_out[i], 1))          # block conv (s=1)
        specs.append((block_out[i], block_out[i + 1], 2))      # block conv (s=2)
    specs.append((block_out[-1], cond_emb_ch, 1))              # conv_out
    return specs


def init_params(key, cond_emb_ch):
    params = []
    for cin, cout, s in layer_specs(cond_emb_ch):
        key, kw_, kb_ = jax.random.split(key, 3)
        scale = 1.0 / float(np.sqrt(cin * 9))
        w = scale * jax.random.normal(kw_, (3, 3, cin, cout), jnp.float32)  # HWIO
        b = 0.01 * jax.random.normal(kb_, (cout,), jnp.float32)
        params.append((w, b, s))
    return params


def controlnet_conditioning_embedding(x_nchw, params):
    # NCHW (PyTorch) -> NHWC for the kernels, back to NCHW at the end.
    x = jnp.transpose(x_nchw, (0, 2, 3, 1))
    n_layers = len(params)
    for idx, (w, b, s) in enumerate(params):
        last = idx == n_layers - 1
        x = conv3x3(x, w, b, stride=s,
                    apply_silu=not last,              # SiLU after all but conv_out
                    out_dtype=jnp.float32 if last else jnp.bfloat16)
    return jnp.transpose(x, (0, 3, 1, 2))


# ----------------------------------------------------------------------------
# Pure-JAX reference (mirrors the kernel's precision: bf16 matmul operands,
# f32 accumulation / bias / SiLU, bf16 intermediate activations).
# ----------------------------------------------------------------------------
def ref_forward(x_nchw, params):
    x = jnp.transpose(x_nchw, (0, 2, 3, 1))
    n_layers = len(params)
    for idx, (w, b, s) in enumerate(params):
        y = lax.conv_general_dilated(
            x.astype(jnp.bfloat16), w.astype(jnp.bfloat16),
            window_strides=(s, s), padding=((1, 1), (1, 1)),
            dimension_numbers=("NHWC", "HWIO", "NHWC"),
            preferred_element_type=jnp.float32)
        y = y + b.reshape(1, 1, 1, -1)
        if idx < n_layers - 1:
            y = y * jax.nn.sigmoid(y)
            x = y.astype(jnp.bfloat16)
        else:
            x = y
    return jnp.transpose(x, (0, 3, 1, 2))


if __name__ == "__main__":
    key = jax.random.PRNGKey(0)
    k_in, k_par = jax.random.split(key)

    cond_emb_channels = 32
    x_nchw = jax.random.normal(k_in, (2, 3, 32, 32), jnp.float32)   # NCHW input
    params = init_params(k_par, cond_emb_channels)

    fwd = jax.jit(lambda x: controlnet_conditioning_embedding(x, params))
    out = jax.block_until_ready(fwd(x_nchw))

    assert out.shape == (2, cond_emb_channels, 4, 4), out.shape
    ref = ref_forward(x_nchw, params)
    np.testing.assert_allclose(np.asarray(out), np.asarray(ref),
                               rtol=2e-2, atol=2e-2)

    print("KERNEL_OK")
</pallas_src>

<mosaic_0001>
module attributes {stable_mosaic.version = 11 : i64} {
  func.func @_matmul_bias_act_kernel(%arg0: i32, %arg1: i32, %arg2: memref<1x512x27xbf16, #tpu.memory_space<vmem>>, %arg3: memref<27x16xbf16, #tpu.memory_space<vmem>>, %arg4: memref<1x16xf32, #tpu.memory_space<vmem>>, %arg5: memref<1x512x16xbf16, #tpu.memory_space<vmem>>) attributes {dimension_semantics = [#tpu.dimension_semantics<parallel>, #tpu.dimension_semantics<parallel>], iteration_bounds = array<i64: 2, 2>, scalar_prefetch = 0 : i64, scratch_operands = 0 : i64, tpu.core_type = #tpu.core_type<tc>, window_params = [{transform_indices = @transform_0, window_bounds = array<i64: 1, 512, 27>}, {pipeline_mode = #tpu.pipeline_mode<synchronous>, transform_indices = @transform_1, window_bounds = array<i64: 27, 16>}, {pipeline_mode = #tpu.pipeline_mode<synchronous>, transform_indices = @transform_2, window_bounds = array<i64: 1, 16>}, {transform_indices = @transform_3, window_bounds = array<i64: 1, 512, 16>}]} {
    %c0 = arith.constant 0 : index
    %c0_0 = arith.constant 0 : index
    %c0_1 = arith.constant 0 : index
    %0 = vector.load %arg2[%c0, %c0_0, %c0_1] : memref<1x512x27xbf16, #tpu.memory_space<vmem>>, vector<1x512x27xbf16>
    %1 = vector.shape_cast %0 : vector<1x512x27xbf16> to vector<512x27xbf16>
    %c0_2 = arith.constant 0 : index
    %c0_3 = arith.constant 0 : index
    %2 = vector.load %arg3[%c0_2, %c0_3] : memref<27x16xbf16, #tpu.memory_space<vmem>>, vector<27x16xbf16>
    %cst = arith.constant dense<0.000000e+00> : vector<512x16xf32>
    %3 = tpu.matmul %1, %2, %cst {dimension_numbers = #tpu.dot_dimension_numbers<[1], [0], [0], [1], [0, 0, 1, 1], [], []>} : vector<512x27xbf16>, vector<27x16xbf16>, vector<512x16xf32> -> vector<512x16xf32>
    %c0_4 = arith.constant 0 : index
    %c0_5 = arith.constant 0 : index
    %4 = vector.load %arg4[%c0_4, %c0_5] : memref<1x16xf32, #tpu.memory_space<vmem>>, vector<1x16xf32>
    %5 = vector.broadcast %4 : vector<1x16xf32> to vector<512x16xf32>
    %6 = arith.addf %3, %5 : vector<512x16xf32>
    %7 = arith.negf %6 : vector<512x16xf32>
    %8 = math.exp %7 : vector<512x16xf32>
    %cst_6 = arith.constant 1.000000e+00 : f32
    %9 = vector.broadcast %cst_6 : f32 to vector<512x16xf32>
    %10 = arith.addf %9, %8 : vector<512x16xf32>
    %11 = arith.divf %9, %10 : vector<512x16xf32>
    %12 = arith.mulf %6, %11 : vector<512x16xf32>
    %13 = arith.truncf %12 : vector<512x16xf32> to vector<512x16xbf16>
    %c0_7 = arith.constant 0 : index
    %c0_8 = arith.constant 0 : index
    %c0_9 = arith.constant 0 : index
    %14 = vector.load %arg5[%c0_7, %c0_8, %c0_9] : memref<1x512x16xbf16, #tpu.memory_space<vmem>>, vector<1x512x16xbf16>
    %15 = vector.shape_cast %14 : vector<1x512x16xbf16> to vector<512x16xbf16>
    %16 = vector.shape_cast %13 : vector<512x16xbf16> to vector<1x512x16xbf16>
    tpu.vector_store %arg5[%c0_7, %c0_8, %c0_9], %16 {strides = array<i32>} : memref<1x512x16xbf16, #tpu.memory_space<vmem>>, vector<1x512x16xbf16>,
    return
  }
  func.func @transform_0(%arg0: i32, %arg1: i32) -> (i32, i32, i32) {
    %c0_i32 = arith.constant 0 : i32
    %c0_i32_0 = arith.constant 0 : i32
    return %arg0, %arg1, %c0_i32 : i32, i32, i32
  }
  func.func @transform_1(%arg0: i32, %arg1: i32) -> (i32, i32) {
    %c0_i32 = arith.constant 0 : i32
    %c0_i32_0 = arith.constant 0 : i32
    %c0_i32_1 = arith.constant 0 : i32
    return %c0_i32, %c0_i32_0 : i32, i32
  }
  func.func @transform_2(%arg0: i32, %arg1: i32) -> (i32, i32) {
    %c0_i32 = arith.constant 0 : i32
    %c0_i32_0 = arith.constant 0 : i32
    %c0_i32_1 = arith.constant 0 : i32
    return %c0_i32, %c0_i32_0 : i32, i32
  }
  func.func @transform_3(%arg0: i32, %arg1: i32) -> (i32, i32, i32) {
    %c0_i32 = arith.constant 0 : i32
    %c0_i32_0 = arith.constant 0 : i32
    return %arg0, %arg1, %c0_i32 : i32, i32, i32
  }
}

module attributes {stable_mosaic.version = 11 : i64} {
  func.func @_matmul_bias_act_kernel(%arg0: i32, %arg1: i32, %arg2: memref<1x512x144xbf16, #tpu.memory_space<vmem>>, %arg3: memref<144x16xbf16, #tpu.memory_space<vmem>>, %arg4: memref<1x16xf32, #tpu.memory_space<vmem>>, %arg5: memref<1x512x16xbf16, #tpu.memory_space<vmem>>) attributes {dimension_semantics = [#tpu.dimension_semantics<parallel>, #tpu.dimension_semantics<parallel>], iteration_bounds = array<i64: 2, 2>, scalar_prefetch = 0 : i64, scratch_operands = 0 : i64, tpu.core_type = #tpu.core_type<tc>, window_params = [{transform_indices = @transform_0, window_bounds = array<i64: 1, 512, 144>}, {pipeline_mode = #tpu.pipeline_mode<synchronous>, transform_indices = @transform_1, window_bounds = array<i64: 144, 16>}, {pipeline_mode = #tpu.pipeline_mode<synchronous>, transform_indices = @transform_2, window_bounds = array<i64: 1, 16>}, {transform_indices = @transform_3, window_bounds = array<i64: 1, 512, 16>}]} {
    %c0 = arith.constant 0 : index
    %c0_0 = arith.constant 0 : index
    %c0_1 = arith.constant 0 : index
    %0 = vector.load %arg2[%c0, %c0_0, %c0_1] : memref<1x512x144xbf16, #tpu.memory_space<vmem>>, vector<1x512x144xbf16>
    %1 = vector.shape_cast %0 : vector<1x512x144xbf16> to vector<512x144xbf16>
    %c0_2 = arith.constant 0 : index
    %c0_3 = arith.constant 0 : index
    %2 = vector.load %arg3[%c0_2, %c0_3] : memref<144x16xbf16, #tpu.memory_space<vmem>>, vector<144x16xbf16>
    %cst = arith.constant dense<0.000000e+00> : vector<512x16xf32>
    %3 = tpu.matmul %1, %2, %cst {dimension_numbers = #tpu.dot_dimension_numbers<[1], [0], [0], [1], [0, 0, 1, 1], [], []>} : vector<512x144xbf16>, vector<144x16xbf16>, vector<512x16xf32> -> vector<512x16xf32>
    %c0_4 = arith.constant 0 : index
    %c0_5 = arith.constant 0 : index
    %4 = vector.load %arg4[%c0_4, %c0_5] : memref<1x16xf32, #tpu.memory_space<vmem>>, vector<1x16xf32>
    %5 = vector.broadcast %4 : vector<1x16xf32> to vector<512x16xf32>
    %6 = arith.addf %3, %5 : vector<512x16xf32>
    %7 = arith.negf %6 : vector<512x16xf32>
    %8 = math.exp %7 : vector<512x16xf32>
    %cst_6 = arith.constant 1.000000e+00 : f32
    %9 = vector.broadcast %cst_6 : f32 to vector<512x16xf32>
    %10 = arith.addf %9, %8 : vector<512x16xf32>
    %11 = arith.divf %9, %10 : vector<512x16xf32>
    %12 = arith.mulf %6, %11 : vector<512x16xf32>
    %13 = arith.truncf %12 : vector<512x16xf32> to vector<512x16xbf16>
    %c0_7 = arith.constant 0 : index
    %c0_8 = arith.constant 0 : index
    %c0_9 = arith.constant 0 : index
    %14 = vector.load %arg5[%c0_7, %c0_8, %c0_9] : memref<1x512x16xbf16, #tpu.memory_space<vmem>>, vector<1x512x16xbf16>
    %15 = vector.shape_cast %14 : vector<1x512x16xbf16> to vector<512x16xbf16>
    %16 = vector.shape_cast %13 : vector<512x16xbf16> to vector<1x512x16xbf16>
    tpu.vector_store %arg5[%c0_7, %c0_8, %c0_9], %16 {strides = array<i32>} : memref<1x512x16xbf16, #tpu.memory_space<vmem>>, vector<1x512x16xbf16>,
    return
  }
  func.func @transform_0(%arg0: i32, %arg1: i32) -> (i32, i32, i32) {
    %c0_i32 = arith.constant 0 : i32
    %c0_i32_0 = arith.constant 0 : i32
    return %arg0, %arg1, %c0_i32 : i32, i32, i32
  }
  func.func @transform_1(%arg0: i32, %arg1: i32) -> (i32, i32) {
    %c0_i32 = arith.constant 0 : i32
    %c0_i32_0 = arith.constant 0 : i32
    %c0_i32_1 = arith.constant 0 : i32
    return %c0_i32, %c0_i32_0 : i32, i32
  }
  func.func @transform_2(%arg0: i32, %arg1: i32) -> (i32, i32) {
    %c0_i32 = arith.constant 0 : i32
    %c0_i32_0 = arith.constant 0 : i32
    %c0_i32_1 = arith.constant 0 : i32
    return %c0_i32, %c0_i32_0 : i32, i32
  }
  func.func @transform_3(%arg0: i32, %arg1: i32) -> (i32, i32, i32) {
    %c0_i32 = arith.constant 0 : i32
    %c0_i32_0 = arith.constant 0 : i32
    return %arg0, %arg1, %c0_i32 : i32, i32, i32
  }
}

module attributes {stable_mosaic.version = 11 : i64} {
  func.func @_matmul_bias_act_kernel(%arg0: i32, %arg1: i32, %arg2: memref<1x256x144xbf16, #tpu.memory_space<vmem>>, %arg3: memref<144x32xbf16, #tpu.memory_space<vmem>>, %arg4: memref<1x32xf32, #tpu.memory_space<vmem>>, %arg5: memref<1x256x32xbf16, #tpu.memory_space<vmem>>) attributes {dimension_semantics = [#tpu.dimension_semantics<parallel>, #tpu.dimension_semantics<parallel>], iteration_bounds = array<i64: 2, 1>, scalar_prefetch = 0 : i64, scratch_operands = 0 : i64, tpu.core_type = #tpu.core_type<tc>, window_params = [{transform_indices = @transform_0, window_bounds = array<i64: 1, 256, 144>}, {pipeline_mode = #tpu.pipeline_mode<synchronous>, transform_indices = @transform_1, window_bounds = array<i64: 144, 32>}, {pipeline_mode = #tpu.pipeline_mode<synchronous>, transform_indices = @transform_2, window_bounds = array<i64: 1, 32>}, {transform_indices = @transform_3, window_bounds = array<i64: 1, 256, 32>}]} {
    %c0 = arith.constant 0 : index
    %c0_0 = arith.constant 0 : index
    %c0_1 = arith.constant 0 : index
    %0 = vector.load %arg2[%c0, %c0_0, %c0_1] : memref<1x256x144xbf16, #tpu.memory_space<vmem>>, vector<1x256x144xbf16>
    %1 = vector.shape_cast %0 : vector<1x256x144xbf16> to vector<256x144xbf16>
    %c0_2 = arith.constant 0 : index
    %c0_3 = arith.constant 0 : index
    %2 = vector.load %arg3[%c0_2, %c0_3] : memref<144x32xbf16, #tpu.memory_space<vmem>>, vector<144x32xbf16>
    %cst = arith.constant dense<0.000000e+00> : vector<256x32xf32>
    %3 = tpu.matmul %1, %2, %cst {dimension_numbers = #tpu.dot_dimension_numbers<[1], [0], [0], [1], [0, 0, 1, 1], [], []>} : vector<256x144xbf16>, vector<144x32xbf16>, vector<256x32xf32> -> vector<256x32xf32>
    %c0_4 = arith.constant 0 : index
    %c0_5 = arith.constant 0 : index
    %4 = vector.load %arg4[%c0_4, %c0_5] : memref<1x32xf32, #tpu.memory_space<vmem>>, vector<1x32xf32>
    %5 = vector.broadcast %4 : vector<1x32xf32> to vector<256x32xf32>
    %6 = arith.addf %3, %5 : vector<256x32xf32>
    %7 = arith.negf %6 : vector<256x32xf32>
    %8 = math.exp %7 : vector<256x32xf32>
    %cst_6 = arith.constant 1.000000e+00 : f32
    %9 = vector.broadcast %cst_6 : f32 to vector<256x32xf32>
    %10 = arith.addf %9, %8 : vector<256x32xf32>
    %11 = arith.divf %9, %10 : vector<256x32xf32>
    %12 = arith.mulf %6, %11 : vector<256x32xf32>
    %13 = arith.truncf %12 : vector<256x32xf32> to vector<256x32xbf16>
    %c0_7 = arith.constant 0 : index
    %c0_8 = arith.constant 0 : index
    %c0_9 = arith.constant 0 : index
    %14 = vector.load %arg5[%c0_7, %c0_8, %c0_9] : memref<1x256x32xbf16, #tpu.memory_space<vmem>>, vector<1x256x32xbf16>
    %15 = vector.shape_cast %14 : vector<1x256x32xbf16> to vector<256x32xbf16>
    %16 = vector.shape_cast %13 : vector<256x32xbf16> to vector<1x256x32xbf16>
    tpu.vector_store %arg5[%c0_7, %c0_8, %c0_9], %16 {strides = array<i32>} : memref<1x256x32xbf16, #tpu.memory_space<vmem>>, vector<1x256x32xbf16>,
    return
  }
  func.func @transform_0(%arg0: i32, %arg1: i32) -> (i32, i32, i32) {
    %c0_i32 = arith.constant 0 : i32
    %c0_i32_0 = arith.constant 0 : i32
    return %arg0, %arg1, %c0_i32 : i32, i32, i32
  }
  func.func @transform_1(%arg0: i32, %arg1: i32) -> (i32, i32) {
    %c0_i32 = arith.constant 0 : i32
    %c0_i32_0 = arith.constant 0 : i32
    %c0_i32_1 = arith.constant 0 : i32
    return %c0_i32, %c0_i32_0 : i32, i32
  }
  func.func @transform_2(%arg0: i32, %arg1: i32) -> (i32, i32) {
    %c0_i32 = arith.constant 0 : i32
    %c0_i32_0 = arith.constant 0 : i32
    %c0_i32_1 = arith.constant 0 : i32
    return %c0_i32, %c0_i32_0 : i32, i32
  }
  func.func @transform_3(%arg0: i32, %arg1: i32) -> (i32, i32, i32) {
    %c0_i32 = arith.constant 0 : i32
    %c0_i32_0 = arith.constant 0 : i32
    return %arg0, %arg1, %c0_i32 : i32, i32, i32
  }
}

module attributes {stable_mosaic.version = 11 : i64} {
  func.func @_matmul_bias_act_kernel(%arg0: i32, %arg1: i32, %arg2: memref<1x256x288xbf16, #tpu.memory_space<vmem>>, %arg3: memref<288x32xbf16, #tpu.memory_space<vmem>>, %arg4: memref<1x32xf32, #tpu.memory_space<vmem>>, %arg5: memref<1x256x32xbf16, #tpu.memory_space<vmem>>) attributes {dimension_semantics = [#tpu.dimension_semantics<parallel>, #tpu.dimension_semantics<parallel>], iteration_bounds = array<i64: 2, 1>, scalar_prefetch = 0 : i64, scratch_operands = 0 : i64, tpu.core_type = #tpu.core_type<tc>, window_params = [{transform_indices = @transform_0, window_bounds = array<i64: 1, 256, 288>}, {pipeline_mode = #tpu.pipeline_mode<synchronous>, transform_indices = @transform_1, window_bounds = array<i64: 288, 32>}, {pipeline_mode = #tpu.pipeline_mode<synchronous>, transform_indices = @transform_2, window_bounds = array<i64: 1, 32>}, {transform_indices = @transform_3, window_bounds = array<i64: 1, 256, 32>}]} {
    %c0 = arith.constant 0 : index
    %c0_0 = arith.constant 0 : index
    %c0_1 = arith.constant 0 : index
    %0 = vector.load %arg2[%c0, %c0_0, %c0_1] : memref<1x256x288xbf16, #tpu.memory_space<vmem>>, vector<1x256x288xbf16>
    %1 = vector.shape_cast %0 : vector<1x256x288xbf16> to vector<256x288xbf16>
    %c0_2 = arith.constant 0 : index
    %c0_3 = arith.constant 0 : index
    %2 = vector.load %arg3[%c0_2, %c0_3] : memref<288x32xbf16, #tpu.memory_space<vmem>>, vector<288x32xbf16>
    %cst = arith.constant dense<0.000000e+00> : vector<256x32xf32>
    %3 = tpu.matmul %1, %2, %cst {dimension_numbers = #tpu.dot_dimension_numbers<[1], [0], [0], [1], [0, 0, 1, 1], [], []>} : vector<256x288xbf16>, vector<288x32xbf16>, vector<256x32xf32> -> vector<256x32xf32>
    %c0_4 = arith.constant 0 : index
    %c0_5 = arith.constant 0 : index
    %4 = vector.load %arg4[%c0_4, %c0_5] : memref<1x32xf32, #tpu.memory_space<vmem>>, vector<1x32xf32>
    %5 = vector.broadcast %4 : vector<1x32xf32> to vector<256x32xf32>
    %6 = arith.addf %3, %5 : vector<256x32xf32>
    %7 = arith.negf %6 : vector<256x32xf32>
    %8 = math.exp %7 : vector<256x32xf32>
    %cst_6 = arith.constant 1.000000e+00 : f32
    %9 = vector.broadcast %cst_6 : f32 to vector<256x32xf32>
    %10 = arith.addf %9, %8 : vector<256x32xf32>
    %11 = arith.divf %9, %10 : vector<256x32xf32>
    %12 = arith.mulf %6, %11 : vector<256x32xf32>
    %13 = arith.truncf %12 : vector<256x32xf32> to vector<256x32xbf16>
    %c0_7 = arith.constant 0 : index
    %c0_8 = arith.constant 0 : index
    %c0_9 = arith.constant 0 : index
    %14 = vector.load %arg5[%c0_7, %c0_8, %c0_9] : memref<1x256x32xbf16, #tpu.memory_space<vmem>>, vector<1x256x32xbf16>
    %15 = vector.shape_cast %14 : vector<1x256x32xbf16> to vector<256x32xbf16>
    %16 = vector.shape_cast %13 : vector<256x32xbf16> to vector<1x256x32xbf16>
    tpu.vector_store %arg5[%c0_7, %c0_8, %c0_9], %16 {strides = array<i32>} : memref<1x256x32xbf16, #tpu.memory_space<vmem>>, vector<1x256x32xbf16>,
    return
  }
  func.func @transform_0(%arg0: i32, %arg1: i32) -> (i32, i32, i32) {
    %c0_i32 = arith.constant 0 : i32
    %c0_i32_0 = arith.constant 0 : i32
    return %arg0, %arg1, %c0_i32 : i32, i32, i32
  }
  func.func @transform_1(%arg0: i32, %arg1: i32) -> (i32, i32) {
    %c0_i32 = arith.constant 0 : i32
    %c0_i32_0 = arith.constant 0 : i32
    %c0_i32_1 = arith.constant 0 : i32
    return %c0_i32, %c0_i32_0 : i32, i32
  }
  func.func @transform_2(%arg0: i32, %arg1: i32) -> (i32, i32) {
    %c0_i32 = arith.constant 0 : i32
    %c0_i32_0 = arith.constant 0 : i32
    %c0_i32_1 = arith.constant 0 : i32
    return %c0_i32, %c0_i32_0 : i32, i32
  }
  func.func @transform_3(%arg0: i32, %arg1: i32) -> (i32, i32, i32) {
    %c0_i32 = arith.constant 0 : i32
    %c0_i32_0 = arith.constant 0 : i32
    return %arg0, %arg1, %c0_i32 : i32, i32, i32
  }
}

module attributes {stable_mosaic.version = 11 : i64} {
  func.func @_matmul_bias_act_kernel(%arg0: i32, %arg1: i32, %arg2: memref<1x64x288xbf16, #tpu.memory_space<vmem>>, %arg3: memref<288x96xbf16, #tpu.memory_space<vmem>>, %arg4: memref<1x96xf32, #tpu.memory_space<vmem>>, %arg5: memref<1x64x96xbf16, #tpu.memory_space<vmem>>) attributes {dimension_semantics = [#tpu.dimension_semantics<parallel>, #tpu.dimension_semantics<parallel>], iteration_bounds = array<i64: 2, 1>, scalar_prefetch = 0 : i64, scratch_operands = 0 : i64, tpu.core_type = #tpu.core_type<tc>, window_params = [{transform_indices = @transform_0, window_bounds = array<i64: 1, 64, 288>}, {pipeline_mode = #tpu.pipeline_mode<synchronous>, transform_indices = @transform_1, window_bounds = array<i64: 288, 96>}, {pipeline_mode = #tpu.pipeline_mode<synchronous>, transform_indices = @transform_2, window_bounds = array<i64: 1, 96>}, {transform_indices = @transform_3, window_bounds = array<i64: 1, 64, 96>}]} {
    %c0 = arith.constant 0 : index
    %c0_0 = arith.constant 0 : index
    %c0_1 = arith.constant 0 : index
    %0 = vector.load %arg2[%c0, %c0_0, %c0_1] : memref<1x64x288xbf16, #tpu.memory_space<vmem>>, vector<1x64x288xbf16>
    %1 = vector.shape_cast %0 : vector<1x64x288xbf16> to vector<64x288xbf16>
    %c0_2 = arith.constant 0 : index
    %c0_3 = arith.constant 0 : index
    %2 = vector.load %arg3[%c0_2, %c0_3] : memref<288x96xbf16, #tpu.memory_space<vmem>>, vector<288x96xbf16>
    %cst = arith.constant dense<0.000000e+00> : vector<64x96xf32>
    %3 = tpu.matmul %1, %2, %cst {dimension_numbers = #tpu.dot_dimension_numbers<[1], [0], [0], [1], [0, 0, 1, 1], [], []>} : vector<64x288xbf16>, vector<288x96xbf16>, vector<64x96xf32> -> vector<64x96xf32>
    %c0_4 = arith.constant 0 : index
    %c0_5 = arith.constant 0 : index
    %4 = vector.load %arg4[%c0_4, %c0_5] : memref<1x96xf32, #tpu.memory_space<vmem>>, vector<1x96xf32>
    %5 = vector.broadcast %4 : vector<1x96xf32> to vector<64x96xf32>
    %6 = arith.addf %3, %5 : vector<64x96xf32>
    %7 = arith.negf %6 : vector<64x96xf32>
    %8 = math.exp %7 : vector<64x96xf32>
    %cst_6 = arith.constant 1.000000e+00 : f32
    %9 = vector.broadcast %cst_6 : f32 to vector<64x96xf32>
    %10 = arith.addf %9, %8 : vector<64x96xf32>
    %11 = arith.divf %9, %10 : vector<64x96xf32>
    %12 = arith.mulf %6, %11 : vector<64x96xf32>
    %13 = arith.truncf %12 : vector<64x96xf32> to vector<64x96xbf16>
    %c0_7 = arith.constant 0 : index
    %c0_8 = arith.constant 0 : index
    %c0_9 = arith.constant 0 : index
    %14 = vector.load %arg5[%c0_7, %c0_8, %c0_9] : memref<1x64x96xbf16, #tpu.memory_space<vmem>>, vector<1x64x96xbf16>
    %15 = vector.shape_cast %14 : vector<1x64x96xbf16> to vector<64x96xbf16>
    %16 = vector.shape_cast %13 : vector<64x96xbf16> to vector<1x64x96xbf16>
    tpu.vector_store %arg5[%c0_7, %c0_8, %c0_9], %16 {strides = array<i32>} : memref<1x64x96xbf16, #tpu.memory_space<vmem>>, vector<1x64x96xbf16>,
    return
  }
  func.func @transform_0(%arg0: i32, %arg1: i32) -> (i32, i32, i32) {
    %c0_i32 = arith.constant 0 : i32
    %c0_i32_0 = arith.constant 0 : i32
    return %arg0, %arg1, %c0_i32 : i32, i32, i32
  }
  func.func @transform_1(%arg0: i32, %arg1: i32) -> (i32, i32) {
    %c0_i32 = arith.constant 0 : i32
    %c0_i32_0 = arith.constant 0 : i32
    %c0_i32_1 = arith.constant 0 : i32
    return %c0_i32, %c0_i32_0 : i32, i32
  }
  func.func @transform_2(%arg0: i32, %arg1: i32) -> (i32, i32) {
    %c0_i32 = arith.constant 0 : i32
    %c0_i32_0 = arith.constant 0 : i32
    %c0_i32_1 = arith.constant 0 : i32
    return %c0_i32, %c0_i32_0 : i32, i32
  }
  func.func @transform_3(%arg0: i32, %arg1: i32) -> (i32, i32, i32) {
    %c0_i32 = arith.constant 0 : i32
    %c0_i32_0 = arith.constant 0 : i32
    return %arg0, %arg1, %c0_i32 : i32, i32, i32
  }
}

module attributes {stable_mosaic.version = 11 : i64} {
  func.func @_conv_kw_kernel(%arg0: i32, %arg1: memref<1x1x80x288xbf16, #tpu.memory_space<vmem>>, %arg2: memref<3x288x96xbf16, #tpu.memory_space<vmem>>, %arg3: memref<1x96xf32, #tpu.memory_space<vmem>>, %arg4: memref<1x64x96xbf16, #tpu.memory_space<vmem>>) attributes {dimension_semantics = [#tpu.dimension_semantics<parallel>], iteration_bounds = array<i64: 2>, scalar_prefetch = 0 : i64, scratch_operands = 0 : i64, tpu.core_type = #tpu.core_type<tc>, window_params = [{transform_indices = @transform_0, window_bounds = array<i64: 1, 1, 80, 288>}, {pipeline_mode = #tpu.pipeline_mode<synchronous>, transform_indices = @transform_1, window_bounds = array<i64: 3, 288, 96>}, {pipeline_mode = #tpu.pipeline_mode<synchronous>, transform_indices = @transform_2, window_bounds = array<i64: 1, 96>}, {transform_indices = @transform_3, window_bounds = array<i64: 1, 64, 96>}]} {
    %c0 = arith.constant 0 : index
    %c0_0 = arith.constant 0 : index
    %c0_1 = arith.constant 0 : index
    %c0_2 = arith.constant 0 : index
    %0 = vector.load %arg1[%c0, %c0_0, %c0_1, %c0_2] : memref<1x1x80x288xbf16, #tpu.memory_space<vmem>>, vector<1x1x64x288xbf16>
    %1 = vector.shape_cast %0 : vector<1x1x64x288xbf16> to vector<64x288xbf16>
    %c0_3 = arith.constant 0 : index
    %c0_4 = arith.constant 0 : index
    %c0_5 = arith.constant 0 : index
    %2 = vector.load %arg2[%c0_3, %c0_4, %c0_5] : memref<3x288x96xbf16, #tpu.memory_space<vmem>>, vector<1x288x96xbf16>
    %3 = vector.shape_cast %2 : vector<1x288x96xbf16> to vector<288x96xbf16>
    %cst = arith.constant dense<0.000000e+00> : vector<64x96xf32>
    %4 = tpu.matmul %1, %3, %cst {dimension_numbers = #tpu.dot_dimension_numbers<[1], [0], [0], [1], [0, 0, 1, 1], [], []>} : vector<64x288xbf16>, vector<288x96xbf16>, vector<64x96xf32> -> vector<64x96xf32>
    %c0_6 = arith.constant 0 : index
    %c0_7 = arith.constant 0 : index
    %c8 = arith.constant 8 : index
    %c0_8 = arith.constant 0 : index
    %5 = vector.load %arg1[%c0_6, %c0_7, %c8, %c0_8] : memref<1x1x80x288xbf16, #tpu.memory_space<vmem>>, vector<1x1x64x288xbf16>
    %6 = vector.shape_cast %5 : vector<1x1x64x288xbf16> to vector<64x288xbf16>
    %c1 = arith.constant 1 : index
    %c0_9 = arith.constant 0 : index
    %c0_10 = arith.constant 0 : index
    %7 = vector.load %arg2[%c1, %c0_9, %c0_10] : memref<3x288x96xbf16, #tpu.memory_space<vmem>>, vector<1x288x96xbf16>
    %8 = vector.shape_cast %7 : vector<1x288x96xbf16> to vector<288x96xbf16>
    %cst_11 = arith.constant dense<0.000000e+00> : vector<64x96xf32>
    %9 = tpu.matmul %6, %8, %cst_11 {dimension_numbers = #tpu.dot_dimension_numbers<[1], [0], [0], [1], [0, 0, 1, 1], [], []>} : vector<64x288xbf16>, vector<288x96xbf16>, vector<64x96xf32> -> vector<64x96xf32>
    %10 = arith.addf %4, %9 : vector<64x96xf32>
    %c0_12 = arith.constant 0 : index
    %c0_13 = arith.constant 0 : index
    %c16 = arith.constant 16 : index
    %c0_14 = arith.constant 0 : index
    %11 = vector.load %arg1[%c0_12, %c0_13, %c16, %c0_14] : memref<1x1x80x288xbf16, #tpu.memory_space<vmem>>, vector<1x1x64x288xbf16>
    %12 = vector.shape_cast %11 : vector<1x1x64x288xbf16> to vector<64x288xbf16>
    %c2 = arith.constant 2 : index
    %c0_15 = arith.constant 0 : index
    %c0_16 = arith.constant 0 : index
    %13 = vector.load %arg2[%c2, %c0_15, %c0_16] : memref<3x288x96xbf16, #tpu.memory_space<vmem>>, vector<1x288x96xbf16>
    %14 = vector.shape_cast %13 : vector<1x288x96xbf16> to vector<288x96xbf16>
    %cst_17 = arith.constant dense<0.000000e+00> : vector<64x96xf32>
    %15 = tpu.matmul %12, %14, %cst_17 {dimension_numbers = #tpu.dot_dimension_numbers<[1], [0], [0], [1], [0, 0, 1, 1], [], []>} : vector<64x288xbf16>, vector<288x96xbf16>, vector<64x96xf32> -> vector<64x96xf32>
    %16 = arith.addf %10, %15 : vector<64x96xf32>
    %c0_18 = arith.constant 0 : index
    %c0_19 = arith.constant 0 : index
    %17 = vector.load %arg3[%c0_18, %c0_19] : memref<1x96xf32, #tpu.memory_space<vmem>>, vector<1x96xf32>
    %18 = vector.broadcast %17 : vector<1x96xf32> to vector<64x96xf32>
    %19 = arith.addf %16, %18 : vector<64x96xf32>
    %20 = arith.negf %19 : vector<64x96xf32>
    %21 = math.exp %20 : vector<64x96xf32>
    %cst_20 = arith.constant 1.000000e+00 : f32
    %22 = vector.broadcast %cst_20 : f32 to vector<64x96xf32>
    %23 = arith.addf %22, %21 : vector<64x96xf32>
    %24 = arith.divf %22, %23 : vector<64x96xf32>
    %25 = arith.mulf %19, %24 : vector<64x96xf32>
    %26 = arith.truncf %25 : vector<64x96xf32> to vector<64x96xbf16>
    %c0_21 = arith.constant 0 : index
    %c0_22 = arith.constant 0 : index
    %c0_23 = arith.constant 0 : index
    %27 = vector.load %arg4[%c0_21, %c0_22, %c0_23] : memref<1x64x96xbf16, #tpu.memory_space<vmem>>, vector<1x64x96xbf16>
    %28 = vector.shape_cast %27 : vector<1x64x96xbf16> to vector<64x96xbf16>
    %29 = vector.shape_cast %26 : vector<64x96xbf16> to vector<1x64x96xbf16>
    tpu.vector_store %arg4[%c0_21, %c0_22, %c0_23], %29 {strides = array<i32>} : memref<1x64x96xbf16, #tpu.memory_space<vmem>>, vector<1x64x96xbf16>,
    return
  }
  func.func @transform_0(%arg0: i32) -> (i32, i32, i32, i32) {
    %c0_i32 = arith.constant 0 : i32
    %c0_i32_0 = arith.constant 0 : i32
    %c0_i32_1 = arith.constant 0 : i32
    %c0_i32_2 = arith.constant 0 : i32
    return %arg0, %c0_i32, %c0_i32_0, %c0_i32_1 : i32, i32, i32, i32
  }
  func.func @transform_1(%arg0: i32) -> (i32, i32, i32) {
    %c0_i32 = arith.constant 0 : i32
    %c0_i32_0 = arith.constant 0 : i32
    %c0_i32_1 = arith.constant 0 : i32
    %c0_i32_2 = arith.constant 0 : i32
    return %c0_i32, %c0_i32_0, %c0_i32_1 : i32, i32, i32
  }
  func.func @transform_2(%arg0: i32) -> (i32, i32) {
    %c0_i32 = arith.constant 0 : i32
    %c0_i32_0 = arith.constant 0 : i32
    %c0_i32_1 = arith.constant 0 : i32
    return %c0_i32, %c0_i32_0 : i32, i32
  }
  func.func @transform_3(%arg0: i32) -> (i32, i32, i32) {
    %c0_i32 = arith.constant 0 : i32
    %c0_i32_0 = arith.constant 0 : i32
    %c0_i32_1 = arith.constant 0 : i32
    return %arg0, %c0_i32, %c0_i32_0 : i32, i32, i32
  }
}

module attributes {stable_mosaic.version = 11 : i64} {
  func.func @_matmul_bias_act_kernel(%arg0: i32, %arg1: i32, %arg2: memref<1x16x864xbf16, #tpu.memory_space<vmem>>, %arg3: memref<864x256xbf16, #tpu.memory_space<vmem>>, %arg4: memref<1x256xf32, #tpu.memory_space<vmem>>, %arg5: memref<1x16x256xbf16, #tpu.memory_space<vmem>>) attributes {dimension_semantics = [#tpu.dimension_semantics<parallel>, #tpu.dimension_semantics<parallel>], iteration_bounds = array<i64: 2, 1>, scalar_prefetch = 0 : i64, scratch_operands = 0 : i64, tpu.core_type = #tpu.core_type<tc>, window_params = [{transform_indices = @transform_0, window_bounds = array<i64: 1, 16, 864>}, {pipeline_mode = #tpu.pipeline_mode<synchronous>, transform_indices = @transform_1, window_bounds = array<i64: 864, 256>}, {pipeline_mode = #tpu.pipeline_mode<synchronous>, transform_indices = @transform_2, window_bounds = array<i64: 1, 256>}, {transform_indices = @transform_3, window_bounds = array<i64: 1, 16, 256>}]} {
    %c0 = arith.constant 0 : index
    %c0_0 = arith.constant 0 : index
    %c0_1 = arith.constant 0 : index
    %0 = vector.load %arg2[%c0, %c0_0, %c0_1] : memref<1x16x864xbf16, #tpu.memory_space<vmem>>, vector<1x16x864xbf16>
    %1 = vector.shape_cast %0 : vector<1x16x864xbf16> to vector<16x864xbf16>
    %c0_2 = arith.constant 0 : index
    %c0_3 = arith.constant 0 : index
    %2 = vector.load %arg3[%c0_2, %c0_3] : memref<864x256xbf16, #tpu.memory_space<vmem>>, vector<864x256xbf16>
    %cst = arith.constant dense<0.000000e+00> : vector<16x256xf32>
    %3 = tpu.matmul %1, %2, %cst {dimension_numbers = #tpu.dot_dimension_numbers<[1], [0], [0], [1], [0, 0, 1, 1], [], []>} : vector<16x864xbf16>, vector<864x256xbf16>, vector<16x256xf32> -> vector<16x256xf32>
    %c0_4 = arith.constant 0 : index
    %c0_5 = arith.constant 0 : index
    %4 = vector.load %arg4[%c0_4, %c0_5] : memref<1x256xf32, #tpu.memory_space<vmem>>, vector<1x256xf32>
    %5 = vector.broadcast %4 : vector<1x256xf32> to vector<16x256xf32>
    %6 = arith.addf %3, %5 : vector<16x256xf32>
    %7 = arith.negf %6 : vector<16x256xf32>
    %8 = math.exp %7 : vector<16x256xf32>
    %cst_6 = arith.constant 1.000000e+00 : f32
    %9 = vector.broadcast %cst_6 : f32 to vector<16x256xf32>
    %10 = arith.addf %9, %8 : vector<16x256xf32>
    %11 = arith.divf %9, %10 : vector<16x256xf32>
    %12 = arith.mulf %6, %11 : vector<16x256xf32>
    %13 = arith.truncf %12 : vector<16x256xf32> to vector<16x256xbf16>
    %c0_7 = arith.constant 0 : index
    %c0_8 = arith.constant 0 : index
    %c0_9 = arith.constant 0 : index
    %14 = vector.load %arg5[%c0_7, %c0_8, %c0_9] : memref<1x16x256xbf16, #tpu.memory_space<vmem>>, vector<1x16x256xbf16>
    %15 = vector.shape_cast %14 : vector<1x16x256xbf16> to vector<16x256xbf16>
    %16 = vector.shape_cast %13 : vector<16x256xbf16> to vector<1x16x256xbf16>
    tpu.vector_store %arg5[%c0_7, %c0_8, %c0_9], %16 {strides = array<i32>} : memref<1x16x256xbf16, #tpu.memory_space<vmem>>, vector<1x16x256xbf16>,
    return
  }
  func.func @transform_0(%arg0: i32, %arg1: i32) -> (i32, i32, i32) {
    %c0_i32 = arith.constant 0 : i32
    %c0_i32_0 = arith.constant 0 : i32
    return %arg0, %arg1, %c0_i32 : i32, i32, i32
  }
  func.func @transform_1(%arg0: i32, %arg1: i32) -> (i32, i32) {
    %c0_i32 = arith.constant 0 : i32
    %c0_i32_0 = arith.constant 0 : i32
    %c0_i32_1 = arith.constant 0 : i32
    return %c0_i32, %c0_i32_0 : i32, i32
  }
  func.func @transform_2(%arg0: i32, %arg1: i32) -> (i32, i32) {
    %c0_i32 = arith.constant 0 : i32
    %c0_i32_0 = arith.constant 0 : i32
    %c0_i32_1 = arith.constant 0 : i32
    return %c0_i32, %c0_i32_0 : i32, i32
  }
  func.func @transform_3(%arg0: i32, %arg1: i32) -> (i32, i32, i32) {
    %c0_i32 = arith.constant 0 : i32
    %c0_i32_0 = arith.constant 0 : i32
    return %arg0, %arg1, %c0_i32 : i32, i32, i32
  }
}

module attributes {stable_mosaic.version = 11 : i64} {
  func.func @_matmul_bias_act_kernel(%arg0: i32, %arg1: i32, %arg2: memref<1x16x2304xbf16, #tpu.memory_space<vmem>>, %arg3: memref<2304x32xbf16, #tpu.memory_space<vmem>>, %arg4: memref<1x32xf32, #tpu.memory_space<vmem>>, %arg5: memref<1x16x32xf32, #tpu.memory_space<vmem>>) attributes {dimension_semantics = [#tpu.dimension_semantics<parallel>, #tpu.dimension_semantics<parallel>], iteration_bounds = array<i64: 2, 1>, scalar_prefetch = 0 : i64, scratch_operands = 0 : i64, tpu.core_type = #tpu.core_type<tc>, window_params = [{transform_indices = @transform_0, window_bounds = array<i64: 1, 16, 2304>}, {pipeline_mode = #tpu.pipeline_mode<synchronous>, transform_indices = @transform_1, window_bounds = array<i64: 2304, 32>}, {pipeline_mode = #tpu.pipeline_mode<synchronous>, transform_indices = @transform_2, window_bounds = array<i64: 1, 32>}, {transform_indices = @transform_3, window_bounds = array<i64: 1, 16, 32>}]} {
    %c0 = arith.constant 0 : index
    %c0_0 = arith.constant 0 : index
    %c0_1 = arith.constant 0 : index
    %0 = vector.load %arg2[%c0, %c0_0, %c0_1] : memref<1x16x2304xbf16, #tpu.memory_space<vmem>>, vector<1x16x2304xbf16>
    %1 = vector.shape_cast %0 : vector<1x16x2304xbf16> to vector<16x2304xbf16>
    %c0_2 = arith.constant 0 : index
    %c0_3 = arith.constant 0 : index
    %2 = vector.load %arg3[%c0_2, %c0_3] : memref<2304x32xbf16, #tpu.memory_space<vmem>>, vector<2304x32xbf16>
    %cst = arith.constant dense<0.000000e+00> : vector<16x32xf32>
    %3 = tpu.matmul %1, %2, %cst {dimension_numbers = #tpu.dot_dimension_numbers<[1], [0], [0], [1], [0, 0, 1, 1], [], []>} : vector<16x2304xbf16>, vector<2304x32xbf16>, vector<16x32xf32> -> vector<16x32xf32>
    %c0_4 = arith.constant 0 : index
    %c0_5 = arith.constant 0 : index
    %4 = vector.load %arg4[%c0_4, %c0_5] : memref<1x32xf32, #tpu.memory_space<vmem>>, vector<1x32xf32>
    %5 = vector.broadcast %4 : vector<1x32xf32> to vector<16x32xf32>
    %6 = arith.addf %3, %5 : vector<16x32xf32>
    %c0_6 = arith.constant 0 : index
    %c0_7 = arith.constant 0 : index
    %c0_8 = arith.constant 0 : index
    %7 = vector.load %arg5[%c0_6, %c0_7, %c0_8] : memref<1x16x32xf32, #tpu.memory_space<vmem>>, vector<1x16x32xf32>
    %8 = vector.shape_cast %7 : vector<1x16x32xf32> to vector<16x32xf32>
    %9 = vector.shape_cast %6 : vector<16x32xf32> to vector<1x16x32xf32>
    tpu.vector_store %arg5[%c0_6, %c0_7, %c0_8], %9 {strides = array<i32>} : memref<1x16x32xf32, #tpu.memory_space<vmem>>, vector<1x16x32xf32>,
    return
  }
  func.func @transform_0(%arg0: i32, %arg1: i32) -> (i32, i32, i32) {
    %c0_i32 = arith.constant 0 : i32
    %c0_i32_0 = arith.constant 0 : i32
    return %arg0, %arg1, %c0_i32 : i32, i32, i32
  }
  func.func @transform_1(%arg0: i32, %arg1: i32) -> (i32, i32) {
    %c0_i32 = arith.constant 0 : i32
    %c0_i32_0 = arith.constant 0 : i32
    %c0_i32_1 = arith.constant 0 : i32
    return %c0_i32, %c0_i32_0 : i32, i32
  }
  func.func @transform_2(%arg0: i32, %arg1: i32) -> (i32, i32) {
    %c0_i32 = arith.constant 0 : i32
    %c0_i32_0 = arith.constant 0 : i32
    %c0_i32_1 = arith.constant 0 : i32
    return %c0_i32, %c0_i32_0 : i32, i32
  }
  func.func @transform_3(%arg0: i32, %arg1: i32) -> (i32, i32, i32) {
    %c0_i32 = arith.constant 0 : i32
    %c0_i32_0 = arith.constant 0 : i32
    return %arg0, %arg1, %c0_i32 : i32, i32, i32
  }
}

</mosaic_0001>

<llo_original>
// kernel: _lambda_.8
$region0: #{_lambda_.8}
  #allocation0 [shape = 'u32[]', space=smem, size = 0x4, offset = 0x4, fixed_abs, tag = 'smem constant byte address 0x4 - core index']
  #allocation1 [shape = 'u32[144,128]{1,0:T(1,128)}', space=vmem, size = 0x12000, scoped, tag = 'internal scratch']
  %s0 = inlined_call_operand.vmem [shape: bf16[2,1024,27], index: 0, kind: input, shape index: {}]
  %s1 = inlined_call_operand.vmem [shape: bf16[27,16], index: 1, kind: input, shape index: {}]
  %s2 = inlined_call_operand.vmem [shape: f32[1,16], index: 2, kind: input, shape index: {}]
  %s3 = inlined_call_operand.vmem [shape: bf16[2,1024,16], index: 3, kind: output, shape index: {}]
  %s4 = sld [smem:[#allocation0]]
  $region45: #{_lambda_.8} parent=0
    _
  %s6 = ssub.s32 1, %s4
  %s7 = scalar_select 0, %s6, %s4
  loop: start=0, step=1, limit=6
  $region2: #{_lambda_.8} parent=0 // loop_pre_header
    _
  $region3: #{_lambda_.8} parent=0 // loop_header
    %s9 = sphi 0, %s13
    %p10 = scmp.ge.s32.totalorder %s9, 6
    %s16 = sphi 0, %s28
    %s17 = sphi 0, %s24
    %s18 = sphi 0, %s16
    %s19 = sphi 0, %s17
    %s20 = sphi 0, %s18
    %s21 = sphi 0, %s19
    %s33 = sphi 0, %s35
    %s36 = sphi 0, %s33
    %s37 = sphi 0, %s36
    %s53 = sphi 0, %s37
    %s57 = sphi 0, %s57
    %s59 = sphi 0, %s57
    %s60 = sphi 0, %s59
    %s74 = sphi 0, %s60
    %s78 = sphi 0, %s78
    %s80 = sphi 0, %s78
    %s81 = sphi 0, %s80
    %s95 = sphi 0, %s81
    %s103 = sphi 0, %s105
    %s106 = sphi 0, %s103
    %s107 = sphi 0, %s106
    %s123 = sphi 0, %s107
  $region4: #{_lambda_.8} parent=0 // loop_header_branch
    %12 = sbr.rel (%p10) target = $region8
  $region5: #{_lambda_.8} parent=0 // loop_body
    %s14 = ssub.s32 %s9, 1
    %s15 = ssub.s32 %s9, 2
    %s22 = sadd.s32 1, %s17
    %p23 = scmp.ge.s32.totalorder %s22, 2
    %s24 = scalar_select %p23, 0, %s22
    %s25 = sadd.s32 1, %s16
    %s26 = scalar_select %p23, %s25, %s16
    %p27 = scmp.ge.s32.totalorder %s26, 2
    %s28 = scalar_select %p27, 0, %s26
    %s29 = ssub.s32 %s16, %s28
    %s30 = ssub.s32 %s17, %s24
    %s31 = sor.u32 %s29, %s30
    %p32 = scmp.eq.s32.totalorder %s31, 0
    %s34 = sadd.s32 %s33, 1
    %s35 = scalar_select %p32, %s33, %s34
    %p38 = pneg %p32
    %p39 = scmp.eq.s32.totalorder %s9, 3
    %p40 = por %p38, %p39
    %p41 = scmp.ne.s32.totalorder %s33, %s36
    %p42 = scmp.eq.s32.totalorder %s9, 0
    %p43 = por %p41, %p42
    %p44 = scmp.ne.s32.totalorder %s33, %s36
    %p45 = scmp.eq.s32.totalorder %s14, 3
    %p46 = por %p44, %p45
    %p47 = scmp.ne.s32.totalorder %s36, %s37
    %p48 = scmp.eq.s32.totalorder %s14, 0
    %p49 = por %p47, %p48
    %p50 = scmp.ne.s32.totalorder %s36, %s37
    %p51 = scmp.eq.s32.totalorder %s15, 3
    %p52 = por %p50, %p51
    %p54 = scmp.ne.s32.totalorder %s37, %s53
    %p55 = scmp.eq.s32.totalorder %s15, 0
    %p56 = por %p54, %p55
    %s58 = sadd.s32 %s57, 1
    %p61 = scmp.eq.s32.totalorder %s9, 3
    %p62 = scmp.ne.s32.totalorder %s57, %s59
    %p63 = scmp.eq.s32.totalorder %s9, 0
    %p64 = por %p62, %p63
    %p65 = scmp.ne.s32.totalorder %s57, %s59
    %p66 = scmp.eq.s32.totalorder %s14, 3
    %p67 = por %p65, %p66
    %p68 = scmp.ne.s32.totalorder %s59, %s60
    %p69 = scmp.eq.s32.totalorder %s14, 0
    %p70 = por %p68, %p69
    %p71 = scmp.ne.s32.totalorder %s59, %s60
    %p72 = scmp.eq.s32.totalorder %s15, 3
    %p73 = por %p71, %p72
    %p75 = scmp.ne.s32.totalorder %s60, %s74
    %p76 = scmp.eq.s32.totalorder %s15, 0
    %p77 = por %p75, %p76
    %s79 = sadd.s32 %s78, 1
    %p82 = scmp.eq.s32.totalorder %s9, 3
    %p83 = scmp.ne.s32.totalorder %s78, %s80
    %p84 = scmp.eq.s32.totalorder %s9, 0
    %p85 = por %p83, %p84
    %p86 = scmp.ne.s32.totalorder %s78, %s80
    %p87 = scmp.eq.s32.totalorder %s14, 3
    %p88 = por %p86, %p87
    %p89 = scmp.ne.s32.totalorder %s80, %s81
    %p90 = scmp.eq.s32.totalorder %s14, 0
    %p91 = por %p89, %p90
    %p92 = scmp.ne.s32.totalorder %s80, %s81
    %p93 = scmp.eq.s32.totalorder %s15, 3
    %p94 = por %p92, %p93
    %p96 = scmp.ne.s32.totalorder %s81, %s95
    %p97 = scmp.eq.s32.totalorder %s15, 0
    %p98 = por %p96, %p97
    %s99 = ssub.s32 %s16, %s28
    %s100 = ssub.s32 %s17, %s24
    %s101 = sor.u32 %s99, %s100
    %p102 = scmp.eq.s32.totalorder %s101, 0
    %s104 = sadd.s32 %s103, 1
    %s105 = scalar_select %p102, %s103, %s104
    %p108 = pneg %p102
    %p109 = scmp.eq.s32.totalorder %s9, 3
    %p110 = por %p108, %p109
    %p111 = scmp.ne.s32.totalorder %s103, %s106
    %p112 = scmp.eq.s32.totalorder %s9, 0
    %p113 = por %p111, %p112
    %p114 = scmp.ne.s32.totalorder %s103, %s106
    %p115 = scmp.eq.s32.totalorder %s14, 3
    %p116 = por %p114, %p115
    %p117 = scmp.ne.s32.totalorder %s106, %s107
    %p118 = scmp.eq.s32.totalorder %s14, 0
    %p119 = por %p117, %p118
    %p120 = scmp.ne.s32.totalorder %s106, %s107
    %p121 = scmp.eq.s32.totalorder %s15, 3
    %p122 = por %p120, %p121
    %p124 = scmp.ne.s32.totalorder %s107, %s123
    %p125 = scmp.eq.s32.totalorder %s15, 0
    %p126 = por %p124, %p125
    %p127 = scmp.le.s32.totalorder 1, %s9
    %p128 = scmp.lt.s32.totalorder %s9, 5
    %p129 = pnand %p127, %p128
    %p130 = pneg %p129
    // Predicated region
    $region9: #{_lambda_.8} parent=5 // pred_check
      _
    $region10: #{_lambda_.8} parent=5 // pred_check_branch
      %132 = sbr.rel (%p129) target = $region12
    $region11: #{_lambda_.8} parent=5 // pred_region
      %s133 = ssub.s32 %s9, 1
      // Predicated region
      $region13: #{_lambda_.8} parent=11 // pred_check
        %p134 = pneg %p70
      $region14: #{_lambda_.8} parent=11 // pred_check_branch
        %136 = sbr.rel (%p134) target = $region16
      $region15: #{_lambda_.8} parent=11 // pred_region
        _
      $region16: #{_lambda_.8} parent=11 // pred_fallthru
        _
      // Predicated region
      $region17: #{_lambda_.8} parent=11 // pred_check
        %p137 = pneg %p91
      $region18: #{_lambda_.8} parent=11 // pred_check_branch
        %139 = sbr.rel (%p137) target = $region20
      $region19: #{_lambda_.8} parent=11 // pred_region
        _
      $region20: #{_lambda_.8} parent=11 // pred_fallthru
        _
    $region12: #{_lambda_.8} parent=5 // pred_fallthru
      _
    %p140 = scmp.lt.s32.totalorder %s9, 4
    // Predicated region
    $region21: #{_lambda_.8} parent=5 // pred_check
      %p141 = pneg %p140
    $region22: #{_lambda_.8} parent=5 // pred_check_branch
      %143 = sbr.rel (%p141) target = $region24
    $region23: #{_lambda_.8} parent=5 // pred_region
      // Predicated region
      $region25: #{_lambda_.8} parent=23 // pred_check
        %p144 = pneg %p43
      $region26: #{_lambda_.8} parent=23 // pred_check_branch
        %146 = sbr.rel (%p144) target = $region28
      $region27: #{_lambda_.8} parent=23 // pred_region
        %s147 = smul.u32 64, %s17
        %p148 = scmp.lt.s32.totalorder %s16, 1
        %s149 = scalar_select %p148, %s16, 1
        %p150 = scmp.lt.s32.totalorder %s147, 127
        %s151 = scalar_select %p150, %s147, 127
        %s152 = smul.addr %s149, 128
        %s153 = sadd.s32 %s151, %s152
        %s154 = smul.addr %s153, 4
        %s155 = scalar_lea.vmem %s0, %s154
        %s156 = smul.u32 64, %s17
      $region28: #{_lambda_.8} parent=23 // pred_fallthru
        _
    $region24: #{_lambda_.8} parent=5 // pred_fallthru
      _
    %p157 = scmp.le.s32.totalorder 1, %s9
    %p158 = scmp.lt.s32.totalorder %s9, 5
    %p159 = pnand %p157, %p158
    %p160 = pneg %p159
    // Predicated region
    $region29: #{_lambda_.8} parent=5 // pred_check
      _
    $region30: #{_lambda_.8} parent=5 // pred_check_branch
      %162 = sbr.rel (%p159) target = $region32
    $region31: #{_lambda_.8} parent=5 // pred_region
      %s163 = ssub.s32 %s9, 1
      %s164 = smul.u32 64, %s19
      %p165 = scmp.lt.s32.totalorder %s18, 1
      %s166 = scalar_select %p165, %s18, 1
      %p167 = scmp.lt.s32.totalorder %s164, 127
      %s168 = scalar_select %p167, %s164, 127
      %s169 = smul.addr %s166, 128
      %s170 = sadd.s32 %s168, %s169
      %s171 = smul.addr %s170, 4
      %s172 = scalar_lea.vmem %s0, %s171
      %p173 = pneg %p49
      %p174 = pneg %p46
      %p175 = pneg %p70
      %p176 = pneg %p67
      %p177 = pneg %p91
      %p178 = pneg %p88
      %p179 = pneg %p119
      %p180 = pneg %p116
      %s181 = smul.u32 64, %s19
      %p182 = scmp.lt.s32.totalorder %s18, 1
      %s183 = scalar_select %p182, %s18, 1
      %p184 = scmp.lt.s32.totalorder %s181, 127
      %s185 = scalar_select %p184, %s181, 127
      %s186 = smul.addr %s183, 128
      %s187 = sadd.s32 %s185, %s186
      %s188 = smul.addr %s187, 4
      %s189 = scalar_lea.vmem %s3, %s188
      %s190 = smul.u32 64, %s19
      %p191 = scmp.lt.s32.totalorder %s18, 1
      %s192 = scalar_select %p191, %s18, 1
      %p193 = scmp.lt.s32.totalorder %s190, 127
      %s194 = scalar_select %p193, %s190, 127
      %s195 = smul.addr %s192, 128
      %s196 = sadd.s32 %s194, %s195
      %s197 = smul.addr %s196, 4
      %s198 = scalar_lea.vmem %s0, %s197
      %s199 = smul.u32 64, %s19
      %s200 = smul.u32 64, %s19
      %p201 = scmp.lt.s32.totalorder %s18, 1
      %s202 = scalar_select %p201, %s18, 1
      %p203 = scmp.lt.s32.totalorder %s200, 127
      %s204 = scalar_select %p203, %s200, 127
      %s205 = smul.addr %s202, 128
      %s206 = sadd.s32 %s204, %s205
      %s207 = smul.addr %s206, 4
      %s208 = scalar_lea.vmem %s3, %s207
      %s209 = smul.u32 64, %s19
      %v211 = vld [vmem:[%s198] sm:$0xf]
      %v212 = vld [vmem:[%s198 + $0x4] sm:$0xf]
      %v213 = vld [vmem:[%s198 + $0x8] sm:$0xf]
      %v214 = vld [vmem:[%s198 + $0xc] sm:$0xf]
      %v215 = vld [vmem:[%s198 + $0x10] sm:$0xf]
      %v216 = vld [vmem:[%s198 + $0x14] sm:$0xf]
      %v217 = vld [vmem:[%s198 + $0x18] sm:$0xf]
      %v218 = vld [vmem:[%s198 + $0x1c] sm:$0xf]
      %v219 = vld [vmem:[%s198 + $0x20] sm:$0xf]
      %v220 = vld [vmem:[%s198 + $0x24] sm:$0xf]
      %v221 = vld [vmem:[%s198 + $0x28] sm:$0xf]
      %v222 = vld [vmem:[%s198 + $0x2c] sm:$0xf]
      %v223 = vld [vmem:[%s198 + $0x30] sm:$0xf]
      %v224 = vld [vmem:[%s198 + $0x34] sm:$0xf]
      %v225 = vld [vmem:[%s198 + $0x38] sm:$0xf]
      %v226 = vld [vmem:[%s198 + $0x3c] sm:$0xf]
      %v227 = vld [vmem:[%s198 + $0x40] sm:$0xf]
      %v228 = vld [vmem:[%s198 + $0x44] sm:$0xf]
      %v229 = vld [vmem:[%s198 + $0x48] sm:$0xf]
      %v230 = vld [vmem:[%s198 + $0x4c] sm:$0xf]
      %v231 = vld [vmem:[%s198 + $0x50] sm:$0xf]
      %v232 = vld [vmem:[%s198 + $0x54] sm:$0xf]
      %v233 = vld [vmem:[%s198 + $0x58] sm:$0xf]
      %v234 = vld [vmem:[%s198 + $0x5c] sm:$0xf]
      %v235 = vld [vmem:[%s198 + $0x60] sm:$0xf]
      %v236 = vld [vmem:[%s198 + $0x64] sm:$0xf]
      %v237 = vld [vmem:[%s198 + $0x68] sm:$0xf]
      %v238 = vld [vmem:[%s198 + $0x6c] sm:$0xf]
      %v239 = vld [vmem:[%s198 + $0x70] sm:$0xf]
      %v240 = vld [vmem:[%s198 + $0x74] sm:$0xf]
      %v241 = vld [vmem:[%s198 + $0x78] sm:$0xf]
      %v242 = vld [vmem:[%s198 + $0x7c] sm:$0xf]
      %v243 = vld [vmem:[%s198 + $0x80] sm:$0xf]
      %v244 = vld [vmem:[%s198 + $0x84] sm:$0xf]
      %v245 = vld [vmem:[%s198 + $0x88] sm:$0xf]
      %v246 = vld [vmem:[%s198 + $0x8c] sm:$0xf]
      %v247 = vld [vmem:[%s198 + $0x90] sm:$0xf]
      %v248 = vld [vmem:[%s198 + $0x94] sm:$0xf]
      %v249 = vld [vmem:[%s198 + $0x98] sm:$0xf]
      %v250 = vld [vmem:[%s198 + $0x9c] sm:$0xf]
      %v251 = vld [vmem:[%s198 + $0xa0] sm:$0xf]
      %v252 = vld [vmem:[%s198 + $0xa4] sm:$0xf]
      %v253 = vld [vmem:[%s198 + $0xa8] sm:$0xf]
      %v254 = vld [vmem:[%s198 + $0xac] sm:$0xf]
      %v255 = vld [vmem:[%s198 + $0xb0] sm:$0xf]
      %v256 = vld [vmem:[%s198 + $0xb4] sm:$0xf]
      %v257 = vld [vmem:[%s198 + $0xb8] sm:$0xf]
      %v258 = vld [vmem:[%s198 + $0xbc] sm:$0xf]
      %v259 = vld [vmem:[%s198 + $0xc0] sm:$0xf]
      %v260 = vld [vmem:[%s198 + $0xc4] sm:$0xf]
      %v261 = vld [vmem:[%s198 + $0xc8] sm:$0xf]
      %v262 = vld [vmem:[%s198 + $0xcc] sm:$0xf]
      %v263 = vld [vmem:[%s198 + $0xd0] sm:$0xf]
      %v264 = vld [vmem:[%s198 + $0xd4] sm:$0xf]
      %v265 = vld [vmem:[%s198 + $0xd8] sm:$0xf]
      %v266 = vld [vmem:[%s198 + $0xdc] sm:$0xf]
      %v267 = vld [vmem:[%s198 + $0xe0] sm:$0xf]
      %v268 = vld [vmem:[%s198 + $0xe4] sm:$0xf]
      %v269 = vld [vmem:[%s198 + $0xe8] sm:$0xf]
      %v270 = vld [vmem:[%s198 + $0xec] sm:$0xf]
      %v271 = vld [vmem:[%s198 + $0xf0] sm:$0xf]
      %v272 = vld [vmem:[%s198 + $0xf4] sm:$0xf]
      %v273 = vld [vmem:[%s198 + $0xf8] sm:$0xf]
      %v274 = vld [vmem:[%s198 + $0xfc] sm:$0xf]
      %v275 = vld [vmem:[%s1] sm:$0xf]
      %v276 = vld [vmem:[%s1 + $0x4] sm:$0xf]
      %v277 = vld [vmem:[%s1 + $0x8] sm:$0xf]
      %v278 = vld [vmem:[%s1 + $0xc] sm:$0x3]
      %v279 = vld [vmem:[%s2] sm:$0x1]
      %v281 = vlaneseq
      %v282 = vshrl.u32 %v281, 7
      %v283 = vsub.s32 0, %v282
      %v284 = vrot.slane %v279, %v283
      %v350 = vunpack.c.l.b16 %v211
      %v351 = vunpack.c.l.b16 %v212
      %v352 = vunpack.c.l.b16 %v213
      %v353 = vunpack.c.l.b16 %v214
      %v354 = vunpack.c.l.b16 %v215
      %v355 = vunpack.c.l.b16 %v216
      %v356 = vunpack.c.l.b16 %v217
      %v357 = vunpack.c.l.b16 %v218
      %v358 = vunpack.c.l.b16 %v219
      %v359 = vunpack.c.l.b16 %v220
      %v360 = vunpack.c.l.b16 %v221
      %v361 = vunpack.c.l.b16 %v222
      %v362 = vunpack.c.l.b16 %v223
      %v363 = vunpack.c.l.b16 %v224
      %v364 = vunpack.c.l.b16 %v225
      %v365 = vunpack.c.l.b16 %v226
      %v366 = vunpack.c.l.b16 %v227
      %v367 = vunpack.c.l.b16 %v228
      %v368 = vunpack.c.l.b16 %v229
      %v369 = vunpack.c.l.b16 %v230
      %v370 = vunpack.c.l.b16 %v231
      %v371 = vunpack.c.l.b16 %v232
      %v372 = vunpack.c.l.b16 %v233
      %v373 = vunpack.c.l.b16 %v234
      %v374 = vunpack.c.l.b16 %v235
      %v375 = vunpack.c.l.b16 %v236
      %v376 = vunpack.c.l.b16 %v237
      %v377 = vunpack.c.l.b16 %v238
      %v378 = vunpack.c.l.b16 %v239
      %v379 = vunpack.c.l.b16 %v240
      %v380 = vunpack.c.l.b16 %v241
      %v381 = vunpack.c.l.b16 %v242
      %v382 = vunpack.c.l.b16 %v243
      %v383 = vunpack.c.l.b16 %v244
      %v384 = vunpack.c.l.b16 %v245
      %v385 = vunpack.c.l.b16 %v246
      %v386 = vunpack.c.l.b16 %v247
      %v387 = vunpack.c.l.b16 %v248
      %v388 = vunpack.c.l.b16 %v249
      %v389 = vunpack.c.l.b16 %v250
      %v390 = vunpack.c.l.b16 %v251
      %v391 = vunpack.c.l.b16 %v252
      %v392 = vunpack.c.l.b16 %v253
      %v393 = vunpack.c.l.b16 %v254
      %v394 = vunpack.c.l.b16 %v255
      %v395 = vunpack.c.l.b16 %v256
      %v396 = vunpack.c.l.b16 %v257
      %v397 = vunpack.c.l.b16 %v258
      %v398 = vunpack.c.l.b16 %v259
      %v399 = vunpack.c.l.b16 %v260
      %v400 = vunpack.c.l.b16 %v261
      %v401 = vunpack.c.l.b16 %v262
      %v402 = vunpack.c.l.b16 %v263
      %v403 = vunpack.c.l.b16 %v264
      %v404 = vunpack.c.l.b16 %v265
      %v405 = vunpack.c.l.b16 %v266
      %v406 = vunpack.c.l.b16 %v267
      %v407 = vunpack.c.l.b16 %v268
      %v408 = vunpack.c.l.b16 %v269
      %v409 = vunpack.c.l.b16 %v270
      %v410 = vunpack.c.l.b16 %v271
      %v411 = vunpack.c.l.b16 %v272
      %v412 = vunpack.c.l.b16 %v273
      %v413 = vunpack.c.l.b16 %v274
      %v414 = vpack.c.b16 %v351, %v350
      %v415 = vpack.c.b16 %v353, %v352
      %v416 = vpack.c.b16 %v355, %v354
      %v417 = vpack.c.b16 %v357, %v356
      %v418 = vpack.c.b16 %v359, %v358
      %v419 = vpack.c.b16 %v361, %v360
      %v420 = vpack.c.b16 %v363, %v362
      %v421 = vpack.c.b16 %v365, %v364
      %v422 = vpack.c.b16 %v367, %v366
      %v423 = vpack.c.b16 %v369, %v368
      %v424 = vpack.c.b16 %v371, %v370
      %v425 = vpack.c.b16 %v373, %v372
      %v426 = vpack.c.b16 %v375, %v374
      %v427 = vpack.c.b16 %v377, %v376
      %v428 = vpack.c.b16 %v379, %v378
      %v429 = vpack.c.b16 %v381, %v380
      %v430 = vpack.c.b16 %v383, %v382
      %v431 = vpack.c.b16 %v385, %v384
      %v432 = vpack.c.b16 %v387, %v386
      %v433 = vpack.c.b16 %v389, %v388
      %v434 = vpack.c.b16 %v391, %v390
      %v435 = vpack.c.b16 %v393, %v392
      %v436 = vpack.c.b16 %v395, %v394
      %v437 = vpack.c.b16 %v397, %v396
      %v438 = vpack.c.b16 %v399, %v398
      %v439 = vpack.c.b16 %v401, %v400
      %v440 = vpack.c.b16 %v403, %v402
      %v441 = vpack.c.b16 %v405, %v404
      %v442 = vpack.c.b16 %v407, %v406
      %v443 = vpack.c.b16 %v409, %v408
      %v444 = vpack.c.b16 %v411, %v410
      %v445 = vpack.c.b16 %v413, %v412
      %v450 = vunpack.c.l.b16 %v275
      %v451 = vunpack.c.l.b16 %v276
      %v452 = vunpack.c.l.b16 %v277
      %v453 = vunpack.c.l.b16 %v278
      %v454 = vpack.c.b16 %v451, %v450
      %v455 = vpack.c.b16 %v453, %v452
      %vm457 = vcmask 220160
      %v459 = vsel %vm457, %v414, 0
      %v462 = vsel %vm457, %v415, 0
      %v465 = vsel %vm457, %v416, 0
      %v468 = vsel %vm457, %v417, 0
      %v471 = vsel %vm457, %v418, 0
      %v474 = vsel %vm457, %v419, 0
      %v477 = vsel %vm457, %v420, 0
      %v480 = vsel %vm457, %v421, 0
      %v483 = vsel %vm457, %v422, 0
      %v486 = vsel %vm457, %v423, 0
      %v489 = vsel %vm457, %v424, 0
      %v492 = vsel %vm457, %v425, 0
      %v495 = vsel %vm457, %v426, 0
      %v498 = vsel %vm457, %v427, 0
      %v501 = vsel %vm457, %v428, 0
      %v504 = vsel %vm457, %v429, 0
      %v507 = vsel %vm457, %v430, 0
      %v510 = vsel %vm457, %v431, 0
      %v513 = vsel %vm457, %v432, 0
      %v516 = vsel %vm457, %v433, 0
      %v519 = vsel %vm457, %v434, 0
      %v522 = vsel %vm457, %v435, 0
      %v525 = vsel %vm457, %v436, 0
      %v528 = vsel %vm457, %v437, 0
      %v531 = vsel %vm457, %v438, 0
      %v534 = vsel %vm457, %v439, 0
      %v537 = vsel %vm457, %v440, 0
      %v540 = vsel %vm457, %v441, 0
      %v543 = vsel %vm457, %v442, 0
      %v546 = vsel %vm457, %v443, 0
      %v549 = vsel %vm457, %v444, 0
      %v552 = vsel %vm457, %v445, 0
      %vm554 = vcmask 1044480
      %vm555 = vcmask 1045504
      %v556 = vsel %vm554, 4294967295, 65535
      %v557 = vsel %vm555, %v556, 0
      %v559 = vand.u32 %v455, %v557
      %561 = vmatprep.subr.bf16.mxu0 0
      %562 = vmatpush1.bf16.msra.mxu0 0
      %563 = vmatprep.subr.bf16.mxu0 0
      %564 = vmatpush1.bf16.msra.mxu0 0
      %565 = vmatprep.subr.bf16.mxu0 0
      %566 = vmatpush1.bf16.msra.mxu0 0
      %567 = vmatprep.subr.bf16.mxu0 0
      %568 = vmatpush1.bf16.msra.mxu0 0
      %569 = vmatprep.subr.bf16.mxu0 0
      %570 = vmatpush1.bf16.msra.mxu0 0
      %571 = vmatprep.subr.bf16.mxu0 0
      %572 = vmatpush1.bf16.msra.mxu0 0
      %573 = vmatprep.subr.bf16.mxu0 0
      %574 = vmatpush1.bf16.msra.mxu0 %v559
      %575 = vmatprep.subr.bf16.mxu0 0
      %576 = vmatpush1.bf16.msra.mxu0 %v454
      %577 = vmatprep.subr.bf16.mxu0 0
      %578 = vmatpush2.bf16.msra.mxu0 0
      %579 = vmatprep.subr.bf16.mxu0 0
      %580 = vmatpush2.bf16.msra.mxu0 0
      %581 = vmatprep.subr.bf16.mxu0 0
      %582 = vmatpush2.bf16.msra.mxu0 0
      %583 = vmatprep.subr.bf16.mxu0 0
      %584 = vmatpush2.bf16.msra.mxu0 0
      %585 = vmatprep.subr.bf16.mxu0 0
      %586 = vmatpush2.bf16.msra.mxu0 0
      %587 = vmatprep.subr.bf16.mxu0 0
      %588 = vmatpush2.bf16.msra.mxu0 0
      %589 = vmatprep.subr.bf16.mxu0 0
      %590 = vmatpush2.bf16.msra.mxu0 0
      %591 = vmatprep.subr.bf16.mxu0 0
      %592 = vmatpush2.bf16.msra.mxu0 0
      %593 = vmatprep.mubr.bf16.mxu0 0
      %594 = vmatmul.mubr.bf16.gmra.mxu0 %v459
      %v595 = vpop.f32.mrf.mxu0
      %v596 = vadd.f32 %v284, %v595
      %v597 = vpop.f32.mrf.mxu0
      %v598 = vpop.f32.mrf.mxu0
      %v599 = vadd.f32 %v284, %v598
      %v600 = vpop.f32.mrf.mxu0
      %601 = vmatprep.mubr.bf16.mxu0 0
      %602 = vmatmul.mubr.bf16.gmra.mxu0 %v462
      %v603 = vpop.f32.mrf.mxu0
      %v604 = vadd.f32 %v284, %v603
      %v605 = vpop.f32.mrf.mxu0
      %v606 = vpop.f32.mrf.mxu0
      %v607 = vadd.f32 %v284, %v606
      %v608 = vpop.f32.mrf.mxu0
      %609 = vmatprep.mubr.bf16.mxu0 0
      %610 = vmatmul.mubr.bf16.gmra.mxu0 %v465
      %v611 = vpop.f32.mrf.mxu0
      %v612 = vadd.f32 %v284, %v611
      %v613 = vpop.f32.mrf.mxu0
      %v614 = vpop.f32.mrf.mxu0
      %v615 = vadd.f32 %v284, %v614
      %v616 = vpop.f32.mrf.mxu0
      %617 = vmatprep.mubr.bf16.mxu0 0
      %618 = vmatmul.mubr.bf16.gmra.mxu0 %v468
      %v619 = vpop.f32.mrf.mxu0
      %v620 = vadd.f32 %v284, %v619
      %v621 = vpop.f32.mrf.mxu0
      %v622 = vpop.f32.mrf.mxu0
      %v623 = vadd.f32 %v284, %v622
      %v624 = vpop.f32.mrf.mxu0
      %625 = vmatprep.mubr.bf16.mxu0 0
      %626 = vmatmul.mubr.bf16.gmra.mxu0 %v471
      %v627 = vpop.f32.mrf.mxu0
      %v628 = vadd.f32 %v284, %v627
      %v629 = vpop.f32.mrf.mxu0
      %v630 = vpop.f32.mrf.mxu0
      %v631 = vadd.f32 %v284, %v630
      %v632 = vpop.f32.mrf.mxu0
      %633 = vmatprep.mubr.bf16.mxu0 0
      %634 = vmatmul.mubr.bf16.gmra.mxu0 %v474
      %v635 = vpop.f32.mrf.mxu0
      %v636 = vadd.f32 %v284, %v635
      %v637 = vpop.f32.mrf.mxu0
      %v638 = vpop.f32.mrf.mxu0
      %v639 = vadd.f32 %v284, %v638
      %v640 = vpop.f32.mrf.mxu0
      %641 = vmatprep.mubr.bf16.mxu0 0
      %642 = vmatmul.mubr.bf16.gmra.mxu0 %v477
      %v643 = vpop.f32.mrf.mxu0
      %v644 = vadd.f32 %v284, %v643
      %v645 = vpop.f32.mrf.mxu0
      %v646 = vpop.f32.mrf.mxu0
      %v647 = vadd.f32 %v284, %v646
      %v648 = vpop.f32.mrf.mxu0
      %649 = vmatprep.mubr.bf16.mxu0 0
      %650 = vmatmul.mubr.bf16.gmra.mxu0 %v480
      %v651 = vpop.f32.mrf.mxu0
      %v652 = vadd.f32 %v284, %v651
      %v653 = vpop.f32.mrf.mxu0
      %v654 = vpop.f32.mrf.mxu0
      %v655 = vadd.f32 %v284, %v654
      %v656 = vpop.f32.mrf.mxu0
      %657 = vmatprep.mubr.bf16.mxu0 0
      %658 = vmatmul.mubr.bf16.gmra.mxu0 %v483
      %v659 = vpop.f32.mrf.mxu0
      %v660 = vadd.f32 %v284, %v659
      %v661 = vpop.f32.mrf.mxu0
      %v662 = vpop.f32.mrf.mxu0
      %v663 = vadd.f32 %v284, %v662
      %v664 = vpop.f32.mrf.mxu0
      %665 = vmatprep.mubr.bf16.mxu0 0
      %666 = vmatmul.mubr.bf16.gmra.mxu0 %v486
      %v667 = vpop.f32.mrf.mxu0
      %v668 = vadd.f32 %v284, %v667
      %v669 = vpop.f32.mrf.mxu0
      %v670 = vpop.f32.mrf.mxu0
      %v671 = vadd.f32 %v284, %v670
      %v672 = vpop.f32.mrf.mxu0
      %673 = vmatprep.mubr.bf16.mxu0 0
      %674 = vmatmul.mubr.bf16.gmra.mxu0 %v489
      %v675 = vpop.f32.mrf.mxu0
      %v676 = vadd.f32 %v284, %v675
      %v677 = vpop.f32.mrf.mxu0
      %v678 = vpop.f32.mrf.mxu0
      %v679 = vadd.f32 %v284, %v678
      %v680 = vpop.f32.mrf.mxu0
      %681 = vmatprep.mubr.bf16.mxu0 0
      %682 = vmatmul.mubr.bf16.gmra.mxu0 %v492
      %v683 = vpop.f32.mrf.mxu0
      %v684 = vadd.f32 %v284, %v683
      %v685 = vpop.f32.mrf.mxu0
      %v686 = vpop.f32.mrf.mxu0
      %v687 = vadd.f32 %v284, %v686
      %v688 = vpop.f32.mrf.mxu0
      %689 = vmatprep.mubr.bf16.mxu0 0
      %690 = vmatmul.mubr.bf16.gmra.mxu0 %v495
      %v691 = vpop.f32.mrf.mxu0
      %v692 = vadd.f32 %v284, %v691
      %v693 = vpop.f32.mrf.mxu0
      %v694 = vpop.f32.mrf.mxu0
      %v695 = vadd.f32 %v284, %v694
      %v696 = vpop.f32.mrf.mxu0
      %697 = vmatprep.mubr.bf16.mxu0 0
      %698 = vmatmul.mubr.bf16.gmra.mxu0 %v498
      %v699 = vpop.f32.mrf.mxu0
      %v700 = vadd.f32 %v284, %v699
      %v701 = vpop.f32.mrf.mxu0
      %v702 = vpop.f32.mrf.mxu0
      %v703 = vadd.f32 %v284, %v702
      %v704 = vpop.f32.mrf.mxu0
      %705 = vmatprep.mubr.bf16.mxu0 0
      %706 = vmatmul.mubr.bf16.gmra.mxu0 %v501
      %v707 = vpop.f32.mrf.mxu0
      %v708 = vadd.f32 %v284, %v707
      %v709 = vpop.f32.mrf.mxu0
      %v710 = vpop.f32.mrf.mxu0
      %v711 = vadd.f32 %v284, %v710
      %v712 = vpop.f32.mrf.mxu0
      %713 = vmatprep.mubr.bf16.mxu0 0
      %714 = vmatmul.mubr.bf16.gmra.mxu0 %v504
      %v715 = vpop.f32.mrf.mxu0
      %v716 = vadd.f32 %v284, %v715
      %v717 = vpop.f32.mrf.mxu0
      %v718 = vpop.f32.mrf.mxu0
      %v719 = vadd.f32 %v284, %v718
      %v720 = vpop.f32.mrf.mxu0
      %721 = vmatprep.mubr.bf16.mxu0 0
      %722 = vmatmul.mubr.bf16.gmra.mxu0 %v507
      %v723 = vpop.f32.mrf.mxu0
      %v724 = vadd.f32 %v284, %v723
      %v725 = vpop.f32.mrf.mxu0
      %v726 = vpop.f32.mrf.mxu0
      %v727 = vadd.f32 %v284, %v726
      %v728 = vpop.f32.mrf.mxu0
      %729 = vmatprep.mubr.bf16.mxu0 0
      %730 = vmatmul.mubr.bf16.gmra.mxu0 %v510
      %v731 = vpop.f32.mrf.mxu0
      %v732 = vadd.f32 %v284, %v731
      %v733 = vpop.f32.mrf.mxu0
      %v734 = vpop.f32.mrf.mxu0
      %v735 = vadd.f32 %v284, %v734
      %v736 = vpop.f32.mrf.mxu0
      %737 = vmatprep.mubr.bf16.mxu0 0
      %738 = vmatmul.mubr.bf16.gmra.mxu0 %v513
      %v739 = vpop.f32.mrf.mxu0
      %v740 = vadd.f32 %v284, %v739
      %v741 = vpop.f32.mrf.mxu0
      %v742 = vpop.f32.mrf.mxu0
      %v743 = vadd.f32 %v284, %v742
      %v744 = vpop.f32.mrf.mxu0
      %745 = vmatprep.mubr.bf16.mxu0 0
      %746 = vmatmul.mubr.bf16.gmra.mxu0 %v516
      %v747 = vpop.f32.mrf.mxu0
      %v748 = vadd.f32 %v284, %v747
      %v749 = vpop.f32.mrf.mxu0
      %v750 = vpop.f32.mrf.mxu0
      %v751 = vadd.f32 %v284, %v750
      %v752 = vpop.f32.mrf.mxu0
      %753 = vmatprep.mubr.bf16.mxu0 0
      %754 = vmatmul.mubr.bf16.gmra.mxu0 %v519
      %v755 = vpop.f32.mrf.mxu0
      %v756 = vadd.f32 %v284, %v755
      %v757 = vpop.f32.mrf.mxu0
      %v758 = vpop.f32.mrf.mxu0
      %v759 = vadd.f32 %v284, %v758
      %v760 = vpop.f32.mrf.mxu0
      %761 = vmatprep.mubr.bf16.mxu0 0
      %762 = vmatmul.mubr.bf16.gmra.mxu0 %v522
      %v763 = vpop.f32.mrf.mxu0
      %v764 = vadd.f32 %v284, %v763
      %v765 = vpop.f32.mrf.mxu0
      %v766 = vpop.f32.mrf.mxu0
      %v767 = vadd.f32 %v284, %v766
      %v768 = vpop.f32.mrf.mxu0
      %769 = vmatprep.mubr.bf16.mxu0 0
      %770 = vmatmul.mubr.bf16.gmra.mxu0 %v525
      %v771 = vpop.f32.mrf.mxu0
      %v772 = vadd.f32 %v284, %v771
      %v773 = vpop.f32.mrf.mxu0
      %v774 = vpop.f32.mrf.mxu0
      %v775 = vadd.f32 %v284, %v774
      %v776 = vpop.f32.mrf.mxu0
      %777 = vmatprep.mubr.bf16.mxu0 0
      %778 = vmatmul.mubr.bf16.gmra.mxu0 %v528
      %v779 = vpop.f32.mrf.mxu0
      %v780 = vadd.f32 %v284, %v779
      %v781 = vpop.f32.mrf.mxu0
      %v782 = vpop.f32.mrf.mxu0
      %v783 = vadd.f32 %v284, %v782
      %v784 = vpop.f32.mrf.mxu0
      %785 = vmatprep.mubr.bf16.mxu0 0
      %786 = vmatmul.mubr.bf16.gmra.mxu0 %v531
      %v787 = vpop.f32.mrf.mxu0
      %v788 = vadd.f32 %v284, %v787
      %v789 = vpop.f32.mrf.mxu0
      %v790 = vpop.f32.mrf.mxu0
      %v791 = vadd.f32 %v284, %v790
      %v792 = vpop.f32.mrf.mxu0
      %793 = vmatprep.mubr.bf16.mxu0 0
      %794 = vmatmul.mubr.bf16.gmra.mxu0 %v534
      %v795 = vpop.f32.mrf.mxu0
      %v796 = vadd.f32 %v284, %v795
      %v797 = vpop.f32.mrf.mxu0
      %v798 = vpop.f32.mrf.mxu0
      %v799 = vadd.f32 %v284, %v798
      %v800 = vpop.f32.mrf.mxu0
      %801 = vmatprep.mubr.bf16.mxu0 0
      %802 = vmatmul.mubr.bf16.gmra.mxu0 %v537
      %v803 = vpop.f32.mrf.mxu0
      %v804 = vadd.f32 %v284, %v803
      %v805 = vpop.f32.mrf.mxu0
      %v806 = vpop.f32.mrf.mxu0
      %v807 = vadd.f32 %v284, %v806
      %v808 = vpop.f32.mrf.mxu0
      %809 = vmatprep.mubr.bf16.mxu0 0
      %810 = vmatmul.mubr.bf16.gmra.mxu0 %v540
      %v811 = vpop.f32.mrf.mxu0
      %v812 = vadd.f32 %v284, %v811
      %v813 = vpop.f32.mrf.mxu0
      %v814 = vpop.f32.mrf.mxu0
      %v815 = vadd.f32 %v284, %v814
      %v816 = vpop.f32.mrf.mxu0
      %817 = vmatprep.mubr.bf16.mxu0 0
      %818 = vmatmul.mubr.bf16.gmra.mxu0 %v543
      %v819 = vpop.f32.mrf.mxu0
      %v820 = vadd.f32 %v284, %v819
      %v821 = vpop.f32.mrf.mxu0
      %v822 = vpop.f32.mrf.mxu0
      %v823 = vadd.f32 %v284, %v822
      %v824 = vpop.f32.mrf.mxu0
      %825 = vmatprep.mubr.bf16.mxu0 0
      %826 = vmatmul.mubr.bf16.gmra.mxu0 %v546
      %v827 = vpop.f32.mrf.mxu0
      %v828 = vadd.f32 %v284, %v827
      %v829 = vpop.f32.mrf.mxu0
      %v830 = vpop.f32.mrf.mxu0
      %v831 = vadd.f32 %v284, %v830
      %v832 = vpop.f32.mrf.mxu0
      %833 = vmatprep.mubr.bf16.mxu0 0
      %834 = vmatmul.mubr.bf16.gmra.mxu0 %v549
      %v835 = vpop.f32.mrf.mxu0
      %v836 = vadd.f32 %v284, %v835
      %v837 = vpop.f32.mrf.mxu0
      %v838 = vpop.f32.mrf.mxu0
      %v839 = vadd.f32 %v284, %v838
      %v840 = vpop.f32.mrf.mxu0
      %841 = vmatprep.mubr.bf16.mxu0 0
      %842 = vmatmul.mubr.bf16.gmra.mxu0 %v552
      %v843 = vpop.f32.mrf.mxu0
      %v844 = vadd.f32 %v284, %v843
      %v845 = vpop.f32.mrf.mxu0
      %v846 = vpop.f32.mrf.mxu0
      %v847 = vadd.f32 %v284, %v846
      %v848 = vpop.f32.mrf.mxu0
      %849 = vdwg.mxu0
      %v850 = vxor.u32 %v596, 2147483648
      %v851 = vxor.u32 %v599, 2147483648
      %v852 = vxor.u32 %v604, 2147483648
      %v853 = vxor.u32 %v607, 2147483648
      %v854 = vxor.u32 %v612, 2147483648
      %v855 = vxor.u32 %v615, 2147483648
      %v856 = vxor.u32 %v620, 2147483648
      %v857 = vxor.u32 %v623, 2147483648
      %v858 = vxor.u32 %v628, 2147483648
      %v859 = vxor.u32 %v631, 2147483648
      %v860 = vxor.u32 %v636, 2147483648
      %v861 = vxor.u32 %v639, 2147483648
      %v862 = vxor.u32 %v644, 2147483648
      %v863 = vxor.u32 %v647, 2147483648
      %v864 = vxor.u32 %v652, 2147483648
      %v865 = vxor.u32 %v655, 2147483648
      %v866 = vxor.u32 %v660, 2147483648
      %v867 = vxor.u32 %v663, 2147483648
      %v868 = vxor.u32 %v668, 2147483648
      %v869 = vxor.u32 %v671, 2147483648
      %v870 = vxor.u32 %v676, 2147483648
      %v871 = vxor.u32 %v679, 2147483648
      %v872 = vxor.u32 %v684, 2147483648
      %v873 = vxor.u32 %v687, 2147483648
      %v874 = vxor.u32 %v692, 2147483648
      %v875 = vxor.u32 %v695, 2147483648
      %v876 = vxor.u32 %v700, 2147483648
      %v877 = vxor.u32 %v703, 2147483648
      %v878 = vxor.u32 %v708, 2147483648
      %v879 = vxor.u32 %v711, 2147483648
      %v880 = vxor.u32 %v716, 2147483648
      %v881 = vxor.u32 %v719, 2147483648
      %v882 = vxor.u32 %v724, 2147483648
      %v883 = vxor.u32 %v727, 2147483648
      %v884 = vxor.u32 %v732, 2147483648
      %v885 = vxor.u32 %v735, 2147483648
      %v886 = vxor.u32 %v740, 2147483648
      %v887 = vxor.u32 %v743, 2147483648
      %v888 = vxor.u32 %v748, 2147483648
      %v889 = vxor.u32 %v751, 2147483648
      %v890 = vxor.u32 %v756, 2147483648
      %v891 = vxor.u32 %v759, 2147483648
      %v892 = vxor.u32 %v764, 2147483648
      %v893 = vxor.u32 %v767, 2147483648
      %v894 = vxor.u32 %v772, 2147483648
      %v895 = vxor.u32 %v775, 2147483648
      %v896 = vxor.u32 %v780, 2147483648
      %v897 = vxor.u32 %v783, 2147483648
      %v898 = vxor.u32 %v788, 2147483648
      %v899 = vxor.u32 %v791, 2147483648
      %v900 = vxor.u32 %v796, 2147483648
      %v901 = vxor.u32 %v799, 2147483648
      %v902 = vxor.u32 %v804, 2147483648
      %v903 = vxor.u32 %v807, 2147483648
      %v904 = vxor.u32 %v812, 2147483648
      %v905 = vxor.u32 %v815, 2147483648
      %v906 = vxor.u32 %v820, 2147483648
      %v907 = vxor.u32 %v823, 2147483648
      %v908 = vxor.u32 %v828, 2147483648
      %v909 = vxor.u32 %v831, 2147483648
      %v910 = vxor.u32 %v836, 2147483648
      %v911 = vxor.u32 %v839, 2147483648
      %v912 = vxor.u32 %v844, 2147483648
      %v913 = vxor.u32 %v847, 2147483648
      %v914 = vmul.f32 %v850, 1.442695
      %v915 = vpow.pop %v914
      %v916 = vmul.f32 %v851, 1.442695
      %v917 = vpow.pop %v916
      %v918 = vmul.f32 %v852, 1.442695
      %v919 = vpow.pop %v918
      %v920 = vmul.f32 %v853, 1.442695
      %v921 = vpow.pop %v920
      %v922 = vmul.f32 %v854, 1.442695
      %v923 = vpow.pop %v922
      %v924 = vmul.f32 %v855, 1.442695
      %v925 = vpow.pop %v924
      %v926 = vmul.f32 %v856, 1.442695
      %v927 = vpow.pop %v926
      %v928 = vmul.f32 %v857, 1.442695
      %v929 = vpow.pop %v928
      %v930 = vmul.f32 %v858, 1.442695
      %v931 = vpow.pop %v930
      %v932 = vmul.f32 %v859, 1.442695
      %v933 = vpow.pop %v932
      %v934 = vmul.f32 %v860, 1.442695
      %v935 = vpow.pop %v934
      %v936 = vmul.f32 %v861, 1.442695
      %v937 = vpow.pop %v936
      %v938 = vmul.f32 %v862, 1.442695
      %v939 = vpow.pop %v938
      %v940 = vmul.f32 %v863, 1.442695
      %v941 = vpow.pop %v940
      %v942 = vmul.f32 %v864, 1.442695
      %v943 = vpow.pop %v942
      %v944 = vmul.f32 %v865, 1.442695
      %v945 = vpow.pop %v944
      %v946 = vmul.f32 %v866, 1.442695
      %v947 = vpow.pop %v946
      %v948 = vmul.f32 %v867, 1.442695
      %v949 = vpow.pop %v948
      %v950 = vmul.f32 %v868, 1.442695
      %v951 = vpow.pop %v950
      %v952 = vmul.f32 %v869, 1.442695
      %v953 = vpow.pop %v952
      %v954 = vmul.f32 %v870, 1.442695
      %v955 = vpow.pop %v954
      %v956 = vmul.f32 %v871, 1.442695
      %v957 = vpow.pop %v956
      %v958 = vmul.f32 %v872, 1.442695
      %v959 = vpow.pop %v958
      %v960 = vmul.f32 %v873, 1.442695
      %v961 = vpow.pop %v960
      %v962 = vmul.f32 %v874, 1.442695
      %v963 = vpow.pop %v962
      %v964 = vmul.f32 %v875, 1.442695
      %v965 = vpow.pop %v964
      %v966 = vmul.f32 %v876, 1.442695
      %v967 = vpow.pop %v966
      %v968 = vmul.f32 %v877, 1.442695
      %v969 = vpow.pop %v968
      %v970 = vmul.f32 %v878, 1.442695
      %v971 = vpow.pop %v970
      %v972 = vmul.f32 %v879, 1.442695
      %v973 = vpow.pop %v972
      %v974 = vmul.f32 %v880, 1.442695
      %v975 = vpow.pop %v974
      %v976 = vmul.f32 %v881, 1.442695
      %v977 = vpow.pop %v976
      %v978 = vmul.f32 %v882, 1.442695
      %v979 = vpow.pop %v978
      %v980 = vmul.f32 %v883, 1.442695
      %v981 = vpow.pop %v980
      %v982 = vmul.f32 %v884, 1.442695
      %v983 = vpow.pop %v982
      %v984 = vmul.f32 %v885, 1.442695
      %v985 = vpow.pop %v984
      %v986 = vmul.f32 %v886, 1.442695
      %v987 = vpow.pop %v986
      %v988 = vmul.f32 %v887, 1.442695
      %v989 = vpow.pop %v988
      %v990 = vmul.f32 %v888, 1.442695
      %v991 = vpow.pop %v990
      %v992 = vmul.f32 %v889, 1.442695
      %v993 = vpow.pop %v992
      %v994 = vmul.f32 %v890, 1.442695
      %v995 = vpow.pop %v994
      %v996 = vmul.f32 %v891, 1.442695
      %v997 = vpow.pop %v996
      %v998 = vmul.f32 %v892, 1.442695
      %v999 = vpow.pop %v998
      %v1000 = vmul.f32 %v893, 1.442695
      %v1001 = vpow.pop %v1000
      %v1002 = vmul.f32 %v894, 1.442695
      %v1003 = vpow.pop %v1002
      %v1004 = vmul.f32 %v895, 1.442695
      %v1005 = vpow.pop %v1004
      %v1006 = vmul.f32 %v896, 1.442695
      %v1007 = vpow.pop %v1006
      %v1008 = vmul.f32 %v897, 1.442695
      %v1009 = vpow.pop %v1008
      %v1010 = vmul.f32 %v898, 1.442695
      %v1011 = vpow.pop %v1010
      %v1012 = vmul.f32 %v899, 1.442695
      %v1013 = vpow.pop %v1012
      %v1014 = vmul.f32 %v900, 1.442695
      %v1015 = vpow.pop %v1014
      %v1016 = vmul.f32 %v901, 1.442695
      %v1017 = vpow.pop %v1016
      %v1018 = vmul.f32 %v902, 1.442695
      %v1019 = vpow.pop %v1018
      %v1020 = vmul.f32 %v903, 1.442695
      %v1021 = vpow.pop %v1020
      %v1022 = vmul.f32 %v904, 1.442695
      %v1023 = vpow.pop %v1022
      %v1024 = vmul.f32 %v905, 1.442695
      %v1025 = vpow.pop %v1024
      %v1026 = vmul.f32 %v906, 1.442695
      %v1027 = vpow.pop %v1026
      %v1028 = vmul.f32 %v907, 1.442695
      %v1029 = vpow.pop %v1028
      %v1030 = vmul.f32 %v908, 1.442695
      %v1031 = vpow.pop %v1030
      %v1032 = vmul.f32 %v909, 1.442695
      %v1033 = vpow.pop %v1032
      %v1034 = vmul.f32 %v910, 1.442695
      %v1035 = vpow.pop %v1034
      %v1036 = vmul.f32 %v911, 1.442695
      %v1037 = vpow.pop %v1036
      %v1038 = vmul.f32 %v912, 1.442695
      %v1039 = vpow.pop %v1038
      %v1040 = vmul.f32 %v913, 1.442695
      %v1041 = vpow.pop %v1040
      %v1042 = vadd.f32 %v915, 1.0
      %v1043 = vadd.f32 %v917, 1.0
      %v1044 = vadd.f32 %v919, 1.0
      %v1045 = vadd.f32 %v921, 1.0
      %v1046 = vadd.f32 %v923, 1.0
      %v1047 = vadd.f32 %v925, 1.0
      %v1048 = vadd.f32 %v927, 1.0
      %v1049 = vadd.f32 %v929, 1.0
      %v1050 = vadd.f32 %v931, 1.0
      %v1051 = vadd.f32 %v933, 1.0
      %v1052 = vadd.f32 %v935, 1.0
      %v1053 = vadd.f32 %v937, 1.0
      %v1054 = vadd.f32 %v939, 1.0
      %v1055 = vadd.f32 %v941, 1.0
      %v1056 = vadd.f32 %v943, 1.0
      %v1057 = vadd.f32 %v945, 1.0
      %v1058 = vadd.f32 %v947, 1.0
      %v1059 = vadd.f32 %v949, 1.0
      %v1060 = vadd.f32 %v951, 1.0
      %v1061 = vadd.f32 %v953, 1.0
      %v1062 = vadd.f32 %v955, 1.0
      %v1063 = vadd.f32 %v957, 1.0
      %v1064 = vadd.f32 %v959, 1.0
      %v1065 = vadd.f32 %v961, 1.0
      %v1066 = vadd.f32 %v963, 1.0
      %v1067 = vadd.f32 %v965, 1.0
      %v1068 = vadd.f32 %v967, 1.0
      %v1069 = vadd.f32 %v969, 1.0
      %v1070 = vadd.f32 %v971, 1.0
      %v1071 = vadd.f32 %v973, 1.0
      %v1072 = vadd.f32 %v975, 1.0
      %v1073 = vadd.f32 %v977, 1.0
      %v1074 = vadd.f32 %v979, 1.0
      %v1075 = vadd.f32 %v981, 1.0
      %v1076 = vadd.f32 %v983, 1.0
      %v1077 = vadd.f32 %v985, 1.0
      %v1078 = vadd.f32 %v987, 1.0
      %v1079 = vadd.f32 %v989, 1.0
      %v1080 = vadd.f32 %v991, 1.0
      %v1081 = vadd.f32 %v993, 1.0
      %v1082 = vadd.f32 %v995, 1.0
      %v1083 = vadd.f32 %v997, 1.0
      %v1084 = vadd.f32 %v999, 1.0
      %v1085 = vadd.f32 %v1001, 1.0
      %v1086 = vadd.f32 %v1003, 1.0
      %v1087 = vadd.f32 %v1005, 1.0
      %v1088 = vadd.f32 %v1007, 1.0
      %v1089 = vadd.f32 %v1009, 1.0
      %v1090 = vadd.f32 %v1011, 1.0
      %v1091 = vadd.f32 %v1013, 1.0
      %v1092 = vadd.f32 %v1015, 1.0
      %v1093 = vadd.f32 %v1017, 1.0
      %v1094 = vadd.f32 %v1019, 1.0
      %v1095 = vadd.f32 %v1021, 1.0
      %v1096 = vadd.f32 %v1023, 1.0
      %v1097 = vadd.f32 %v1025, 1.0
      %v1098 = vadd.f32 %v1027, 1.0
      %v1099 = vadd.f32 %v1029, 1.0
      %v1100 = vadd.f32 %v1031, 1.0
      %v1101 = vadd.f32 %v1033, 1.0
      %v1102 = vadd.f32 %v1035, 1.0
      %v1103 = vadd.f32 %v1037, 1.0
      %v1104 = vadd.f32 %v1039, 1.0
      %v1105 = vadd.f32 %v1041, 1.0
      %v1106 = vrcp.pop %v1042
      %v1107 = vmul.f32 1.0, %v1106
      %v1108 = vrcp.pop %v1043
      %v1109 = vmul.f32 1.0, %v1108
      %v1110 = vrcp.pop %v1044
      %v1111 = vmul.f32 1.0, %v1110
      %v1112 = vrcp.pop %v1045
      %v1113 = vmul.f32 1.0, %v1112
      %v1114 = vrcp.pop %v1046
      %v1115 = vmul.f32 1.0, %v1114
      %v1116 = vrcp.pop %v1047
      %v1117 = vmul.f32 1.0, %v1116
      %v1118 = vrcp.pop %v1048
      %v1119 = vmul.f32 1.0, %v1118
      %v1120 = vrcp.pop %v1049
      %v1121 = vmul.f32 1.0, %v1120
      %v1122 = vrcp.pop %v1050
      %v1123 = vmul.f32 1.0, %v1122
      %v1124 = vrcp.pop %v1051
      %v1125 = vmul.f32 1.0, %v1124
      %v1126 = vrcp.pop %v1052
      %v1127 = vmul.f32 1.0, %v1126
      %v1128 = vrcp.pop %v1053
      %v1129 = vmul.f32 1.0, %v1128
      %v1130 = vrcp.pop %v1054
      %v1131 = vmul.f32 1.0, %v1130
      %v1132 = vrcp.pop %v1055
      %v1133 = vmul.f32 1.0, %v1132
      %v1134 = vrcp.pop %v1056
      %v1135 = vmul.f32 1.0, %v1134
      %v1136 = vrcp.pop %v1057
      %v1137 = vmul.f32 1.0, %v1136
      %v1138 = vrcp.pop %v1058
      %v1139 = vmul.f32 1.0, %v1138
      %v1140 = vrcp.pop %v1059
      %v1141 = vmul.f32 1.0, %v1140
      %v1142 = vrcp.pop %v1060
      %v1143 = vmul.f32 1.0, %v1142
      %v1144 = vrcp.pop %v1061
      %v1145 = vmul.f32 1.0, %v1144
      %v1146 = vrcp.pop %v1062
      %v1147 = vmul.f32 1.0, %v1146
      %v1148 = vrcp.pop %v1063
      %v1149 = vmul.f32 1.0, %v1148
      %v1150 = vrcp.pop %v1064
      %v1151 = vmul.f32 1.0, %v1150
      %v1152 = vrcp.pop %v1065
      %v1153 = vmul.f32 1.0, %v1152
      %v1154 = vrcp.pop %v1066
      %v1155 = vmul.f32 1.0, %v1154
      %v1156 = vrcp.pop %v1067
      %v1157 = vmul.f32 1.0, %v1156
      %v1158 = vrcp.pop %v1068
      %v1159 = vmul.f32 1.0, %v1158
      %v1160 = vrcp.pop %v1069
      %v1161 = vmul.f32 1.0, %v1160
      %v1162 = vrcp.pop %v1070
      %v1163 = vmul.f32 1.0, %v1162
      %v1164 = vrcp.pop %v1071
      %v1165 = vmul.f32 1.0, %v1164
      %v1166 = vrcp.pop %v1072
      %v1167 = vmul.f32 1.0, %v1166
      %v1168 = vrcp.pop %v1073
      %v1169 = vmul.f32 1.0, %v1168
      %v1170 = vrcp.pop %v1074
      %v1171 = vmul.f32 1.0, %v1170
      %v1172 = vrcp.pop %v1075
      %v1173 = vmul.f32 1.0, %v1172
      %v1174 = vrcp.pop %v1076
      %v1175 = vmul.f32 1.0, %v1174
      %v1176 = vrcp.pop %v1077
      %v1177 = vmul.f32 1.0, %v1176
      %v1178 = vrcp.pop %v1078
      %v1179 = vmul.f32 1.0, %v1178
      %v1180 = vrcp.pop %v1079
      %v1181 = vmul.f32 1.0, %v1180
      %v1182 = vrcp.pop %v1080
      %v1183 = vmul.f32 1.0, %v1182
      %v1184 = vrcp.pop %v1081
      %v1185 = vmul.f32 1.0, %v1184
      %v1186 = vrcp.pop %v1082
      %v1187 = vmul.f32 1.0, %v1186
      %v1188 = vrcp.pop %v1083
      %v1189 = vmul.f32 1.0, %v1188
      %v1190 = vrcp.pop %v1084
      %v1191 = vmul.f32 1.0, %v1190
      %v1192 = vrcp.pop %v1085
      %v1193 = vmul.f32 1.0, %v1192
      %v1194 = vrcp.pop %v1086
      %v1195 = vmul.f32 1.0, %v1194
      %v1196 = vrcp.pop %v1087
      %v1197 = vmul.f32 1.0, %v1196
      %v1198 = vrcp.pop %v1088
      %v1199 = vmul.f32 1.0, %v1198
      %v1200 = vrcp.pop %v1089
      %v1201 = vmul.f32 1.0, %v1200
      %v1202 = vrcp.pop %v1090
      %v1203 = vmul.f32 1.0, %v1202
      %v1204 = vrcp.pop %v1091
      %v1205 = vmul.f32 1.0, %v1204
      %v1206 = vrcp.pop %v1092
      %v1207 = vmul.f32 1.0, %v1206
      %v1208 = vrcp.pop %v1093
      %v1209 = vmul.f32 1.0, %v1208
      %v1210 = vrcp.pop %v1094
      %v1211 = vmul.f32 1.0, %v1210
      %v1212 = vrcp.pop %v1095
      %v1213 = vmul.f32 1.0, %v1212
      %v1214 = vrcp.pop %v1096
      %v1215 = vmul.f32 1.0, %v1214
      %v1216 = vrcp.pop %v1097
      %v1217 = vmul.f32 1.0, %v1216
      %v1218 = vrcp.pop %v1098
      %v1219 = vmul.f32 1.0, %v1218
      %v1220 = vrcp.pop %v1099
      %v1221 = vmul.f32 1.0, %v1220
      %v1222 = vrcp.pop %v1100
      %v1223 = vmul.f32 1.0, %v1222
      %v1224 = vrcp.pop %v1101
      %v1225 = vmul.f32 1.0, %v1224
      %v1226 = vrcp.pop %v1102
      %v1227 = vmul.f32 1.0, %v1226
      %v1228 = vrcp.pop %v1103
      %v1229 = vmul.f32 1.0, %v1228
      %v1230 = vrcp.pop %v1104
      %v1231 = vmul.f32 1.0, %v1230
      %v1232 = vrcp.pop %v1105
      %v1233 = vmul.f32 1.0, %v1232
      %v1234 = vmul.f32 %v596, %v1107
      %v1235 = vmul.f32 %v599, %v1109
      %v1236 = vmul.f32 %v604, %v1111
      %v1237 = vmul.f32 %v607, %v1113
      %v1238 = vmul.f32 %v612, %v1115
      %v1239 = vmul.f32 %v615, %v1117
      %v1240 = vmul.f32 %v620, %v1119
      %v1241 = vmul.f32 %v623, %v1121
      %v1242 = vmul.f32 %v628, %v1123
      %v1243 = vmul.f32 %v631, %v1125
      %v1244 = vmul.f32 %v636, %v1127
      %v1245 = vmul.f32 %v639, %v1129
      %v1246 = vmul.f32 %v644, %v1131
      %v1247 = vmul.f32 %v647, %v1133
      %v1248 = vmul.f32 %v652, %v1135
      %v1249 = vmul.f32 %v655, %v1137
      %v1250 = vmul.f32 %v660, %v1139
      %v1251 = vmul.f32 %v663, %v1141
      %v1252 = vmul.f32 %v668, %v1143
      %v1253 = vmul.f32 %v671, %v1145
      %v1254 = vmul.f32 %v676, %v1147
      %v1255 = vmul.f32 %v679, %v1149
      %v1256 = vmul.f32 %v684, %v1151
      %v1257 = vmul.f32 %v687, %v1153
      %v1258 = vmul.f32 %v692, %v1155
      %v1259 = vmul.f32 %v695, %v1157
      %v1260 = vmul.f32 %v700, %v1159
      %v1261 = vmul.f32 %v703, %v1161
      %v1262 = vmul.f32 %v708, %v1163
      %v1263 = vmul.f32 %v711, %v1165
      %v1264 = vmul.f32 %v716, %v1167
      %v1265 = vmul.f32 %v719, %v1169
      %v1266 = vmul.f32 %v724, %v1171
      %v1267 = vmul.f32 %v727, %v1173
      %v1268 = vmul.f32 %v732, %v1175
      %v1269 = vmul.f32 %v735, %v1177
      %v1270 = vmul.f32 %v740, %v1179
      %v1271 = vmul.f32 %v743, %v1181
      %v1272 = vmul.f32 %v748, %v1183
      %v1273 = vmul.f32 %v751, %v1185
      %v1274 = vmul.f32 %v756, %v1187
      %v1275 = vmul.f32 %v759, %v1189
      %v1276 = vmul.f32 %v764, %v1191
      %v1277 = vmul.f32 %v767, %v1193
      %v1278 = vmul.f32 %v772, %v1195
      %v1279 = vmul.f32 %v775, %v1197
      %v1280 = vmul.f32 %v780, %v1199
      %v1281 = vmul.f32 %v783, %v1201
      %v1282 = vmul.f32 %v788, %v1203
      %v1283 = vmul.f32 %v791, %v1205
      %v1284 = vmul.f32 %v796, %v1207
      %v1285 = vmul.f32 %v799, %v1209
      %v1286 = vmul.f32 %v804, %v1211
      %v1287 = vmul.f32 %v807, %v1213
      %v1288 = vmul.f32 %v812, %v1215
      %v1289 = vmul.f32 %v815, %v1217
      %v1290 = vmul.f32 %v820, %v1219
      %v1291 = vmul.f32 %v823, %v1221
      %v1292 = vmul.f32 %v828, %v1223
      %v1293 = vmul.f32 %v831, %v1225
      %v1294 = vmul.f32 %v836, %v1227
      %v1295 = vmul.f32 %v839, %v1229
      %v1296 = vmul.f32 %v844, %v1231
      %v1297 = vmul.f32 %v847, %v1233
      %v1298 = vpack.c.bf16 %v1235, %v1234
      %v1299 = vpack.c.bf16 %v1237, %v1236
      %v1300 = vpack.c.bf16 %v1239, %v1238
      %v1301 = vpack.c.bf16 %v1241, %v1240
      %v1302 = vpack.c.bf16 %v1243, %v1242
      %v1303 = vpack.c.bf16 %v1245, %v1244
      %v1304 = vpack.c.bf16 %v1247, %v1246
      %v1305 = vpack.c.bf16 %v1249, %v1248
      %v1306 = vpack.c.bf16 %v1251, %v1250
      %v1307 = vpack.c.bf16 %v1253, %v1252
      %v1308 = vpack.c.bf16 %v1255, %v1254
      %v1309 = vpack.c.bf16 %v1257, %v1256
      %v1310 = vpack.c.bf16 %v1259, %v1258
      %v1311 = vpack.c.bf16 %v1261, %v1260
      %v1312 = vpack.c.bf16 %v1263, %v1262
      %v1313 = vpack.c.bf16 %v1265, %v1264
      %v1314 = vpack.c.bf16 %v1267, %v1266
      %v1315 = vpack.c.bf16 %v1269, %v1268
      %v1316 = vpack.c.bf16 %v1271, %v1270
      %v1317 = vpack.c.bf16 %v1273, %v1272
      %v1318 = vpack.c.bf16 %v1275, %v1274
      %v1319 = vpack.c.bf16 %v1277, %v1276
      %v1320 = vpack.c.bf16 %v1279, %v1278
      %v1321 = vpack.c.bf16 %v1281, %v1280
      %v1322 = vpack.c.bf16 %v1283, %v1282
      %v1323 = vpack.c.bf16 %v1285, %v1284
      %v1324 = vpack.c.bf16 %v1287, %v1286
      %v1325 = vpack.c.bf16 %v1289, %v1288
      %v1326 = vpack.c.bf16 %v1291, %v1290
      %v1327 = vpack.c.bf16 %v1293, %v1292
      %v1328 = vpack.c.bf16 %v1295, %v1294
      %v1329 = vpack.c.bf16 %v1297, %v1296
      %v1362 = vunpack.c.l.b16 %v1298
      %v1363 = vunpack.c.h.b16 %v1298
      %v1364 = vunpack.c.l.b16 %v1299
      %v1365 = vunpack.c.h.b16 %v1299
      %v1366 = vunpack.c.l.b16 %v1300
      %v1367 = vunpack.c.h.b16 %v1300
      %v1368 = vunpack.c.l.b16 %v1301
      %v1369 = vunpack.c.h.b16 %v1301
      %v1370 = vunpack.c.l.b16 %v1302
      %v1371 = vunpack.c.h.b16 %v1302
      %v1372 = vunpack.c.l.b16 %v1303
      %v1373 = vunpack.c.h.b16 %v1303
      %v1374 = vunpack.c.l.b16 %v1304
      %v1375 = vunpack.c.h.b16 %v1304
      %v1376 = vunpack.c.l.b16 %v1305
      %v1377 = vunpack.c.h.b16 %v1305
      %v1378 = vunpack.c.l.b16 %v1306
      %v1379 = vunpack.c.h.b16 %v1306
      %v1380 = vunpack.c.l.b16 %v1307
      %v1381 = vunpack.c.h.b16 %v1307
      %v1382 = vunpack.c.l.b16 %v1308
      %v1383 = vunpack.c.h.b16 %v1308
      %v1384 = vunpack.c.l.b16 %v1309
      %v1385 = vunpack.c.h.b16 %v1309
      %v1386 = vunpack.c.l.b16 %v1310
      %v1387 = vunpack.c.h.b16 %v1310
      %v1388 = vunpack.c.l.b16 %v1311
      %v1389 = vunpack.c.h.b16 %v1311
      %v1390 = vunpack.c.l.b16 %v1312
      %v1391 = vunpack.c.h.b16 %v1312
      %v1392 = vunpack.c.l.b16 %v1313
      %v1393 = vunpack.c.h.b16 %v1313
      %v1394 = vunpack.c.l.b16 %v1314
      %v1395 = vunpack.c.h.b16 %v1314
      %v1396 = vunpack.c.l.b16 %v1315
      %v1397 = vunpack.c.h.b16 %v1315
      %v1398 = vunpack.c.l.b16 %v1316
      %v1399 = vunpack.c.h.b16 %v1316
      %v1400 = vunpack.c.l.b16 %v1317
      %v1401 = vunpack.c.h.b16 %v1317
      %v1402 = vunpack.c.l.b16 %v1318
      %v1403 = vunpack.c.h.b16 %v1318
      %v1404 = vunpack.c.l.b16 %v1319
      %v1405 = vunpack.c.h.b16 %v1319
      %v1406 = vunpack.c.l.b16 %v1320
      %v1407 = vunpack.c.h.b16 %v1320
      %v1408 = vunpack.c.l.b16 %v1321
      %v1409 = vunpack.c.h.b16 %v1321
      %v1410 = vunpack.c.l.b16 %v1322
      %v1411 = vunpack.c.h.b16 %v1322
      %v1412 = vunpack.c.l.b16 %v1323
      %v1413 = vunpack.c.h.b16 %v1323
      %v1414 = vunpack.c.l.b16 %v1324
      %v1415 = vunpack.c.h.b16 %v1324
      %v1416 = vunpack.c.l.b16 %v1325
      %v1417 = vunpack.c.h.b16 %v1325
      %v1418 = vunpack.c.l.b16 %v1326
      %v1419 = vunpack.c.h.b16 %v1326
      %v1420 = vunpack.c.l.b16 %v1327
      %v1421 = vunpack.c.h.b16 %v1327
      %v1422 = vunpack.c.l.b16 %v1328
      %v1423 = vunpack.c.h.b16 %v1328
      %v1424 = vunpack.c.l.b16 %v1329
      %v1425 = vunpack.c.h.b16 %v1329
      %v1426 = vpack.c.b16 %v1362, %v1362
      %v1427 = vpack.c.b16 %v1363, %v1363
      %v1428 = vpack.c.b16 %v1364, %v1364
      %v1429 = vpack.c.b16 %v1365, %v1365
      %v1430 = vpack.c.b16 %v1366, %v1366
      %v1431 = vpack.c.b16 %v1367, %v1367
      %v1432 = vpack.c.b16 %v1368, %v1368
      %v1433 = vpack.c.b16 %v1369, %v1369
      %v1434 = vpack.c.b16 %v1370, %v1370
      %v1435 = vpack.c.b16 %v1371, %v1371
      %v1436 = vpack.c.b16 %v1372, %v1372
      %v1437 = vpack.c.b16 %v1373, %v1373
      %v1438 = vpack.c.b16 %v1374, %v1374
      %v1439 = vpack.c.b16 %v1375, %v1375
      %v1440 = vpack.c.b16 %v1376, %v1376
      %v1441 = vpack.c.b16 %v1377, %v1377
      %v1442 = vpack.c.b16 %v1378, %v1378
      %v1443 = vpack.c.b16 %v1379, %v1379
      %v1444 = vpack.c.b16 %v1380, %v1380
      %v1445 = vpack.c.b16 %v1381, %v1381
      %v1446 = vpack.c.b16 %v1382, %v1382
      %v1447 = vpack.c.b16 %v1383, %v1383
      %v1448 = vpack.c.b16 %v1384, %v1384
      %v1449 = vpack.c.b16 %v1385, %v1385
      %v1450 = vpack.c.b16 %v1386, %v1386
      %v1451 = vpack.c.b16 %v1387, %v1387
      %v1452 = vpack.c.b16 %v1388, %v1388
      %v1453 = vpack.c.b16 %v1389, %v1389
      %v1454 = vpack.c.b16 %v1390, %v1390
      %v1455 = vpack.c.b16 %v1391, %v1391
      %v1456 = vpack.c.b16 %v1392, %v1392
      %v1457 = vpack.c.b16 %v1393, %v1393
      %v1458 = vpack.c.b16 %v1394, %v1394
      %v1459 = vpack.c.b16 %v1395, %v1395
      %v1460 = vpack.c.b16 %v1396, %v1396
      %v1461 = vpack.c.b16 %v1397, %v1397
      %v1462 = vpack.c.b16 %v1398, %v1398
      %v1463 = vpack.c.b16 %v1399, %v1399
      %v1464 = vpack.c.b16 %v1400, %v1400
      %v1465 = vpack.c.b16 %v1401, %v1401
      %v1466 = vpack.c.b16 %v1402, %v1402
      %v1467 = vpack.c.b16 %v1403, %v1403
      %v1468 = vpack.c.b16 %v1404, %v1404
      %v1469 = vpack.c.b16 %v1405, %v1405
      %v1470 = vpack.c.b16 %v1406, %v1406
      %v1471 = vpack.c.b16 %v1407, %v1407
      %v1472 = vpack.c.b16 %v1408, %v1408
      %v1473 = vpack.c.b16 %v1409, %v1409
      %v1474 = vpack.c.b16 %v1410, %v1410
      %v1475 = vpack.c.b16 %v1411, %v1411
      %v1476 = vpack.c.b16 %v1412, %v1412
      %v1477 = vpack.c.b16 %v1413, %v1413
      %v1478 = vpack.c.b16 %v1414, %v1414
      %v1479 = vpack.c.b16 %v1415, %v1415
      %v1480 = vpack.c.b16 %v1416, %v1416
      %v1481 = vpack.c.b16 %v1417, %v1417
      %v1482 = vpack.c.b16 %v1418, %v1418
      %v1483 = vpack.c.b16 %v1419, %v1419
      %v1484 = vpack.c.b16 %v1420, %v1420
      %v1485 = vpack.c.b16 %v1421, %v1421
      %v1486 = vpack.c.b16 %v1422, %v1422
      %v1487 = vpack.c.b16 %v1423, %v1423
      %v1488 = vpack.c.b16 %v1424, %v1424
      %v1489 = vpack.c.b16 %v1425, %v1425
      %vm1554 = vcmask 125952
      %1555 = vst.msk [vmem:[%s208] sm:$0xf] %vm1554, %v1426
      %1556 = vst.msk [vmem:[%s208 + $0x4] sm:$0xf] %vm1554, %v1427
      %1557 = vst.msk [vmem:[%s208 + $0x8] sm:$0xf] %vm1554, %v1428
      %1558 = vst.msk [vmem:[%s208 + $0xc] sm:$0xf] %vm1554, %v1429
      %1559 = vst.msk [vmem:[%s208 + $0x10] sm:$0xf] %vm1554, %v1430
      %1560 = vst.msk [vmem:[%s208 + $0x14] sm:$0xf] %vm1554, %v1431
      %1561 = vst.msk [vmem:[%s208 + $0x18] sm:$0xf] %vm1554, %v1432
      %1562 = vst.msk [vmem:[%s208 + $0x1c] sm:$0xf] %vm1554, %v1433
      %1563 = vst.msk [vmem:[%s208 + $0x20] sm:$0xf] %vm1554, %v1434
      %1564 = vst.msk [vmem:[%s208 + $0x24] sm:$0xf] %vm1554, %v1435
      %1565 = vst.msk [vmem:[%s208 + $0x28] sm:$0xf] %vm1554, %v1436
      %1566 = vst.msk [vmem:[%s208 + $0x2c] sm:$0xf] %vm1554, %v1437
      %1567 = vst.msk [vmem:[%s208 + $0x30] sm:$0xf] %vm1554, %v1438
      %1568 = vst.msk [vmem:[%s208 + $0x34] sm:$0xf] %vm1554, %v1439
      %1569 = vst.msk [vmem:[%s208 + $0x38] sm:$0xf] %vm1554, %v1440
      %1570 = vst.msk [vmem:[%s208 + $0x3c] sm:$0xf] %vm1554, %v1441
      %1571 = vst.msk [vmem:[%s208 + $0x40] sm:$0xf] %vm1554, %v1442
      %1572 = vst.msk [vmem:[%s208 + $0x44] sm:$0xf] %vm1554, %v1443
      %1573 = vst.msk [vmem:[%s208 + $0x48] sm:$0xf] %vm1554, %v1444
      %1574 = vst.msk [vmem:[%s208 + $0x4c] sm:$0xf] %vm1554, %v1445
      %1575 = vst.msk [vmem:[%s208 + $0x50] sm:$0xf] %vm1554, %v1446
      %1576 = vst.msk [vmem:[%s208 + $0x54] sm:$0xf] %vm1554, %v1447
      %1577 = vst.msk [vmem:[%s208 + $0x58] sm:$0xf] %vm1554, %v1448
      %1578 = vst.msk [vmem:[%s208 + $0x5c] sm:$0xf] %vm1554, %v1449
      %1579 = vst.msk [vmem:[%s208 + $0x60] sm:$0xf] %vm1554, %v1450
      %1580 = vst.msk [vmem:[%s208 + $0x64] sm:$0xf] %vm1554, %v1451
      %1581 = vst.msk [vmem:[%s208 + $0x68] sm:$0xf] %vm1554, %v1452
      %1582 = vst.msk [vmem:[%s208 + $0x6c] sm:$0xf] %vm1554, %v1453
      %1583 = vst.msk [vmem:[%s208 + $0x70] sm:$0xf] %vm1554, %v1454
      %1584 = vst.msk [vmem:[%s208 + $0x74] sm:$0xf] %vm1554, %v1455
      %1585 = vst.msk [vmem:[%s208 + $0x78] sm:$0xf] %vm1554, %v1456
      %1586 = vst.msk [vmem:[%s208 + $0x7c] sm:$0xf] %vm1554, %v1457
      %1587 = vst.msk [vmem:[%s208 + $0x80] sm:$0xf] %vm1554, %v1458
      %1588 = vst.msk [vmem:[%s208 + $0x84] sm:$0xf] %vm1554, %v1459
      %1589 = vst.msk [vmem:[%s208 + $0x88] sm:$0xf] %vm1554, %v1460
      %1590 = vst.msk [vmem:[%s208 + $0x8c] sm:$0xf] %vm1554, %v1461
      %1591 = vst.msk [vmem:[%s208 + $0x90] sm:$0xf] %vm1554, %v1462
      %1592 = vst.msk [vmem:[%s208 + $0x94] sm:$0xf] %vm1554, %v1463
      %1593 = vst.msk [vmem:[%s208 + $0x98] sm:$0xf] %vm1554, %v1464
      %1594 = vst.msk [vmem:[%s208 + $0x9c] sm:$0xf] %vm1554, %v1465
      %1595 = vst.msk [vmem:[%s208 + $0xa0] sm:$0xf] %vm1554, %v1466
      %1596 = vst.msk [vmem:[%s208 + $0xa4] sm:$0xf] %vm1554, %v1467
      %1597 = vst.msk [vmem:[%s208 + $0xa8] sm:$0xf] %vm1554, %v1468
      %1598 = vst.msk [vmem:[%s208 + $0xac] sm:$0xf] %vm1554, %v1469
      %1599 = vst.msk [vmem:[%s208 + $0xb0] sm:$0xf] %vm1554, %v1470
      %1600 = vst.msk [vmem:[%s208 + $0xb4] sm:$0xf] %vm1554, %v1471
      %1601 = vst.msk [vmem:[%s208 + $0xb8] sm:$0xf] %vm1554, %v1472
      %1602 = vst.msk [vmem:[%s208 + $0xbc] sm:$0xf] %vm1554, %v1473
      %1603 = vst.msk [vmem:[%s208 + $0xc0] sm:$0xf] %vm1554, %v1474
      %1604 = vst.msk [vmem:[%s208 + $0xc4] sm:$0xf] %vm1554, %v1475
      %1605 = vst.msk [vmem:[%s208 + $0xc8] sm:$0xf] %vm1554, %v1476
      %1606 = vst.msk [vmem:[%s208 + $0xcc] sm:$0xf] %vm1554, %v1477
      %1607 = vst.msk [vmem:[%s208 + $0xd0] sm:$0xf] %vm1554, %v1478
      %1608 = vst.msk [vmem:[%s208 + $0xd4] sm:$0xf] %vm1554, %v1479
      %1609 = vst.msk [vmem:[%s208 + $0xd8] sm:$0xf] %vm1554, %v1480
      %1610 = vst.msk [vmem:[%s208 + $0xdc] sm:$0xf] %vm1554, %v1481
      %1611 = vst.msk [vmem:[%s208 + $0xe0] sm:$0xf] %vm1554, %v1482
      %1612 = vst.msk [vmem:[%s208 + $0xe4] sm:$0xf] %vm1554, %v1483
      %1613 = vst.msk [vmem:[%s208 + $0xe8] sm:$0xf] %vm1554, %v1484
      %1614 = vst.msk [vmem:[%s208 + $0xec] sm:$0xf] %vm1554, %v1485
      %1615 = vst.msk [vmem:[%s208 + $0xf0] sm:$0xf] %vm1554, %v1486
      %1616 = vst.msk [vmem:[%s208 + $0xf4] sm:$0xf] %vm1554, %v1487
      %1617 = vst.msk [vmem:[%s208 + $0xf8] sm:$0xf] %vm1554, %v1488
      %1618 = vst.msk [vmem:[%s208 + $0xfc] sm:$0xf] %vm1554, %v1489
      %s1619 = smul.u32 64, %s19
      %p1620 = scmp.lt.s32.totalorder %s18, 1
      %s1621 = scalar_select %p1620, %s18, 1
      %p1622 = scmp.lt.s32.totalorder %s1619, 127
      %s1623 = scalar_select %p1622, %s1619, 127
      %s1624 = smul.addr %s1621, 128
      %s1625 = sadd.s32 %s1623, %s1624
      %s1626 = smul.addr %s1625, 4
      %s1627 = scalar_lea.vmem %s3, %s1626
      // Predicated region
      $region33: #{_lambda_.8} parent=31 // pred_check
        %p1628 = pneg %p116
      $region34: #{_lambda_.8} parent=31 // pred_check_branch
        %1630 = sbr.rel (%p1628) target = $region36
      $region35: #{_lambda_.8} parent=31 // pred_region
        %s1631 = smul.u32 64, %s19
      $region36: #{_lambda_.8} parent=31 // pred_fallthru
        _
    $region32: #{_lambda_.8} parent=5 // pred_fallthru
      _
    %p1632 = scmp.le.s32.totalorder 2, %s9
    // Predicated region
    $region37: #{_lambda_.8} parent=5 // pred_check
      %p1633 = pneg %p1632
    $region38: #{_lambda_.8} parent=5 // pred_check_branch
      %1635 = sbr.rel (%p1633) target = $region40
    $region39: #{_lambda_.8} parent=5 // pred_region
      %s1636 = ssub.s32 %s9, 2
      // Predicated region
      $region41: #{_lambda_.8} parent=39 // pred_check
        %p1637 = pneg %p122
      $region42: #{_lambda_.8} parent=39 // pred_check_branch
        %1639 = sbr.rel (%p1637) target = $region44
      $region43: #{_lambda_.8} parent=39 // pred_region
        %s1640 = smul.u32 64, %s21
        %p1641 = scmp.lt.s32.totalorder %s20, 1
        %s1642 = scalar_select %p1641, %s20, 1
        %p1643 = scmp.lt.s32.totalorder %s1640, 127
        %s1644 = scalar_select %p1643, %s1640, 127
        %s1645 = smul.addr %s1642, 128
        %s1646 = sadd.s32 %s1644, %s1645
        %s1647 = smul.addr %s1646, 4
        %s1648 = scalar_lea.vmem %s3, %s1647
      $region44: #{_lambda_.8} parent=39 // pred_fallthru
        _
    $region40: #{_lambda_.8} parent=5 // pred_fallthru
      _
  $region6: #{_lambda_.8} parent=0 // loop_footer
    %s13 = sadd.s32 1, %s9
  $region7: #{_lambda_.8} parent=0 // loop_footer_branch
    %8 = sbr.rel target = $region3
  $region8: #{_lambda_.8} parent=0 // loop_exit
    _

// kernel: _lambda_.9
$region0: #{_lambda_.9}
  #allocation0 [shape = 'u32[]', space=smem, size = 0x4, offset = 0x4, fixed_abs, tag = 'smem constant byte address 0x4 - core index']
  #allocation1 [shape = 'u32[144,128]{1,0:T(1,128)}', space=vmem, size = 0x12000, scoped, tag = 'internal scratch']
  %s0 = inlined_call_operand.vmem [shape: bf16[2,1024,144], index: 0, kind: input, shape index: {}]
  %s1 = inlined_call_operand.vmem [shape: bf16[144,16], index: 1, kind: input, shape index: {}]
  %s2 = inlined_call_operand.vmem [shape: f32[1,16], index: 2, kind: input, shape index: {}]
  %s3 = inlined_call_operand.vmem [shape: bf16[2,1024,16], index: 3, kind: output, shape index: {}]
  %s4 = sld [smem:[#allocation0]]
  $region45: #{_lambda_.9} parent=0
    _
  %s6 = ssub.s32 1, %s4
  %s7 = scalar_select 0, %s6, %s4
  loop: start=0, step=1, limit=6
  $region2: #{_lambda_.9} parent=0 // loop_pre_header
    _
  $region3: #{_lambda_.9} parent=0 // loop_header
    %s9 = sphi 0, %s13
    %p10 = scmp.ge.s32.totalorder %s9, 6
    %s16 = sphi 0, %s28
    %s17 = sphi 0, %s24
    %s18 = sphi 0, %s16
    %s19 = sphi 0, %s17
    %s20 = sphi 0, %s18
    %s21 = sphi 0, %s19
    %s33 = sphi 0, %s35
    %s36 = sphi 0, %s33
    %s37 = sphi 0, %s36
    %s53 = sphi 0, %s37
    %s57 = sphi 0, %s57
    %s59 = sphi 0, %s57
    %s60 = sphi 0, %s59
    %s74 = sphi 0, %s60
    %s78 = sphi 0, %s78
    %s80 = sphi 0, %s78
    %s81 = sphi 0, %s80
    %s95 = sphi 0, %s81
    %s103 = sphi 0, %s105
    %s106 = sphi 0, %s103
    %s107 = sphi 0, %s106
    %s123 = sphi 0, %s107
  $region4: #{_lambda_.9} parent=0 // loop_header_branch
    %12 = sbr.rel (%p10) target = $region8
  $region5: #{_lambda_.9} parent=0 // loop_body
    %s14 = ssub.s32 %s9, 1
    %s15 = ssub.s32 %s9, 2
    %s22 = sadd.s32 1, %s17
    %p23 = scmp.ge.s32.totalorder %s22, 2
    %s24 = scalar_select %p23, 0, %s22
    %s25 = sadd.s32 1, %s16
    %s26 = scalar_select %p23, %s25, %s16
    %p27 = scmp.ge.s32.totalorder %s26, 2
    %s28 = scalar_select %p27, 0, %s26
    %s29 = ssub.s32 %s16, %s28
    %s30 = ssub.s32 %s17, %s24
    %s31 = sor.u32 %s29, %s30
    %p32 = scmp.eq.s32.totalorder %s31, 0
    %s34 = sadd.s32 %s33, 1
    %s35 = scalar_select %p32, %s33, %s34
    %p38 = pneg %p32
    %p39 = scmp.eq.s32.totalorder %s9, 3
    %p40 = por %p38, %p39
    %p41 = scmp.ne.s32.totalorder %s33, %s36
    %p42 = scmp.eq.s32.totalorder %s9, 0
    %p43 = por %p41, %p42
    %p44 = scmp.ne.s32.totalorder %s33, %s36
    %p45 = scmp.eq.s32.totalorder %s14, 3
    %p46 = por %p44, %p45
    %p47 = scmp.ne.s32.totalorder %s36, %s37
    %p48 = scmp.eq.s32.totalorder %s14, 0
    %p49 = por %p47, %p48
    %p50 = scmp.ne.s32.totalorder %s36, %s37
    %p51 = scmp.eq.s32.totalorder %s15, 3
    %p52 = por %p50, %p51
    %p54 = scmp.ne.s32.totalorder %s37, %s53
    %p55 = scmp.eq.s32.totalorder %s15, 0
    %p56 = por %p54, %p55
    %s58 = sadd.s32 %s57, 1
    %p61 = scmp.eq.s32.totalorder %s9, 3
    %p62 = scmp.ne.s32.totalorder %s57, %s59
    %p63 = scmp.eq.s32.totalorder %s9, 0
    %p64 = por %p62, %p63
    %p65 = scmp.ne.s32.totalorder %s57, %s59
    %p66 = scmp.eq.s32.totalorder %s14, 3
    %p67 = por %p65, %p66
    %p68 = scmp.ne.s32.totalorder %s59, %s60
    %p69 = scmp.eq.s32.totalorder %s14, 0
    %p70 = por %p68, %p69
    %p71 = scmp.ne.s32.totalorder %s59, %s60
    %p72 = scmp.eq.s32.totalorder %s15, 3
    %p73 = por %p71, %p72
    %p75 = scmp.ne.s32.totalorder %s60, %s74
    %p76 = scmp.eq.s32.totalorder %s15, 0
    %p77 = por %p75, %p76
    %s79 = sadd.s32 %s78, 1
    %p82 = scmp.eq.s32.totalorder %s9, 3
    %p83 = scmp.ne.s32.totalorder %s78, %s80
    %p84 = scmp.eq.s32.totalorder %s9, 0
    %p85 = por %p83, %p84
    %p86 = scmp.ne.s32.totalorder %s78, %s80
    %p87 = scmp.eq.s32.totalorder %s14, 3
    %p88 = por %p86, %p87
    %p89 = scmp.ne.s32.totalorder %s80, %s81
    %p90 = scmp.eq.s32.totalorder %s14, 0
    %p91 = por %p89, %p90
    %p92 = scmp.ne.s32.totalorder %s80, %s81
    %p93 = scmp.eq.s32.totalorder %s15, 3
    %p94 = por %p92, %p93
    %p96 = scmp.ne.s32.totalorder %s81, %s95
    %p97 = scmp.eq.s32.totalorder %s15, 0
    %p98 = por %p96, %p97
    %s99 = ssub.s32 %s16, %s28
    %s100 = ssub.s32 %s17, %s24
    %s101 = sor.u32 %s99, %s100
    %p102 = scmp.eq.s32.totalorder %s101, 0
    %s104 = sadd.s32 %s103, 1
    %s105 = scalar_select %p102, %s103, %s104
    %p108 = pneg %p102
    %p109 = scmp.eq.s32.totalorder %s9, 3
    %p110 = por %p108, %p109
    %p111 = scmp.ne.s32.totalorder %s103, %s106
    %p112 = scmp.eq.s32.totalorder %s9, 0
    %p113 = por %p111, %p112
    %p114 = scmp.ne.s32.totalorder %s103, %s106
    %p115 = scmp.eq.s32.totalorder %s14, 3
    %p116 = por %p114, %p115
    %p117 = scmp.ne.s32.totalorder %s106, %s107
    %p118 = scmp.eq.s32.totalorder %s14, 0
    %p119 = por %p117, %p118
    %p120 = scmp.ne.s32.totalorder %s106, %s107
    %p121 = scmp.eq.s32.totalorder %s15, 3
    %p122 = por %p120, %p121
    %p124 = scmp.ne.s32.totalorder %s107, %s123
    %p125 = scmp.eq.s32.totalorder %s15, 0
    %p126 = por %p124, %p125
    %p127 = scmp.le.s32.totalorder 1, %s9
    %p128 = scmp.lt.s32.totalorder %s9, 5
    %p129 = pnand %p127, %p128
    %p130 = pneg %p129
    // Predicated region
    $region9: #{_lambda_.9} parent=5 // pred_check
      _
    $region10: #{_lambda_.9} parent=5 // pred_check_branch
      %132 = sbr.rel (%p129) target = $region12
    $region11: #{_lambda_.9} parent=5 // pred_region
      %s133 = ssub.s32 %s9, 1
      // Predicated region
      $region13: #{_lambda_.9} parent=11 // pred_check
        %p134 = pneg %p70
      $region14: #{_lambda_.9} parent=11 // pred_check_branch
        %136 = sbr.rel (%p134) target = $region16
      $region15: #{_lambda_.9} parent=11 // pred_region
        _
      $region16: #{_lambda_.9} parent=11 // pred_fallthru
        _
      // Predicated region
      $region17: #{_lambda_.9} parent=11 // pred_check
        %p137 = pneg %p91
      $region18: #{_lambda_.9} parent=11 // pred_check_branch
        %139 = sbr.rel (%p137) target = $region20
      $region19: #{_lambda_.9} parent=11 // pred_region
        _
      $region20: #{_lambda_.9} parent=11 // pred_fallthru
        _
    $region12: #{_lambda_.9} parent=5 // pred_fallthru
      _
    %p140 = scmp.lt.s32.totalorder %s9, 4
    // Predicated region
    $region21: #{_lambda_.9} parent=5 // pred_check
      %p141 = pneg %p140
    $region22: #{_lambda_.9} parent=5 // pred_check_branch
      %143 = sbr.rel (%p141) target = $region24
    $region23: #{_lambda_.9} parent=5 // pred_region
      // Predicated region
      $region25: #{_lambda_.9} parent=23 // pred_check
        %p144 = pneg %p43
      $region26: #{_lambda_.9} parent=23 // pred_check_branch
        %146 = sbr.rel (%p144) target = $region28
      $region27: #{_lambda_.9} parent=23 // pred_region
        %s147 = smul.u32 64, %s17
        %p148 = scmp.lt.s32.totalorder %s16, 1
        %s149 = scalar_select %p148, %s16, 1
        %p150 = scmp.lt.s32.totalorder %s147, 127
        %s151 = scalar_select %p150, %s147, 127
        %s152 = smul.addr %s151, 2
        %s153 = smul.addr %s149, 256
        %s154 = sadd.s32 %s152, %s153
        %s155 = smul.addr %s154, 4
        %s156 = scalar_lea.vmem %s0, %s155
        %s157 = smul.u32 64, %s17
      $region28: #{_lambda_.9} parent=23 // pred_fallthru
        _
    $region24: #{_lambda_.9} parent=5 // pred_fallthru
      _
    %p158 = scmp.le.s32.totalorder 1, %s9
    %p159 = scmp.lt.s32.totalorder %s9, 5
    %p160 = pnand %p158, %p159
    %p161 = pneg %p160
    // Predicated region
    $region29: #{_lambda_.9} parent=5 // pred_check
      _
    $region30: #{_lambda_.9} parent=5 // pred_check_branch
      %163 = sbr.rel (%p160) target = $region32
    $region31: #{_lambda_.9} parent=5 // pred_region
      %s164 = ssub.s32 %s9, 1
      %s165 = smul.u32 64, %s19
      %p166 = scmp.lt.s32.totalorder %s18, 1
      %s167 = scalar_select %p166, %s18, 1
      %p168 = scmp.lt.s32.totalorder %s165, 127
      %s169 = scalar_select %p168, %s165, 127
      %s170 = smul.addr %s169, 2
      %s171 = smul.addr %s167, 256
      %s172 = sadd.s32 %s170, %s171
      %s173 = smul.addr %s172, 4
      %s174 = scalar_lea.vmem %s0, %s173
      %p175 = pneg %p49
      %p176 = pneg %p46
      %p177 = pneg %p70
      %p178 = pneg %p67
      %p179 = pneg %p91
      %p180 = pneg %p88
      %p181 = pneg %p119
      %p182 = pneg %p116
      %s183 = smul.u32 64, %s19
      %p184 = scmp.lt.s32.totalorder %s18, 1
      %s185 = scalar_select %p184, %s18, 1
      %p186 = scmp.lt.s32.totalorder %s183, 127
      %s187 = scalar_select %p186, %s183, 127
      %s188 = smul.addr %s185, 128
      %s189 = sadd.s32 %s187, %s188
      %s190 = smul.addr %s189, 4
      %s191 = scalar_lea.vmem %s3, %s190
      %s192 = smul.u32 64, %s19
      %p193 = scmp.lt.s32.totalorder %s18, 1
      %s194 = scalar_select %p193, %s18, 1
      %p195 = scmp.lt.s32.totalorder %s192, 127
      %s196 = scalar_select %p195, %s192, 127
      %s197 = smul.addr %s196, 2
      %s198 = smul.addr %s194, 256
      %s199 = sadd.s32 %s197, %s198
      %s200 = smul.addr %s199, 4
      %s201 = scalar_lea.vmem %s0, %s200
      %s202 = smul.u32 64, %s19
      %s203 = smul.u32 64, %s19
      %p204 = scmp.lt.s32.totalorder %s18, 1
      %s205 = scalar_select %p204, %s18, 1
      %p206 = scmp.lt.s32.totalorder %s203, 127
      %s207 = scalar_select %p206, %s203, 127
      %s208 = smul.addr %s205, 128
      %s209 = sadd.s32 %s207, %s208
      %s210 = smul.addr %s209, 4
      %s211 = scalar_lea.vmem %s3, %s210
      %s212 = smul.u32 64, %s19
      %v214 = vld [vmem:[%s201] sm:$0xff]
      %v215 = vld [vmem:[%s201 + $0x8] sm:$0xff]
      %v216 = vld [vmem:[%s201 + $0x10] sm:$0xff]
      %v217 = vld [vmem:[%s201 + $0x18] sm:$0xff]
      %v218 = vld [vmem:[%s201 + $0x20] sm:$0xff]
      %v219 = vld [vmem:[%s201 + $0x28] sm:$0xff]
      %v220 = vld [vmem:[%s201 + $0x30] sm:$0xff]
      %v221 = vld [vmem:[%s201 + $0x38] sm:$0xff]
      %v222 = vld [vmem:[%s201 + $0x40] sm:$0xff]
      %v223 = vld [vmem:[%s201 + $0x48] sm:$0xff]
      %v224 = vld [vmem:[%s201 + $0x50] sm:$0xff]
      %v225 = vld [vmem:[%s201 + $0x58] sm:$0xff]
      %v226 = vld [vmem:[%s201 + $0x60] sm:$0xff]
      %v227 = vld [vmem:[%s201 + $0x68] sm:$0xff]
      %v228 = vld [vmem:[%s201 + $0x70] sm:$0xff]
      %v229 = vld [vmem:[%s201 + $0x78] sm:$0xff]
      %v230 = vld [vmem:[%s201 + $0x80] sm:$0xff]
      %v231 = vld [vmem:[%s201 + $0x88] sm:$0xff]
      %v232 = vld [vmem:[%s201 + $0x90] sm:$0xff]
      %v233 = vld [vmem:[%s201 + $0x98] sm:$0xff]
      %v234 = vld [vmem:[%s201 + $0xa0] sm:$0xff]
      %v235 = vld [vmem:[%s201 + $0xa8] sm:$0xff]
      %v236 = vld [vmem:[%s201 + $0xb0] sm:$0xff]
      %v237 = vld [vmem:[%s201 + $0xb8] sm:$0xff]
      %v238 = vld [vmem:[%s201 + $0xc0] sm:$0xff]
      %v239 = vld [vmem:[%s201 + $0xc8] sm:$0xff]
      %v240 = vld [vmem:[%s201 + $0xd0] sm:$0xff]
      %v241 = vld [vmem:[%s201 + $0xd8] sm:$0xff]
      %v242 = vld [vmem:[%s201 + $0xe0] sm:$0xff]
      %v243 = vld [vmem:[%s201 + $0xe8] sm:$0xff]
      %v244 = vld [vmem:[%s201 + $0xf0] sm:$0xff]
      %v245 = vld [vmem:[%s201 + $0xf8] sm:$0xff]
      %v246 = vld [vmem:[%s201 + $0x100] sm:$0xff]
      %v247 = vld [vmem:[%s201 + $0x108] sm:$0xff]
      %v248 = vld [vmem:[%s201 + $0x110] sm:$0xff]
      %v249 = vld [vmem:[%s201 + $0x118] sm:$0xff]
      %v250 = vld [vmem:[%s201 + $0x120] sm:$0xff]
      %v251 = vld [vmem:[%s201 + $0x128] sm:$0xff]
      %v252 = vld [vmem:[%s201 + $0x130] sm:$0xff]
      %v253 = vld [vmem:[%s201 + $0x138] sm:$0xff]
      %v254 = vld [vmem:[%s201 + $0x140] sm:$0xff]
      %v255 = vld [vmem:[%s201 + $0x148] sm:$0xff]
      %v256 = vld [vmem:[%s201 + $0x150] sm:$0xff]
      %v257 = vld [vmem:[%s201 + $0x158] sm:$0xff]
      %v258 = vld [vmem:[%s201 + $0x160] sm:$0xff]
      %v259 = vld [vmem:[%s201 + $0x168] sm:$0xff]
      %v260 = vld [vmem:[%s201 + $0x170] sm:$0xff]
      %v261 = vld [vmem:[%s201 + $0x178] sm:$0xff]
      %v262 = vld [vmem:[%s201 + $0x180] sm:$0xff]
      %v263 = vld [vmem:[%s201 + $0x188] sm:$0xff]
      %v264 = vld [vmem:[%s201 + $0x190] sm:$0xff]
      %v265 = vld [vmem:[%s201 + $0x198] sm:$0xff]
      %v266 = vld [vmem:[%s201 + $0x1a0] sm:$0xff]
      %v267 = vld [vmem:[%s201 + $0x1a8] sm:$0xff]
      %v268 = vld [vmem:[%s201 + $0x1b0] sm:$0xff]
      %v269 = vld [vmem:[%s201 + $0x1b8] sm:$0xff]
      %v270 = vld [vmem:[%s201 + $0x1c0] sm:$0xff]
      %v271 = vld [vmem:[%s201 + $0x1c8] sm:$0xff]
      %v272 = vld [vmem:[%s201 + $0x1d0] sm:$0xff]
      %v273 = vld [vmem:[%s201 + $0x1d8] sm:$0xff]
      %v274 = vld [vmem:[%s201 + $0x1e0] sm:$0xff]
      %v275 = vld [vmem:[%s201 + $0x1e8] sm:$0xff]
      %v276 = vld [vmem:[%s201 + $0x1f0] sm:$0xff]
      %v277 = vld [vmem:[%s201 + $0x1f8] sm:$0xff]
      %v278 = vld [vmem:[%s1] sm:$0xf]
      %v279 = vld [vmem:[%s1 + $0x4] sm:$0xf]
      %v280 = vld [vmem:[%s1 + $0x8] sm:$0xf]
      %v281 = vld [vmem:[%s1 + $0xc] sm:$0xf]
      %v282 = vld [vmem:[%s1 + $0x10] sm:$0xf]
      %v283 = vld [vmem:[%s1 + $0x14] sm:$0xf]
      %v284 = vld [vmem:[%s1 + $0x18] sm:$0xf]
      %v285 = vld [vmem:[%s1 + $0x1c] sm:$0xf]
      %v286 = vld [vmem:[%s1 + $0x20] sm:$0xf]
      %v287 = vld [vmem:[%s1 + $0x24] sm:$0xf]
      %v288 = vld [vmem:[%s1 + $0x28] sm:$0xf]
      %v289 = vld [vmem:[%s1 + $0x2c] sm:$0xf]
      %v290 = vld [vmem:[%s1 + $0x30] sm:$0xf]
      %v291 = vld [vmem:[%s1 + $0x34] sm:$0xf]
      %v292 = vld [vmem:[%s1 + $0x38] sm:$0xf]
      %v293 = vld [vmem:[%s1 + $0x3c] sm:$0xf]
      %v294 = vld [vmem:[%s1 + $0x40] sm:$0xf]
      %v295 = vld [vmem:[%s1 + $0x44] sm:$0xf]
      %v296 = vld [vmem:[%s2] sm:$0x1]
      %v298 = vlaneseq
      %v299 = vshrl.u32 %v298, 7
      %v300 = vsub.s32 0, %v299
      %v301 = vrot.slane %v296, %v300
      %v367 = vunpack.c.l.b16 %v214
      %v368 = vunpack.c.h.b16 %v214
      %v369 = vunpack.c.l.b16 %v215
      %v370 = vunpack.c.h.b16 %v215
      %v371 = vunpack.c.l.b16 %v216
      %v372 = vunpack.c.h.b16 %v216
      %v373 = vunpack.c.l.b16 %v217
      %v374 = vunpack.c.h.b16 %v217
      %v375 = vunpack.c.l.b16 %v218
      %v376 = vunpack.c.h.b16 %v218
      %v377 = vunpack.c.l.b16 %v219
      %v378 = vunpack.c.h.b16 %v219
      %v379 = vunpack.c.l.b16 %v220
      %v380 = vunpack.c.h.b16 %v220
      %v381 = vunpack.c.l.b16 %v221
      %v382 = vunpack.c.h.b16 %v221
      %v383 = vunpack.c.l.b16 %v222
      %v384 = vunpack.c.h.b16 %v222
      %v385 = vunpack.c.l.b16 %v223
      %v386 = vunpack.c.h.b16 %v223
      %v387 = vunpack.c.l.b16 %v224
      %v388 = vunpack.c.h.b16 %v224
      %v389 = vunpack.c.l.b16 %v225
      %v390 = vunpack.c.h.b16 %v225
      %v391 = vunpack.c.l.b16 %v226
      %v392 = vunpack.c.h.b16 %v226
      %v393 = vunpack.c.l.b16 %v227
      %v394 = vunpack.c.h.b16 %v227
      %v395 = vunpack.c.l.b16 %v228
      %v396 = vunpack.c.h.b16 %v228
      %v397 = vunpack.c.l.b16 %v229
      %v398 = vunpack.c.h.b16 %v229
      %v399 = vunpack.c.l.b16 %v230
      %v400 = vunpack.c.h.b16 %v230
      %v401 = vunpack.c.l.b16 %v231
      %v402 = vunpack.c.h.b16 %v231
      %v403 = vunpack.c.l.b16 %v232
      %v404 = vunpack.c.h.b16 %v232
      %v405 = vunpack.c.l.b16 %v233
      %v406 = vunpack.c.h.b16 %v233
      %v407 = vunpack.c.l.b16 %v234
      %v408 = vunpack.c.h.b16 %v234
      %v409 = vunpack.c.l.b16 %v235
      %v410 = vunpack.c.h.b16 %v235
      %v411 = vunpack.c.l.b16 %v236
      %v412 = vunpack.c.h.b16 %v236
      %v413 = vunpack.c.l.b16 %v237
      %v414 = vunpack.c.h.b16 %v237
      %v415 = vunpack.c.l.b16 %v238
      %v416 = vunpack.c.h.b16 %v238
      %v417 = vunpack.c.l.b16 %v239
      %v418 = vunpack.c.h.b16 %v239
      %v419 = vunpack.c.l.b16 %v240
      %v420 = vunpack.c.h.b16 %v240
      %v421 = vunpack.c.l.b16 %v241
      %v422 = vunpack.c.h.b16 %v241
      %v423 = vunpack.c.l.b16 %v242
      %v424 = vunpack.c.h.b16 %v242
      %v425 = vunpack.c.l.b16 %v243
      %v426 = vunpack.c.h.b16 %v243
      %v427 = vunpack.c.l.b16 %v244
      %v428 = vunpack.c.h.b16 %v244
      %v429 = vunpack.c.l.b16 %v245
      %v430 = vunpack.c.h.b16 %v245
      %v431 = vunpack.c.l.b16 %v246
      %v432 = vunpack.c.h.b16 %v246
      %v433 = vunpack.c.l.b16 %v247
      %v434 = vunpack.c.h.b16 %v247
      %v435 = vunpack.c.l.b16 %v248
      %v436 = vunpack.c.h.b16 %v248
      %v437 = vunpack.c.l.b16 %v249
      %v438 = vunpack.c.h.b16 %v249
      %v439 = vunpack.c.l.b16 %v250
      %v440 = vunpack.c.h.b16 %v250
      %v441 = vunpack.c.l.b16 %v251
      %v442 = vunpack.c.h.b16 %v251
      %v443 = vunpack.c.l.b16 %v252
      %v444 = vunpack.c.h.b16 %v252
      %v445 = vunpack.c.l.b16 %v253
      %v446 = vunpack.c.h.b16 %v253
      %v447 = vunpack.c.l.b16 %v254
      %v448 = vunpack.c.h.b16 %v254
      %v449 = vunpack.c.l.b16 %v255
      %v450 = vunpack.c.h.b16 %v255
      %v451 = vunpack.c.l.b16 %v256
      %v452 = vunpack.c.h.b16 %v256
      %v453 = vunpack.c.l.b16 %v257
      %v454 = vunpack.c.h.b16 %v257
      %v455 = vunpack.c.l.b16 %v258
      %v456 = vunpack.c.h.b16 %v258
      %v457 = vunpack.c.l.b16 %v259
      %v458 = vunpack.c.h.b16 %v259
      %v459 = vunpack.c.l.b16 %v260
      %v460 = vunpack.c.h.b16 %v260
      %v461 = vunpack.c.l.b16 %v261
      %v462 = vunpack.c.h.b16 %v261
      %v463 = vunpack.c.l.b16 %v262
      %v464 = vunpack.c.h.b16 %v262
      %v465 = vunpack.c.l.b16 %v263
      %v466 = vunpack.c.h.b16 %v263
      %v467 = vunpack.c.l.b16 %v264
      %v468 = vunpack.c.h.b16 %v264
      %v469 = vunpack.c.l.b16 %v265
      %v470 = vunpack.c.h.b16 %v265
      %v471 = vunpack.c.l.b16 %v266
      %v472 = vunpack.c.h.b16 %v266
      %v473 = vunpack.c.l.b16 %v267
      %v474 = vunpack.c.h.b16 %v267
      %v475 = vunpack.c.l.b16 %v268
      %v476 = vunpack.c.h.b16 %v268
      %v477 = vunpack.c.l.b16 %v269
      %v478 = vunpack.c.h.b16 %v269
      %v479 = vunpack.c.l.b16 %v270
      %v480 = vunpack.c.h.b16 %v270
      %v481 = vunpack.c.l.b16 %v271
      %v482 = vunpack.c.h.b16 %v271
      %v483 = vunpack.c.l.b16 %v272
      %v484 = vunpack.c.h.b16 %v272
      %v485 = vunpack.c.l.b16 %v273
      %v486 = vunpack.c.h.b16 %v273
      %v487 = vunpack.c.l.b16 %v274
      %v488 = vunpack.c.h.b16 %v274
      %v489 = vunpack.c.l.b16 %v275
      %v490 = vunpack.c.h.b16 %v275
      %v491 = vunpack.c.l.b16 %v276
      %v492 = vunpack.c.h.b16 %v276
      %v493 = vunpack.c.l.b16 %v277
      %v494 = vunpack.c.h.b16 %v277
      %v495 = vpack.c.b16 %v369, %v367
      %v496 = vpack.c.b16 %v370, %v368
      %v497 = vpack.c.b16 %v373, %v371
      %v498 = vpack.c.b16 %v374, %v372
      %v499 = vpack.c.b16 %v377, %v375
      %v500 = vpack.c.b16 %v378, %v376
      %v501 = vpack.c.b16 %v381, %v379
      %v502 = vpack.c.b16 %v382, %v380
      %v503 = vpack.c.b16 %v385, %v383
      %v504 = vpack.c.b16 %v386, %v384
      %v505 = vpack.c.b16 %v389, %v387
      %v506 = vpack.c.b16 %v390, %v388
      %v507 = vpack.c.b16 %v393, %v391
      %v508 = vpack.c.b16 %v394, %v392
      %v509 = vpack.c.b16 %v397, %v395
      %v510 = vpack.c.b16 %v398, %v396
      %v511 = vpack.c.b16 %v401, %v399
      %v512 = vpack.c.b16 %v402, %v400
      %v513 = vpack.c.b16 %v405, %v403
      %v514 = vpack.c.b16 %v406, %v404
      %v515 = vpack.c.b16 %v409, %v407
      %v516 = vpack.c.b16 %v410, %v408
      %v517 = vpack.c.b16 %v413, %v411
      %v518 = vpack.c.b16 %v414, %v412
      %v519 = vpack.c.b16 %v417, %v415
      %v520 = vpack.c.b16 %v418, %v416
      %v521 = vpack.c.b16 %v421, %v419
      %v522 = vpack.c.b16 %v422, %v420
      %v523 = vpack.c.b16 %v425, %v423
      %v524 = vpack.c.b16 %v426, %v424
      %v525 = vpack.c.b16 %v429, %v427
      %v526 = vpack.c.b16 %v430, %v428
      %v527 = vpack.c.b16 %v433, %v431
      %v528 = vpack.c.b16 %v434, %v432
      %v529 = vpack.c.b16 %v437, %v435
      %v530 = vpack.c.b16 %v438, %v436
      %v531 = vpack.c.b16 %v441, %v439
      %v532 = vpack.c.b16 %v442, %v440
      %v533 = vpack.c.b16 %v445, %v443
      %v534 = vpack.c.b16 %v446, %v444
      %v535 = vpack.c.b16 %v449, %v447
      %v536 = vpack.c.b16 %v450, %v448
      %v537 = vpack.c.b16 %v453, %v451
      %v538 = vpack.c.b16 %v454, %v452
      %v539 = vpack.c.b16 %v457, %v455
      %v540 = vpack.c.b16 %v458, %v456
      %v541 = vpack.c.b16 %v461, %v459
      %v542 = vpack.c.b16 %v462, %v460
      %v543 = vpack.c.b16 %v465, %v463
      %v544 = vpack.c.b16 %v466, %v464
      %v545 = vpack.c.b16 %v469, %v467
      %v546 = vpack.c.b16 %v470, %v468
      %v547 = vpack.c.b16 %v473, %v471
      %v548 = vpack.c.b16 %v474, %v472
      %v549 = vpack.c.b16 %v477, %v475
      %v550 = vpack.c.b16 %v478, %v476
      %v551 = vpack.c.b16 %v481, %v479
      %v552 = vpack.c.b16 %v482, %v480
      %v553 = vpack.c.b16 %v485, %v483
      %v554 = vpack.c.b16 %v486, %v484
      %v555 = vpack.c.b16 %v489, %v487
      %v556 = vpack.c.b16 %v490, %v488
      %v557 = vpack.c.b16 %v493, %v491
      %v558 = vpack.c.b16 %v494, %v492
      %v609 = vunpack.c.l.b16 %v278
      %v610 = vunpack.c.l.b16 %v279
      %v611 = vunpack.c.l.b16 %v280
      %v612 = vunpack.c.l.b16 %v281
      %v613 = vunpack.c.l.b16 %v282
      %v614 = vunpack.c.l.b16 %v283
      %v615 = vunpack.c.l.b16 %v284
      %v616 = vunpack.c.l.b16 %v285
      %v617 = vunpack.c.l.b16 %v286
      %v618 = vunpack.c.l.b16 %v287
      %v619 = vunpack.c.l.b16 %v288
      %v620 = vunpack.c.l.b16 %v289
      %v621 = vunpack.c.l.b16 %v290
      %v622 = vunpack.c.l.b16 %v291
      %v623 = vunpack.c.l.b16 %v292
      %v624 = vunpack.c.l.b16 %v293
      %v625 = vunpack.c.l.b16 %v294
      %v626 = vunpack.c.l.b16 %v295
      %v627 = vpack.c.b16 %v610, %v609
      %v628 = vpack.c.b16 %v612, %v611
      %v629 = vpack.c.b16 %v614, %v613
      %v630 = vpack.c.b16 %v616, %v615
      %v631 = vpack.c.b16 %v618, %v617
      %v632 = vpack.c.b16 %v620, %v619
      %v633 = vpack.c.b16 %v622, %v621
      %v634 = vpack.c.b16 %v624, %v623
      %v635 = vpack.c.b16 %v626, %v625
      %vm645 = vcmask 130048
      %v647 = vsel %vm645, %v496, 0
      %v650 = vsel %vm645, %v498, 0
      %v653 = vsel %vm645, %v500, 0
      %v656 = vsel %vm645, %v502, 0
      %v659 = vsel %vm645, %v504, 0
      %v662 = vsel %vm645, %v506, 0
      %v665 = vsel %vm645, %v508, 0
      %v668 = vsel %vm645, %v510, 0
      %v671 = vsel %vm645, %v512, 0
      %v674 = vsel %vm645, %v514, 0
      %v677 = vsel %vm645, %v516, 0
      %v680 = vsel %vm645, %v518, 0
      %v683 = vsel %vm645, %v520, 0
      %v686 = vsel %vm645, %v522, 0
      %v689 = vsel %vm645, %v524, 0
      %v692 = vsel %vm645, %v526, 0
      %v695 = vsel %vm645, %v528, 0
      %v698 = vsel %vm645, %v530, 0
      %v701 = vsel %vm645, %v532, 0
      %v704 = vsel %vm645, %v534, 0
      %v707 = vsel %vm645, %v536, 0
      %v710 = vsel %vm645, %v538, 0
      %v713 = vsel %vm645, %v540, 0
      %v716 = vsel %vm645, %v542, 0
      %v719 = vsel %vm645, %v544, 0
      %v722 = vsel %vm645, %v546, 0
      %v725 = vsel %vm645, %v548, 0
      %v728 = vsel %vm645, %v550, 0
      %v731 = vsel %vm645, %v552, 0
      %v734 = vsel %vm645, %v554, 0
      %v737 = vsel %vm645, %v556, 0
      %v740 = vsel %vm645, %v558, 0
      %742 = vmatprep.subr.bf16.mxu0 0
      %743 = vmatpush1.bf16.msra.mxu0 %v634
      %744 = vmatprep.subr.bf16.mxu0 0
      %745 = vmatpush1.bf16.msra.mxu0 %v633
      %746 = vmatprep.subr.bf16.mxu0 0
      %747 = vmatpush1.bf16.msra.mxu0 %v632
      %748 = vmatprep.subr.bf16.mxu0 0
      %749 = vmatpush1.bf16.msra.mxu0 %v631
      %750 = vmatprep.subr.bf16.mxu0 0
      %751 = vmatpush1.bf16.msra.mxu0 %v630
      %752 = vmatprep.subr.bf16.mxu0 0
      %753 = vmatpush1.bf16.msra.mxu0 %v629
      %754 = vmatprep.subr.bf16.mxu0 0
      %755 = vmatpush1.bf16.msra.mxu0 %v628
      %756 = vmatprep.subr.bf16.mxu0 0
      %757 = vmatpush1.bf16.msra.mxu0 %v627
      %758 = vmatprep.subr.bf16.mxu0 0
      %759 = vmatpush2.bf16.msra.mxu0 0
      %760 = vmatprep.subr.bf16.mxu0 0
      %761 = vmatpush2.bf16.msra.mxu0 0
      %762 = vmatprep.subr.bf16.mxu0 0
      %763 = vmatpush2.bf16.msra.mxu0 0
      %764 = vmatprep.subr.bf16.mxu0 0
      %765 = vmatpush2.bf16.msra.mxu0 0
      %766 = vmatprep.subr.bf16.mxu0 0
      %767 = vmatpush2.bf16.msra.mxu0 0
      %768 = vmatprep.subr.bf16.mxu0 0
      %769 = vmatpush2.bf16.msra.mxu0 0
      %770 = vmatprep.subr.bf16.mxu0 0
      %771 = vmatpush2.bf16.msra.mxu0 0
      %772 = vmatprep.subr.bf16.mxu0 0
      %773 = vmatpush2.bf16.msra.mxu0 %v635
      %774 = vmatprep.mubr.bf16.mxu0 %v647
      %775 = vmatmul.mubr.bf16.gmra.mxu0 %v495
      %v776 = vpop.f32.mrf.mxu0
      %v777 = vadd.f32 %v301, %v776
      %v778 = vpop.f32.mrf.mxu0
      %v779 = vpop.f32.mrf.mxu0
      %v780 = vadd.f32 %v301, %v779
      %v781 = vpop.f32.mrf.mxu0
      %782 = vmatprep.mubr.bf16.mxu0 %v650
      %783 = vmatmul.mubr.bf16.gmra.mxu0 %v497
      %v784 = vpop.f32.mrf.mxu0
      %v785 = vadd.f32 %v301, %v784
      %v786 = vpop.f32.mrf.mxu0
      %v787 = vpop.f32.mrf.mxu0
      %v788 = vadd.f32 %v301, %v787
      %v789 = vpop.f32.mrf.mxu0
      %790 = vmatprep.mubr.bf16.mxu0 %v653
      %791 = vmatmul.mubr.bf16.gmra.mxu0 %v499
      %v792 = vpop.f32.mrf.mxu0
      %v793 = vadd.f32 %v301, %v792
      %v794 = vpop.f32.mrf.mxu0
      %v795 = vpop.f32.mrf.mxu0
      %v796 = vadd.f32 %v301, %v795
      %v797 = vpop.f32.mrf.mxu0
      %798 = vmatprep.mubr.bf16.mxu0 %v656
      %799 = vmatmul.mubr.bf16.gmra.mxu0 %v501
      %v800 = vpop.f32.mrf.mxu0
      %v801 = vadd.f32 %v301, %v800
      %v802 = vpop.f32.mrf.mxu0
      %v803 = vpop.f32.mrf.mxu0
      %v804 = vadd.f32 %v301, %v803
      %v805 = vpop.f32.mrf.mxu0
      %806 = vmatprep.mubr.bf16.mxu0 %v659
      %807 = vmatmul.mubr.bf16.gmra.mxu0 %v503
      %v808 = vpop.f32.mrf.mxu0
      %v809 = vadd.f32 %v301, %v808
      %v810 = vpop.f32.mrf.mxu0
      %v811 = vpop.f32.mrf.mxu0
      %v812 = vadd.f32 %v301, %v811
      %v813 = vpop.f32.mrf.mxu0
      %814 = vmatprep.mubr.bf16.mxu0 %v662
      %815 = vmatmul.mubr.bf16.gmra.mxu0 %v505
      %v816 = vpop.f32.mrf.mxu0
      %v817 = vadd.f32 %v301, %v816
      %v818 = vpop.f32.mrf.mxu0
      %v819 = vpop.f32.mrf.mxu0
      %v820 = vadd.f32 %v301, %v819
      %v821 = vpop.f32.mrf.mxu0
      %822 = vmatprep.mubr.bf16.mxu0 %v665
      %823 = vmatmul.mubr.bf16.gmra.mxu0 %v507
      %v824 = vpop.f32.mrf.mxu0
      %v825 = vadd.f32 %v301, %v824
      %v826 = vpop.f32.mrf.mxu0
      %v827 = vpop.f32.mrf.mxu0
      %v828 = vadd.f32 %v301, %v827
      %v829 = vpop.f32.mrf.mxu0
      %830 = vmatprep.mubr.bf16.mxu0 %v668
      %831 = vmatmul.mubr.bf16.gmra.mxu0 %v509
      %v832 = vpop.f32.mrf.mxu0
      %v833 = vadd.f32 %v301, %v832
      %v834 = vpop.f32.mrf.mxu0
      %v835 = vpop.f32.mrf.mxu0
      %v836 = vadd.f32 %v301, %v835
      %v837 = vpop.f32.mrf.mxu0
      %838 = vmatprep.mubr.bf16.mxu0 %v671
      %839 = vmatmul.mubr.bf16.gmra.mxu0 %v511
      %v840 = vpop.f32.mrf.mxu0
      %v841 = vadd.f32 %v301, %v840
      %v842 = vpop.f32.mrf.mxu0
      %v843 = vpop.f32.mrf.mxu0
      %v844 = vadd.f32 %v301, %v843
      %v845 = vpop.f32.mrf.mxu0
      %846 = vmatprep.mubr.bf16.mxu0 %v674
      %847 = vmatmul.mubr.bf16.gmra.mxu0 %v513
      %v848 = vpop.f32.mrf.mxu0
      %v849 = vadd.f32 %v301, %v848
      %v850 = vpop.f32.mrf.mxu0
      %v851 = vpop.f32.mrf.mxu0
      %v852 = vadd.f32 %v301, %v851
      %v853 = vpop.f32.mrf.mxu0
      %854 = vmatprep.mubr.bf16.mxu0 %v677
      %855 = vmatmul.mubr.bf16.gmra.mxu0 %v515
      %v856 = vpop.f32.mrf.mxu0
      %v857 = vadd.f32 %v301, %v856
      %v858 = vpop.f32.mrf.mxu0
      %v859 = vpop.f32.mrf.mxu0
      %v860 = vadd.f32 %v301, %v859
      %v861 = vpop.f32.mrf.mxu0
      %862 = vmatprep.mubr.bf16.mxu0 %v680
      %863 = vmatmul.mubr.bf16.gmra.mxu0 %v517
      %v864 = vpop.f32.mrf.mxu0
      %v865 = vadd.f32 %v301, %v864
      %v866 = vpop.f32.mrf.mxu0
      %v867 = vpop.f32.mrf.mxu0
      %v868 = vadd.f32 %v301, %v867
      %v869 = vpop.f32.mrf.mxu0
      %870 = vmatprep.mubr.bf16.mxu0 %v683
      %871 = vmatmul.mubr.bf16.gmra.mxu0 %v519
      %v872 = vpop.f32.mrf.mxu0
      %v873 = vadd.f32 %v301, %v872
      %v874 = vpop.f32.mrf.mxu0
      %v875 = vpop.f32.mrf.mxu0
      %v876 = vadd.f32 %v301, %v875
      %v877 = vpop.f32.mrf.mxu0
      %878 = vmatprep.mubr.bf16.mxu0 %v686
      %879 = vmatmul.mubr.bf16.gmra.mxu0 %v521
      %v880 = vpop.f32.mrf.mxu0
      %v881 = vadd.f32 %v301, %v880
      %v882 = vpop.f32.mrf.mxu0
      %v883 = vpop.f32.mrf.mxu0
      %v884 = vadd.f32 %v301, %v883
      %v885 = vpop.f32.mrf.mxu0
      %886 = vmatprep.mubr.bf16.mxu0 %v689
      %887 = vmatmul.mubr.bf16.gmra.mxu0 %v523
      %v888 = vpop.f32.mrf.mxu0
      %v889 = vadd.f32 %v301, %v888
      %v890 = vpop.f32.mrf.mxu0
      %v891 = vpop.f32.mrf.mxu0
      %v892 = vadd.f32 %v301, %v891
      %v893 = vpop.f32.mrf.mxu0
      %894 = vmatprep.mubr.bf16.mxu0 %v692
      %895 = vmatmul.mubr.bf16.gmra.mxu0 %v525
      %v896 = vpop.f32.mrf.mxu0
      %v897 = vadd.f32 %v301, %v896
      %v898 = vpop.f32.mrf.mxu0
      %v899 = vpop.f32.mrf.mxu0
      %v900 = vadd.f32 %v301, %v899
      %v901 = vpop.f32.mrf.mxu0
      %902 = vmatprep.mubr.bf16.mxu0 %v695
      %903 = vmatmul.mubr.bf16.gmra.mxu0 %v527
      %v904 = vpop.f32.mrf.mxu0
      %v905 = vadd.f32 %v301, %v904
      %v906 = vpop.f32.mrf.mxu0
      %v907 = vpop.f32.mrf.mxu0
      %v908 = vadd.f32 %v301, %v907
      %v909 = vpop.f32.mrf.mxu0
      %910 = vmatprep.mubr.bf16.mxu0 %v698
      %911 = vmatmul.mubr.bf16.gmra.mxu0 %v529
      %v912 = vpop.f32.mrf.mxu0
      %v913 = vadd.f32 %v301, %v912
      %v914 = vpop.f32.mrf.mxu0
      %v915 = vpop.f32.mrf.mxu0
      %v916 = vadd.f32 %v301, %v915
      %v917 = vpop.f32.mrf.mxu0
      %918 = vmatprep.mubr.bf16.mxu0 %v701
      %919 = vmatmul.mubr.bf16.gmra.mxu0 %v531
      %v920 = vpop.f32.mrf.mxu0
      %v921 = vadd.f32 %v301, %v920
      %v922 = vpop.f32.mrf.mxu0
      %v923 = vpop.f32.mrf.mxu0
      %v924 = vadd.f32 %v301, %v923
      %v925 = vpop.f32.mrf.mxu0
      %926 = vmatprep.mubr.bf16.mxu0 %v704
      %927 = vmatmul.mubr.bf16.gmra.mxu0 %v533
      %v928 = vpop.f32.mrf.mxu0
      %v929 = vadd.f32 %v301, %v928
      %v930 = vpop.f32.mrf.mxu0
      %v931 = vpop.f32.mrf.mxu0
      %v932 = vadd.f32 %v301, %v931
      %v933 = vpop.f32.mrf.mxu0
      %934 = vmatprep.mubr.bf16.mxu0 %v707
      %935 = vmatmul.mubr.bf16.gmra.mxu0 %v535
      %v936 = vpop.f32.mrf.mxu0
      %v937 = vadd.f32 %v301, %v936
      %v938 = vpop.f32.mrf.mxu0
      %v939 = vpop.f32.mrf.mxu0
      %v940 = vadd.f32 %v301, %v939
      %v941 = vpop.f32.mrf.mxu0
      %942 = vmatprep.mubr.bf16.mxu0 %v710
      %943 = vmatmul.mubr.bf16.gmra.mxu0 %v537
      %v944 = vpop.f32.mrf.mxu0
      %v945 = vadd.f32 %v301, %v944
      %v946 = vpop.f32.mrf.mxu0
      %v947 = vpop.f32.mrf.mxu0
      %v948 = vadd.f32 %v301, %v947
      %v949 = vpop.f32.mrf.mxu0
      %950 = vmatprep.mubr.bf16.mxu0 %v713
      %951 = vmatmul.mubr.bf16.gmra.mxu0 %v539
      %v952 = vpop.f32.mrf.mxu0
      %v953 = vadd.f32 %v301, %v952
      %v954 = vpop.f32.mrf.mxu0
      %v955 = vpop.f32.mrf.mxu0
      %v956 = vadd.f32 %v301, %v955
      %v957 = vpop.f32.mrf.mxu0
      %958 = vmatprep.mubr.bf16.mxu0 %v716
      %959 = vmatmul.mubr.bf16.gmra.mxu0 %v541
      %v960 = vpop.f32.mrf.mxu0
      %v961 = vadd.f32 %v301, %v960
      %v962 = vpop.f32.mrf.mxu0
      %v963 = vpop.f32.mrf.mxu0
      %v964 = vadd.f32 %v301, %v963
      %v965 = vpop.f32.mrf.mxu0
      %966 = vmatprep.mubr.bf16.mxu0 %v719
      %967 = vmatmul.mubr.bf16.gmra.mxu0 %v543
      %v968 = vpop.f32.mrf.mxu0
      %v969 = vadd.f32 %v301, %v968
      %v970 = vpop.f32.mrf.mxu0
      %v971 = vpop.f32.mrf.mxu0
      %v972 = vadd.f32 %v301, %v971
      %v973 = vpop.f32.mrf.mxu0
      %974 = vmatprep.mubr.bf16.mxu0 %v722
      %975 = vmatmul.mubr.bf16.gmra.mxu0 %v545
      %v976 = vpop.f32.mrf.mxu0
      %v977 = vadd.f32 %v301, %v976
      %v978 = vpop.f32.mrf.mxu0
      %v979 = vpop.f32.mrf.mxu0
      %v980 = vadd.f32 %v301, %v979
      %v981 = vpop.f32.mrf.mxu0
      %982 = vmatprep.mubr.bf16.mxu0 %v725
      %983 = vmatmul.mubr.bf16.gmra.mxu0 %v547
      %v984 = vpop.f32.mrf.mxu0
      %v985 = vadd.f32 %v301, %v984
      %v986 = vpop.f32.mrf.mxu0
      %v987 = vpop.f32.mrf.mxu0
      %v988 = vadd.f32 %v301, %v987
      %v989 = vpop.f32.mrf.mxu0
      %990 = vmatprep.mubr.bf16.mxu0 %v728
      %991 = vmatmul.mubr.bf16.gmra.mxu0 %v549
      %v992 = vpop.f32.mrf.mxu0
      %v993 = vadd.f32 %v301, %v992
      %v994 = vpop.f32.mrf.mxu0
      %v995 = vpop.f32.mrf.mxu0
      %v996 = vadd.f32 %v301, %v995
      %v997 = vpop.f32.mrf.mxu0
      %998 = vmatprep.mubr.bf16.mxu0 %v731
      %999 = vmatmul.mubr.bf16.gmra.mxu0 %v551
      %v1000 = vpop.f32.mrf.mxu0
      %v1001 = vadd.f32 %v301, %v1000
      %v1002 = vpop.f32.mrf.mxu0
      %v1003 = vpop.f32.mrf.mxu0
      %v1004 = vadd.f32 %v301, %v1003
      %v1005 = vpop.f32.mrf.mxu0
      %1006 = vmatprep.mubr.bf16.mxu0 %v734
      %1007 = vmatmul.mubr.bf16.gmra.mxu0 %v553
      %v1008 = vpop.f32.mrf.mxu0
      %v1009 = vadd.f32 %v301, %v1008
      %v1010 = vpop.f32.mrf.mxu0
      %v1011 = vpop.f32.mrf.mxu0
      %v1012 = vadd.f32 %v301, %v1011
      %v1013 = vpop.f32.mrf.mxu0
      %1014 = vmatprep.mubr.bf16.mxu0 %v737
      %1015 = vmatmul.mubr.bf16.gmra.mxu0 %v555
      %v1016 = vpop.f32.mrf.mxu0
      %v1017 = vadd.f32 %v301, %v1016
      %v1018 = vpop.f32.mrf.mxu0
      %v1019 = vpop.f32.mrf.mxu0
      %v1020 = vadd.f32 %v301, %v1019
      %v1021 = vpop.f32.mrf.mxu0
      %1022 = vmatprep.mubr.bf16.mxu0 %v740
      %1023 = vmatmul.mubr.bf16.gmra.mxu0 %v557
      %v1024 = vpop.f32.mrf.mxu0
      %v1025 = vadd.f32 %v301, %v1024
      %v1026 = vpop.f32.mrf.mxu0
      %v1027 = vpop.f32.mrf.mxu0
      %v1028 = vadd.f32 %v301, %v1027
      %v1029 = vpop.f32.mrf.mxu0
      %1030 = vdwg.mxu0
      %v1031 = vxor.u32 %v777, 2147483648
      %v1032 = vxor.u32 %v780, 2147483648
      %v1033 = vxor.u32 %v785, 2147483648
      %v1034 = vxor.u32 %v788, 2147483648
      %v1035 = vxor.u32 %v793, 2147483648
      %v1036 = vxor.u32 %v796, 2147483648
      %v1037 = vxor.u32 %v801, 2147483648
      %v1038 = vxor.u32 %v804, 2147483648
      %v1039 = vxor.u32 %v809, 2147483648
      %v1040 = vxor.u32 %v812, 2147483648
      %v1041 = vxor.u32 %v817, 2147483648
      %v1042 = vxor.u32 %v820, 2147483648
      %v1043 = vxor.u32 %v825, 2147483648
      %v1044 = vxor.u32 %v828, 2147483648
      %v1045 = vxor.u32 %v833, 2147483648
      %v1046 = vxor.u32 %v836, 2147483648
      %v1047 = vxor.u32 %v841, 2147483648
      %v1048 = vxor.u32 %v844, 2147483648
      %v1049 = vxor.u32 %v849, 2147483648
      %v1050 = vxor.u32 %v852, 2147483648
      %v1051 = vxor.u32 %v857, 2147483648
      %v1052 = vxor.u32 %v860, 2147483648
      %v1053 = vxor.u32 %v865, 2147483648
      %v1054 = vxor.u32 %v868, 2147483648
      %v1055 = vxor.u32 %v873, 2147483648
      %v1056 = vxor.u32 %v876, 2147483648
      %v1057 = vxor.u32 %v881, 2147483648
      %v1058 = vxor.u32 %v884, 2147483648
      %v1059 = vxor.u32 %v889, 2147483648
      %v1060 = vxor.u32 %v892, 2147483648
      %v1061 = vxor.u32 %v897, 2147483648
      %v1062 = vxor.u32 %v900, 2147483648
      %v1063 = vxor.u32 %v905, 2147483648
      %v1064 = vxor.u32 %v908, 2147483648
      %v1065 = vxor.u32 %v913, 2147483648
      %v1066 = vxor.u32 %v916, 2147483648
      %v1067 = vxor.u32 %v921, 2147483648
      %v1068 = vxor.u32 %v924, 2147483648
      %v1069 = vxor.u32 %v929, 2147483648
      %v1070 = vxor.u32 %v932, 2147483648
      %v1071 = vxor.u32 %v937, 2147483648
      %v1072 = vxor.u32 %v940, 2147483648
      %v1073 = vxor.u32 %v945, 2147483648
      %v1074 = vxor.u32 %v948, 2147483648
      %v1075 = vxor.u32 %v953, 2147483648
      %v1076 = vxor.u32 %v956, 2147483648
      %v1077 = vxor.u32 %v961, 2147483648
      %v1078 = vxor.u32 %v964, 2147483648
      %v1079 = vxor.u32 %v969, 2147483648
      %v1080 = vxor.u32 %v972, 2147483648
      %v1081 = vxor.u32 %v977, 2147483648
      %v1082 = vxor.u32 %v980, 2147483648
      %v1083 = vxor.u32 %v985, 2147483648
      %v1084 = vxor.u32 %v988, 2147483648
      %v1085 = vxor.u32 %v993, 2147483648
      %v1086 = vxor.u32 %v996, 2147483648
      %v1087 = vxor.u32 %v1001, 2147483648
      %v1088 = vxor.u32 %v1004, 2147483648
      %v1089 = vxor.u32 %v1009, 2147483648
      %v1090 = vxor.u32 %v1012, 2147483648
      %v1091 = vxor.u32 %v1017, 2147483648
      %v1092 = vxor.u32 %v1020, 2147483648
      %v1093 = vxor.u32 %v1025, 2147483648
      %v1094 = vxor.u32 %v1028, 2147483648
      %v1095 = vmul.f32 %v1031, 1.442695
      %v1096 = vpow.pop %v1095
      %v1097 = vmul.f32 %v1032, 1.442695
      %v1098 = vpow.pop %v1097
      %v1099 = vmul.f32 %v1033, 1.442695
      %v1100 = vpow.pop %v1099
      %v1101 = vmul.f32 %v1034, 1.442695
      %v1102 = vpow.pop %v1101
      %v1103 = vmul.f32 %v1035, 1.442695
      %v1104 = vpow.pop %v1103
      %v1105 = vmul.f32 %v1036, 1.442695
      %v1106 = vpow.pop %v1105
      %v1107 = vmul.f32 %v1037, 1.442695
      %v1108 = vpow.pop %v1107
      %v1109 = vmul.f32 %v1038, 1.442695
      %v1110 = vpow.pop %v1109
      %v1111 = vmul.f32 %v1039, 1.442695
      %v1112 = vpow.pop %v1111
      %v1113 = vmul.f32 %v1040, 1.442695
      %v1114 = vpow.pop %v1113
      %v1115 = vmul.f32 %v1041, 1.442695
      %v1116 = vpow.pop %v1115
      %v1117 = vmul.f32 %v1042, 1.442695
      %v1118 = vpow.pop %v1117
      %v1119 = vmul.f32 %v1043, 1.442695
      %v1120 = vpow.pop %v1119
      %v1121 = vmul.f32 %v1044, 1.442695
      %v1122 = vpow.pop %v1121
      %v1123 = vmul.f32 %v1045, 1.442695
      %v1124 = vpow.pop %v1123
      %v1125 = vmul.f32 %v1046, 1.442695
      %v1126 = vpow.pop %v1125
      %v1127 = vmul.f32 %v1047, 1.442695
      %v1128 = vpow.pop %v1127
      %v1129 = vmul.f32 %v1048, 1.442695
      %v1130 = vpow.pop %v1129
      %v1131 = vmul.f32 %v1049, 1.442695
      %v1132 = vpow.pop %v1131
      %v1133 = vmul.f32 %v1050, 1.442695
      %v1134 = vpow.pop %v1133
      %v1135 = vmul.f32 %v1051, 1.442695
      %v1136 = vpow.pop %v1135
      %v1137 = vmul.f32 %v1052, 1.442695
      %v1138 = vpow.pop %v1137
      %v1139 = vmul.f32 %v1053, 1.442695
      %v1140 = vpow.pop %v1139
      %v1141 = vmul.f32 %v1054, 1.442695
      %v1142 = vpow.pop %v1141
      %v1143 = vmul.f32 %v1055, 1.442695
      %v1144 = vpow.pop %v1143
      %v1145 = vmul.f32 %v1056, 1.442695
      %v1146 = vpow.pop %v1145
      %v1147 = vmul.f32 %v1057, 1.442695
      %v1148 = vpow.pop %v1147
      %v1149 = vmul.f32 %v1058, 1.442695
      %v1150 = vpow.pop %v1149
      %v1151 = vmul.f32 %v1059, 1.442695
      %v1152 = vpow.pop %v1151
      %v1153 = vmul.f32 %v1060, 1.442695
      %v1154 = vpow.pop %v1153
      %v1155 = vmul.f32 %v1061, 1.442695
      %v1156 = vpow.pop %v1155
      %v1157 = vmul.f32 %v1062, 1.442695
      %v1158 = vpow.pop %v1157
      %v1159 = vmul.f32 %v1063, 1.442695
      %v1160 = vpow.pop %v1159
      %v1161 = vmul.f32 %v1064, 1.442695
      %v1162 = vpow.pop %v1161
      %v1163 = vmul.f32 %v1065, 1.442695
      %v1164 = vpow.pop %v1163
      %v1165 = vmul.f32 %v1066, 1.442695
      %v1166 = vpow.pop %v1165
      %v1167 = vmul.f32 %v1067, 1.442695
      %v1168 = vpow.pop %v1167
      %v1169 = vmul.f32 %v1068, 1.442695
      %v1170 = vpow.pop %v1169
      %v1171 = vmul.f32 %v1069, 1.442695
      %v1172 = vpow.pop %v1171
      %v1173 = vmul.f32 %v1070, 1.442695
      %v1174 = vpow.pop %v1173
      %v1175 = vmul.f32 %v1071, 1.442695
      %v1176 = vpow.pop %v1175
      %v1177 = vmul.f32 %v1072, 1.442695
      %v1178 = vpow.pop %v1177
      %v1179 = vmul.f32 %v1073, 1.442695
      %v1180 = vpow.pop %v1179
      %v1181 = vmul.f32 %v1074, 1.442695
      %v1182 = vpow.pop %v1181
      %v1183 = vmul.f32 %v1075, 1.442695
      %v1184 = vpow.pop %v1183
      %v1185 = vmul.f32 %v1076, 1.442695
      %v1186 = vpow.pop %v1185
      %v1187 = vmul.f32 %v1077, 1.442695
      %v1188 = vpow.pop %v1187
      %v1189 = vmul.f32 %v1078, 1.442695
      %v1190 = vpow.pop %v1189
      %v1191 = vmul.f32 %v1079, 1.442695
      %v1192 = vpow.pop %v1191
      %v1193 = vmul.f32 %v1080, 1.442695
      %v1194 = vpow.pop %v1193
      %v1195 = vmul.f32 %v1081, 1.442695
      %v1196 = vpow.pop %v1195
      %v1197 = vmul.f32 %v1082, 1.442695
      %v1198 = vpow.pop %v1197
      %v1199 = vmul.f32 %v1083, 1.442695
      %v1200 = vpow.pop %v1199
      %v1201 = vmul.f32 %v1084, 1.442695
      %v1202 = vpow.pop %v1201
      %v1203 = vmul.f32 %v1085, 1.442695
      %v1204 = vpow.pop %v1203
      %v1205 = vmul.f32 %v1086, 1.442695
      %v1206 = vpow.pop %v1205
      %v1207 = vmul.f32 %v1087, 1.442695
      %v1208 = vpow.pop %v1207
      %v1209 = vmul.f32 %v1088, 1.442695
      %v1210 = vpow.pop %v1209
      %v1211 = vmul.f32 %v1089, 1.442695
      %v1212 = vpow.pop %v1211
      %v1213 = vmul.f32 %v1090, 1.442695
      %v1214 = vpow.pop %v1213
      %v1215 = vmul.f32 %v1091, 1.442695
      %v1216 = vpow.pop %v1215
      %v1217 = vmul.f32 %v1092, 1.442695
      %v1218 = vpow.pop %v1217
      %v1219 = vmul.f32 %v1093, 1.442695
      %v1220 = vpow.pop %v1219
      %v1221 = vmul.f32 %v1094, 1.442695
      %v1222 = vpow.pop %v1221
      %v1223 = vadd.f32 %v1096, 1.0
      %v1224 = vadd.f32 %v1098, 1.0
      %v1225 = vadd.f32 %v1100, 1.0
      %v1226 = vadd.f32 %v1102, 1.0
      %v1227 = vadd.f32 %v1104, 1.0
      %v1228 = vadd.f32 %v1106, 1.0
      %v1229 = vadd.f32 %v1108, 1.0
      %v1230 = vadd.f32 %v1110, 1.0
      %v1231 = vadd.f32 %v1112, 1.0
      %v1232 = vadd.f32 %v1114, 1.0
      %v1233 = vadd.f32 %v1116, 1.0
      %v1234 = vadd.f32 %v1118, 1.0
      %v1235 = vadd.f32 %v1120, 1.0
      %v1236 = vadd.f32 %v1122, 1.0
      %v1237 = vadd.f32 %v1124, 1.0
      %v1238 = vadd.f32 %v1126, 1.0
      %v1239 = vadd.f32 %v1128, 1.0
      %v1240 = vadd.f32 %v1130, 1.0
      %v1241 = vadd.f32 %v1132, 1.0
      %v1242 = vadd.f32 %v1134, 1.0
      %v1243 = vadd.f32 %v1136, 1.0
      %v1244 = vadd.f32 %v1138, 1.0
      %v1245 = vadd.f32 %v1140, 1.0
      %v1246 = vadd.f32 %v1142, 1.0
      %v1247 = vadd.f32 %v1144, 1.0
      %v1248 = vadd.f32 %v1146, 1.0
      %v1249 = vadd.f32 %v1148, 1.0
      %v1250 = vadd.f32 %v1150, 1.0
      %v1251 = vadd.f32 %v1152, 1.0
      %v1252 = vadd.f32 %v1154, 1.0
      %v1253 = vadd.f32 %v1156, 1.0
      %v1254 = vadd.f32 %v1158, 1.0
      %v1255 = vadd.f32 %v1160, 1.0
      %v1256 = vadd.f32 %v1162, 1.0
      %v1257 = vadd.f32 %v1164, 1.0
      %v1258 = vadd.f32 %v1166, 1.0
      %v1259 = vadd.f32 %v1168, 1.0
      %v1260 = vadd.f32 %v1170, 1.0
      %v1261 = vadd.f32 %v1172, 1.0
      %v1262 = vadd.f32 %v1174, 1.0
      %v1263 = vadd.f32 %v1176, 1.0
      %v1264 = vadd.f32 %v1178, 1.0
      %v1265 = vadd.f32 %v1180, 1.0
      %v1266 = vadd.f32 %v1182, 1.0
      %v1267 = vadd.f32 %v1184, 1.0
      %v1268 = vadd.f32 %v1186, 1.0
      %v1269 = vadd.f32 %v1188, 1.0
      %v1270 = vadd.f32 %v1190, 1.0
      %v1271 = vadd.f32 %v1192, 1.0
      %v1272 = vadd.f32 %v1194, 1.0
      %v1273 = vadd.f32 %v1196, 1.0
      %v1274 = vadd.f32 %v1198, 1.0
      %v1275 = vadd.f32 %v1200, 1.0
      %v1276 = vadd.f32 %v1202, 1.0
      %v1277 = vadd.f32 %v1204, 1.0
      %v1278 = vadd.f32 %v1206, 1.0
      %v1279 = vadd.f32 %v1208, 1.0
      %v1280 = vadd.f32 %v1210, 1.0
      %v1281 = vadd.f32 %v1212, 1.0
      %v1282 = vadd.f32 %v1214, 1.0
      %v1283 = vadd.f32 %v1216, 1.0
      %v1284 = vadd.f32 %v1218, 1.0
      %v1285 = vadd.f32 %v1220, 1.0
      %v1286 = vadd.f32 %v1222, 1.0
      %v1287 = vrcp.pop %v1223
      %v1288 = vmul.f32 1.0, %v1287
      %v1289 = vrcp.pop %v1224
      %v1290 = vmul.f32 1.0, %v1289
      %v1291 = vrcp.pop %v1225
      %v1292 = vmul.f32 1.0, %v1291
      %v1293 = vrcp.pop %v1226
      %v1294 = vmul.f32 1.0, %v1293
      %v1295 = vrcp.pop %v1227
      %v1296 = vmul.f32 1.0, %v1295
      %v1297 = vrcp.pop %v1228
      %v1298 = vmul.f32 1.0, %v1297
      %v1299 = vrcp.pop %v1229
      %v1300 = vmul.f32 1.0, %v1299
      %v1301 = vrcp.pop %v1230
      %v1302 = vmul.f32 1.0, %v1301
      %v1303 = vrcp.pop %v1231
      %v1304 = vmul.f32 1.0, %v1303
      %v1305 = vrcp.pop %v1232
      %v1306 = vmul.f32 1.0, %v1305
      %v1307 = vrcp.pop %v1233
      %v1308 = vmul.f32 1.0, %v1307
      %v1309 = vrcp.pop %v1234
      %v1310 = vmul.f32 1.0, %v1309
      %v1311 = vrcp.pop %v1235
      %v1312 = vmul.f32 1.0, %v1311
      %v1313 = vrcp.pop %v1236
      %v1314 = vmul.f32 1.0, %v1313
      %v1315 = vrcp.pop %v1237
      %v1316 = vmul.f32 1.0, %v1315
      %v1317 = vrcp.pop %v1238
      %v1318 = vmul.f32 1.0, %v1317
      %v1319 = vrcp.pop %v1239
      %v1320 = vmul.f32 1.0, %v1319
      %v1321 = vrcp.pop %v1240
      %v1322 = vmul.f32 1.0, %v1321
      %v1323 = vrcp.pop %v1241
      %v1324 = vmul.f32 1.0, %v1323
      %v1325 = vrcp.pop %v1242
      %v1326 = vmul.f32 1.0, %v1325
      %v1327 = vrcp.pop %v1243
      %v1328 = vmul.f32 1.0, %v1327
      %v1329 = vrcp.pop %v1244
      %v1330 = vmul.f32 1.0, %v1329
      %v1331 = vrcp.pop %v1245
      %v1332 = vmul.f32 1.0, %v1331
      %v1333 = vrcp.pop %v1246
      %v1334 = vmul.f32 1.0, %v1333
      %v1335 = vrcp.pop %v1247
      %v1336 = vmul.f32 1.0, %v1335
      %v1337 = vrcp.pop %v1248
      %v1338 = vmul.f32 1.0, %v1337
      %v1339 = vrcp.pop %v1249
      %v1340 = vmul.f32 1.0, %v1339
      %v1341 = vrcp.pop %v1250
      %v1342 = vmul.f32 1.0, %v1341
      %v1343 = vrcp.pop %v1251
      %v1344 = vmul.f32 1.0, %v1343
      %v1345 = vrcp.pop %v1252
      %v1346 = vmul.f32 1.0, %v1345
      %v1347 = vrcp.pop %v1253
      %v1348 = vmul.f32 1.0, %v1347
      %v1349 = vrcp.pop %v1254
      %v1350 = vmul.f32 1.0, %v1349
      %v1351 = vrcp.pop %v1255
      %v1352 = vmul.f32 1.0, %v1351
      %v1353 = vrcp.pop %v1256
      %v1354 = vmul.f32 1.0, %v1353
      %v1355 = vrcp.pop %v1257
      %v1356 = vmul.f32 1.0, %v1355
      %v1357 = vrcp.pop %v1258
      %v1358 = vmul.f32 1.0, %v1357
      %v1359 = vrcp.pop %v1259
      %v1360 = vmul.f32 1.0, %v1359
      %v1361 = vrcp.pop %v1260
      %v1362 = vmul.f32 1.0, %v1361
      %v1363 = vrcp.pop %v1261
      %v1364 = vmul.f32 1.0, %v1363
      %v1365 = vrcp.pop %v1262
      %v1366 = vmul.f32 1.0, %v1365
      %v1367 = vrcp.pop %v1263
      %v1368 = vmul.f32 1.0, %v1367
      %v1369 = vrcp.pop %v1264
      %v1370 = vmul.f32 1.0, %v1369
      %v1371 = vrcp.pop %v1265
      %v1372 = vmul.f32 1.0, %v1371
      %v1373 = vrcp.pop %v1266
      %v1374 = vmul.f32 1.0, %v1373
      %v1375 = vrcp.pop %v1267
      %v1376 = vmul.f32 1.0, %v1375
      %v1377 = vrcp.pop %v1268
      %v1378 = vmul.f32 1.0, %v1377
      %v1379 = vrcp.pop %v1269
      %v1380 = vmul.f32 1.0, %v1379
      %v1381 = vrcp.pop %v1270
      %v1382 = vmul.f32 1.0, %v1381
      %v1383 = vrcp.pop %v1271
      %v1384 = vmul.f32 1.0, %v1383
      %v1385 = vrcp.pop %v1272
      %v1386 = vmul.f32 1.0, %v1385
      %v1387 = vrcp.pop %v1273
      %v1388 = vmul.f32 1.0, %v1387
      %v1389 = vrcp.pop %v1274
      %v1390 = vmul.f32 1.0, %v1389
      %v1391 = vrcp.pop %v1275
      %v1392 = vmul.f32 1.0, %v1391
      %v1393 = vrcp.pop %v1276
      %v1394 = vmul.f32 1.0, %v1393
      %v1395 = vrcp.pop %v1277
      %v1396 = vmul.f32 1.0, %v1395
      %v1397 = vrcp.pop %v1278
      %v1398 = vmul.f32 1.0, %v1397
      %v1399 = vrcp.pop %v1279
      %v1400 = vmul.f32 1.0, %v1399
      %v1401 = vrcp.pop %v1280
      %v1402 = vmul.f32 1.0, %v1401
      %v1403 = vrcp.pop %v1281
      %v1404 = vmul.f32 1.0, %v1403
      %v1405 = vrcp.pop %v1282
      %v1406 = vmul.f32 1.0, %v1405
      %v1407 = vrcp.pop %v1283
      %v1408 = vmul.f32 1.0, %v1407
      %v1409 = vrcp.pop %v1284
      %v1410 = vmul.f32 1.0, %v1409
      %v1411 = vrcp.pop %v1285
      %v1412 = vmul.f32 1.0, %v1411
      %v1413 = vrcp.pop %v1286
      %v1414 = vmul.f32 1.0, %v1413
      %v1415 = vmul.f32 %v777, %v1288
      %v1416 = vmul.f32 %v780, %v1290
      %v1417 = vmul.f32 %v785, %v1292
      %v1418 = vmul.f32 %v788, %v1294
      %v1419 = vmul.f32 %v793, %v1296
      %v1420 = vmul.f32 %v796, %v1298
      %v1421 = vmul.f32 %v801, %v1300
      %v1422 = vmul.f32 %v804, %v1302
      %v1423 = vmul.f32 %v809, %v1304
      %v1424 = vmul.f32 %v812, %v1306
      %v1425 = vmul.f32 %v817, %v1308
      %v1426 = vmul.f32 %v820, %v1310
      %v1427 = vmul.f32 %v825, %v1312
      %v1428 = vmul.f32 %v828, %v1314
      %v1429 = vmul.f32 %v833, %v1316
      %v1430 = vmul.f32 %v836, %v1318
      %v1431 = vmul.f32 %v841, %v1320
      %v1432 = vmul.f32 %v844, %v1322
      %v1433 = vmul.f32 %v849, %v1324
      %v1434 = vmul.f32 %v852, %v1326
      %v1435 = vmul.f32 %v857, %v1328
      %v1436 = vmul.f32 %v860, %v1330
      %v1437 = vmul.f32 %v865, %v1332
      %v1438 = vmul.f32 %v868, %v1334
      %v1439 = vmul.f32 %v873, %v1336
      %v1440 = vmul.f32 %v876, %v1338
      %v1441 = vmul.f32 %v881, %v1340
      %v1442 = vmul.f32 %v884, %v1342
      %v1443 = vmul.f32 %v889, %v1344
      %v1444 = vmul.f32 %v892, %v1346
      %v1445 = vmul.f32 %v897, %v1348
      %v1446 = vmul.f32 %v900, %v1350
      %v1447 = vmul.f32 %v905, %v1352
      %v1448 = vmul.f32 %v908, %v1354
      %v1449 = vmul.f32 %v913, %v1356
      %v1450 = vmul.f32 %v916, %v1358
      %v1451 = vmul.f32 %v921, %v1360
      %v1452 = vmul.f32 %v924, %v1362
      %v1453 = vmul.f32 %v929, %v1364
      %v1454 = vmul.f32 %v932, %v1366
      %v1455 = vmul.f32 %v937, %v1368
      %v1456 = vmul.f32 %v940, %v1370
      %v1457 = vmul.f32 %v945, %v1372
      %v1458 = vmul.f32 %v948, %v1374
      %v1459 = vmul.f32 %v953, %v1376
      %v1460 = vmul.f32 %v956, %v1378
      %v1461 = vmul.f32 %v961, %v1380
      %v1462 = vmul.f32 %v964, %v1382
      %v1463 = vmul.f32 %v969, %v1384
      %v1464 = vmul.f32 %v972, %v1386
      %v1465 = vmul.f32 %v977, %v1388
      %v1466 = vmul.f32 %v980, %v1390
      %v1467 = vmul.f32 %v985, %v1392
      %v1468 = vmul.f32 %v988, %v1394
      %v1469 = vmul.f32 %v993, %v1396
      %v1470 = vmul.f32 %v996, %v1398
      %v1471 = vmul.f32 %v1001, %v1400
      %v1472 = vmul.f32 %v1004, %v1402
      %v1473 = vmul.f32 %v1009, %v1404
      %v1474 = vmul.f32 %v1012, %v1406
      %v1475 = vmul.f32 %v1017, %v1408
      %v1476 = vmul.f32 %v1020, %v1410
      %v1477 = vmul.f32 %v1025, %v1412
      %v1478 = vmul.f32 %v1028, %v1414
      %v1479 = vpack.c.bf16 %v1416, %v1415
      %v1480 = vpack.c.bf16 %v1418, %v1417
      %v1481 = vpack.c.bf16 %v1420, %v1419
      %v1482 = vpack.c.bf16 %v1422, %v1421
      %v1483 = vpack.c.bf16 %v1424, %v1423
      %v1484 = vpack.c.bf16 %v1426, %v1425
      %v1485 = vpack.c.bf16 %v1428, %v1427
      %v1486 = vpack.c.bf16 %v1430, %v1429
      %v1487 = vpack.c.bf16 %v1432, %v1431
      %v1488 = vpack.c.bf16 %v1434, %v1433
      %v1489 = vpack.c.bf16 %v1436, %v1435
      %v1490 = vpack.c.bf16 %v1438, %v1437
      %v1491 = vpack.c.bf16 %v1440, %v1439
      %v1492 = vpack.c.bf16 %v1442, %v1441
      %v1493 = vpack.c.bf16 %v1444, %v1443
      %v1494 = vpack.c.bf16 %v1446, %v1445
      %v1495 = vpack.c.bf16 %v1448, %v1447
      %v1496 = vpack.c.bf16 %v1450, %v1449
      %v1497 = vpack.c.bf16 %v1452, %v1451
      %v1498 = vpack.c.bf16 %v1454, %v1453
      %v1499 = vpack.c.bf16 %v1456, %v1455
      %v1500 = vpack.c.bf16 %v1458, %v1457
      %v1501 = vpack.c.bf16 %v1460, %v1459
      %v1502 = vpack.c.bf16 %v1462, %v1461
      %v1503 = vpack.c.bf16 %v1464, %v1463
      %v1504 = vpack.c.bf16 %v1466, %v1465
      %v1505 = vpack.c.bf16 %v1468, %v1467
      %v1506 = vpack.c.bf16 %v1470, %v1469
      %v1507 = vpack.c.bf16 %v1472, %v1471
      %v1508 = vpack.c.bf16 %v1474, %v1473
      %v1509 = vpack.c.bf16 %v1476, %v1475
      %v1510 = vpack.c.bf16 %v1478, %v1477
      %v1543 = vunpack.c.l.b16 %v1479
      %v1544 = vunpack.c.h.b16 %v1479
      %v1545 = vunpack.c.l.b16 %v1480
      %v1546 = vunpack.c.h.b16 %v1480
      %v1547 = vunpack.c.l.b16 %v1481
      %v1548 = vunpack.c.h.b16 %v1481
      %v1549 = vunpack.c.l.b16 %v1482
      %v1550 = vunpack.c.h.b16 %v1482
      %v1551 = vunpack.c.l.b16 %v1483
      %v1552 = vunpack.c.h.b16 %v1483
      %v1553 = vunpack.c.l.b16 %v1484
      %v1554 = vunpack.c.h.b16 %v1484
      %v1555 = vunpack.c.l.b16 %v1485
      %v1556 = vunpack.c.h.b16 %v1485
      %v1557 = vunpack.c.l.b16 %v1486
      %v1558 = vunpack.c.h.b16 %v1486
      %v1559 = vunpack.c.l.b16 %v1487
      %v1560 = vunpack.c.h.b16 %v1487
      %v1561 = vunpack.c.l.b16 %v1488
      %v1562 = vunpack.c.h.b16 %v1488
      %v1563 = vunpack.c.l.b16 %v1489
      %v1564 = vunpack.c.h.b16 %v1489
      %v1565 = vunpack.c.l.b16 %v1490
      %v1566 = vunpack.c.h.b16 %v1490
      %v1567 = vunpack.c.l.b16 %v1491
      %v1568 = vunpack.c.h.b16 %v1491
      %v1569 = vunpack.c.l.b16 %v1492
      %v1570 = vunpack.c.h.b16 %v1492
      %v1571 = vunpack.c.l.b16 %v1493
      %v1572 = vunpack.c.h.b16 %v1493
      %v1573 = vunpack.c.l.b16 %v1494
      %v1574 = vunpack.c.h.b16 %v1494
      %v1575 = vunpack.c.l.b16 %v1495
      %v1576 = vunpack.c.h.b16 %v1495
      %v1577 = vunpack.c.l.b16 %v1496
      %v1578 = vunpack.c.h.b16 %v1496
      %v1579 = vunpack.c.l.b16 %v1497
      %v1580 = vunpack.c.h.b16 %v1497
      %v1581 = vunpack.c.l.b16 %v1498
      %v1582 = vunpack.c.h.b16 %v1498
      %v1583 = vunpack.c.l.b16 %v1499
      %v1584 = vunpack.c.h.b16 %v1499
      %v1585 = vunpack.c.l.b16 %v1500
      %v1586 = vunpack.c.h.b16 %v1500
      %v1587 = vunpack.c.l.b16 %v1501
      %v1588 = vunpack.c.h.b16 %v1501
      %v1589 = vunpack.c.l.b16 %v1502
      %v1590 = vunpack.c.h.b16 %v1502
      %v1591 = vunpack.c.l.b16 %v1503
      %v1592 = vunpack.c.h.b16 %v1503
      %v1593 = vunpack.c.l.b16 %v1504
      %v1594 = vunpack.c.h.b16 %v1504
      %v1595 = vunpack.c.l.b16 %v1505
      %v1596 = vunpack.c.h.b16 %v1505
      %v1597 = vunpack.c.l.b16 %v1506
      %v1598 = vunpack.c.h.b16 %v1506
      %v1599 = vunpack.c.l.b16 %v1507
      %v1600 = vunpack.c.h.b16 %v1507
      %v1601 = vunpack.c.l.b16 %v1508
      %v1602 = vunpack.c.h.b16 %v1508
      %v1603 = vunpack.c.l.b16 %v1509
      %v1604 = vunpack.c.h.b16 %v1509
      %v1605 = vunpack.c.l.b16 %v1510
      %v1606 = vunpack.c.h.b16 %v1510
      %v1607 = vpack.c.b16 %v1543, %v1543
      %v1608 = vpack.c.b16 %v1544, %v1544
      %v1609 = vpack.c.b16 %v1545, %v1545
      %v1610 = vpack.c.b16 %v1546, %v1546
      %v1611 = vpack.c.b16 %v1547, %v1547
      %v1612 = vpack.c.b16 %v1548, %v1548
      %v1613 = vpack.c.b16 %v1549, %v1549
      %v1614 = vpack.c.b16 %v1550, %v1550
      %v1615 = vpack.c.b16 %v1551, %v1551
      %v1616 = vpack.c.b16 %v1552, %v1552
      %v1617 = vpack.c.b16 %v1553, %v1553
      %v1618 = vpack.c.b16 %v1554, %v1554
      %v1619 = vpack.c.b16 %v1555, %v1555
      %v1620 = vpack.c.b16 %v1556, %v1556
      %v1621 = vpack.c.b16 %v1557, %v1557
      %v1622 = vpack.c.b16 %v1558, %v1558
      %v1623 = vpack.c.b16 %v1559, %v1559
      %v1624 = vpack.c.b16 %v1560, %v1560
      %v1625 = vpack.c.b16 %v1561, %v1561
      %v1626 = vpack.c.b16 %v1562, %v1562
      %v1627 = vpack.c.b16 %v1563, %v1563
      %v1628 = vpack.c.b16 %v1564, %v1564
      %v1629 = vpack.c.b16 %v1565, %v1565
      %v1630 = vpack.c.b16 %v1566, %v1566
      %v1631 = vpack.c.b16 %v1567, %v1567
      %v1632 = vpack.c.b16 %v1568, %v1568
      %v1633 = vpack.c.b16 %v1569, %v1569
      %v1634 = vpack.c.b16 %v1570, %v1570
      %v1635 = vpack.c.b16 %v1571, %v1571
      %v1636 = vpack.c.b16 %v1572, %v1572
      %v1637 = vpack.c.b16 %v1573, %v1573
      %v1638 = vpack.c.b16 %v1574, %v1574
      %v1639 = vpack.c.b16 %v1575, %v1575
      %v1640 = vpack.c.b16 %v1576, %v1576
      %v1641 = vpack.c.b16 %v1577, %v1577
      %v1642 = vpack.c.b16 %v1578, %v1578
      %v1643 = vpack.c.b16 %v1579, %v1579
      %v1644 = vpack.c.b16 %v1580, %v1580
      %v1645 = vpack.c.b16 %v1581, %v1581
      %v1646 = vpack.c.b16 %v1582, %v1582
      %v1647 = vpack.c.b16 %v1583, %v1583
      %v1648 = vpack.c.b16 %v1584, %v1584
      %v1649 = vpack.c.b16 %v1585, %v1585
      %v1650 = vpack.c.b16 %v1586, %v1586
      %v1651 = vpack.c.b16 %v1587, %v1587
      %v1652 = vpack.c.b16 %v1588, %v1588
      %v1653 = vpack.c.b16 %v1589, %v1589
      %v1654 = vpack.c.b16 %v1590, %v1590
      %v1655 = vpack.c.b16 %v1591, %v1591
      %v1656 = vpack.c.b16 %v1592, %v1592
      %v1657 = vpack.c.b16 %v1593, %v1593
      %v1658 = vpack.c.b16 %v1594, %v1594
      %v1659 = vpack.c.b16 %v1595, %v1595
      %v1660 = vpack.c.b16 %v1596, %v1596
      %v1661 = vpack.c.b16 %v1597, %v1597
      %v1662 = vpack.c.b16 %v1598, %v1598
      %v1663 = vpack.c.b16 %v1599, %v1599
      %v1664 = vpack.c.b16 %v1600, %v1600
      %v1665 = vpack.c.b16 %v1601, %v1601
      %v1666 = vpack.c.b16 %v1602, %v1602
      %v1667 = vpack.c.b16 %v1603, %v1603
      %v1668 = vpack.c.b16 %v1604, %v1604
      %v1669 = vpack.c.b16 %v1605, %v1605
      %v1670 = vpack.c.b16 %v1606, %v1606
      %vm1735 = vcmask 125952
      %1736 = vst.msk [vmem:[%s211] sm:$0xf] %vm1735, %v1607
      %1737 = vst.msk [vmem:[%s211 + $0x4] sm:$0xf] %vm1735, %v1608
      %1738 = vst.msk [vmem:[%s211 + $0x8] sm:$0xf] %vm1735, %v1609
      %1739 = vst.msk [vmem:[%s211 + $0xc] sm:$0xf] %vm1735, %v1610
      %1740 = vst.msk [vmem:[%s211 + $0x10] sm:$0xf] %vm1735, %v1611
      %1741 = vst.msk [vmem:[%s211 + $0x14] sm:$0xf] %vm1735, %v1612
      %1742 = vst.msk [vmem:[%s211 + $0x18] sm:$0xf] %vm1735, %v1613
      %1743 = vst.msk [vmem:[%s211 + $0x1c] sm:$0xf] %vm1735, %v1614
      %1744 = vst.msk [vmem:[%s211 + $0x20] sm:$0xf] %vm1735, %v1615
      %1745 = vst.msk [vmem:[%s211 + $0x24] sm:$0xf] %vm1735, %v1616
      %1746 = vst.msk [vmem:[%s211 + $0x28] sm:$0xf] %vm1735, %v1617
      %1747 = vst.msk [vmem:[%s211 + $0x2c] sm:$0xf] %vm1735, %v1618
      %1748 = vst.msk [vmem:[%s211 + $0x30] sm:$0xf] %vm1735, %v1619
      %1749 = vst.msk [vmem:[%s211 + $0x34] sm:$0xf] %vm1735, %v1620
      %1750 = vst.msk [vmem:[%s211 + $0x38] sm:$0xf] %vm1735, %v1621
      %1751 = vst.msk [vmem:[%s211 + $0x3c] sm:$0xf] %vm1735, %v1622
      %1752 = vst.msk [vmem:[%s211 + $0x40] sm:$0xf] %vm1735, %v1623
      %1753 = vst.msk [vmem:[%s211 + $0x44] sm:$0xf] %vm1735, %v1624
      %1754 = vst.msk [vmem:[%s211 + $0x48] sm:$0xf] %vm1735, %v1625
      %1755 = vst.msk [vmem:[%s211 + $0x4c] sm:$0xf] %vm1735, %v1626
      %1756 = vst.msk [vmem:[%s211 + $0x50] sm:$0xf] %vm1735, %v1627
      %1757 = vst.msk [vmem:[%s211 + $0x54] sm:$0xf] %vm1735, %v1628
      %1758 = vst.msk [vmem:[%s211 + $0x58] sm:$0xf] %vm1735, %v1629
      %1759 = vst.msk [vmem:[%s211 + $0x5c] sm:$0xf] %vm1735, %v1630
      %1760 = vst.msk [vmem:[%s211 + $0x60] sm:$0xf] %vm1735, %v1631
      %1761 = vst.msk [vmem:[%s211 + $0x64] sm:$0xf] %vm1735, %v1632
      %1762 = vst.msk [vmem:[%s211 + $0x68] sm:$0xf] %vm1735, %v1633
      %1763 = vst.msk [vmem:[%s211 + $0x6c] sm:$0xf] %vm1735, %v1634
      %1764 = vst.msk [vmem:[%s211 + $0x70] sm:$0xf] %vm1735, %v1635
      %1765 = vst.msk [vmem:[%s211 + $0x74] sm:$0xf] %vm1735, %v1636
      %1766 = vst.msk [vmem:[%s211 + $0x78] sm:$0xf] %vm1735, %v1637
      %1767 = vst.msk [vmem:[%s211 + $0x7c] sm:$0xf] %vm1735, %v1638
      %1768 = vst.msk [vmem:[%s211 + $0x80] sm:$0xf] %vm1735, %v1639
      %1769 = vst.msk [vmem:[%s211 + $0x84] sm:$0xf] %vm1735, %v1640
      %1770 = vst.msk [vmem:[%s211 + $0x88] sm:$0xf] %vm1735, %v1641
      %1771 = vst.msk [vmem:[%s211 + $0x8c] sm:$0xf] %vm1735, %v1642
      %1772 = vst.msk [vmem:[%s211 + $0x90] sm:$0xf] %vm1735, %v1643
      %1773 = vst.msk [vmem:[%s211 + $0x94] sm:$0xf] %vm1735, %v1644
      %1774 = vst.msk [vmem:[%s211 + $0x98] sm:$0xf] %vm1735, %v1645
      %1775 = vst.msk [vmem:[%s211 + $0x9c] sm:$0xf] %vm1735, %v1646
      %1776 = vst.msk [vmem:[%s211 + $0xa0] sm:$0xf] %vm1735, %v1647
      %1777 = vst.msk [vmem:[%s211 + $0xa4] sm:$0xf] %vm1735, %v1648
      %1778 = vst.msk [vmem:[%s211 + $0xa8] sm:$0xf] %vm1735, %v1649
      %1779 = vst.msk [vmem:[%s211 + $0xac] sm:$0xf] %vm1735, %v1650
      %1780 = vst.msk [vmem:[%s211 + $0xb0] sm:$0xf] %vm1735, %v1651
      %1781 = vst.msk [vmem:[%s211 + $0xb4] sm:$0xf] %vm1735, %v1652
      %1782 = vst.msk [vmem:[%s211 + $0xb8] sm:$0xf] %vm1735, %v1653
      %1783 = vst.msk [vmem:[%s211 + $0xbc] sm:$0xf] %vm1735, %v1654
      %1784 = vst.msk [vmem:[%s211 + $0xc0] sm:$0xf] %vm1735, %v1655
      %1785 = vst.msk [vmem:[%s211 + $0xc4] sm:$0xf] %vm1735, %v1656
      %1786 = vst.msk [vmem:[%s211 + $0xc8] sm:$0xf] %vm1735, %v1657
      %1787 = vst.msk [vmem:[%s211 + $0xcc] sm:$0xf] %vm1735, %v1658
      %1788 = vst.msk [vmem:[%s211 + $0xd0] sm:$0xf] %vm1735, %v1659
      %1789 = vst.msk [vmem:[%s211 + $0xd4] sm:$0xf] %vm1735, %v1660
      %1790 = vst.msk [vmem:[%s211 + $0xd8] sm:$0xf] %vm1735, %v1661
      %1791 = vst.msk [vmem:[%s211 + $0xdc] sm:$0xf] %vm1735, %v1662
      %1792 = vst.msk [vmem:[%s211 + $0xe0] sm:$0xf] %vm1735, %v1663
      %1793 = vst.msk [vmem:[%s211 + $0xe4] sm:$0xf] %vm1735, %v1664
      %1794 = vst.msk [vmem:[%s211 + $0xe8] sm:$0xf] %vm1735, %v1665
      %1795 = vst.msk [vmem:[%s211 + $0xec] sm:$0xf] %vm1735, %v1666
      %1796 = vst.msk [vmem:[%s211 + $0xf0] sm:$0xf] %vm1735, %v1667
      %1797 = vst.msk [vmem:[%s211 + $0xf4] sm:$0xf] %vm1735, %v1668
      %1798 = vst.msk [vmem:[%s211 + $0xf8] sm:$0xf] %vm1735, %v1669
      %1799 = vst.msk [vmem:[%s211 + $0xfc] sm:$0xf] %vm1735, %v1670
      %s1800 = smul.u32 64, %s19
      %p1801 = scmp.lt.s32.totalorder %s18, 1
      %s1802 = scalar_select %p1801, %s18, 1
      %p1803 = scmp.lt.s32.totalorder %s1800, 127
      %s1804 = scalar_select %p1803, %s1800, 127
      %s1805 = smul.addr %s1802, 128
      %s1806 = sadd.s32 %s1804, %s1805
      %s1807 = smul.addr %s1806, 4
      %s1808 = scalar_lea.vmem %s3, %s1807
      // Predicated region
      $region33: #{_lambda_.9} parent=31 // pred_check
        %p1809 = pneg %p116
      $region34: #{_lambda_.9} parent=31 // pred_check_branch
        %1811 = sbr.rel (%p1809) target = $region36
      $region35: #{_lambda_.9} parent=31 // pred_region
        %s1812 = smul.u32 64, %s19
      $region36: #{_lambda_.9} parent=31 // pred_fallthru
        _
    $region32: #{_lambda_.9} parent=5 // pred_fallthru
      _
    %p1813 = scmp.le.s32.totalorder 2, %s9
    // Predicated region
    $region37: #{_lambda_.9} parent=5 // pred_check
      %p1814 = pneg %p1813
    $region38: #{_lambda_.9} parent=5 // pred_check_branch
      %1816 = sbr.rel (%p1814) target = $region40
    $region39: #{_lambda_.9} parent=5 // pred_region
      %s1817 = ssub.s32 %s9, 2
      // Predicated region
      $region41: #{_lambda_.9} parent=39 // pred_check
        %p1818 = pneg %p122
      $region42: #{_lambda_.9} parent=39 // pred_check_branch
        %1820 = sbr.rel (%p1818) target = $region44
      $region43: #{_lambda_.9} parent=39 // pred_region
        %s1821 = smul.u32 64, %s21
        %p1822 = scmp.lt.s32.totalorder %s20, 1
        %s1823 = scalar_select %p1822, %s20, 1
        %p1824 = scmp.lt.s32.totalorder %s1821, 127
        %s1825 = scalar_select %p1824, %s1821, 127
        %s1826 = smul.addr %s1823, 128
        %s1827 = sadd.s32 %s1825, %s1826
        %s1828 = smul.addr %s1827, 4
        %s1829 = scalar_lea.vmem %s3, %s1828
      $region44: #{_lambda_.9} parent=39 // pred_fallthru
        _
    $region40: #{_lambda_.9} parent=5 // pred_fallthru
      _
  $region6: #{_lambda_.9} parent=0 // loop_footer
    %s13 = sadd.s32 1, %s9
  $region7: #{_lambda_.9} parent=0 // loop_footer_branch
    %8 = sbr.rel target = $region3
  $region8: #{_lambda_.9} parent=0 // loop_exit
    _

// kernel: _lambda_.10
$region0: #{_lambda_.10}
  #allocation0 [shape = 'u32[]', space=smem, size = 0x4, offset = 0x4, fixed_abs, tag = 'smem constant byte address 0x4 - core index']
  #allocation1 [shape = 'u32[144,128]{1,0:T(1,128)}', space=vmem, size = 0x12000, scoped, tag = 'internal scratch']
  %s0 = inlined_call_operand.vmem [shape: bf16[2,256,144], index: 0, kind: input, shape index: {}]
  %s1 = inlined_call_operand.vmem [shape: bf16[144,32], index: 1, kind: input, shape index: {}]
  %s2 = inlined_call_operand.vmem [shape: f32[1,32], index: 2, kind: input, shape index: {}]
  %s3 = inlined_call_operand.vmem [shape: bf16[2,256,32], index: 3, kind: output, shape index: {}]
  %s4 = sld [smem:[#allocation0]]
  $region45: #{_lambda_.10} parent=0
    _
  %s6 = ssub.s32 1, %s4
  %s7 = scalar_select 0, %s6, %s4
  loop: start=0, step=1, limit=4
  $region2: #{_lambda_.10} parent=0 // loop_pre_header
    _
  $region3: #{_lambda_.10} parent=0 // loop_header
    %s9 = sphi 0, %s13
    %p10 = scmp.ge.s32.totalorder %s9, 4
    %s16 = sphi 0, %s28
    %s17 = sphi 0, %s24
    %s18 = sphi 0, %s16
    %s19 = sphi 0, %s17
    %s20 = sphi 0, %s18
    %s21 = sphi 0, %s19
    %s33 = sphi 0, %s35
    %s36 = sphi 0, %s33
    %s37 = sphi 0, %s36
    %s53 = sphi 0, %s37
    %s57 = sphi 0, %s57
    %s59 = sphi 0, %s57
    %s60 = sphi 0, %s59
    %s74 = sphi 0, %s60
    %s78 = sphi 0, %s78
    %s80 = sphi 0, %s78
    %s81 = sphi 0, %s80
    %s95 = sphi 0, %s81
    %s103 = sphi 0, %s105
    %s106 = sphi 0, %s103
    %s107 = sphi 0, %s106
    %s123 = sphi 0, %s107
  $region4: #{_lambda_.10} parent=0 // loop_header_branch
    %12 = sbr.rel (%p10) target = $region8
  $region5: #{_lambda_.10} parent=0 // loop_body
    %s14 = ssub.s32 %s9, 1
    %s15 = ssub.s32 %s9, 2
    %s22 = sadd.s32 1, %s17
    %p23 = scmp.ge.s32.totalorder %s22, 1
    %s24 = scalar_select %p23, 0, %s22
    %s25 = sadd.s32 1, %s16
    %s26 = scalar_select %p23, %s25, %s16
    %p27 = scmp.ge.s32.totalorder %s26, 2
    %s28 = scalar_select %p27, 0, %s26
    %s29 = ssub.s32 %s16, %s28
    %s30 = ssub.s32 %s17, %s24
    %s31 = sor.u32 %s29, %s30
    %p32 = scmp.eq.s32.totalorder %s31, 0
    %s34 = sadd.s32 %s33, 1
    %s35 = scalar_select %p32, %s33, %s34
    %p38 = pneg %p32
    %p39 = scmp.eq.s32.totalorder %s9, 1
    %p40 = por %p38, %p39
    %p41 = scmp.ne.s32.totalorder %s33, %s36
    %p42 = scmp.eq.s32.totalorder %s9, 0
    %p43 = por %p41, %p42
    %p44 = scmp.ne.s32.totalorder %s33, %s36
    %p45 = scmp.eq.s32.totalorder %s14, 1
    %p46 = por %p44, %p45
    %p47 = scmp.ne.s32.totalorder %s36, %s37
    %p48 = scmp.eq.s32.totalorder %s14, 0
    %p49 = por %p47, %p48
    %p50 = scmp.ne.s32.totalorder %s36, %s37
    %p51 = scmp.eq.s32.totalorder %s15, 1
    %p52 = por %p50, %p51
    %p54 = scmp.ne.s32.totalorder %s37, %s53
    %p55 = scmp.eq.s32.totalorder %s15, 0
    %p56 = por %p54, %p55
    %s58 = sadd.s32 %s57, 1
    %p61 = scmp.eq.s32.totalorder %s9, 1
    %p62 = scmp.ne.s32.totalorder %s57, %s59
    %p63 = scmp.eq.s32.totalorder %s9, 0
    %p64 = por %p62, %p63
    %p65 = scmp.ne.s32.totalorder %s57, %s59
    %p66 = scmp.eq.s32.totalorder %s14, 1
    %p67 = por %p65, %p66
    %p68 = scmp.ne.s32.totalorder %s59, %s60
    %p69 = scmp.eq.s32.totalorder %s14, 0
    %p70 = por %p68, %p69
    %p71 = scmp.ne.s32.totalorder %s59, %s60
    %p72 = scmp.eq.s32.totalorder %s15, 1
    %p73 = por %p71, %p72
    %p75 = scmp.ne.s32.totalorder %s60, %s74
    %p76 = scmp.eq.s32.totalorder %s15, 0
    %p77 = por %p75, %p76
    %s79 = sadd.s32 %s78, 1
    %p82 = scmp.eq.s32.totalorder %s9, 1
    %p83 = scmp.ne.s32.totalorder %s78, %s80
    %p84 = scmp.eq.s32.totalorder %s9, 0
    %p85 = por %p83, %p84
    %p86 = scmp.ne.s32.totalorder %s78, %s80
    %p87 = scmp.eq.s32.totalorder %s14, 1
    %p88 = por %p86, %p87
    %p89 = scmp.ne.s32.totalorder %s80, %s81
    %p90 = scmp.eq.s32.totalorder %s14, 0
    %p91 = por %p89, %p90
    %p92 = scmp.ne.s32.totalorder %s80, %s81
    %p93 = scmp.eq.s32.totalorder %s15, 1
    %p94 = por %p92, %p93
    %p96 = scmp.ne.s32.totalorder %s81, %s95
    %p97 = scmp.eq.s32.totalorder %s15, 0
    %p98 = por %p96, %p97
    %s99 = ssub.s32 %s16, %s28
    %s100 = ssub.s32 %s17, %s24
    %s101 = sor.u32 %s99, %s100
    %p102 = scmp.eq.s32.totalorder %s101, 0
    %s104 = sadd.s32 %s103, 1
    %s105 = scalar_select %p102, %s103, %s104
    %p108 = pneg %p102
    %p109 = scmp.eq.s32.totalorder %s9, 1
    %p110 = por %p108, %p109
    %p111 = scmp.ne.s32.totalorder %s103, %s106
    %p112 = scmp.eq.s32.totalorder %s9, 0
    %p113 = por %p111, %p112
    %p114 = scmp.ne.s32.totalorder %s103, %s106
    %p115 = scmp.eq.s32.totalorder %s14, 1
    %p116 = por %p114, %p115
    %p117 = scmp.ne.s32.totalorder %s106, %s107
    %p118 = scmp.eq.s32.totalorder %s14, 0
    %p119 = por %p117, %p118
    %p120 = scmp.ne.s32.totalorder %s106, %s107
    %p121 = scmp.eq.s32.totalorder %s15, 1
    %p122 = por %p120, %p121
    %p124 = scmp.ne.s32.totalorder %s107, %s123
    %p125 = scmp.eq.s32.totalorder %s15, 0
    %p126 = por %p124, %p125
    %p127 = scmp.le.s32.totalorder 1, %s9
    %p128 = scmp.lt.s32.totalorder %s9, 3
    %p129 = pnand %p127, %p128
    %p130 = pneg %p129
    // Predicated region
    $region9: #{_lambda_.10} parent=5 // pred_check
      _
    $region10: #{_lambda_.10} parent=5 // pred_check_branch
      %132 = sbr.rel (%p129) target = $region12
    $region11: #{_lambda_.10} parent=5 // pred_region
      %s133 = ssub.s32 %s9, 1
      // Predicated region
      $region13: #{_lambda_.10} parent=11 // pred_check
        %p134 = pneg %p70
      $region14: #{_lambda_.10} parent=11 // pred_check_branch
        %136 = sbr.rel (%p134) target = $region16
      $region15: #{_lambda_.10} parent=11 // pred_region
        _
      $region16: #{_lambda_.10} parent=11 // pred_fallthru
        _
      // Predicated region
      $region17: #{_lambda_.10} parent=11 // pred_check
        %p137 = pneg %p91
      $region18: #{_lambda_.10} parent=11 // pred_check_branch
        %139 = sbr.rel (%p137) target = $region20
      $region19: #{_lambda_.10} parent=11 // pred_region
        _
      $region20: #{_lambda_.10} parent=11 // pred_fallthru
        _
    $region12: #{_lambda_.10} parent=5 // pred_fallthru
      _
    %p140 = scmp.lt.s32.totalorder %s9, 2
    // Predicated region
    $region21: #{_lambda_.10} parent=5 // pred_check
      %p141 = pneg %p140
    $region22: #{_lambda_.10} parent=5 // pred_check_branch
      %143 = sbr.rel (%p141) target = $region24
    $region23: #{_lambda_.10} parent=5 // pred_region
      // Predicated region
      $region25: #{_lambda_.10} parent=23 // pred_check
        %p144 = pneg %p43
      $region26: #{_lambda_.10} parent=23 // pred_check_branch
        %146 = sbr.rel (%p144) target = $region28
      $region27: #{_lambda_.10} parent=23 // pred_region
        %s147 = smul.u32 32, %s17
        %p148 = scmp.lt.s32.totalorder %s16, 1
        %s149 = scalar_select %p148, %s16, 1
        %p150 = scmp.lt.s32.totalorder %s147, 31
        %s151 = scalar_select %p150, %s147, 31
        %s152 = smul.addr %s151, 2
        %s153 = smul.addr %s149, 64
        %s154 = sadd.s32 %s152, %s153
        %s155 = smul.addr %s154, 4
        %s156 = scalar_lea.vmem %s0, %s155
        %s157 = smul.u32 32, %s17
      $region28: #{_lambda_.10} parent=23 // pred_fallthru
        _
    $region24: #{_lambda_.10} parent=5 // pred_fallthru
      _
    %p158 = scmp.le.s32.totalorder 1, %s9
    %p159 = scmp.lt.s32.totalorder %s9, 3
    %p160 = pnand %p158, %p159
    %p161 = pneg %p160
    // Predicated region
    $region29: #{_lambda_.10} parent=5 // pred_check
      _
    $region30: #{_lambda_.10} parent=5 // pred_check_branch
      %163 = sbr.rel (%p160) target = $region32
    $region31: #{_lambda_.10} parent=5 // pred_region
      %s164 = ssub.s32 %s9, 1
      %s165 = smul.u32 32, %s19
      %p166 = scmp.lt.s32.totalorder %s18, 1
      %s167 = scalar_select %p166, %s18, 1
      %p168 = scmp.lt.s32.totalorder %s165, 31
      %s169 = scalar_select %p168, %s165, 31
      %s170 = smul.addr %s169, 2
      %s171 = smul.addr %s167, 64
      %s172 = sadd.s32 %s170, %s171
      %s173 = smul.addr %s172, 4
      %s174 = scalar_lea.vmem %s0, %s173
      %p175 = pneg %p49
      %p176 = pneg %p46
      %p177 = pneg %p70
      %p178 = pneg %p67
      %p179 = pneg %p91
      %p180 = pneg %p88
      %p181 = pneg %p119
      %p182 = pneg %p116
      %s183 = smul.u32 32, %s19
      %p184 = scmp.lt.s32.totalorder %s18, 1
      %s185 = scalar_select %p184, %s18, 1
      %p186 = scmp.lt.s32.totalorder %s183, 31
      %s187 = scalar_select %p186, %s183, 31
      %s188 = smul.addr %s185, 32
      %s189 = sadd.s32 %s187, %s188
      %s190 = smul.addr %s189, 4
      %s191 = scalar_lea.vmem %s3, %s190
      %s192 = smul.u32 32, %s19
      %p193 = scmp.lt.s32.totalorder %s18, 1
      %s194 = scalar_select %p193, %s18, 1
      %p195 = scmp.lt.s32.totalorder %s192, 31
      %s196 = scalar_select %p195, %s192, 31
      %s197 = smul.addr %s196, 2
      %s198 = smul.addr %s194, 64
      %s199 = sadd.s32 %s197, %s198
      %s200 = smul.addr %s199, 4
      %s201 = scalar_lea.vmem %s0, %s200
      %s202 = smul.u32 32, %s19
      %s203 = smul.u32 32, %s19
      %p204 = scmp.lt.s32.totalorder %s18, 1
      %s205 = scalar_select %p204, %s18, 1
      %p206 = scmp.lt.s32.totalorder %s203, 31
      %s207 = scalar_select %p206, %s203, 31
      %s208 = smul.addr %s205, 32
      %s209 = sadd.s32 %s207, %s208
      %s210 = smul.addr %s209, 4
      %s211 = scalar_lea.vmem %s3, %s210
      %s212 = smul.u32 32, %s19
      %v214 = vld [vmem:[%s201] sm:$0xff]
      %v215 = vld [vmem:[%s201 + $0x8] sm:$0xff]
      %v216 = vld [vmem:[%s201 + $0x10] sm:$0xff]
      %v217 = vld [vmem:[%s201 + $0x18] sm:$0xff]
      %v218 = vld [vmem:[%s201 + $0x20] sm:$0xff]
      %v219 = vld [vmem:[%s201 + $0x28] sm:$0xff]
      %v220 = vld [vmem:[%s201 + $0x30] sm:$0xff]
      %v221 = vld [vmem:[%s201 + $0x38] sm:$0xff]
      %v222 = vld [vmem:[%s201 + $0x40] sm:$0xff]
      %v223 = vld [vmem:[%s201 + $0x48] sm:$0xff]
      %v224 = vld [vmem:[%s201 + $0x50] sm:$0xff]
      %v225 = vld [vmem:[%s201 + $0x58] sm:$0xff]
      %v226 = vld [vmem:[%s201 + $0x60] sm:$0xff]
      %v227 = vld [vmem:[%s201 + $0x68] sm:$0xff]
      %v228 = vld [vmem:[%s201 + $0x70] sm:$0xff]
      %v229 = vld [vmem:[%s201 + $0x78] sm:$0xff]
      %v230 = vld [vmem:[%s201 + $0x80] sm:$0xff]
      %v231 = vld [vmem:[%s201 + $0x88] sm:$0xff]
      %v232 = vld [vmem:[%s201 + $0x90] sm:$0xff]
      %v233 = vld [vmem:[%s201 + $0x98] sm:$0xff]
      %v234 = vld [vmem:[%s201 + $0xa0] sm:$0xff]
      %v235 = vld [vmem:[%s201 + $0xa8] sm:$0xff]
      %v236 = vld [vmem:[%s201 + $0xb0] sm:$0xff]
      %v237 = vld [vmem:[%s201 + $0xb8] sm:$0xff]
      %v238 = vld [vmem:[%s201 + $0xc0] sm:$0xff]
      %v239 = vld [vmem:[%s201 + $0xc8] sm:$0xff]
      %v240 = vld [vmem:[%s201 + $0xd0] sm:$0xff]
      %v241 = vld [vmem:[%s201 + $0xd8] sm:$0xff]
      %v242 = vld [vmem:[%s201 + $0xe0] sm:$0xff]
      %v243 = vld [vmem:[%s201 + $0xe8] sm:$0xff]
      %v244 = vld [vmem:[%s201 + $0xf0] sm:$0xff]
      %v245 = vld [vmem:[%s201 + $0xf8] sm:$0xff]
      %v246 = vld [vmem:[%s1] sm:$0xf]
      %v247 = vld [vmem:[%s1 + $0x4] sm:$0xf]
      %v248 = vld [vmem:[%s1 + $0x8] sm:$0xf]
      %v249 = vld [vmem:[%s1 + $0xc] sm:$0xf]
      %v250 = vld [vmem:[%s1 + $0x10] sm:$0xf]
      %v251 = vld [vmem:[%s1 + $0x14] sm:$0xf]
      %v252 = vld [vmem:[%s1 + $0x18] sm:$0xf]
      %v253 = vld [vmem:[%s1 + $0x1c] sm:$0xf]
      %v254 = vld [vmem:[%s1 + $0x20] sm:$0xf]
      %v255 = vld [vmem:[%s1 + $0x24] sm:$0xf]
      %v256 = vld [vmem:[%s1 + $0x28] sm:$0xf]
      %v257 = vld [vmem:[%s1 + $0x2c] sm:$0xf]
      %v258 = vld [vmem:[%s1 + $0x30] sm:$0xf]
      %v259 = vld [vmem:[%s1 + $0x34] sm:$0xf]
      %v260 = vld [vmem:[%s1 + $0x38] sm:$0xf]
      %v261 = vld [vmem:[%s1 + $0x3c] sm:$0xf]
      %v262 = vld [vmem:[%s1 + $0x40] sm:$0xf]
      %v263 = vld [vmem:[%s1 + $0x44] sm:$0xf]
      %v264 = vld [vmem:[%s2] sm:$0x1]
      %v266 = vlaneseq
      %v267 = vshrl.u32 %v266, 7
      %v268 = vsub.s32 0, %v267
      %v269 = vrot.slane %v264, %v268
      %v303 = vunpack.c.l.b16 %v214
      %v304 = vunpack.c.h.b16 %v214
      %v305 = vunpack.c.l.b16 %v215
      %v306 = vunpack.c.h.b16 %v215
      %v307 = vunpack.c.l.b16 %v216
      %v308 = vunpack.c.h.b16 %v216
      %v309 = vunpack.c.l.b16 %v217
      %v310 = vunpack.c.h.b16 %v217
      %v311 = vunpack.c.l.b16 %v218
      %v312 = vunpack.c.h.b16 %v218
      %v313 = vunpack.c.l.b16 %v219
      %v314 = vunpack.c.h.b16 %v219
      %v315 = vunpack.c.l.b16 %v220
      %v316 = vunpack.c.h.b16 %v220
      %v317 = vunpack.c.l.b16 %v221
      %v318 = vunpack.c.h.b16 %v221
      %v319 = vunpack.c.l.b16 %v222
      %v320 = vunpack.c.h.b16 %v222
      %v321 = vunpack.c.l.b16 %v223
      %v322 = vunpack.c.h.b16 %v223
      %v323 = vunpack.c.l.b16 %v224
      %v324 = vunpack.c.h.b16 %v224
      %v325 = vunpack.c.l.b16 %v225
      %v326 = vunpack.c.h.b16 %v225
      %v327 = vunpack.c.l.b16 %v226
      %v328 = vunpack.c.h.b16 %v226
      %v329 = vunpack.c.l.b16 %v227
      %v330 = vunpack.c.h.b16 %v227
      %v331 = vunpack.c.l.b16 %v228
      %v332 = vunpack.c.h.b16 %v228
      %v333 = vunpack.c.l.b16 %v229
      %v334 = vunpack.c.h.b16 %v229
      %v335 = vunpack.c.l.b16 %v230
      %v336 = vunpack.c.h.b16 %v230
      %v337 = vunpack.c.l.b16 %v231
      %v338 = vunpack.c.h.b16 %v231
      %v339 = vunpack.c.l.b16 %v232
      %v340 = vunpack.c.h.b16 %v232
      %v341 = vunpack.c.l.b16 %v233
      %v342 = vunpack.c.h.b16 %v233
      %v343 = vunpack.c.l.b16 %v234
      %v344 = vunpack.c.h.b16 %v234
      %v345 = vunpack.c.l.b16 %v235
      %v346 = vunpack.c.h.b16 %v235
      %v347 = vunpack.c.l.b16 %v236
      %v348 = vunpack.c.h.b16 %v236
      %v349 = vunpack.c.l.b16 %v237
      %v350 = vunpack.c.h.b16 %v237
      %v351 = vunpack.c.l.b16 %v238
      %v352 = vunpack.c.h.b16 %v238
      %v353 = vunpack.c.l.b16 %v239
      %v354 = vunpack.c.h.b16 %v239
      %v355 = vunpack.c.l.b16 %v240
      %v356 = vunpack.c.h.b16 %v240
      %v357 = vunpack.c.l.b16 %v241
      %v358 = vunpack.c.h.b16 %v241
      %v359 = vunpack.c.l.b16 %v242
      %v360 = vunpack.c.h.b16 %v242
      %v361 = vunpack.c.l.b16 %v243
      %v362 = vunpack.c.h.b16 %v243
      %v363 = vunpack.c.l.b16 %v244
      %v364 = vunpack.c.h.b16 %v244
      %v365 = vunpack.c.l.b16 %v245
      %v366 = vunpack.c.h.b16 %v245
      %v367 = vpack.c.b16 %v305, %v303
      %v368 = vpack.c.b16 %v306, %v304
      %v369 = vpack.c.b16 %v309, %v307
      %v370 = vpack.c.b16 %v310, %v308
      %v371 = vpack.c.b16 %v313, %v311
      %v372 = vpack.c.b16 %v314, %v312
      %v373 = vpack.c.b16 %v317, %v315
      %v374 = vpack.c.b16 %v318, %v316
      %v375 = vpack.c.b16 %v321, %v319
      %v376 = vpack.c.b16 %v322, %v320
      %v377 = vpack.c.b16 %v325, %v323
      %v378 = vpack.c.b16 %v326, %v324
      %v379 = vpack.c.b16 %v329, %v327
      %v380 = vpack.c.b16 %v330, %v328
      %v381 = vpack.c.b16 %v333, %v331
      %v382 = vpack.c.b16 %v334, %v332
      %v383 = vpack.c.b16 %v337, %v335
      %v384 = vpack.c.b16 %v338, %v336
      %v385 = vpack.c.b16 %v341, %v339
      %v386 = vpack.c.b16 %v342, %v340
      %v387 = vpack.c.b16 %v345, %v343
      %v388 = vpack.c.b16 %v346, %v344
      %v389 = vpack.c.b16 %v349, %v347
      %v390 = vpack.c.b16 %v350, %v348
      %v391 = vpack.c.b16 %v353, %v351
      %v392 = vpack.c.b16 %v354, %v352
      %v393 = vpack.c.b16 %v357, %v355
      %v394 = vpack.c.b16 %v358, %v356
      %v395 = vpack.c.b16 %v361, %v359
      %v396 = vpack.c.b16 %v362, %v360
      %v397 = vpack.c.b16 %v365, %v363
      %v398 = vpack.c.b16 %v366, %v364
      %v433 = vunpack.c.l.b16 %v246
      %v434 = vunpack.c.l.b16 %v247
      %v435 = vunpack.c.l.b16 %v248
      %v436 = vunpack.c.l.b16 %v249
      %v437 = vunpack.c.l.b16 %v250
      %v438 = vunpack.c.l.b16 %v251
      %v439 = vunpack.c.l.b16 %v252
      %v440 = vunpack.c.l.b16 %v253
      %v441 = vunpack.c.l.b16 %v254
      %v442 = vunpack.c.l.b16 %v255
      %v443 = vunpack.c.l.b16 %v256
      %v444 = vunpack.c.l.b16 %v257
      %v445 = vunpack.c.l.b16 %v258
      %v446 = vunpack.c.l.b16 %v259
      %v447 = vunpack.c.l.b16 %v260
      %v448 = vunpack.c.l.b16 %v261
      %v449 = vunpack.c.l.b16 %v262
      %v450 = vunpack.c.l.b16 %v263
      %v451 = vpack.c.b16 %v434, %v433
      %v452 = vpack.c.b16 %v436, %v435
      %v453 = vpack.c.b16 %v438, %v437
      %v454 = vpack.c.b16 %v440, %v439
      %v455 = vpack.c.b16 %v442, %v441
      %v456 = vpack.c.b16 %v444, %v443
      %v457 = vpack.c.b16 %v446, %v445
      %v458 = vpack.c.b16 %v448, %v447
      %v459 = vpack.c.b16 %v450, %v449
      %vm469 = vcmask 130048
      %v471 = vsel %vm469, %v368, 0
      %v474 = vsel %vm469, %v370, 0
      %v477 = vsel %vm469, %v372, 0
      %v480 = vsel %vm469, %v374, 0
      %v483 = vsel %vm469, %v376, 0
      %v486 = vsel %vm469, %v378, 0
      %v489 = vsel %vm469, %v380, 0
      %v492 = vsel %vm469, %v382, 0
      %v495 = vsel %vm469, %v384, 0
      %v498 = vsel %vm469, %v386, 0
      %v501 = vsel %vm469, %v388, 0
      %v504 = vsel %vm469, %v390, 0
      %v507 = vsel %vm469, %v392, 0
      %v510 = vsel %vm469, %v394, 0
      %v513 = vsel %vm469, %v396, 0
      %v516 = vsel %vm469, %v398, 0
      %518 = vmatprep.subr.bf16.mxu0 0
      %519 = vmatpush1.bf16.msra.mxu0 %v458
      %520 = vmatprep.subr.bf16.mxu0 0
      %521 = vmatpush1.bf16.msra.mxu0 %v457
      %522 = vmatprep.subr.bf16.mxu0 0
      %523 = vmatpush1.bf16.msra.mxu0 %v456
      %524 = vmatprep.subr.bf16.mxu0 0
      %525 = vmatpush1.bf16.msra.mxu0 %v455
      %526 = vmatprep.subr.bf16.mxu0 0
      %527 = vmatpush1.bf16.msra.mxu0 %v454
      %528 = vmatprep.subr.bf16.mxu0 0
      %529 = vmatpush1.bf16.msra.mxu0 %v453
      %530 = vmatprep.subr.bf16.mxu0 0
      %531 = vmatpush1.bf16.msra.mxu0 %v452
      %532 = vmatprep.subr.bf16.mxu0 0
      %533 = vmatpush1.bf16.msra.mxu0 %v451
      %534 = vmatprep.subr.bf16.mxu0 0
      %535 = vmatpush2.bf16.msra.mxu0 0
      %536 = vmatprep.subr.bf16.mxu0 0
      %537 = vmatpush2.bf16.msra.mxu0 0
      %538 = vmatprep.subr.bf16.mxu0 0
      %539 = vmatpush2.bf16.msra.mxu0 0
      %540 = vmatprep.subr.bf16.mxu0 0
      %541 = vmatpush2.bf16.msra.mxu0 0
      %542 = vmatprep.subr.bf16.mxu0 0
      %543 = vmatpush2.bf16.msra.mxu0 0
      %544 = vmatprep.subr.bf16.mxu0 0
      %545 = vmatpush2.bf16.msra.mxu0 0
      %546 = vmatprep.subr.bf16.mxu0 0
      %547 = vmatpush2.bf16.msra.mxu0 0
      %548 = vmatprep.subr.bf16.mxu0 0
      %549 = vmatpush2.bf16.msra.mxu0 %v459
      %550 = vmatprep.mubr.bf16.mxu0 %v471
      %551 = vmatmul.mubr.bf16.gmra.mxu0 %v367
      %v552 = vpop.f32.mrf.mxu0
      %v553 = vadd.f32 %v269, %v552
      %v554 = vpop.f32.mrf.mxu0
      %v555 = vpop.f32.mrf.mxu0
      %v556 = vadd.f32 %v269, %v555
      %v557 = vpop.f32.mrf.mxu0
      %558 = vmatprep.mubr.bf16.mxu0 %v474
      %559 = vmatmul.mubr.bf16.gmra.mxu0 %v369
      %v560 = vpop.f32.mrf.mxu0
      %v561 = vadd.f32 %v269, %v560
      %v562 = vpop.f32.mrf.mxu0
      %v563 = vpop.f32.mrf.mxu0
      %v564 = vadd.f32 %v269, %v563
      %v565 = vpop.f32.mrf.mxu0
      %566 = vmatprep.mubr.bf16.mxu0 %v477
      %567 = vmatmul.mubr.bf16.gmra.mxu0 %v371
      %v568 = vpop.f32.mrf.mxu0
      %v569 = vadd.f32 %v269, %v568
      %v570 = vpop.f32.mrf.mxu0
      %v571 = vpop.f32.mrf.mxu0
      %v572 = vadd.f32 %v269, %v571
      %v573 = vpop.f32.mrf.mxu0
      %574 = vmatprep.mubr.bf16.mxu0 %v480
      %575 = vmatmul.mubr.bf16.gmra.mxu0 %v373
      %v576 = vpop.f32.mrf.mxu0
      %v577 = vadd.f32 %v269, %v576
      %v578 = vpop.f32.mrf.mxu0
      %v579 = vpop.f32.mrf.mxu0
      %v580 = vadd.f32 %v269, %v579
      %v581 = vpop.f32.mrf.mxu0
      %582 = vmatprep.mubr.bf16.mxu0 %v483
      %583 = vmatmul.mubr.bf16.gmra.mxu0 %v375
      %v584 = vpop.f32.mrf.mxu0
      %v585 = vadd.f32 %v269, %v584
      %v586 = vpop.f32.mrf.mxu0
      %v587 = vpop.f32.mrf.mxu0
      %v588 = vadd.f32 %v269, %v587
      %v589 = vpop.f32.mrf.mxu0
      %590 = vmatprep.mubr.bf16.mxu0 %v486
      %591 = vmatmul.mubr.bf16.gmra.mxu0 %v377
      %v592 = vpop.f32.mrf.mxu0
      %v593 = vadd.f32 %v269, %v592
      %v594 = vpop.f32.mrf.mxu0
      %v595 = vpop.f32.mrf.mxu0
      %v596 = vadd.f32 %v269, %v595
      %v597 = vpop.f32.mrf.mxu0
      %598 = vmatprep.mubr.bf16.mxu0 %v489
      %599 = vmatmul.mubr.bf16.gmra.mxu0 %v379
      %v600 = vpop.f32.mrf.mxu0
      %v601 = vadd.f32 %v269, %v600
      %v602 = vpop.f32.mrf.mxu0
      %v603 = vpop.f32.mrf.mxu0
      %v604 = vadd.f32 %v269, %v603
      %v605 = vpop.f32.mrf.mxu0
      %606 = vmatprep.mubr.bf16.mxu0 %v492
      %607 = vmatmul.mubr.bf16.gmra.mxu0 %v381
      %v608 = vpop.f32.mrf.mxu0
      %v609 = vadd.f32 %v269, %v608
      %v610 = vpop.f32.mrf.mxu0
      %v611 = vpop.f32.mrf.mxu0
      %v612 = vadd.f32 %v269, %v611
      %v613 = vpop.f32.mrf.mxu0
      %614 = vmatprep.mubr.bf16.mxu0 %v495
      %615 = vmatmul.mubr.bf16.gmra.mxu0 %v383
      %v616 = vpop.f32.mrf.mxu0
      %v617 = vadd.f32 %v269, %v616
      %v618 = vpop.f32.mrf.mxu0
      %v619 = vpop.f32.mrf.mxu0
      %v620 = vadd.f32 %v269, %v619
      %v621 = vpop.f32.mrf.mxu0
      %622 = vmatprep.mubr.bf16.mxu0 %v498
      %623 = vmatmul.mubr.bf16.gmra.mxu0 %v385
      %v624 = vpop.f32.mrf.mxu0
      %v625 = vadd.f32 %v269, %v624
      %v626 = vpop.f32.mrf.mxu0
      %v627 = vpop.f32.mrf.mxu0
      %v628 = vadd.f32 %v269, %v627
      %v629 = vpop.f32.mrf.mxu0
      %630 = vmatprep.mubr.bf16.mxu0 %v501
      %631 = vmatmul.mubr.bf16.gmra.mxu0 %v387
      %v632 = vpop.f32.mrf.mxu0
      %v633 = vadd.f32 %v269, %v632
      %v634 = vpop.f32.mrf.mxu0
      %v635 = vpop.f32.mrf.mxu0
      %v636 = vadd.f32 %v269, %v635
      %v637 = vpop.f32.mrf.mxu0
      %638 = vmatprep.mubr.bf16.mxu0 %v504
      %639 = vmatmul.mubr.bf16.gmra.mxu0 %v389
      %v640 = vpop.f32.mrf.mxu0
      %v641 = vadd.f32 %v269, %v640
      %v642 = vpop.f32.mrf.mxu0
      %v643 = vpop.f32.mrf.mxu0
      %v644 = vadd.f32 %v269, %v643
      %v645 = vpop.f32.mrf.mxu0
      %646 = vmatprep.mubr.bf16.mxu0 %v507
      %647 = vmatmul.mubr.bf16.gmra.mxu0 %v391
      %v648 = vpop.f32.mrf.mxu0
      %v649 = vadd.f32 %v269, %v648
      %v650 = vpop.f32.mrf.mxu0
      %v651 = vpop.f32.mrf.mxu0
      %v652 = vadd.f32 %v269, %v651
      %v653 = vpop.f32.mrf.mxu0
      %654 = vmatprep.mubr.bf16.mxu0 %v510
      %655 = vmatmul.mubr.bf16.gmra.mxu0 %v393
      %v656 = vpop.f32.mrf.mxu0
      %v657 = vadd.f32 %v269, %v656
      %v658 = vpop.f32.mrf.mxu0
      %v659 = vpop.f32.mrf.mxu0
      %v660 = vadd.f32 %v269, %v659
      %v661 = vpop.f32.mrf.mxu0
      %662 = vmatprep.mubr.bf16.mxu0 %v513
      %663 = vmatmul.mubr.bf16.gmra.mxu0 %v395
      %v664 = vpop.f32.mrf.mxu0
      %v665 = vadd.f32 %v269, %v664
      %v666 = vpop.f32.mrf.mxu0
      %v667 = vpop.f32.mrf.mxu0
      %v668 = vadd.f32 %v269, %v667
      %v669 = vpop.f32.mrf.mxu0
      %670 = vmatprep.mubr.bf16.mxu0 %v516
      %671 = vmatmul.mubr.bf16.gmra.mxu0 %v397
      %v672 = vpop.f32.mrf.mxu0
      %v673 = vadd.f32 %v269, %v672
      %v674 = vpop.f32.mrf.mxu0
      %v675 = vpop.f32.mrf.mxu0
      %v676 = vadd.f32 %v269, %v675
      %v677 = vpop.f32.mrf.mxu0
      %678 = vdwg.mxu0
      %v679 = vxor.u32 %v553, 2147483648
      %v680 = vxor.u32 %v556, 2147483648
      %v681 = vxor.u32 %v561, 2147483648
      %v682 = vxor.u32 %v564, 2147483648
      %v683 = vxor.u32 %v569, 2147483648
      %v684 = vxor.u32 %v572, 2147483648
      %v685 = vxor.u32 %v577, 2147483648
      %v686 = vxor.u32 %v580, 2147483648
      %v687 = vxor.u32 %v585, 2147483648
      %v688 = vxor.u32 %v588, 2147483648
      %v689 = vxor.u32 %v593, 2147483648
      %v690 = vxor.u32 %v596, 2147483648
      %v691 = vxor.u32 %v601, 2147483648
      %v692 = vxor.u32 %v604, 2147483648
      %v693 = vxor.u32 %v609, 2147483648
      %v694 = vxor.u32 %v612, 2147483648
      %v695 = vxor.u32 %v617, 2147483648
      %v696 = vxor.u32 %v620, 2147483648
      %v697 = vxor.u32 %v625, 2147483648
      %v698 = vxor.u32 %v628, 2147483648
      %v699 = vxor.u32 %v633, 2147483648
      %v700 = vxor.u32 %v636, 2147483648
      %v701 = vxor.u32 %v641, 2147483648
      %v702 = vxor.u32 %v644, 2147483648
      %v703 = vxor.u32 %v649, 2147483648
      %v704 = vxor.u32 %v652, 2147483648
      %v705 = vxor.u32 %v657, 2147483648
      %v706 = vxor.u32 %v660, 2147483648
      %v707 = vxor.u32 %v665, 2147483648
      %v708 = vxor.u32 %v668, 2147483648
      %v709 = vxor.u32 %v673, 2147483648
      %v710 = vxor.u32 %v676, 2147483648
      %v711 = vmul.f32 %v679, 1.442695
      %v712 = vpow.pop %v711
      %v713 = vmul.f32 %v680, 1.442695
      %v714 = vpow.pop %v713
      %v715 = vmul.f32 %v681, 1.442695
      %v716 = vpow.pop %v715
      %v717 = vmul.f32 %v682, 1.442695
      %v718 = vpow.pop %v717
      %v719 = vmul.f32 %v683, 1.442695
      %v720 = vpow.pop %v719
      %v721 = vmul.f32 %v684, 1.442695
      %v722 = vpow.pop %v721
      %v723 = vmul.f32 %v685, 1.442695
      %v724 = vpow.pop %v723
      %v725 = vmul.f32 %v686, 1.442695
      %v726 = vpow.pop %v725
      %v727 = vmul.f32 %v687, 1.442695
      %v728 = vpow.pop %v727
      %v729 = vmul.f32 %v688, 1.442695
      %v730 = vpow.pop %v729
      %v731 = vmul.f32 %v689, 1.442695
      %v732 = vpow.pop %v731
      %v733 = vmul.f32 %v690, 1.442695
      %v734 = vpow.pop %v733
      %v735 = vmul.f32 %v691, 1.442695
      %v736 = vpow.pop %v735
      %v737 = vmul.f32 %v692, 1.442695
      %v738 = vpow.pop %v737
      %v739 = vmul.f32 %v693, 1.442695
      %v740 = vpow.pop %v739
      %v741 = vmul.f32 %v694, 1.442695
      %v742 = vpow.pop %v741
      %v743 = vmul.f32 %v695, 1.442695
      %v744 = vpow.pop %v743
      %v745 = vmul.f32 %v696, 1.442695
      %v746 = vpow.pop %v745
      %v747 = vmul.f32 %v697, 1.442695
      %v748 = vpow.pop %v747
      %v749 = vmul.f32 %v698, 1.442695
      %v750 = vpow.pop %v749
      %v751 = vmul.f32 %v699, 1.442695
      %v752 = vpow.pop %v751
      %v753 = vmul.f32 %v700, 1.442695
      %v754 = vpow.pop %v753
      %v755 = vmul.f32 %v701, 1.442695
      %v756 = vpow.pop %v755
      %v757 = vmul.f32 %v702, 1.442695
      %v758 = vpow.pop %v757
      %v759 = vmul.f32 %v703, 1.442695
      %v760 = vpow.pop %v759
      %v761 = vmul.f32 %v704, 1.442695
      %v762 = vpow.pop %v761
      %v763 = vmul.f32 %v705, 1.442695
      %v764 = vpow.pop %v763
      %v765 = vmul.f32 %v706, 1.442695
      %v766 = vpow.pop %v765
      %v767 = vmul.f32 %v707, 1.442695
      %v768 = vpow.pop %v767
      %v769 = vmul.f32 %v708, 1.442695
      %v770 = vpow.pop %v769
      %v771 = vmul.f32 %v709, 1.442695
      %v772 = vpow.pop %v771
      %v773 = vmul.f32 %v710, 1.442695
      %v774 = vpow.pop %v773
      %v775 = vadd.f32 %v712, 1.0
      %v776 = vadd.f32 %v714, 1.0
      %v777 = vadd.f32 %v716, 1.0
      %v778 = vadd.f32 %v718, 1.0
      %v779 = vadd.f32 %v720, 1.0
      %v780 = vadd.f32 %v722, 1.0
      %v781 = vadd.f32 %v724, 1.0
      %v782 = vadd.f32 %v726, 1.0
      %v783 = vadd.f32 %v728, 1.0
      %v784 = vadd.f32 %v730, 1.0
      %v785 = vadd.f32 %v732, 1.0
      %v786 = vadd.f32 %v734, 1.0
      %v787 = vadd.f32 %v736, 1.0
      %v788 = vadd.f32 %v738, 1.0
      %v789 = vadd.f32 %v740, 1.0
      %v790 = vadd.f32 %v742, 1.0
      %v791 = vadd.f32 %v744, 1.0
      %v792 = vadd.f32 %v746, 1.0
      %v793 = vadd.f32 %v748, 1.0
      %v794 = vadd.f32 %v750, 1.0
      %v795 = vadd.f32 %v752, 1.0
      %v796 = vadd.f32 %v754, 1.0
      %v797 = vadd.f32 %v756, 1.0
      %v798 = vadd.f32 %v758, 1.0
      %v799 = vadd.f32 %v760, 1.0
      %v800 = vadd.f32 %v762, 1.0
      %v801 = vadd.f32 %v764, 1.0
      %v802 = vadd.f32 %v766, 1.0
      %v803 = vadd.f32 %v768, 1.0
      %v804 = vadd.f32 %v770, 1.0
      %v805 = vadd.f32 %v772, 1.0
      %v806 = vadd.f32 %v774, 1.0
      %v807 = vrcp.pop %v775
      %v808 = vmul.f32 1.0, %v807
      %v809 = vrcp.pop %v776
      %v810 = vmul.f32 1.0, %v809
      %v811 = vrcp.pop %v777
      %v812 = vmul.f32 1.0, %v811
      %v813 = vrcp.pop %v778
      %v814 = vmul.f32 1.0, %v813
      %v815 = vrcp.pop %v779
      %v816 = vmul.f32 1.0, %v815
      %v817 = vrcp.pop %v780
      %v818 = vmul.f32 1.0, %v817
      %v819 = vrcp.pop %v781
      %v820 = vmul.f32 1.0, %v819
      %v821 = vrcp.pop %v782
      %v822 = vmul.f32 1.0, %v821
      %v823 = vrcp.pop %v783
      %v824 = vmul.f32 1.0, %v823
      %v825 = vrcp.pop %v784
      %v826 = vmul.f32 1.0, %v825
      %v827 = vrcp.pop %v785
      %v828 = vmul.f32 1.0, %v827
      %v829 = vrcp.pop %v786
      %v830 = vmul.f32 1.0, %v829
      %v831 = vrcp.pop %v787
      %v832 = vmul.f32 1.0, %v831
      %v833 = vrcp.pop %v788
      %v834 = vmul.f32 1.0, %v833
      %v835 = vrcp.pop %v789
      %v836 = vmul.f32 1.0, %v835
      %v837 = vrcp.pop %v790
      %v838 = vmul.f32 1.0, %v837
      %v839 = vrcp.pop %v791
      %v840 = vmul.f32 1.0, %v839
      %v841 = vrcp.pop %v792
      %v842 = vmul.f32 1.0, %v841
      %v843 = vrcp.pop %v793
      %v844 = vmul.f32 1.0, %v843
      %v845 = vrcp.pop %v794
      %v846 = vmul.f32 1.0, %v845
      %v847 = vrcp.pop %v795
      %v848 = vmul.f32 1.0, %v847
      %v849 = vrcp.pop %v796
      %v850 = vmul.f32 1.0, %v849
      %v851 = vrcp.pop %v797
      %v852 = vmul.f32 1.0, %v851
      %v853 = vrcp.pop %v798
      %v854 = vmul.f32 1.0, %v853
      %v855 = vrcp.pop %v799
      %v856 = vmul.f32 1.0, %v855
      %v857 = vrcp.pop %v800
      %v858 = vmul.f32 1.0, %v857
      %v859 = vrcp.pop %v801
      %v860 = vmul.f32 1.0, %v859
      %v861 = vrcp.pop %v802
      %v862 = vmul.f32 1.0, %v861
      %v863 = vrcp.pop %v803
      %v864 = vmul.f32 1.0, %v863
      %v865 = vrcp.pop %v804
      %v866 = vmul.f32 1.0, %v865
      %v867 = vrcp.pop %v805
      %v868 = vmul.f32 1.0, %v867
      %v869 = vrcp.pop %v806
      %v870 = vmul.f32 1.0, %v869
      %v871 = vmul.f32 %v553, %v808
      %v872 = vmul.f32 %v556, %v810
      %v873 = vmul.f32 %v561, %v812
      %v874 = vmul.f32 %v564, %v814
      %v875 = vmul.f32 %v569, %v816
      %v876 = vmul.f32 %v572, %v818
      %v877 = vmul.f32 %v577, %v820
      %v878 = vmul.f32 %v580, %v822
      %v879 = vmul.f32 %v585, %v824
      %v880 = vmul.f32 %v588, %v826
      %v881 = vmul.f32 %v593, %v828
      %v882 = vmul.f32 %v596, %v830
      %v883 = vmul.f32 %v601, %v832
      %v884 = vmul.f32 %v604, %v834
      %v885 = vmul.f32 %v609, %v836
      %v886 = vmul.f32 %v612, %v838
      %v887 = vmul.f32 %v617, %v840
      %v888 = vmul.f32 %v620, %v842
      %v889 = vmul.f32 %v625, %v844
      %v890 = vmul.f32 %v628, %v846
      %v891 = vmul.f32 %v633, %v848
      %v892 = vmul.f32 %v636, %v850
      %v893 = vmul.f32 %v641, %v852
      %v894 = vmul.f32 %v644, %v854
      %v895 = vmul.f32 %v649, %v856
      %v896 = vmul.f32 %v652, %v858
      %v897 = vmul.f32 %v657, %v860
      %v898 = vmul.f32 %v660, %v862
      %v899 = vmul.f32 %v665, %v864
      %v900 = vmul.f32 %v668, %v866
      %v901 = vmul.f32 %v673, %v868
      %v902 = vmul.f32 %v676, %v870
      %v903 = vpack.c.bf16 %v872, %v871
      %v904 = vpack.c.bf16 %v874, %v873
      %v905 = vpack.c.bf16 %v876, %v875
      %v906 = vpack.c.bf16 %v878, %v877
      %v907 = vpack.c.bf16 %v880, %v879
      %v908 = vpack.c.bf16 %v882, %v881
      %v909 = vpack.c.bf16 %v884, %v883
      %v910 = vpack.c.bf16 %v886, %v885
      %v911 = vpack.c.bf16 %v888, %v887
      %v912 = vpack.c.bf16 %v890, %v889
      %v913 = vpack.c.bf16 %v892, %v891
      %v914 = vpack.c.bf16 %v894, %v893
      %v915 = vpack.c.bf16 %v896, %v895
      %v916 = vpack.c.bf16 %v898, %v897
      %v917 = vpack.c.bf16 %v900, %v899
      %v918 = vpack.c.bf16 %v902, %v901
      %v935 = vunpack.c.l.b16 %v903
      %v936 = vunpack.c.h.b16 %v903
      %v937 = vunpack.c.l.b16 %v904
      %v938 = vunpack.c.h.b16 %v904
      %v939 = vunpack.c.l.b16 %v905
      %v940 = vunpack.c.h.b16 %v905
      %v941 = vunpack.c.l.b16 %v906
      %v942 = vunpack.c.h.b16 %v906
      %v943 = vunpack.c.l.b16 %v907
      %v944 = vunpack.c.h.b16 %v907
      %v945 = vunpack.c.l.b16 %v908
      %v946 = vunpack.c.h.b16 %v908
      %v947 = vunpack.c.l.b16 %v909
      %v948 = vunpack.c.h.b16 %v909
      %v949 = vunpack.c.l.b16 %v910
      %v950 = vunpack.c.h.b16 %v910
      %v951 = vunpack.c.l.b16 %v911
      %v952 = vunpack.c.h.b16 %v911
      %v953 = vunpack.c.l.b16 %v912
      %v954 = vunpack.c.h.b16 %v912
      %v955 = vunpack.c.l.b16 %v913
      %v956 = vunpack.c.h.b16 %v913
      %v957 = vunpack.c.l.b16 %v914
      %v958 = vunpack.c.h.b16 %v914
      %v959 = vunpack.c.l.b16 %v915
      %v960 = vunpack.c.h.b16 %v915
      %v961 = vunpack.c.l.b16 %v916
      %v962 = vunpack.c.h.b16 %v916
      %v963 = vunpack.c.l.b16 %v917
      %v964 = vunpack.c.h.b16 %v917
      %v965 = vunpack.c.l.b16 %v918
      %v966 = vunpack.c.h.b16 %v918
      %v967 = vpack.c.b16 %v935, %v935
      %v968 = vpack.c.b16 %v936, %v936
      %v969 = vpack.c.b16 %v937, %v937
      %v970 = vpack.c.b16 %v938, %v938
      %v971 = vpack.c.b16 %v939, %v939
      %v972 = vpack.c.b16 %v940, %v940
      %v973 = vpack.c.b16 %v941, %v941
      %v974 = vpack.c.b16 %v942, %v942
      %v975 = vpack.c.b16 %v943, %v943
      %v976 = vpack.c.b16 %v944, %v944
      %v977 = vpack.c.b16 %v945, %v945
      %v978 = vpack.c.b16 %v946, %v946
      %v979 = vpack.c.b16 %v947, %v947
      %v980 = vpack.c.b16 %v948, %v948
      %v981 = vpack.c.b16 %v949, %v949
      %v982 = vpack.c.b16 %v950, %v950
      %v983 = vpack.c.b16 %v951, %v951
      %v984 = vpack.c.b16 %v952, %v952
      %v985 = vpack.c.b16 %v953, %v953
      %v986 = vpack.c.b16 %v954, %v954
      %v987 = vpack.c.b16 %v955, %v955
      %v988 = vpack.c.b16 %v956, %v956
      %v989 = vpack.c.b16 %v957, %v957
      %v990 = vpack.c.b16 %v958, %v958
      %v991 = vpack.c.b16 %v959, %v959
      %v992 = vpack.c.b16 %v960, %v960
      %v993 = vpack.c.b16 %v961, %v961
      %v994 = vpack.c.b16 %v962, %v962
      %v995 = vpack.c.b16 %v963, %v963
      %v996 = vpack.c.b16 %v964, %v964
      %v997 = vpack.c.b16 %v965, %v965
      %v998 = vpack.c.b16 %v966, %v966
      %vm1031 = vcmask 257024
      %1032 = vst.msk [vmem:[%s211] sm:$0xf] %vm1031, %v967
      %1033 = vst.msk [vmem:[%s211 + $0x4] sm:$0xf] %vm1031, %v968
      %1034 = vst.msk [vmem:[%s211 + $0x8] sm:$0xf] %vm1031, %v969
      %1035 = vst.msk [vmem:[%s211 + $0xc] sm:$0xf] %vm1031, %v970
      %1036 = vst.msk [vmem:[%s211 + $0x10] sm:$0xf] %vm1031, %v971
      %1037 = vst.msk [vmem:[%s211 + $0x14] sm:$0xf] %vm1031, %v972
      %1038 = vst.msk [vmem:[%s211 + $0x18] sm:$0xf] %vm1031, %v973
      %1039 = vst.msk [vmem:[%s211 + $0x1c] sm:$0xf] %vm1031, %v974
      %1040 = vst.msk [vmem:[%s211 + $0x20] sm:$0xf] %vm1031, %v975
      %1041 = vst.msk [vmem:[%s211 + $0x24] sm:$0xf] %vm1031, %v976
      %1042 = vst.msk [vmem:[%s211 + $0x28] sm:$0xf] %vm1031, %v977
      %1043 = vst.msk [vmem:[%s211 + $0x2c] sm:$0xf] %vm1031, %v978
      %1044 = vst.msk [vmem:[%s211 + $0x30] sm:$0xf] %vm1031, %v979
      %1045 = vst.msk [vmem:[%s211 + $0x34] sm:$0xf] %vm1031, %v980
      %1046 = vst.msk [vmem:[%s211 + $0x38] sm:$0xf] %vm1031, %v981
      %1047 = vst.msk [vmem:[%s211 + $0x3c] sm:$0xf] %vm1031, %v982
      %1048 = vst.msk [vmem:[%s211 + $0x40] sm:$0xf] %vm1031, %v983
      %1049 = vst.msk [vmem:[%s211 + $0x44] sm:$0xf] %vm1031, %v984
      %1050 = vst.msk [vmem:[%s211 + $0x48] sm:$0xf] %vm1031, %v985
      %1051 = vst.msk [vmem:[%s211 + $0x4c] sm:$0xf] %vm1031, %v986
      %1052 = vst.msk [vmem:[%s211 + $0x50] sm:$0xf] %vm1031, %v987
      %1053 = vst.msk [vmem:[%s211 + $0x54] sm:$0xf] %vm1031, %v988
      %1054 = vst.msk [vmem:[%s211 + $0x58] sm:$0xf] %vm1031, %v989
      %1055 = vst.msk [vmem:[%s211 + $0x5c] sm:$0xf] %vm1031, %v990
      %1056 = vst.msk [vmem:[%s211 + $0x60] sm:$0xf] %vm1031, %v991
      %1057 = vst.msk [vmem:[%s211 + $0x64] sm:$0xf] %vm1031, %v992
      %1058 = vst.msk [vmem:[%s211 + $0x68] sm:$0xf] %vm1031, %v993
      %1059 = vst.msk [vmem:[%s211 + $0x6c] sm:$0xf] %vm1031, %v994
      %1060 = vst.msk [vmem:[%s211 + $0x70] sm:$0xf] %vm1031, %v995
      %1061 = vst.msk [vmem:[%s211 + $0x74] sm:$0xf] %vm1031, %v996
      %1062 = vst.msk [vmem:[%s211 + $0x78] sm:$0xf] %vm1031, %v997
      %1063 = vst.msk [vmem:[%s211 + $0x7c] sm:$0xf] %vm1031, %v998
      %s1064 = smul.u32 32, %s19
      %p1065 = scmp.lt.s32.totalorder %s18, 1
      %s1066 = scalar_select %p1065, %s18, 1
      %p1067 = scmp.lt.s32.totalorder %s1064, 31
      %s1068 = scalar_select %p1067, %s1064, 31
      %s1069 = smul.addr %s1066, 32
      %s1070 = sadd.s32 %s1068, %s1069
      %s1071 = smul.addr %s1070, 4
      %s1072 = scalar_lea.vmem %s3, %s1071
      // Predicated region
      $region33: #{_lambda_.10} parent=31 // pred_check
        %p1073 = pneg %p116
      $region34: #{_lambda_.10} parent=31 // pred_check_branch
        %1075 = sbr.rel (%p1073) target = $region36
      $region35: #{_lambda_.10} parent=31 // pred_region
        %s1076 = smul.u32 32, %s19
      $region36: #{_lambda_.10} parent=31 // pred_fallthru
        _
    $region32: #{_lambda_.10} parent=5 // pred_fallthru
      _
    %p1077 = scmp.le.s32.totalorder 2, %s9
    // Predicated region
    $region37: #{_lambda_.10} parent=5 // pred_check
      %p1078 = pneg %p1077
    $region38: #{_lambda_.10} parent=5 // pred_check_branch
      %1080 = sbr.rel (%p1078) target = $region40
    $region39: #{_lambda_.10} parent=5 // pred_region
      %s1081 = ssub.s32 %s9, 2
      // Predicated region
      $region41: #{_lambda_.10} parent=39 // pred_check
        %p1082 = pneg %p122
      $region42: #{_lambda_.10} parent=39 // pred_check_branch
        %1084 = sbr.rel (%p1082) target = $region44
      $region43: #{_lambda_.10} parent=39 // pred_region
        %s1085 = smul.u32 32, %s21
        %p1086 = scmp.lt.s32.totalorder %s20, 1
        %s1087 = scalar_select %p1086, %s20, 1
        %p1088 = scmp.lt.s32.totalorder %s1085, 31
        %s1089 = scalar_select %p1088, %s1085, 31
        %s1090 = smul.addr %s1087, 32
        %s1091 = sadd.s32 %s1089, %s1090
        %s1092 = smul.addr %s1091, 4
        %s1093 = scalar_lea.vmem %s3, %s1092
      $region44: #{_lambda_.10} parent=39 // pred_fallthru
        _
    $region40: #{_lambda_.10} parent=5 // pred_fallthru
      _
  $region6: #{_lambda_.10} parent=0 // loop_footer
    %s13 = sadd.s32 1, %s9
  $region7: #{_lambda_.10} parent=0 // loop_footer_branch
    %8 = sbr.rel target = $region3
  $region8: #{_lambda_.10} parent=0 // loop_exit
    _

// kernel: _lambda_.11
$region0: #{_lambda_.11}
  #allocation0 [shape = 'u32[]', space=smem, size = 0x4, offset = 0x4, fixed_abs, tag = 'smem constant byte address 0x4 - core index']
  #allocation1 [shape = 'u32[144,128]{1,0:T(1,128)}', space=vmem, size = 0x12000, scoped, tag = 'internal scratch']
  %s0 = inlined_call_operand.vmem [shape: bf16[2,256,288], index: 0, kind: input, shape index: {}]
  %s1 = inlined_call_operand.vmem [shape: bf16[288,32], index: 1, kind: input, shape index: {}]
  %s2 = inlined_call_operand.vmem [shape: f32[1,32], index: 2, kind: input, shape index: {}]
  %s3 = inlined_call_operand.vmem [shape: bf16[2,256,32], index: 3, kind: output, shape index: {}]
  %s4 = sld [smem:[#allocation0]]
  $region45: #{_lambda_.11} parent=0
    _
  %s6 = ssub.s32 1, %s4
  %s7 = scalar_select 0, %s6, %s4
  loop: start=0, step=1, limit=4
  $region2: #{_lambda_.11} parent=0 // loop_pre_header
    _
  $region3: #{_lambda_.11} parent=0 // loop_header
    %s9 = sphi 0, %s13
    %p10 = scmp.ge.s32.totalorder %s9, 4
    %s16 = sphi 0, %s28
    %s17 = sphi 0, %s24
    %s18 = sphi 0, %s16
    %s19 = sphi 0, %s17
    %s20 = sphi 0, %s18
    %s21 = sphi 0, %s19
    %s33 = sphi 0, %s35
    %s36 = sphi 0, %s33
    %s37 = sphi 0, %s36
    %s53 = sphi 0, %s37
    %s57 = sphi 0, %s57
    %s59 = sphi 0, %s57
    %s60 = sphi 0, %s59
    %s74 = sphi 0, %s60
    %s78 = sphi 0, %s78
    %s80 = sphi 0, %s78
    %s81 = sphi 0, %s80
    %s95 = sphi 0, %s81
    %s103 = sphi 0, %s105
    %s106 = sphi 0, %s103
    %s107 = sphi 0, %s106
    %s123 = sphi 0, %s107
  $region4: #{_lambda_.11} parent=0 // loop_header_branch
    %12 = sbr.rel (%p10) target = $region8
  $region5: #{_lambda_.11} parent=0 // loop_body
    %s14 = ssub.s32 %s9, 1
    %s15 = ssub.s32 %s9, 2
    %s22 = sadd.s32 1, %s17
    %p23 = scmp.ge.s32.totalorder %s22, 1
    %s24 = scalar_select %p23, 0, %s22
    %s25 = sadd.s32 1, %s16
    %s26 = scalar_select %p23, %s25, %s16
    %p27 = scmp.ge.s32.totalorder %s26, 2
    %s28 = scalar_select %p27, 0, %s26
    %s29 = ssub.s32 %s16, %s28
    %s30 = ssub.s32 %s17, %s24
    %s31 = sor.u32 %s29, %s30
    %p32 = scmp.eq.s32.totalorder %s31, 0
    %s34 = sadd.s32 %s33, 1
    %s35 = scalar_select %p32, %s33, %s34
    %p38 = pneg %p32
    %p39 = scmp.eq.s32.totalorder %s9, 1
    %p40 = por %p38, %p39
    %p41 = scmp.ne.s32.totalorder %s33, %s36
    %p42 = scmp.eq.s32.totalorder %s9, 0
    %p43 = por %p41, %p42
    %p44 = scmp.ne.s32.totalorder %s33, %s36
    %p45 = scmp.eq.s32.totalorder %s14, 1
    %p46 = por %p44, %p45
    %p47 = scmp.ne.s32.totalorder %s36, %s37
    %p48 = scmp.eq.s32.totalorder %s14, 0
    %p49 = por %p47, %p48
    %p50 = scmp.ne.s32.totalorder %s36, %s37
    %p51 = scmp.eq.s32.totalorder %s15, 1
    %p52 = por %p50, %p51
    %p54 = scmp.ne.s32.totalorder %s37, %s53
    %p55 = scmp.eq.s32.totalorder %s15, 0
    %p56 = por %p54, %p55
    %s58 = sadd.s32 %s57, 1
    %p61 = scmp.eq.s32.totalorder %s9, 1
    %p62 = scmp.ne.s32.totalorder %s57, %s59
    %p63 = scmp.eq.s32.totalorder %s9, 0
    %p64 = por %p62, %p63
    %p65 = scmp.ne.s32.totalorder %s57, %s59
    %p66 = scmp.eq.s32.totalorder %s14, 1
    %p67 = por %p65, %p66
    %p68 = scmp.ne.s32.totalorder %s59, %s60
    %p69 = scmp.eq.s32.totalorder %s14, 0
    %p70 = por %p68, %p69
    %p71 = scmp.ne.s32.totalorder %s59, %s60
    %p72 = scmp.eq.s32.totalorder %s15, 1
    %p73 = por %p71, %p72
    %p75 = scmp.ne.s32.totalorder %s60, %s74
    %p76 = scmp.eq.s32.totalorder %s15, 0
    %p77 = por %p75, %p76
    %s79 = sadd.s32 %s78, 1
    %p82 = scmp.eq.s32.totalorder %s9, 1
    %p83 = scmp.ne.s32.totalorder %s78, %s80
    %p84 = scmp.eq.s32.totalorder %s9, 0
    %p85 = por %p83, %p84
    %p86 = scmp.ne.s32.totalorder %s78, %s80
    %p87 = scmp.eq.s32.totalorder %s14, 1
    %p88 = por %p86, %p87
    %p89 = scmp.ne.s32.totalorder %s80, %s81
    %p90 = scmp.eq.s32.totalorder %s14, 0
    %p91 = por %p89, %p90
    %p92 = scmp.ne.s32.totalorder %s80, %s81
    %p93 = scmp.eq.s32.totalorder %s15, 1
    %p94 = por %p92, %p93
    %p96 = scmp.ne.s32.totalorder %s81, %s95
    %p97 = scmp.eq.s32.totalorder %s15, 0
    %p98 = por %p96, %p97
    %s99 = ssub.s32 %s16, %s28
    %s100 = ssub.s32 %s17, %s24
    %s101 = sor.u32 %s99, %s100
    %p102 = scmp.eq.s32.totalorder %s101, 0
    %s104 = sadd.s32 %s103, 1
    %s105 = scalar_select %p102, %s103, %s104
    %p108 = pneg %p102
    %p109 = scmp.eq.s32.totalorder %s9, 1
    %p110 = por %p108, %p109
    %p111 = scmp.ne.s32.totalorder %s103, %s106
    %p112 = scmp.eq.s32.totalorder %s9, 0
    %p113 = por %p111, %p112
    %p114 = scmp.ne.s32.totalorder %s103, %s106
    %p115 = scmp.eq.s32.totalorder %s14, 1
    %p116 = por %p114, %p115
    %p117 = scmp.ne.s32.totalorder %s106, %s107
    %p118 = scmp.eq.s32.totalorder %s14, 0
    %p119 = por %p117, %p118
    %p120 = scmp.ne.s32.totalorder %s106, %s107
    %p121 = scmp.eq.s32.totalorder %s15, 1
    %p122 = por %p120, %p121
    %p124 = scmp.ne.s32.totalorder %s107, %s123
    %p125 = scmp.eq.s32.totalorder %s15, 0
    %p126 = por %p124, %p125
    %p127 = scmp.le.s32.totalorder 1, %s9
    %p128 = scmp.lt.s32.totalorder %s9, 3
    %p129 = pnand %p127, %p128
    %p130 = pneg %p129
    // Predicated region
    $region9: #{_lambda_.11} parent=5 // pred_check
      _
    $region10: #{_lambda_.11} parent=5 // pred_check_branch
      %132 = sbr.rel (%p129) target = $region12
    $region11: #{_lambda_.11} parent=5 // pred_region
      %s133 = ssub.s32 %s9, 1
      // Predicated region
      $region13: #{_lambda_.11} parent=11 // pred_check
        %p134 = pneg %p70
      $region14: #{_lambda_.11} parent=11 // pred_check_branch
        %136 = sbr.rel (%p134) target = $region16
      $region15: #{_lambda_.11} parent=11 // pred_region
        _
      $region16: #{_lambda_.11} parent=11 // pred_fallthru
        _
      // Predicated region
      $region17: #{_lambda_.11} parent=11 // pred_check
        %p137 = pneg %p91
      $region18: #{_lambda_.11} parent=11 // pred_check_branch
        %139 = sbr.rel (%p137) target = $region20
      $region19: #{_lambda_.11} parent=11 // pred_region
        _
      $region20: #{_lambda_.11} parent=11 // pred_fallthru
        _
    $region12: #{_lambda_.11} parent=5 // pred_fallthru
      _
    %p140 = scmp.lt.s32.totalorder %s9, 2
    // Predicated region
    $region21: #{_lambda_.11} parent=5 // pred_check
      %p141 = pneg %p140
    $region22: #{_lambda_.11} parent=5 // pred_check_branch
      %143 = sbr.rel (%p141) target = $region24
    $region23: #{_lambda_.11} parent=5 // pred_region
      // Predicated region
      $region25: #{_lambda_.11} parent=23 // pred_check
        %p144 = pneg %p43
      $region26: #{_lambda_.11} parent=23 // pred_check_branch
        %146 = sbr.rel (%p144) target = $region28
      $region27: #{_lambda_.11} parent=23 // pred_region
        %s147 = smul.u32 32, %s17
        %p148 = scmp.lt.s32.totalorder %s16, 1
        %s149 = scalar_select %p148, %s16, 1
        %p150 = scmp.lt.s32.totalorder %s147, 31
        %s151 = scalar_select %p150, %s147, 31
        %s152 = smul.addr %s151, 3
        %s153 = smul.addr %s149, 96
        %s154 = sadd.s32 %s152, %s153
        %s155 = smul.addr %s154, 4
        %s156 = scalar_lea.vmem %s0, %s155
        %s157 = smul.u32 32, %s17
      $region28: #{_lambda_.11} parent=23 // pred_fallthru
        _
    $region24: #{_lambda_.11} parent=5 // pred_fallthru
      _
    %p158 = scmp.le.s32.totalorder 1, %s9
    %p159 = scmp.lt.s32.totalorder %s9, 3
    %p160 = pnand %p158, %p159
    %p161 = pneg %p160
    // Predicated region
    $region29: #{_lambda_.11} parent=5 // pred_check
      _
    $region30: #{_lambda_.11} parent=5 // pred_check_branch
      %163 = sbr.rel (%p160) target = $region32
    $region31: #{_lambda_.11} parent=5 // pred_region
      %s164 = ssub.s32 %s9, 1
      %s165 = smul.u32 32, %s19
      %p166 = scmp.lt.s32.totalorder %s18, 1
      %s167 = scalar_select %p166, %s18, 1
      %p168 = scmp.lt.s32.totalorder %s165, 31
      %s169 = scalar_select %p168, %s165, 31
      %s170 = smul.addr %s169, 3
      %s171 = smul.addr %s167, 96
      %s172 = sadd.s32 %s170, %s171
      %s173 = smul.addr %s172, 4
      %s174 = scalar_lea.vmem %s0, %s173
      %p175 = pneg %p49
      %p176 = pneg %p46
      %p177 = pneg %p70
      %p178 = pneg %p67
      %p179 = pneg %p91
      %p180 = pneg %p88
      %p181 = pneg %p119
      %p182 = pneg %p116
      %s183 = smul.u32 32, %s19
      %p184 = scmp.lt.s32.totalorder %s18, 1
      %s185 = scalar_select %p184, %s18, 1
      %p186 = scmp.lt.s32.totalorder %s183, 31
      %s187 = scalar_select %p186, %s183, 31
      %s188 = smul.addr %s185, 32
      %s189 = sadd.s32 %s187, %s188
      %s190 = smul.addr %s189, 4
      %s191 = scalar_lea.vmem %s3, %s190
      %s192 = smul.u32 32, %s19
      %p193 = scmp.lt.s32.totalorder %s18, 1
      %s194 = scalar_select %p193, %s18, 1
      %p195 = scmp.lt.s32.totalorder %s192, 31
      %s196 = scalar_select %p195, %s192, 31
      %s197 = smul.addr %s196, 3
      %s198 = smul.addr %s194, 96
      %s199 = sadd.s32 %s197, %s198
      %s200 = smul.addr %s199, 4
      %s201 = scalar_lea.vmem %s0, %s200
      %s202 = smul.u32 32, %s19
      %s203 = smul.u32 32, %s19
      %p204 = scmp.lt.s32.totalorder %s18, 1
      %s205 = scalar_select %p204, %s18, 1
      %p206 = scmp.lt.s32.totalorder %s203, 31
      %s207 = scalar_select %p206, %s203, 31
      %s208 = smul.addr %s205, 32
      %s209 = sadd.s32 %s207, %s208
      %s210 = smul.addr %s209, 4
      %s211 = scalar_lea.vmem %s3, %s210
      %s212 = smul.u32 32, %s19
      %v214 = vld [vmem:[%s201] sm:$0xff]
      %v215 = vld [vmem:[%s201 + $0x8] sm:$0xf]
      %v216 = vld [vmem:[%s201 + $0xc] sm:$0xff]
      %v217 = vld [vmem:[%s201 + $0x14] sm:$0xf]
      %v218 = vld [vmem:[%s201 + $0x18] sm:$0xff]
      %v219 = vld [vmem:[%s201 + $0x20] sm:$0xf]
      %v220 = vld [vmem:[%s201 + $0x24] sm:$0xff]
      %v221 = vld [vmem:[%s201 + $0x2c] sm:$0xf]
      %v222 = vld [vmem:[%s201 + $0x30] sm:$0xff]
      %v223 = vld [vmem:[%s201 + $0x38] sm:$0xf]
      %v224 = vld [vmem:[%s201 + $0x3c] sm:$0xff]
      %v225 = vld [vmem:[%s201 + $0x44] sm:$0xf]
      %v226 = vld [vmem:[%s201 + $0x48] sm:$0xff]
      %v227 = vld [vmem:[%s201 + $0x50] sm:$0xf]
      %v228 = vld [vmem:[%s201 + $0x54] sm:$0xff]
      %v229 = vld [vmem:[%s201 + $0x5c] sm:$0xf]
      %v230 = vld [vmem:[%s201 + $0x60] sm:$0xff]
      %v231 = vld [vmem:[%s201 + $0x68] sm:$0xf]
      %v232 = vld [vmem:[%s201 + $0x6c] sm:$0xff]
      %v233 = vld [vmem:[%s201 + $0x74] sm:$0xf]
      %v234 = vld [vmem:[%s201 + $0x78] sm:$0xff]
      %v235 = vld [vmem:[%s201 + $0x80] sm:$0xf]
      %v236 = vld [vmem:[%s201 + $0x84] sm:$0xff]
      %v237 = vld [vmem:[%s201 + $0x8c] sm:$0xf]
      %v238 = vld [vmem:[%s201 + $0x90] sm:$0xff]
      %v239 = vld [vmem:[%s201 + $0x98] sm:$0xf]
      %v240 = vld [vmem:[%s201 + $0x9c] sm:$0xff]
      %v241 = vld [vmem:[%s201 + $0xa4] sm:$0xf]
      %v242 = vld [vmem:[%s201 + $0xa8] sm:$0xff]
      %v243 = vld [vmem:[%s201 + $0xb0] sm:$0xf]
      %v244 = vld [vmem:[%s201 + $0xb4] sm:$0xff]
      %v245 = vld [vmem:[%s201 + $0xbc] sm:$0xf]
      %v246 = vld [vmem:[%s201 + $0xc0] sm:$0xff]
      %v247 = vld [vmem:[%s201 + $0xc8] sm:$0xf]
      %v248 = vld [vmem:[%s201 + $0xcc] sm:$0xff]
      %v249 = vld [vmem:[%s201 + $0xd4] sm:$0xf]
      %v250 = vld [vmem:[%s201 + $0xd8] sm:$0xff]
      %v251 = vld [vmem:[%s201 + $0xe0] sm:$0xf]
      %v252 = vld [vmem:[%s201 + $0xe4] sm:$0xff]
      %v253 = vld [vmem:[%s201 + $0xec] sm:$0xf]
      %v254 = vld [vmem:[%s201 + $0xf0] sm:$0xff]
      %v255 = vld [vmem:[%s201 + $0xf8] sm:$0xf]
      %v256 = vld [vmem:[%s201 + $0xfc] sm:$0xff]
      %v257 = vld [vmem:[%s201 + $0x104] sm:$0xf]
      %v258 = vld [vmem:[%s201 + $0x108] sm:$0xff]
      %v259 = vld [vmem:[%s201 + $0x110] sm:$0xf]
      %v260 = vld [vmem:[%s201 + $0x114] sm:$0xff]
      %v261 = vld [vmem:[%s201 + $0x11c] sm:$0xf]
      %v262 = vld [vmem:[%s201 + $0x120] sm:$0xff]
      %v263 = vld [vmem:[%s201 + $0x128] sm:$0xf]
      %v264 = vld [vmem:[%s201 + $0x12c] sm:$0xff]
      %v265 = vld [vmem:[%s201 + $0x134] sm:$0xf]
      %v266 = vld [vmem:[%s201 + $0x138] sm:$0xff]
      %v267 = vld [vmem:[%s201 + $0x140] sm:$0xf]
      %v268 = vld [vmem:[%s201 + $0x144] sm:$0xff]
      %v269 = vld [vmem:[%s201 + $0x14c] sm:$0xf]
      %v270 = vld [vmem:[%s201 + $0x150] sm:$0xff]
      %v271 = vld [vmem:[%s201 + $0x158] sm:$0xf]
      %v272 = vld [vmem:[%s201 + $0x15c] sm:$0xff]
      %v273 = vld [vmem:[%s201 + $0x164] sm:$0xf]
      %v274 = vld [vmem:[%s201 + $0x168] sm:$0xff]
      %v275 = vld [vmem:[%s201 + $0x170] sm:$0xf]
      %v276 = vld [vmem:[%s201 + $0x174] sm:$0xff]
      %v277 = vld [vmem:[%s201 + $0x17c] sm:$0xf]
      %v278 = vld [vmem:[%s1] sm:$0xf]
      %v279 = vld [vmem:[%s1 + $0x4] sm:$0xf]
      %v280 = vld [vmem:[%s1 + $0x8] sm:$0xf]
      %v281 = vld [vmem:[%s1 + $0xc] sm:$0xf]
      %v282 = vld [vmem:[%s1 + $0x10] sm:$0xf]
      %v283 = vld [vmem:[%s1 + $0x14] sm:$0xf]
      %v284 = vld [vmem:[%s1 + $0x18] sm:$0xf]
      %v285 = vld [vmem:[%s1 + $0x1c] sm:$0xf]
      %v286 = vld [vmem:[%s1 + $0x20] sm:$0xf]
      %v287 = vld [vmem:[%s1 + $0x24] sm:$0xf]
      %v288 = vld [vmem:[%s1 + $0x28] sm:$0xf]
      %v289 = vld [vmem:[%s1 + $0x2c] sm:$0xf]
      %v290 = vld [vmem:[%s1 + $0x30] sm:$0xf]
      %v291 = vld [vmem:[%s1 + $0x34] sm:$0xf]
      %v292 = vld [vmem:[%s1 + $0x38] sm:$0xf]
      %v293 = vld [vmem:[%s1 + $0x3c] sm:$0xf]
      %v294 = vld [vmem:[%s1 + $0x40] sm:$0xf]
      %v295 = vld [vmem:[%s1 + $0x44] sm:$0xf]
      %v296 = vld [vmem:[%s1 + $0x48] sm:$0xf]
      %v297 = vld [vmem:[%s1 + $0x4c] sm:$0xf]
      %v298 = vld [vmem:[%s1 + $0x50] sm:$0xf]
      %v299 = vld [vmem:[%s1 + $0x54] sm:$0xf]
      %v300 = vld [vmem:[%s1 + $0x58] sm:$0xf]
      %v301 = vld [vmem:[%s1 + $0x5c] sm:$0xf]
      %v302 = vld [vmem:[%s1 + $0x60] sm:$0xf]
      %v303 = vld [vmem:[%s1 + $0x64] sm:$0xf]
      %v304 = vld [vmem:[%s1 + $0x68] sm:$0xf]
      %v305 = vld [vmem:[%s1 + $0x6c] sm:$0xf]
      %v306 = vld [vmem:[%s1 + $0x70] sm:$0xf]
      %v307 = vld [vmem:[%s1 + $0x74] sm:$0xf]
      %v308 = vld [vmem:[%s1 + $0x78] sm:$0xf]
      %v309 = vld [vmem:[%s1 + $0x7c] sm:$0xf]
      %v310 = vld [vmem:[%s1 + $0x80] sm:$0xf]
      %v311 = vld [vmem:[%s1 + $0x84] sm:$0xf]
      %v312 = vld [vmem:[%s1 + $0x88] sm:$0xf]
      %v313 = vld [vmem:[%s1 + $0x8c] sm:$0xf]
      %v314 = vld [vmem:[%s2] sm:$0x1]
      %v316 = vlaneseq
      %v317 = vshrl.u32 %v316, 7
      %v318 = vsub.s32 0, %v317
      %v319 = vrot.slane %v314, %v318
      %v385 = vunpack.c.l.b16 %v214
      %v386 = vunpack.c.h.b16 %v214
      %v387 = vunpack.c.l.b16 %v215
      %v388 = vunpack.c.l.b16 %v216
      %v389 = vunpack.c.h.b16 %v216
      %v390 = vunpack.c.l.b16 %v217
      %v391 = vunpack.c.l.b16 %v218
      %v392 = vunpack.c.h.b16 %v218
      %v393 = vunpack.c.l.b16 %v219
      %v394 = vunpack.c.l.b16 %v220
      %v395 = vunpack.c.h.b16 %v220
      %v396 = vunpack.c.l.b16 %v221
      %v397 = vunpack.c.l.b16 %v222
      %v398 = vunpack.c.h.b16 %v222
      %v399 = vunpack.c.l.b16 %v223
      %v400 = vunpack.c.l.b16 %v224
      %v401 = vunpack.c.h.b16 %v224
      %v402 = vunpack.c.l.b16 %v225
      %v403 = vunpack.c.l.b16 %v226
      %v404 = vunpack.c.h.b16 %v226
      %v405 = vunpack.c.l.b16 %v227
      %v406 = vunpack.c.l.b16 %v228
      %v407 = vunpack.c.h.b16 %v228
      %v408 = vunpack.c.l.b16 %v229
      %v409 = vunpack.c.l.b16 %v230
      %v410 = vunpack.c.h.b16 %v230
      %v411 = vunpack.c.l.b16 %v231
      %v412 = vunpack.c.l.b16 %v232
      %v413 = vunpack.c.h.b16 %v232
      %v414 = vunpack.c.l.b16 %v233
      %v415 = vunpack.c.l.b16 %v234
      %v416 = vunpack.c.h.b16 %v234
      %v417 = vunpack.c.l.b16 %v235
      %v418 = vunpack.c.l.b16 %v236
      %v419 = vunpack.c.h.b16 %v236
      %v420 = vunpack.c.l.b16 %v237
      %v421 = vunpack.c.l.b16 %v238
      %v422 = vunpack.c.h.b16 %v238
      %v423 = vunpack.c.l.b16 %v239
      %v424 = vunpack.c.l.b16 %v240
      %v425 = vunpack.c.h.b16 %v240
      %v426 = vunpack.c.l.b16 %v241
      %v427 = vunpack.c.l.b16 %v242
      %v428 = vunpack.c.h.b16 %v242
      %v429 = vunpack.c.l.b16 %v243
      %v430 = vunpack.c.l.b16 %v244
      %v431 = vunpack.c.h.b16 %v244
      %v432 = vunpack.c.l.b16 %v245
      %v433 = vunpack.c.l.b16 %v246
      %v434 = vunpack.c.h.b16 %v246
      %v435 = vunpack.c.l.b16 %v247
      %v436 = vunpack.c.l.b16 %v248
      %v437 = vunpack.c.h.b16 %v248
      %v438 = vunpack.c.l.b16 %v249
      %v439 = vunpack.c.l.b16 %v250
      %v440 = vunpack.c.h.b16 %v250
      %v441 = vunpack.c.l.b16 %v251
      %v442 = vunpack.c.l.b16 %v252
      %v443 = vunpack.c.h.b16 %v252
      %v444 = vunpack.c.l.b16 %v253
      %v445 = vunpack.c.l.b16 %v254
      %v446 = vunpack.c.h.b16 %v254
      %v447 = vunpack.c.l.b16 %v255
      %v448 = vunpack.c.l.b16 %v256
      %v449 = vunpack.c.h.b16 %v256
      %v450 = vunpack.c.l.b16 %v257
      %v451 = vunpack.c.l.b16 %v258
      %v452 = vunpack.c.h.b16 %v258
      %v453 = vunpack.c.l.b16 %v259
      %v454 = vunpack.c.l.b16 %v260
      %v455 = vunpack.c.h.b16 %v260
      %v456 = vunpack.c.l.b16 %v261
      %v457 = vunpack.c.l.b16 %v262
      %v458 = vunpack.c.h.b16 %v262
      %v459 = vunpack.c.l.b16 %v263
      %v460 = vunpack.c.l.b16 %v264
      %v461 = vunpack.c.h.b16 %v264
      %v462 = vunpack.c.l.b16 %v265
      %v463 = vunpack.c.l.b16 %v266
      %v464 = vunpack.c.h.b16 %v266
      %v465 = vunpack.c.l.b16 %v267
      %v466 = vunpack.c.l.b16 %v268
      %v467 = vunpack.c.h.b16 %v268
      %v468 = vunpack.c.l.b16 %v269
      %v469 = vunpack.c.l.b16 %v270
      %v470 = vunpack.c.h.b16 %v270
      %v471 = vunpack.c.l.b16 %v271
      %v472 = vunpack.c.l.b16 %v272
      %v473 = vunpack.c.h.b16 %v272
      %v474 = vunpack.c.l.b16 %v273
      %v475 = vunpack.c.l.b16 %v274
      %v476 = vunpack.c.h.b16 %v274
      %v477 = vunpack.c.l.b16 %v275
      %v478 = vunpack.c.l.b16 %v276
      %v479 = vunpack.c.h.b16 %v276
      %v480 = vunpack.c.l.b16 %v277
      %v481 = vpack.c.b16 %v388, %v385
      %v482 = vpack.c.b16 %v389, %v386
      %v483 = vpack.c.b16 %v390, %v387
      %v484 = vpack.c.b16 %v394, %v391
      %v485 = vpack.c.b16 %v395, %v392
      %v486 = vpack.c.b16 %v396, %v393
      %v487 = vpack.c.b16 %v400, %v397
      %v488 = vpack.c.b16 %v401, %v398
      %v489 = vpack.c.b16 %v402, %v399
      %v490 = vpack.c.b16 %v406, %v403
      %v491 = vpack.c.b16 %v407, %v404
      %v492 = vpack.c.b16 %v408, %v405
      %v493 = vpack.c.b16 %v412, %v409
      %v494 = vpack.c.b16 %v413, %v410
      %v495 = vpack.c.b16 %v414, %v411
      %v496 = vpack.c.b16 %v418, %v415
      %v497 = vpack.c.b16 %v419, %v416
      %v498 = vpack.c.b16 %v420, %v417
      %v499 = vpack.c.b16 %v424, %v421
      %v500 = vpack.c.b16 %v425, %v422
      %v501 = vpack.c.b16 %v426, %v423
      %v502 = vpack.c.b16 %v430, %v427
      %v503 = vpack.c.b16 %v431, %v428
      %v504 = vpack.c.b16 %v432, %v429
      %v505 = vpack.c.b16 %v436, %v433
      %v506 = vpack.c.b16 %v437, %v434
      %v507 = vpack.c.b16 %v438, %v435
      %v508 = vpack.c.b16 %v442, %v439
      %v509 = vpack.c.b16 %v443, %v440
      %v510 = vpack.c.b16 %v444, %v441
      %v511 = vpack.c.b16 %v448, %v445
      %v512 = vpack.c.b16 %v449, %v446
      %v513 = vpack.c.b16 %v450, %v447
      %v514 = vpack.c.b16 %v454, %v451
      %v515 = vpack.c.b16 %v455, %v452
      %v516 = vpack.c.b16 %v456, %v453
      %v517 = vpack.c.b16 %v460, %v457
      %v518 = vpack.c.b16 %v461, %v458
      %v519 = vpack.c.b16 %v462, %v459
      %v520 = vpack.c.b16 %v466, %v463
      %v521 = vpack.c.b16 %v467, %v464
      %v522 = vpack.c.b16 %v468, %v465
      %v523 = vpack.c.b16 %v472, %v469
      %v524 = vpack.c.b16 %v473, %v470
      %v525 = vpack.c.b16 %v474, %v471
      %v526 = vpack.c.b16 %v478, %v475
      %v527 = vpack.c.b16 %v479, %v476
      %v528 = vpack.c.b16 %v480, %v477
      %v597 = vunpack.c.l.b16 %v278
      %v598 = vunpack.c.l.b16 %v279
      %v599 = vunpack.c.l.b16 %v280
      %v600 = vunpack.c.l.b16 %v281
      %v601 = vunpack.c.l.b16 %v282
      %v602 = vunpack.c.l.b16 %v283
      %v603 = vunpack.c.l.b16 %v284
      %v604 = vunpack.c.l.b16 %v285
      %v605 = vunpack.c.l.b16 %v286
      %v606 = vunpack.c.l.b16 %v287
      %v607 = vunpack.c.l.b16 %v288
      %v608 = vunpack.c.l.b16 %v289
      %v609 = vunpack.c.l.b16 %v290
      %v610 = vunpack.c.l.b16 %v291
      %v611 = vunpack.c.l.b16 %v292
      %v612 = vunpack.c.l.b16 %v293
      %v613 = vunpack.c.l.b16 %v294
      %v614 = vunpack.c.l.b16 %v295
      %v615 = vunpack.c.l.b16 %v296
      %v616 = vunpack.c.l.b16 %v297
      %v617 = vunpack.c.l.b16 %v298
      %v618 = vunpack.c.l.b16 %v299
      %v619 = vunpack.c.l.b16 %v300
      %v620 = vunpack.c.l.b16 %v301
      %v621 = vunpack.c.l.b16 %v302
      %v622 = vunpack.c.l.b16 %v303
      %v623 = vunpack.c.l.b16 %v304
      %v624 = vunpack.c.l.b16 %v305
      %v625 = vunpack.c.l.b16 %v306
      %v626 = vunpack.c.l.b16 %v307
      %v627 = vunpack.c.l.b16 %v308
      %v628 = vunpack.c.l.b16 %v309
      %v629 = vunpack.c.l.b16 %v310
      %v630 = vunpack.c.l.b16 %v311
      %v631 = vunpack.c.l.b16 %v312
      %v632 = vunpack.c.l.b16 %v313
      %v633 = vpack.c.b16 %v598, %v597
      %v634 = vpack.c.b16 %v600, %v599
      %v635 = vpack.c.b16 %v602, %v601
      %v636 = vpack.c.b16 %v604, %v603
      %v637 = vpack.c.b16 %v606, %v605
      %v638 = vpack.c.b16 %v608, %v607
      %v639 = vpack.c.b16 %v610, %v609
      %v640 = vpack.c.b16 %v612, %v611
      %v641 = vpack.c.b16 %v614, %v613
      %v642 = vpack.c.b16 %v616, %v615
      %v643 = vpack.c.b16 %v618, %v617
      %v644 = vpack.c.b16 %v620, %v619
      %v645 = vpack.c.b16 %v622, %v621
      %v646 = vpack.c.b16 %v624, %v623
      %v647 = vpack.c.b16 %v626, %v625
      %v648 = vpack.c.b16 %v628, %v627
      %v649 = vpack.c.b16 %v630, %v629
      %v650 = vpack.c.b16 %v632, %v631
      %vm669 = vcmask 261120
      %v671 = vsel %vm669, %v483, 0
      %v674 = vsel %vm669, %v486, 0
      %v677 = vsel %vm669, %v489, 0
      %v680 = vsel %vm669, %v492, 0
      %v683 = vsel %vm669, %v495, 0
      %v686 = vsel %vm669, %v498, 0
      %v689 = vsel %vm669, %v501, 0
      %v692 = vsel %vm669, %v504, 0
      %v695 = vsel %vm669, %v507, 0
      %v698 = vsel %vm669, %v510, 0
      %v701 = vsel %vm669, %v513, 0
      %v704 = vsel %vm669, %v516, 0
      %v707 = vsel %vm669, %v519, 0
      %v710 = vsel %vm669, %v522, 0
      %v713 = vsel %vm669, %v525, 0
      %v716 = vsel %vm669, %v528, 0
      %718 = vmatprep.subr.bf16.mxu0 0
      %719 = vmatpush1.bf16.msra.mxu0 %v640
      %720 = vmatprep.subr.bf16.mxu0 0
      %721 = vmatpush1.bf16.msra.mxu0 %v639
      %722 = vmatprep.subr.bf16.mxu0 0
      %723 = vmatpush1.bf16.msra.mxu0 %v638
      %724 = vmatprep.subr.bf16.mxu0 0
      %725 = vmatpush1.bf16.msra.mxu0 %v637
      %726 = vmatprep.subr.bf16.mxu0 0
      %727 = vmatpush1.bf16.msra.mxu0 %v636
      %728 = vmatprep.subr.bf16.mxu0 0
      %729 = vmatpush1.bf16.msra.mxu0 %v635
      %730 = vmatprep.subr.bf16.mxu0 0
      %731 = vmatpush1.bf16.msra.mxu0 %v634
      %732 = vmatprep.subr.bf16.mxu0 0
      %733 = vmatpush1.bf16.msra.mxu0 %v633
      %734 = vmatprep.subr.bf16.mxu0 0
      %735 = vmatpush2.bf16.msra.mxu0 %v648
      %736 = vmatprep.subr.bf16.mxu0 0
      %737 = vmatpush2.bf16.msra.mxu0 %v647
      %738 = vmatprep.subr.bf16.mxu0 0
      %739 = vmatpush2.bf16.msra.mxu0 %v646
      %740 = vmatprep.subr.bf16.mxu0 0
      %741 = vmatpush2.bf16.msra.mxu0 %v645
      %742 = vmatprep.subr.bf16.mxu0 0
      %743 = vmatpush2.bf16.msra.mxu0 %v644
      %744 = vmatprep.subr.bf16.mxu0 0
      %745 = vmatpush2.bf16.msra.mxu0 %v643
      %746 = vmatprep.subr.bf16.mxu0 0
      %747 = vmatpush2.bf16.msra.mxu0 %v642
      %748 = vmatprep.subr.bf16.mxu0 0
      %749 = vmatpush2.bf16.msra.mxu0 %v641
      %750 = vmatprep.mubr.bf16.mxu0 %v482
      %751 = vmatmul.mubr.bf16.gmra.mxu0 %v481
      %v752 = vpop.f32.mrf.mxu0
      %v753 = vadd.f32 %v319, %v752
      %v754 = vpop.f32.mrf.mxu0
      %v755 = vpop.f32.mrf.mxu0
      %v756 = vadd.f32 %v319, %v755
      %v757 = vpop.f32.mrf.mxu0
      %758 = vmatprep.mubr.bf16.mxu0 %v485
      %759 = vmatmul.mubr.bf16.gmra.mxu0 %v484
      %v760 = vpop.f32.mrf.mxu0
      %v761 = vadd.f32 %v319, %v760
      %v762 = vpop.f32.mrf.mxu0
      %v763 = vpop.f32.mrf.mxu0
      %v764 = vadd.f32 %v319, %v763
      %v765 = vpop.f32.mrf.mxu0
      %766 = vmatprep.mubr.bf16.mxu0 %v488
      %767 = vmatmul.mubr.bf16.gmra.mxu0 %v487
      %v768 = vpop.f32.mrf.mxu0
      %v769 = vadd.f32 %v319, %v768
      %v770 = vpop.f32.mrf.mxu0
      %v771 = vpop.f32.mrf.mxu0
      %v772 = vadd.f32 %v319, %v771
      %v773 = vpop.f32.mrf.mxu0
      %774 = vmatprep.mubr.bf16.mxu0 %v491
      %775 = vmatmul.mubr.bf16.gmra.mxu0 %v490
      %v776 = vpop.f32.mrf.mxu0
      %v777 = vadd.f32 %v319, %v776
      %v778 = vpop.f32.mrf.mxu0
      %v779 = vpop.f32.mrf.mxu0
      %v780 = vadd.f32 %v319, %v779
      %v781 = vpop.f32.mrf.mxu0
      %782 = vmatprep.mubr.bf16.mxu0 %v494
      %783 = vmatmul.mubr.bf16.gmra.mxu0 %v493
      %v784 = vpop.f32.mrf.mxu0
      %v785 = vadd.f32 %v319, %v784
      %v786 = vpop.f32.mrf.mxu0
      %v787 = vpop.f32.mrf.mxu0
      %v788 = vadd.f32 %v319, %v787
      %v789 = vpop.f32.mrf.mxu0
      %790 = vmatprep.mubr.bf16.mxu0 %v497
      %791 = vmatmul.mubr.bf16.gmra.mxu0 %v496
      %v792 = vpop.f32.mrf.mxu0
      %v793 = vadd.f32 %v319, %v792
      %v794 = vpop.f32.mrf.mxu0
      %v795 = vpop.f32.mrf.mxu0
      %v796 = vadd.f32 %v319, %v795
      %v797 = vpop.f32.mrf.mxu0
      %798 = vmatprep.mubr.bf16.mxu0 %v500
      %799 = vmatmul.mubr.bf16.gmra.mxu0 %v499
      %v800 = vpop.f32.mrf.mxu0
      %v801 = vadd.f32 %v319, %v800
      %v802 = vpop.f32.mrf.mxu0
      %v803 = vpop.f32.mrf.mxu0
      %v804 = vadd.f32 %v319, %v803
      %v805 = vpop.f32.mrf.mxu0
      %806 = vmatprep.mubr.bf16.mxu0 %v503
      %807 = vmatmul.mubr.bf16.gmra.mxu0 %v502
      %v808 = vpop.f32.mrf.mxu0
      %v809 = vadd.f32 %v319, %v808
      %v810 = vpop.f32.mrf.mxu0
      %v811 = vpop.f32.mrf.mxu0
      %v812 = vadd.f32 %v319, %v811
      %v813 = vpop.f32.mrf.mxu0
      %814 = vmatprep.mubr.bf16.mxu0 %v506
      %815 = vmatmul.mubr.bf16.gmra.mxu0 %v505
      %v816 = vpop.f32.mrf.mxu0
      %v817 = vadd.f32 %v319, %v816
      %v818 = vpop.f32.mrf.mxu0
      %v819 = vpop.f32.mrf.mxu0
      %v820 = vadd.f32 %v319, %v819
      %v821 = vpop.f32.mrf.mxu0
      %822 = vmatprep.mubr.bf16.mxu0 %v509
      %823 = vmatmul.mubr.bf16.gmra.mxu0 %v508
      %v824 = vpop.f32.mrf.mxu0
      %v825 = vadd.f32 %v319, %v824
      %v826 = vpop.f32.mrf.mxu0
      %v827 = vpop.f32.mrf.mxu0
      %v828 = vadd.f32 %v319, %v827
      %v829 = vpop.f32.mrf.mxu0
      %830 = vmatprep.mubr.bf16.mxu0 %v512
      %831 = vmatmul.mubr.bf16.gmra.mxu0 %v511
      %v832 = vpop.f32.mrf.mxu0
      %v833 = vadd.f32 %v319, %v832
      %v834 = vpop.f32.mrf.mxu0
      %v835 = vpop.f32.mrf.mxu0
      %v836 = vadd.f32 %v319, %v835
      %v837 = vpop.f32.mrf.mxu0
      %838 = vmatprep.mubr.bf16.mxu0 %v515
      %839 = vmatmul.mubr.bf16.gmra.mxu0 %v514
      %v840 = vpop.f32.mrf.mxu0
      %v841 = vadd.f32 %v319, %v840
      %v842 = vpop.f32.mrf.mxu0
      %v843 = vpop.f32.mrf.mxu0
      %v844 = vadd.f32 %v319, %v843
      %v845 = vpop.f32.mrf.mxu0
      %846 = vmatprep.mubr.bf16.mxu0 %v518
      %847 = vmatmul.mubr.bf16.gmra.mxu0 %v517
      %v848 = vpop.f32.mrf.mxu0
      %v849 = vadd.f32 %v319, %v848
      %v850 = vpop.f32.mrf.mxu0
      %v851 = vpop.f32.mrf.mxu0
      %v852 = vadd.f32 %v319, %v851
      %v853 = vpop.f32.mrf.mxu0
      %854 = vmatprep.mubr.bf16.mxu0 %v521
      %855 = vmatmul.mubr.bf16.gmra.mxu0 %v520
      %v856 = vpop.f32.mrf.mxu0
      %v857 = vadd.f32 %v319, %v856
      %v858 = vpop.f32.mrf.mxu0
      %v859 = vpop.f32.mrf.mxu0
      %v860 = vadd.f32 %v319, %v859
      %v861 = vpop.f32.mrf.mxu0
      %862 = vmatprep.mubr.bf16.mxu0 %v524
      %863 = vmatmul.mubr.bf16.gmra.mxu0 %v523
      %v864 = vpop.f32.mrf.mxu0
      %v865 = vadd.f32 %v319, %v864
      %v866 = vpop.f32.mrf.mxu0
      %v867 = vpop.f32.mrf.mxu0
      %v868 = vadd.f32 %v319, %v867
      %v869 = vpop.f32.mrf.mxu0
      %870 = vmatprep.mubr.bf16.mxu0 %v527
      %871 = vmatmul.mubr.bf16.gmra.mxu0 %v526
      %v872 = vpop.f32.mrf.mxu0
      %v873 = vadd.f32 %v319, %v872
      %v874 = vpop.f32.mrf.mxu0
      %v875 = vpop.f32.mrf.mxu0
      %v876 = vadd.f32 %v319, %v875
      %v877 = vpop.f32.mrf.mxu0
      %878 = vdwg.mxu0
      %879 = vmatprep.subr.bf16.mxu0 0
      %880 = vmatpush1.bf16.msra.mxu0 0
      %881 = vmatprep.subr.bf16.mxu0 0
      %882 = vmatpush1.bf16.msra.mxu0 0
      %883 = vmatprep.subr.bf16.mxu0 0
      %884 = vmatpush1.bf16.msra.mxu0 0
      %885 = vmatprep.subr.bf16.mxu0 0
      %886 = vmatpush1.bf16.msra.mxu0 0
      %887 = vmatprep.subr.bf16.mxu0 0
      %888 = vmatpush1.bf16.msra.mxu0 0
      %889 = vmatprep.subr.bf16.mxu0 0
      %890 = vmatpush1.bf16.msra.mxu0 0
      %891 = vmatprep.subr.bf16.mxu0 0
      %892 = vmatpush1.bf16.msra.mxu0 %v650
      %893 = vmatprep.subr.bf16.mxu0 0
      %894 = vmatpush1.bf16.msra.mxu0 %v649
      %895 = vmatprep.subr.bf16.mxu0 0
      %896 = vmatpush2.bf16.msra.mxu0 0
      %897 = vmatprep.subr.bf16.mxu0 0
      %898 = vmatpush2.bf16.msra.mxu0 0
      %899 = vmatprep.subr.bf16.mxu0 0
      %900 = vmatpush2.bf16.msra.mxu0 0
      %901 = vmatprep.subr.bf16.mxu0 0
      %902 = vmatpush2.bf16.msra.mxu0 0
      %903 = vmatprep.subr.bf16.mxu0 0
      %904 = vmatpush2.bf16.msra.mxu0 0
      %905 = vmatprep.subr.bf16.mxu0 0
      %906 = vmatpush2.bf16.msra.mxu0 0
      %907 = vmatprep.subr.bf16.mxu0 0
      %908 = vmatpush2.bf16.msra.mxu0 0
      %909 = vmatprep.subr.bf16.mxu0 0
      %910 = vmatpush2.bf16.msra.mxu0 0
      %911 = vmatprep.mubr.bf16.mxu0 0
      %912 = vmatmul.mubr.bf16.gmra.mxu0 %v671
      %v913 = vpop.f32.mrf.mxu0
      %v914 = vadd.f32 %v753, %v913
      %v915 = vpop.f32.mrf.mxu0
      %v916 = vpop.f32.mrf.mxu0
      %v917 = vadd.f32 %v756, %v916
      %v918 = vpop.f32.mrf.mxu0
      %919 = vmatprep.mubr.bf16.mxu0 0
      %920 = vmatmul.mubr.bf16.gmra.mxu0 %v674
      %v921 = vpop.f32.mrf.mxu0
      %v922 = vadd.f32 %v761, %v921
      %v923 = vpop.f32.mrf.mxu0
      %v924 = vpop.f32.mrf.mxu0
      %v925 = vadd.f32 %v764, %v924
      %v926 = vpop.f32.mrf.mxu0
      %927 = vmatprep.mubr.bf16.mxu0 0
      %928 = vmatmul.mubr.bf16.gmra.mxu0 %v677
      %v929 = vpop.f32.mrf.mxu0
      %v930 = vadd.f32 %v769, %v929
      %v931 = vpop.f32.mrf.mxu0
      %v932 = vpop.f32.mrf.mxu0
      %v933 = vadd.f32 %v772, %v932
      %v934 = vpop.f32.mrf.mxu0
      %935 = vmatprep.mubr.bf16.mxu0 0
      %936 = vmatmul.mubr.bf16.gmra.mxu0 %v680
      %v937 = vpop.f32.mrf.mxu0
      %v938 = vadd.f32 %v777, %v937
      %v939 = vpop.f32.mrf.mxu0
      %v940 = vpop.f32.mrf.mxu0
      %v941 = vadd.f32 %v780, %v940
      %v942 = vpop.f32.mrf.mxu0
      %943 = vmatprep.mubr.bf16.mxu0 0
      %944 = vmatmul.mubr.bf16.gmra.mxu0 %v683
      %v945 = vpop.f32.mrf.mxu0
      %v946 = vadd.f32 %v785, %v945
      %v947 = vpop.f32.mrf.mxu0
      %v948 = vpop.f32.mrf.mxu0
      %v949 = vadd.f32 %v788, %v948
      %v950 = vpop.f32.mrf.mxu0
      %951 = vmatprep.mubr.bf16.mxu0 0
      %952 = vmatmul.mubr.bf16.gmra.mxu0 %v686
      %v953 = vpop.f32.mrf.mxu0
      %v954 = vadd.f32 %v793, %v953
      %v955 = vpop.f32.mrf.mxu0
      %v956 = vpop.f32.mrf.mxu0
      %v957 = vadd.f32 %v796, %v956
      %v958 = vpop.f32.mrf.mxu0
      %959 = vmatprep.mubr.bf16.mxu0 0
      %960 = vmatmul.mubr.bf16.gmra.mxu0 %v689
      %v961 = vpop.f32.mrf.mxu0
      %v962 = vadd.f32 %v801, %v961
      %v963 = vpop.f32.mrf.mxu0
      %v964 = vpop.f32.mrf.mxu0
      %v965 = vadd.f32 %v804, %v964
      %v966 = vpop.f32.mrf.mxu0
      %967 = vmatprep.mubr.bf16.mxu0 0
      %968 = vmatmul.mubr.bf16.gmra.mxu0 %v692
      %v969 = vpop.f32.mrf.mxu0
      %v970 = vadd.f32 %v809, %v969
      %v971 = vpop.f32.mrf.mxu0
      %v972 = vpop.f32.mrf.mxu0
      %v973 = vadd.f32 %v812, %v972
      %v974 = vpop.f32.mrf.mxu0
      %975 = vmatprep.mubr.bf16.mxu0 0
      %976 = vmatmul.mubr.bf16.gmra.mxu0 %v695
      %v977 = vpop.f32.mrf.mxu0
      %v978 = vadd.f32 %v817, %v977
      %v979 = vpop.f32.mrf.mxu0
      %v980 = vpop.f32.mrf.mxu0
      %v981 = vadd.f32 %v820, %v980
      %v982 = vpop.f32.mrf.mxu0
      %983 = vmatprep.mubr.bf16.mxu0 0
      %984 = vmatmul.mubr.bf16.gmra.mxu0 %v698
      %v985 = vpop.f32.mrf.mxu0
      %v986 = vadd.f32 %v825, %v985
      %v987 = vpop.f32.mrf.mxu0
      %v988 = vpop.f32.mrf.mxu0
      %v989 = vadd.f32 %v828, %v988
      %v990 = vpop.f32.mrf.mxu0
      %991 = vmatprep.mubr.bf16.mxu0 0
      %992 = vmatmul.mubr.bf16.gmra.mxu0 %v701
      %v993 = vpop.f32.mrf.mxu0
      %v994 = vadd.f32 %v833, %v993
      %v995 = vpop.f32.mrf.mxu0
      %v996 = vpop.f32.mrf.mxu0
      %v997 = vadd.f32 %v836, %v996
      %v998 = vpop.f32.mrf.mxu0
      %999 = vmatprep.mubr.bf16.mxu0 0
      %1000 = vmatmul.mubr.bf16.gmra.mxu0 %v704
      %v1001 = vpop.f32.mrf.mxu0
      %v1002 = vadd.f32 %v841, %v1001
      %v1003 = vpop.f32.mrf.mxu0
      %v1004 = vpop.f32.mrf.mxu0
      %v1005 = vadd.f32 %v844, %v1004
      %v1006 = vpop.f32.mrf.mxu0
      %1007 = vmatprep.mubr.bf16.mxu0 0
      %1008 = vmatmul.mubr.bf16.gmra.mxu0 %v707
      %v1009 = vpop.f32.mrf.mxu0
      %v1010 = vadd.f32 %v849, %v1009
      %v1011 = vpop.f32.mrf.mxu0
      %v1012 = vpop.f32.mrf.mxu0
      %v1013 = vadd.f32 %v852, %v1012
      %v1014 = vpop.f32.mrf.mxu0
      %1015 = vmatprep.mubr.bf16.mxu0 0
      %1016 = vmatmul.mubr.bf16.gmra.mxu0 %v710
      %v1017 = vpop.f32.mrf.mxu0
      %v1018 = vadd.f32 %v857, %v1017
      %v1019 = vpop.f32.mrf.mxu0
      %v1020 = vpop.f32.mrf.mxu0
      %v1021 = vadd.f32 %v860, %v1020
      %v1022 = vpop.f32.mrf.mxu0
      %1023 = vmatprep.mubr.bf16.mxu0 0
      %1024 = vmatmul.mubr.bf16.gmra.mxu0 %v713
      %v1025 = vpop.f32.mrf.mxu0
      %v1026 = vadd.f32 %v865, %v1025
      %v1027 = vpop.f32.mrf.mxu0
      %v1028 = vpop.f32.mrf.mxu0
      %v1029 = vadd.f32 %v868, %v1028
      %v1030 = vpop.f32.mrf.mxu0
      %1031 = vmatprep.mubr.bf16.mxu0 0
      %1032 = vmatmul.mubr.bf16.gmra.mxu0 %v716
      %v1033 = vpop.f32.mrf.mxu0
      %v1034 = vadd.f32 %v873, %v1033
      %v1035 = vpop.f32.mrf.mxu0
      %v1036 = vpop.f32.mrf.mxu0
      %v1037 = vadd.f32 %v876, %v1036
      %v1038 = vpop.f32.mrf.mxu0
      %1039 = vdwg.mxu0
      %v1040 = vxor.u32 %v914, 2147483648
      %v1041 = vxor.u32 %v917, 2147483648
      %v1042 = vxor.u32 %v922, 2147483648
      %v1043 = vxor.u32 %v925, 2147483648
      %v1044 = vxor.u32 %v930, 2147483648
      %v1045 = vxor.u32 %v933, 2147483648
      %v1046 = vxor.u32 %v938, 2147483648
      %v1047 = vxor.u32 %v941, 2147483648
      %v1048 = vxor.u32 %v946, 2147483648
      %v1049 = vxor.u32 %v949, 2147483648
      %v1050 = vxor.u32 %v954, 2147483648
      %v1051 = vxor.u32 %v957, 2147483648
      %v1052 = vxor.u32 %v962, 2147483648
      %v1053 = vxor.u32 %v965, 2147483648
      %v1054 = vxor.u32 %v970, 2147483648
      %v1055 = vxor.u32 %v973, 2147483648
      %v1056 = vxor.u32 %v978, 2147483648
      %v1057 = vxor.u32 %v981, 2147483648
      %v1058 = vxor.u32 %v986, 2147483648
      %v1059 = vxor.u32 %v989, 2147483648
      %v1060 = vxor.u32 %v994, 2147483648
      %v1061 = vxor.u32 %v997, 2147483648
      %v1062 = vxor.u32 %v1002, 2147483648
      %v1063 = vxor.u32 %v1005, 2147483648
      %v1064 = vxor.u32 %v1010, 2147483648
      %v1065 = vxor.u32 %v1013, 2147483648
      %v1066 = vxor.u32 %v1018, 2147483648
      %v1067 = vxor.u32 %v1021, 2147483648
      %v1068 = vxor.u32 %v1026, 2147483648
      %v1069 = vxor.u32 %v1029, 2147483648
      %v1070 = vxor.u32 %v1034, 2147483648
      %v1071 = vxor.u32 %v1037, 2147483648
      %v1072 = vmul.f32 %v1040, 1.442695
      %v1073 = vpow.pop %v1072
      %v1074 = vmul.f32 %v1041, 1.442695
      %v1075 = vpow.pop %v1074
      %v1076 = vmul.f32 %v1042, 1.442695
      %v1077 = vpow.pop %v1076
      %v1078 = vmul.f32 %v1043, 1.442695
      %v1079 = vpow.pop %v1078
      %v1080 = vmul.f32 %v1044, 1.442695
      %v1081 = vpow.pop %v1080
      %v1082 = vmul.f32 %v1045, 1.442695
      %v1083 = vpow.pop %v1082
      %v1084 = vmul.f32 %v1046, 1.442695
      %v1085 = vpow.pop %v1084
      %v1086 = vmul.f32 %v1047, 1.442695
      %v1087 = vpow.pop %v1086
      %v1088 = vmul.f32 %v1048, 1.442695
      %v1089 = vpow.pop %v1088
      %v1090 = vmul.f32 %v1049, 1.442695
      %v1091 = vpow.pop %v1090
      %v1092 = vmul.f32 %v1050, 1.442695
      %v1093 = vpow.pop %v1092
      %v1094 = vmul.f32 %v1051, 1.442695
      %v1095 = vpow.pop %v1094
      %v1096 = vmul.f32 %v1052, 1.442695
      %v1097 = vpow.pop %v1096
      %v1098 = vmul.f32 %v1053, 1.442695
      %v1099 = vpow.pop %v1098
      %v1100 = vmul.f32 %v1054, 1.442695
      %v1101 = vpow.pop %v1100
      %v1102 = vmul.f32 %v1055, 1.442695
      %v1103 = vpow.pop %v1102
      %v1104 = vmul.f32 %v1056, 1.442695
      %v1105 = vpow.pop %v1104
      %v1106 = vmul.f32 %v1057, 1.442695
      %v1107 = vpow.pop %v1106
      %v1108 = vmul.f32 %v1058, 1.442695
      %v1109 = vpow.pop %v1108
      %v1110 = vmul.f32 %v1059, 1.442695
      %v1111 = vpow.pop %v1110
      %v1112 = vmul.f32 %v1060, 1.442695
      %v1113 = vpow.pop %v1112
      %v1114 = vmul.f32 %v1061, 1.442695
      %v1115 = vpow.pop %v1114
      %v1116 = vmul.f32 %v1062, 1.442695
      %v1117 = vpow.pop %v1116
      %v1118 = vmul.f32 %v1063, 1.442695
      %v1119 = vpow.pop %v1118
      %v1120 = vmul.f32 %v1064, 1.442695
      %v1121 = vpow.pop %v1120
      %v1122 = vmul.f32 %v1065, 1.442695
      %v1123 = vpow.pop %v1122
      %v1124 = vmul.f32 %v1066, 1.442695
      %v1125 = vpow.pop %v1124
      %v1126 = vmul.f32 %v1067, 1.442695
      %v1127 = vpow.pop %v1126
      %v1128 = vmul.f32 %v1068, 1.442695
      %v1129 = vpow.pop %v1128
      %v1130 = vmul.f32 %v1069, 1.442695
      %v1131 = vpow.pop %v1130
      %v1132 = vmul.f32 %v1070, 1.442695
      %v1133 = vpow.pop %v1132
      %v1134 = vmul.f32 %v1071, 1.442695
      %v1135 = vpow.pop %v1134
      %v1136 = vadd.f32 %v1073, 1.0
      %v1137 = vadd.f32 %v1075, 1.0
      %v1138 = vadd.f32 %v1077, 1.0
      %v1139 = vadd.f32 %v1079, 1.0
      %v1140 = vadd.f32 %v1081, 1.0
      %v1141 = vadd.f32 %v1083, 1.0
      %v1142 = vadd.f32 %v1085, 1.0
      %v1143 = vadd.f32 %v1087, 1.0
      %v1144 = vadd.f32 %v1089, 1.0
      %v1145 = vadd.f32 %v1091, 1.0
      %v1146 = vadd.f32 %v1093, 1.0
      %v1147 = vadd.f32 %v1095, 1.0
      %v1148 = vadd.f32 %v1097, 1.0
      %v1149 = vadd.f32 %v1099, 1.0
      %v1150 = vadd.f32 %v1101, 1.0
      %v1151 = vadd.f32 %v1103, 1.0
      %v1152 = vadd.f32 %v1105, 1.0
      %v1153 = vadd.f32 %v1107, 1.0
      %v1154 = vadd.f32 %v1109, 1.0
      %v1155 = vadd.f32 %v1111, 1.0
      %v1156 = vadd.f32 %v1113, 1.0
      %v1157 = vadd.f32 %v1115, 1.0
      %v1158 = vadd.f32 %v1117, 1.0
      %v1159 = vadd.f32 %v1119, 1.0
      %v1160 = vadd.f32 %v1121, 1.0
      %v1161 = vadd.f32 %v1123, 1.0
      %v1162 = vadd.f32 %v1125, 1.0
      %v1163 = vadd.f32 %v1127, 1.0
      %v1164 = vadd.f32 %v1129, 1.0
      %v1165 = vadd.f32 %v1131, 1.0
      %v1166 = vadd.f32 %v1133, 1.0
      %v1167 = vadd.f32 %v1135, 1.0
      %v1168 = vrcp.pop %v1136
      %v1169 = vmul.f32 1.0, %v1168
      %v1170 = vrcp.pop %v1137
      %v1171 = vmul.f32 1.0, %v1170
      %v1172 = vrcp.pop %v1138
      %v1173 = vmul.f32 1.0, %v1172
      %v1174 = vrcp.pop %v1139
      %v1175 = vmul.f32 1.0, %v1174
      %v1176 = vrcp.pop %v1140
      %v1177 = vmul.f32 1.0, %v1176
      %v1178 = vrcp.pop %v1141
      %v1179 = vmul.f32 1.0, %v1178
      %v1180 = vrcp.pop %v1142
      %v1181 = vmul.f32 1.0, %v1180
      %v1182 = vrcp.pop %v1143
      %v1183 = vmul.f32 1.0, %v1182
      %v1184 = vrcp.pop %v1144
      %v1185 = vmul.f32 1.0, %v1184
      %v1186 = vrcp.pop %v1145
      %v1187 = vmul.f32 1.0, %v1186
      %v1188 = vrcp.pop %v1146
      %v1189 = vmul.f32 1.0, %v1188
      %v1190 = vrcp.pop %v1147
      %v1191 = vmul.f32 1.0, %v1190
      %v1192 = vrcp.pop %v1148
      %v1193 = vmul.f32 1.0, %v1192
      %v1194 = vrcp.pop %v1149
      %v1195 = vmul.f32 1.0, %v1194
      %v1196 = vrcp.pop %v1150
      %v1197 = vmul.f32 1.0, %v1196
      %v1198 = vrcp.pop %v1151
      %v1199 = vmul.f32 1.0, %v1198
      %v1200 = vrcp.pop %v1152
      %v1201 = vmul.f32 1.0, %v1200
      %v1202 = vrcp.pop %v1153
      %v1203 = vmul.f32 1.0, %v1202
      %v1204 = vrcp.pop %v1154
      %v1205 = vmul.f32 1.0, %v1204
      %v1206 = vrcp.pop %v1155
      %v1207 = vmul.f32 1.0, %v1206
      %v1208 = vrcp.pop %v1156
      %v1209 = vmul.f32 1.0, %v1208
      %v1210 = vrcp.pop %v1157
      %v1211 = vmul.f32 1.0, %v1210
      %v1212 = vrcp.pop %v1158
      %v1213 = vmul.f32 1.0, %v1212
      %v1214 = vrcp.pop %v1159
      %v1215 = vmul.f32 1.0, %v1214
      %v1216 = vrcp.pop %v1160
      %v1217 = vmul.f32 1.0, %v1216
      %v1218 = vrcp.pop %v1161
      %v1219 = vmul.f32 1.0, %v1218
      %v1220 = vrcp.pop %v1162
      %v1221 = vmul.f32 1.0, %v1220
      %v1222 = vrcp.pop %v1163
      %v1223 = vmul.f32 1.0, %v1222
      %v1224 = vrcp.pop %v1164
      %v1225 = vmul.f32 1.0, %v1224
      %v1226 = vrcp.pop %v1165
      %v1227 = vmul.f32 1.0, %v1226
      %v1228 = vrcp.pop %v1166
      %v1229 = vmul.f32 1.0, %v1228
      %v1230 = vrcp.pop %v1167
      %v1231 = vmul.f32 1.0, %v1230
      %v1232 = vmul.f32 %v914, %v1169
      %v1233 = vmul.f32 %v917, %v1171
      %v1234 = vmul.f32 %v922, %v1173
      %v1235 = vmul.f32 %v925, %v1175
      %v1236 = vmul.f32 %v930, %v1177
      %v1237 = vmul.f32 %v933, %v1179
      %v1238 = vmul.f32 %v938, %v1181
      %v1239 = vmul.f32 %v941, %v1183
      %v1240 = vmul.f32 %v946, %v1185
      %v1241 = vmul.f32 %v949, %v1187
      %v1242 = vmul.f32 %v954, %v1189
      %v1243 = vmul.f32 %v957, %v1191
      %v1244 = vmul.f32 %v962, %v1193
      %v1245 = vmul.f32 %v965, %v1195
      %v1246 = vmul.f32 %v970, %v1197
      %v1247 = vmul.f32 %v973, %v1199
      %v1248 = vmul.f32 %v978, %v1201
      %v1249 = vmul.f32 %v981, %v1203
      %v1250 = vmul.f32 %v986, %v1205
      %v1251 = vmul.f32 %v989, %v1207
      %v1252 = vmul.f32 %v994, %v1209
      %v1253 = vmul.f32 %v997, %v1211
      %v1254 = vmul.f32 %v1002, %v1213
      %v1255 = vmul.f32 %v1005, %v1215
      %v1256 = vmul.f32 %v1010, %v1217
      %v1257 = vmul.f32 %v1013, %v1219
      %v1258 = vmul.f32 %v1018, %v1221
      %v1259 = vmul.f32 %v1021, %v1223
      %v1260 = vmul.f32 %v1026, %v1225
      %v1261 = vmul.f32 %v1029, %v1227
      %v1262 = vmul.f32 %v1034, %v1229
      %v1263 = vmul.f32 %v1037, %v1231
      %v1264 = vpack.c.bf16 %v1233, %v1232
      %v1265 = vpack.c.bf16 %v1235, %v1234
      %v1266 = vpack.c.bf16 %v1237, %v1236
      %v1267 = vpack.c.bf16 %v1239, %v1238
      %v1268 = vpack.c.bf16 %v1241, %v1240
      %v1269 = vpack.c.bf16 %v1243, %v1242
      %v1270 = vpack.c.bf16 %v1245, %v1244
      %v1271 = vpack.c.bf16 %v1247, %v1246
      %v1272 = vpack.c.bf16 %v1249, %v1248
      %v1273 = vpack.c.bf16 %v1251, %v1250
      %v1274 = vpack.c.bf16 %v1253, %v1252
      %v1275 = vpack.c.bf16 %v1255, %v1254
      %v1276 = vpack.c.bf16 %v1257, %v1256
      %v1277 = vpack.c.bf16 %v1259, %v1258
      %v1278 = vpack.c.bf16 %v1261, %v1260
      %v1279 = vpack.c.bf16 %v1263, %v1262
      %v1296 = vunpack.c.l.b16 %v1264
      %v1297 = vunpack.c.h.b16 %v1264
      %v1298 = vunpack.c.l.b16 %v1265
      %v1299 = vunpack.c.h.b16 %v1265
      %v1300 = vunpack.c.l.b16 %v1266
      %v1301 = vunpack.c.h.b16 %v1266
      %v1302 = vunpack.c.l.b16 %v1267
      %v1303 = vunpack.c.h.b16 %v1267
      %v1304 = vunpack.c.l.b16 %v1268
      %v1305 = vunpack.c.h.b16 %v1268
      %v1306 = vunpack.c.l.b16 %v1269
      %v1307 = vunpack.c.h.b16 %v1269
      %v1308 = vunpack.c.l.b16 %v1270
      %v1309 = vunpack.c.h.b16 %v1270
      %v1310 = vunpack.c.l.b16 %v1271
      %v1311 = vunpack.c.h.b16 %v1271
      %v1312 = vunpack.c.l.b16 %v1272
      %v1313 = vunpack.c.h.b16 %v1272
      %v1314 = vunpack.c.l.b16 %v1273
      %v1315 = vunpack.c.h.b16 %v1273
      %v1316 = vunpack.c.l.b16 %v1274
      %v1317 = vunpack.c.h.b16 %v1274
      %v1318 = vunpack.c.l.b16 %v1275
      %v1319 = vunpack.c.h.b16 %v1275
      %v1320 = vunpack.c.l.b16 %v1276
      %v1321 = vunpack.c.h.b16 %v1276
      %v1322 = vunpack.c.l.b16 %v1277
      %v1323 = vunpack.c.h.b16 %v1277
      %v1324 = vunpack.c.l.b16 %v1278
      %v1325 = vunpack.c.h.b16 %v1278
      %v1326 = vunpack.c.l.b16 %v1279
      %v1327 = vunpack.c.h.b16 %v1279
      %v1328 = vpack.c.b16 %v1296, %v1296
      %v1329 = vpack.c.b16 %v1297, %v1297
      %v1330 = vpack.c.b16 %v1298, %v1298
      %v1331 = vpack.c.b16 %v1299, %v1299
      %v1332 = vpack.c.b16 %v1300, %v1300
      %v1333 = vpack.c.b16 %v1301, %v1301
      %v1334 = vpack.c.b16 %v1302, %v1302
      %v1335 = vpack.c.b16 %v1303, %v1303
      %v1336 = vpack.c.b16 %v1304, %v1304
      %v1337 = vpack.c.b16 %v1305, %v1305
      %v1338 = vpack.c.b16 %v1306, %v1306
      %v1339 = vpack.c.b16 %v1307, %v1307
      %v1340 = vpack.c.b16 %v1308, %v1308
      %v1341 = vpack.c.b16 %v1309, %v1309
      %v1342 = vpack.c.b16 %v1310, %v1310
      %v1343 = vpack.c.b16 %v1311, %v1311
      %v1344 = vpack.c.b16 %v1312, %v1312
      %v1345 = vpack.c.b16 %v1313, %v1313
      %v1346 = vpack.c.b16 %v1314, %v1314
      %v1347 = vpack.c.b16 %v1315, %v1315
      %v1348 = vpack.c.b16 %v1316, %v1316
      %v1349 = vpack.c.b16 %v1317, %v1317
      %v1350 = vpack.c.b16 %v1318, %v1318
      %v1351 = vpack.c.b16 %v1319, %v1319
      %v1352 = vpack.c.b16 %v1320, %v1320
      %v1353 = vpack.c.b16 %v1321, %v1321
      %v1354 = vpack.c.b16 %v1322, %v1322
      %v1355 = vpack.c.b16 %v1323, %v1323
      %v1356 = vpack.c.b16 %v1324, %v1324
      %v1357 = vpack.c.b16 %v1325, %v1325
      %v1358 = vpack.c.b16 %v1326, %v1326
      %v1359 = vpack.c.b16 %v1327, %v1327
      %vm1392 = vcmask 257024
      %1393 = vst.msk [vmem:[%s211] sm:$0xf] %vm1392, %v1328
      %1394 = vst.msk [vmem:[%s211 + $0x4] sm:$0xf] %vm1392, %v1329
      %1395 = vst.msk [vmem:[%s211 + $0x8] sm:$0xf] %vm1392, %v1330
      %1396 = vst.msk [vmem:[%s211 + $0xc] sm:$0xf] %vm1392, %v1331
      %1397 = vst.msk [vmem:[%s211 + $0x10] sm:$0xf] %vm1392, %v1332
      %1398 = vst.msk [vmem:[%s211 + $0x14] sm:$0xf] %vm1392, %v1333
      %1399 = vst.msk [vmem:[%s211 + $0x18] sm:$0xf] %vm1392, %v1334
      %1400 = vst.msk [vmem:[%s211 + $0x1c] sm:$0xf] %vm1392, %v1335
      %1401 = vst.msk [vmem:[%s211 + $0x20] sm:$0xf] %vm1392, %v1336
      %1402 = vst.msk [vmem:[%s211 + $0x24] sm:$0xf] %vm1392, %v1337
      %1403 = vst.msk [vmem:[%s211 + $0x28] sm:$0xf] %vm1392, %v1338
      %1404 = vst.msk [vmem:[%s211 + $0x2c] sm:$0xf] %vm1392, %v1339
      %1405 = vst.msk [vmem:[%s211 + $0x30] sm:$0xf] %vm1392, %v1340
      %1406 = vst.msk [vmem:[%s211 + $0x34] sm:$0xf] %vm1392, %v1341
      %1407 = vst.msk [vmem:[%s211 + $0x38] sm:$0xf] %vm1392, %v1342
      %1408 = vst.msk [vmem:[%s211 + $0x3c] sm:$0xf] %vm1392, %v1343
      %1409 = vst.msk [vmem:[%s211 + $0x40] sm:$0xf] %vm1392, %v1344
      %1410 = vst.msk [vmem:[%s211 + $0x44] sm:$0xf] %vm1392, %v1345
      %1411 = vst.msk [vmem:[%s211 + $0x48] sm:$0xf] %vm1392, %v1346
      %1412 = vst.msk [vmem:[%s211 + $0x4c] sm:$0xf] %vm1392, %v1347
      %1413 = vst.msk [vmem:[%s211 + $0x50] sm:$0xf] %vm1392, %v1348
      %1414 = vst.msk [vmem:[%s211 + $0x54] sm:$0xf] %vm1392, %v1349
      %1415 = vst.msk [vmem:[%s211 + $0x58] sm:$0xf] %vm1392, %v1350
      %1416 = vst.msk [vmem:[%s211 + $0x5c] sm:$0xf] %vm1392, %v1351
      %1417 = vst.msk [vmem:[%s211 + $0x60] sm:$0xf] %vm1392, %v1352
      %1418 = vst.msk [vmem:[%s211 + $0x64] sm:$0xf] %vm1392, %v1353
      %1419 = vst.msk [vmem:[%s211 + $0x68] sm:$0xf] %vm1392, %v1354
      %1420 = vst.msk [vmem:[%s211 + $0x6c] sm:$0xf] %vm1392, %v1355
      %1421 = vst.msk [vmem:[%s211 + $0x70] sm:$0xf] %vm1392, %v1356
      %1422 = vst.msk [vmem:[%s211 + $0x74] sm:$0xf] %vm1392, %v1357
      %1423 = vst.msk [vmem:[%s211 + $0x78] sm:$0xf] %vm1392, %v1358
      %1424 = vst.msk [vmem:[%s211 + $0x7c] sm:$0xf] %vm1392, %v1359
      %s1425 = smul.u32 32, %s19
      %p1426 = scmp.lt.s32.totalorder %s18, 1
      %s1427 = scalar_select %p1426, %s18, 1
      %p1428 = scmp.lt.s32.totalorder %s1425, 31
      %s1429 = scalar_select %p1428, %s1425, 31
      %s1430 = smul.addr %s1427, 32
      %s1431 = sadd.s32 %s1429, %s1430
      %s1432 = smul.addr %s1431, 4
      %s1433 = scalar_lea.vmem %s3, %s1432
      // Predicated region
      $region33: #{_lambda_.11} parent=31 // pred_check
        %p1434 = pneg %p116
      $region34: #{_lambda_.11} parent=31 // pred_check_branch
        %1436 = sbr.rel (%p1434) target = $region36
      $region35: #{_lambda_.11} parent=31 // pred_region
        %s1437 = smul.u32 32, %s19
      $region36: #{_lambda_.11} parent=31 // pred_fallthru
        _
    $region32: #{_lambda_.11} parent=5 // pred_fallthru
      _
    %p1438 = scmp.le.s32.totalorder 2, %s9
    // Predicated region
    $region37: #{_lambda_.11} parent=5 // pred_check
      %p1439 = pneg %p1438
    $region38: #{_lambda_.11} parent=5 // pred_check_branch
      %1441 = sbr.rel (%p1439) target = $region40
    $region39: #{_lambda_.11} parent=5 // pred_region
      %s1442 = ssub.s32 %s9, 2
      // Predicated region
      $region41: #{_lambda_.11} parent=39 // pred_check
        %p1443 = pneg %p122
      $region42: #{_lambda_.11} parent=39 // pred_check_branch
        %1445 = sbr.rel (%p1443) target = $region44
      $region43: #{_lambda_.11} parent=39 // pred_region
        %s1446 = smul.u32 32, %s21
        %p1447 = scmp.lt.s32.totalorder %s20, 1
        %s1448 = scalar_select %p1447, %s20, 1
        %p1449 = scmp.lt.s32.totalorder %s1446, 31
        %s1450 = scalar_select %p1449, %s1446, 31
        %s1451 = smul.addr %s1448, 32
        %s1452 = sadd.s32 %s1450, %s1451
        %s1453 = smul.addr %s1452, 4
        %s1454 = scalar_lea.vmem %s3, %s1453
      $region44: #{_lambda_.11} parent=39 // pred_fallthru
        _
    $region40: #{_lambda_.11} parent=5 // pred_fallthru
      _
  $region6: #{_lambda_.11} parent=0 // loop_footer
    %s13 = sadd.s32 1, %s9
  $region7: #{_lambda_.11} parent=0 // loop_footer_branch
    %8 = sbr.rel target = $region3
  $region8: #{_lambda_.11} parent=0 // loop_exit
    _

// kernel: _lambda_.12
$region0: #{_lambda_.12}
  #allocation0 [shape = 'u32[]', space=smem, size = 0x4, offset = 0x4, fixed_abs, tag = 'smem constant byte address 0x4 - core index']
  #allocation1 [shape = 'u32[144,128]{1,0:T(1,128)}', space=vmem, size = 0x12000, scoped, tag = 'internal scratch']
  %s0 = inlined_call_operand.vmem [shape: bf16[2,64,288], index: 0, kind: input, shape index: {}]
  %s1 = inlined_call_operand.vmem [shape: bf16[288,96], index: 1, kind: input, shape index: {}]
  %s2 = inlined_call_operand.vmem [shape: f32[1,96], index: 2, kind: input, shape index: {}]
  %s3 = inlined_call_operand.vmem [shape: bf16[2,64,96], index: 3, kind: output, shape index: {}]
  %s4 = sld [smem:[#allocation0]]
  $region45: #{_lambda_.12} parent=0
    _
  %s6 = ssub.s32 1, %s4
  %s7 = scalar_select 0, %s6, %s4
  loop: start=0, step=1, limit=4
  $region2: #{_lambda_.12} parent=0 // loop_pre_header
    _
  $region3: #{_lambda_.12} parent=0 // loop_header
    %s9 = sphi 0, %s13
    %p10 = scmp.ge.s32.totalorder %s9, 4
    %s16 = sphi 0, %s28
    %s17 = sphi 0, %s24
    %s18 = sphi 0, %s16
    %s19 = sphi 0, %s17
    %s20 = sphi 0, %s18
    %s21 = sphi 0, %s19
    %s33 = sphi 0, %s35
    %s36 = sphi 0, %s33
    %s37 = sphi 0, %s36
    %s53 = sphi 0, %s37
    %s57 = sphi 0, %s57
    %s59 = sphi 0, %s57
    %s60 = sphi 0, %s59
    %s74 = sphi 0, %s60
    %s78 = sphi 0, %s78
    %s80 = sphi 0, %s78
    %s81 = sphi 0, %s80
    %s95 = sphi 0, %s81
    %s103 = sphi 0, %s105
    %s106 = sphi 0, %s103
    %s107 = sphi 0, %s106
    %s123 = sphi 0, %s107
  $region4: #{_lambda_.12} parent=0 // loop_header_branch
    %12 = sbr.rel (%p10) target = $region8
  $region5: #{_lambda_.12} parent=0 // loop_body
    %s14 = ssub.s32 %s9, 1
    %s15 = ssub.s32 %s9, 2
    %s22 = sadd.s32 1, %s17
    %p23 = scmp.ge.s32.totalorder %s22, 1
    %s24 = scalar_select %p23, 0, %s22
    %s25 = sadd.s32 1, %s16
    %s26 = scalar_select %p23, %s25, %s16
    %p27 = scmp.ge.s32.totalorder %s26, 2
    %s28 = scalar_select %p27, 0, %s26
    %s29 = ssub.s32 %s16, %s28
    %s30 = ssub.s32 %s17, %s24
    %s31 = sor.u32 %s29, %s30
    %p32 = scmp.eq.s32.totalorder %s31, 0
    %s34 = sadd.s32 %s33, 1
    %s35 = scalar_select %p32, %s33, %s34
    %p38 = pneg %p32
    %p39 = scmp.eq.s32.totalorder %s9, 1
    %p40 = por %p38, %p39
    %p41 = scmp.ne.s32.totalorder %s33, %s36
    %p42 = scmp.eq.s32.totalorder %s9, 0
    %p43 = por %p41, %p42
    %p44 = scmp.ne.s32.totalorder %s33, %s36
    %p45 = scmp.eq.s32.totalorder %s14, 1
    %p46 = por %p44, %p45
    %p47 = scmp.ne.s32.totalorder %s36, %s37
    %p48 = scmp.eq.s32.totalorder %s14, 0
    %p49 = por %p47, %p48
    %p50 = scmp.ne.s32.totalorder %s36, %s37
    %p51 = scmp.eq.s32.totalorder %s15, 1
    %p52 = por %p50, %p51
    %p54 = scmp.ne.s32.totalorder %s37, %s53
    %p55 = scmp.eq.s32.totalorder %s15, 0
    %p56 = por %p54, %p55
    %s58 = sadd.s32 %s57, 1
    %p61 = scmp.eq.s32.totalorder %s9, 1
    %p62 = scmp.ne.s32.totalorder %s57, %s59
    %p63 = scmp.eq.s32.totalorder %s9, 0
    %p64 = por %p62, %p63
    %p65 = scmp.ne.s32.totalorder %s57, %s59
    %p66 = scmp.eq.s32.totalorder %s14, 1
    %p67 = por %p65, %p66
    %p68 = scmp.ne.s32.totalorder %s59, %s60
    %p69 = scmp.eq.s32.totalorder %s14, 0
    %p70 = por %p68, %p69
    %p71 = scmp.ne.s32.totalorder %s59, %s60
    %p72 = scmp.eq.s32.totalorder %s15, 1
    %p73 = por %p71, %p72
    %p75 = scmp.ne.s32.totalorder %s60, %s74
    %p76 = scmp.eq.s32.totalorder %s15, 0
    %p77 = por %p75, %p76
    %s79 = sadd.s32 %s78, 1
    %p82 = scmp.eq.s32.totalorder %s9, 1
    %p83 = scmp.ne.s32.totalorder %s78, %s80
    %p84 = scmp.eq.s32.totalorder %s9, 0
    %p85 = por %p83, %p84
    %p86 = scmp.ne.s32.totalorder %s78, %s80
    %p87 = scmp.eq.s32.totalorder %s14, 1
    %p88 = por %p86, %p87
    %p89 = scmp.ne.s32.totalorder %s80, %s81
    %p90 = scmp.eq.s32.totalorder %s14, 0
    %p91 = por %p89, %p90
    %p92 = scmp.ne.s32.totalorder %s80, %s81
    %p93 = scmp.eq.s32.totalorder %s15, 1
    %p94 = por %p92, %p93
    %p96 = scmp.ne.s32.totalorder %s81, %s95
    %p97 = scmp.eq.s32.totalorder %s15, 0
    %p98 = por %p96, %p97
    %s99 = ssub.s32 %s16, %s28
    %s100 = ssub.s32 %s17, %s24
    %s101 = sor.u32 %s99, %s100
    %p102 = scmp.eq.s32.totalorder %s101, 0
    %s104 = sadd.s32 %s103, 1
    %s105 = scalar_select %p102, %s103, %s104
    %p108 = pneg %p102
    %p109 = scmp.eq.s32.totalorder %s9, 1
    %p110 = por %p108, %p109
    %p111 = scmp.ne.s32.totalorder %s103, %s106
    %p112 = scmp.eq.s32.totalorder %s9, 0
    %p113 = por %p111, %p112
    %p114 = scmp.ne.s32.totalorder %s103, %s106
    %p115 = scmp.eq.s32.totalorder %s14, 1
    %p116 = por %p114, %p115
    %p117 = scmp.ne.s32.totalorder %s106, %s107
    %p118 = scmp.eq.s32.totalorder %s14, 0
    %p119 = por %p117, %p118
    %p120 = scmp.ne.s32.totalorder %s106, %s107
    %p121 = scmp.eq.s32.totalorder %s15, 1
    %p122 = por %p120, %p121
    %p124 = scmp.ne.s32.totalorder %s107, %s123
    %p125 = scmp.eq.s32.totalorder %s15, 0
    %p126 = por %p124, %p125
    %p127 = scmp.le.s32.totalorder 1, %s9
    %p128 = scmp.lt.s32.totalorder %s9, 3
    %p129 = pnand %p127, %p128
    %p130 = pneg %p129
    // Predicated region
    $region9: #{_lambda_.12} parent=5 // pred_check
      _
    $region10: #{_lambda_.12} parent=5 // pred_check_branch
      %132 = sbr.rel (%p129) target = $region12
    $region11: #{_lambda_.12} parent=5 // pred_region
      %s133 = ssub.s32 %s9, 1
      // Predicated region
      $region13: #{_lambda_.12} parent=11 // pred_check
        %p134 = pneg %p70
      $region14: #{_lambda_.12} parent=11 // pred_check_branch
        %136 = sbr.rel (%p134) target = $region16
      $region15: #{_lambda_.12} parent=11 // pred_region
        _
      $region16: #{_lambda_.12} parent=11 // pred_fallthru
        _
      // Predicated region
      $region17: #{_lambda_.12} parent=11 // pred_check
        %p137 = pneg %p91
      $region18: #{_lambda_.12} parent=11 // pred_check_branch
        %139 = sbr.rel (%p137) target = $region20
      $region19: #{_lambda_.12} parent=11 // pred_region
        _
      $region20: #{_lambda_.12} parent=11 // pred_fallthru
        _
    $region12: #{_lambda_.12} parent=5 // pred_fallthru
      _
    %p140 = scmp.lt.s32.totalorder %s9, 2
    // Predicated region
    $region21: #{_lambda_.12} parent=5 // pred_check
      %p141 = pneg %p140
    $region22: #{_lambda_.12} parent=5 // pred_check_branch
      %143 = sbr.rel (%p141) target = $region24
    $region23: #{_lambda_.12} parent=5 // pred_region
      // Predicated region
      $region25: #{_lambda_.12} parent=23 // pred_check
        %p144 = pneg %p43
      $region26: #{_lambda_.12} parent=23 // pred_check_branch
        %146 = sbr.rel (%p144) target = $region28
      $region27: #{_lambda_.12} parent=23 // pred_region
        %s147 = smul.u32 8, %s17
        %p148 = scmp.lt.s32.totalorder %s16, 1
        %s149 = scalar_select %p148, %s16, 1
        %p150 = scmp.lt.s32.totalorder %s147, 7
        %s151 = scalar_select %p150, %s147, 7
        %s152 = smul.addr %s151, 3
        %s153 = smul.addr %s149, 24
        %s154 = sadd.s32 %s152, %s153
        %s155 = smul.addr %s154, 4
        %s156 = scalar_lea.vmem %s0, %s155
        %s157 = smul.u32 8, %s17
      $region28: #{_lambda_.12} parent=23 // pred_fallthru
        _
    $region24: #{_lambda_.12} parent=5 // pred_fallthru
      _
    %p158 = scmp.le.s32.totalorder 1, %s9
    %p159 = scmp.lt.s32.totalorder %s9, 3
    %p160 = pnand %p158, %p159
    %p161 = pneg %p160
    // Predicated region
    $region29: #{_lambda_.12} parent=5 // pred_check
      _
    $region30: #{_lambda_.12} parent=5 // pred_check_branch
      %163 = sbr.rel (%p160) target = $region32
    $region31: #{_lambda_.12} parent=5 // pred_region
      %s164 = ssub.s32 %s9, 1
      %s165 = smul.u32 8, %s19
      %p166 = scmp.lt.s32.totalorder %s18, 1
      %s167 = scalar_select %p166, %s18, 1
      %p168 = scmp.lt.s32.totalorder %s165, 7
      %s169 = scalar_select %p168, %s165, 7
      %s170 = smul.addr %s169, 3
      %s171 = smul.addr %s167, 24
      %s172 = sadd.s32 %s170, %s171
      %s173 = smul.addr %s172, 4
      %s174 = scalar_lea.vmem %s0, %s173
      %p175 = pneg %p49
      %p176 = pneg %p46
      %p177 = pneg %p70
      %p178 = pneg %p67
      %p179 = pneg %p91
      %p180 = pneg %p88
      %p181 = pneg %p119
      %p182 = pneg %p116
      %s183 = smul.u32 8, %s19
      %p184 = scmp.lt.s32.totalorder %s18, 1
      %s185 = scalar_select %p184, %s18, 1
      %p186 = scmp.lt.s32.totalorder %s183, 7
      %s187 = scalar_select %p186, %s183, 7
      %s188 = smul.addr %s185, 8
      %s189 = sadd.s32 %s187, %s188
      %s190 = smul.addr %s189, 4
      %s191 = scalar_lea.vmem %s3, %s190
      %s192 = smul.u32 8, %s19
      %p193 = scmp.lt.s32.totalorder %s18, 1
      %s194 = scalar_select %p193, %s18, 1
      %p195 = scmp.lt.s32.totalorder %s192, 7
      %s196 = scalar_select %p195, %s192, 7
      %s197 = smul.addr %s196, 3
      %s198 = smul.addr %s194, 24
      %s199 = sadd.s32 %s197, %s198
      %s200 = smul.addr %s199, 4
      %s201 = scalar_lea.vmem %s0, %s200
      %s202 = smul.u32 8, %s19
      %s203 = smul.u32 8, %s19
      %p204 = scmp.lt.s32.totalorder %s18, 1
      %s205 = scalar_select %p204, %s18, 1
      %p206 = scmp.lt.s32.totalorder %s203, 7
      %s207 = scalar_select %p206, %s203, 7
      %s208 = smul.addr %s205, 8
      %s209 = sadd.s32 %s207, %s208
      %s210 = smul.addr %s209, 4
      %s211 = scalar_lea.vmem %s3, %s210
      %s212 = smul.u32 8, %s19
      %v214 = vld [vmem:[%s201] sm:$0xff]
      %v215 = vld [vmem:[%s201 + $0x8] sm:$0xf]
      %v216 = vld [vmem:[%s201 + $0xc] sm:$0xff]
      %v217 = vld [vmem:[%s201 + $0x14] sm:$0xf]
      %v218 = vld [vmem:[%s201 + $0x18] sm:$0xff]
      %v219 = vld [vmem:[%s201 + $0x20] sm:$0xf]
      %v220 = vld [vmem:[%s201 + $0x24] sm:$0xff]
      %v221 = vld [vmem:[%s201 + $0x2c] sm:$0xf]
      %v222 = vld [vmem:[%s201 + $0x30] sm:$0xff]
      %v223 = vld [vmem:[%s201 + $0x38] sm:$0xf]
      %v224 = vld [vmem:[%s201 + $0x3c] sm:$0xff]
      %v225 = vld [vmem:[%s201 + $0x44] sm:$0xf]
      %v226 = vld [vmem:[%s201 + $0x48] sm:$0xff]
      %v227 = vld [vmem:[%s201 + $0x50] sm:$0xf]
      %v228 = vld [vmem:[%s201 + $0x54] sm:$0xff]
      %v229 = vld [vmem:[%s201 + $0x5c] sm:$0xf]
      %v230 = vld [vmem:[%s1] sm:$0xf]
      %v231 = vld [vmem:[%s1 + $0x4] sm:$0xf]
      %v232 = vld [vmem:[%s1 + $0x8] sm:$0xf]
      %v233 = vld [vmem:[%s1 + $0xc] sm:$0xf]
      %v234 = vld [vmem:[%s1 + $0x10] sm:$0xf]
      %v235 = vld [vmem:[%s1 + $0x14] sm:$0xf]
      %v236 = vld [vmem:[%s1 + $0x18] sm:$0xf]
      %v237 = vld [vmem:[%s1 + $0x1c] sm:$0xf]
      %v238 = vld [vmem:[%s1 + $0x20] sm:$0xf]
      %v239 = vld [vmem:[%s1 + $0x24] sm:$0xf]
      %v240 = vld [vmem:[%s1 + $0x28] sm:$0xf]
      %v241 = vld [vmem:[%s1 + $0x2c] sm:$0xf]
      %v242 = vld [vmem:[%s1 + $0x30] sm:$0xf]
      %v243 = vld [vmem:[%s1 + $0x34] sm:$0xf]
      %v244 = vld [vmem:[%s1 + $0x38] sm:$0xf]
      %v245 = vld [vmem:[%s1 + $0x3c] sm:$0xf]
      %v246 = vld [vmem:[%s1 + $0x40] sm:$0xf]
      %v247 = vld [vmem:[%s1 + $0x44] sm:$0xf]
      %v248 = vld [vmem:[%s1 + $0x48] sm:$0xf]
      %v249 = vld [vmem:[%s1 + $0x4c] sm:$0xf]
      %v250 = vld [vmem:[%s1 + $0x50] sm:$0xf]
      %v251 = vld [vmem:[%s1 + $0x54] sm:$0xf]
      %v252 = vld [vmem:[%s1 + $0x58] sm:$0xf]
      %v253 = vld [vmem:[%s1 + $0x5c] sm:$0xf]
      %v254 = vld [vmem:[%s1 + $0x60] sm:$0xf]
      %v255 = vld [vmem:[%s1 + $0x64] sm:$0xf]
      %v256 = vld [vmem:[%s1 + $0x68] sm:$0xf]
      %v257 = vld [vmem:[%s1 + $0x6c] sm:$0xf]
      %v258 = vld [vmem:[%s1 + $0x70] sm:$0xf]
      %v259 = vld [vmem:[%s1 + $0x74] sm:$0xf]
      %v260 = vld [vmem:[%s1 + $0x78] sm:$0xf]
      %v261 = vld [vmem:[%s1 + $0x7c] sm:$0xf]
      %v262 = vld [vmem:[%s1 + $0x80] sm:$0xf]
      %v263 = vld [vmem:[%s1 + $0x84] sm:$0xf]
      %v264 = vld [vmem:[%s1 + $0x88] sm:$0xf]
      %v265 = vld [vmem:[%s1 + $0x8c] sm:$0xf]
      %v266 = vld [vmem:[%s2] sm:$0x1]
      %v268 = vlaneseq
      %v269 = vshrl.u32 %v268, 7
      %v270 = vsub.s32 0, %v269
      %v271 = vrot.slane %v266, %v270
      %v289 = vunpack.c.l.b16 %v214
      %v290 = vunpack.c.h.b16 %v214
      %v291 = vunpack.c.l.b16 %v215
      %v292 = vunpack.c.l.b16 %v216
      %v293 = vunpack.c.h.b16 %v216
      %v294 = vunpack.c.l.b16 %v217
      %v295 = vunpack.c.l.b16 %v218
      %v296 = vunpack.c.h.b16 %v218
      %v297 = vunpack.c.l.b16 %v219
      %v298 = vunpack.c.l.b16 %v220
      %v299 = vunpack.c.h.b16 %v220
      %v300 = vunpack.c.l.b16 %v221
      %v301 = vunpack.c.l.b16 %v222
      %v302 = vunpack.c.h.b16 %v222
      %v303 = vunpack.c.l.b16 %v223
      %v304 = vunpack.c.l.b16 %v224
      %v305 = vunpack.c.h.b16 %v224
      %v306 = vunpack.c.l.b16 %v225
      %v307 = vunpack.c.l.b16 %v226
      %v308 = vunpack.c.h.b16 %v226
      %v309 = vunpack.c.l.b16 %v227
      %v310 = vunpack.c.l.b16 %v228
      %v311 = vunpack.c.h.b16 %v228
      %v312 = vunpack.c.l.b16 %v229
      %v313 = vpack.c.b16 %v292, %v289
      %v314 = vpack.c.b16 %v293, %v290
      %v315 = vpack.c.b16 %v294, %v291
      %v316 = vpack.c.b16 %v298, %v295
      %v317 = vpack.c.b16 %v299, %v296
      %v318 = vpack.c.b16 %v300, %v297
      %v319 = vpack.c.b16 %v304, %v301
      %v320 = vpack.c.b16 %v305, %v302
      %v321 = vpack.c.b16 %v306, %v303
      %v322 = vpack.c.b16 %v310, %v307
      %v323 = vpack.c.b16 %v311, %v308
      %v324 = vpack.c.b16 %v312, %v309
      %v369 = vunpack.c.l.b16 %v230
      %v370 = vunpack.c.l.b16 %v231
      %v371 = vunpack.c.l.b16 %v232
      %v372 = vunpack.c.l.b16 %v233
      %v373 = vunpack.c.l.b16 %v234
      %v374 = vunpack.c.l.b16 %v235
      %v375 = vunpack.c.l.b16 %v236
      %v376 = vunpack.c.l.b16 %v237
      %v377 = vunpack.c.l.b16 %v238
      %v378 = vunpack.c.l.b16 %v239
      %v379 = vunpack.c.l.b16 %v240
      %v380 = vunpack.c.l.b16 %v241
      %v381 = vunpack.c.l.b16 %v242
      %v382 = vunpack.c.l.b16 %v243
      %v383 = vunpack.c.l.b16 %v244
      %v384 = vunpack.c.l.b16 %v245
      %v385 = vunpack.c.l.b16 %v246
      %v386 = vunpack.c.l.b16 %v247
      %v387 = vunpack.c.l.b16 %v248
      %v388 = vunpack.c.l.b16 %v249
      %v389 = vunpack.c.l.b16 %v250
      %v390 = vunpack.c.l.b16 %v251
      %v391 = vunpack.c.l.b16 %v252
      %v392 = vunpack.c.l.b16 %v253
      %v393 = vunpack.c.l.b16 %v254
      %v394 = vunpack.c.l.b16 %v255
      %v395 = vunpack.c.l.b16 %v256
      %v396 = vunpack.c.l.b16 %v257
      %v397 = vunpack.c.l.b16 %v258
      %v398 = vunpack.c.l.b16 %v259
      %v399 = vunpack.c.l.b16 %v260
      %v400 = vunpack.c.l.b16 %v261
      %v401 = vunpack.c.l.b16 %v262
      %v402 = vunpack.c.l.b16 %v263
      %v403 = vunpack.c.l.b16 %v264
      %v404 = vunpack.c.l.b16 %v265
      %v405 = vpack.c.b16 %v370, %v369
      %v406 = vpack.c.b16 %v372, %v371
      %v407 = vpack.c.b16 %v374, %v373
      %v408 = vpack.c.b16 %v376, %v375
      %v409 = vpack.c.b16 %v378, %v377
      %v410 = vpack.c.b16 %v380, %v379
      %v411 = vpack.c.b16 %v382, %v381
      %v412 = vpack.c.b16 %v384, %v383
      %v413 = vpack.c.b16 %v386, %v385
      %v414 = vpack.c.b16 %v388, %v387
      %v415 = vpack.c.b16 %v390, %v389
      %v416 = vpack.c.b16 %v392, %v391
      %v417 = vpack.c.b16 %v394, %v393
      %v418 = vpack.c.b16 %v396, %v395
      %v419 = vpack.c.b16 %v398, %v397
      %v420 = vpack.c.b16 %v400, %v399
      %v421 = vpack.c.b16 %v402, %v401
      %v422 = vpack.c.b16 %v404, %v403
      %vm441 = vcmask 261120
      %v443 = vsel %vm441, %v315, 0
      %v446 = vsel %vm441, %v318, 0
      %v449 = vsel %vm441, %v321, 0
      %v452 = vsel %vm441, %v324, 0
      %454 = vmatprep.subr.bf16.mxu0 0
      %455 = vmatpush1.bf16.msra.mxu0 %v412
      %456 = vmatprep.subr.bf16.mxu0 0
      %457 = vmatpush1.bf16.msra.mxu0 %v411
      %458 = vmatprep.subr.bf16.mxu0 0
      %459 = vmatpush1.bf16.msra.mxu0 %v410
      %460 = vmatprep.subr.bf16.mxu0 0
      %461 = vmatpush1.bf16.msra.mxu0 %v409
      %462 = vmatprep.subr.bf16.mxu0 0
      %463 = vmatpush1.bf16.msra.mxu0 %v408
      %464 = vmatprep.subr.bf16.mxu0 0
      %465 = vmatpush1.bf16.msra.mxu0 %v407
      %466 = vmatprep.subr.bf16.mxu0 0
      %467 = vmatpush1.bf16.msra.mxu0 %v406
      %468 = vmatprep.subr.bf16.mxu0 0
      %469 = vmatpush1.bf16.msra.mxu0 %v405
      %470 = vmatprep.subr.bf16.mxu0 0
      %471 = vmatpush2.bf16.msra.mxu0 %v420
      %472 = vmatprep.subr.bf16.mxu0 0
      %473 = vmatpush2.bf16.msra.mxu0 %v419
      %474 = vmatprep.subr.bf16.mxu0 0
      %475 = vmatpush2.bf16.msra.mxu0 %v418
      %476 = vmatprep.subr.bf16.mxu0 0
      %477 = vmatpush2.bf16.msra.mxu0 %v417
      %478 = vmatprep.subr.bf16.mxu0 0
      %479 = vmatpush2.bf16.msra.mxu0 %v416
      %480 = vmatprep.subr.bf16.mxu0 0
      %481 = vmatpush2.bf16.msra.mxu0 %v415
      %482 = vmatprep.subr.bf16.mxu0 0
      %483 = vmatpush2.bf16.msra.mxu0 %v414
      %484 = vmatprep.subr.bf16.mxu0 0
      %485 = vmatpush2.bf16.msra.mxu0 %v413
      %486 = vmatprep.mubr.bf16.mxu0 %v314
      %487 = vmatmul.mubr.bf16.gmra.mxu0 %v313
      %v488 = vpop.f32.mrf.mxu0
      %v489 = vadd.f32 %v271, %v488
      %v490 = vpop.f32.mrf.mxu0
      %v491 = vpop.f32.mrf.mxu0
      %v492 = vadd.f32 %v271, %v491
      %v493 = vpop.f32.mrf.mxu0
      %494 = vmatprep.mubr.bf16.mxu0 %v317
      %495 = vmatmul.mubr.bf16.gmra.mxu0 %v316
      %v496 = vpop.f32.mrf.mxu0
      %v497 = vadd.f32 %v271, %v496
      %v498 = vpop.f32.mrf.mxu0
      %v499 = vpop.f32.mrf.mxu0
      %v500 = vadd.f32 %v271, %v499
      %v501 = vpop.f32.mrf.mxu0
      %502 = vmatprep.mubr.bf16.mxu0 %v320
      %503 = vmatmul.mubr.bf16.gmra.mxu0 %v319
      %v504 = vpop.f32.mrf.mxu0
      %v505 = vadd.f32 %v271, %v504
      %v506 = vpop.f32.mrf.mxu0
      %v507 = vpop.f32.mrf.mxu0
      %v508 = vadd.f32 %v271, %v507
      %v509 = vpop.f32.mrf.mxu0
      %510 = vmatprep.mubr.bf16.mxu0 %v323
      %511 = vmatmul.mubr.bf16.gmra.mxu0 %v322
      %v512 = vpop.f32.mrf.mxu0
      %v513 = vadd.f32 %v271, %v512
      %v514 = vpop.f32.mrf.mxu0
      %v515 = vpop.f32.mrf.mxu0
      %v516 = vadd.f32 %v271, %v515
      %v517 = vpop.f32.mrf.mxu0
      %518 = vdwg.mxu0
      %519 = vmatprep.subr.bf16.mxu0 0
      %520 = vmatpush1.bf16.msra.mxu0 0
      %521 = vmatprep.subr.bf16.mxu0 0
      %522 = vmatpush1.bf16.msra.mxu0 0
      %523 = vmatprep.subr.bf16.mxu0 0
      %524 = vmatpush1.bf16.msra.mxu0 0
      %525 = vmatprep.subr.bf16.mxu0 0
      %526 = vmatpush1.bf16.msra.mxu0 0
      %527 = vmatprep.subr.bf16.mxu0 0
      %528 = vmatpush1.bf16.msra.mxu0 0
      %529 = vmatprep.subr.bf16.mxu0 0
      %530 = vmatpush1.bf16.msra.mxu0 0
      %531 = vmatprep.subr.bf16.mxu0 0
      %532 = vmatpush1.bf16.msra.mxu0 %v422
      %533 = vmatprep.subr.bf16.mxu0 0
      %534 = vmatpush1.bf16.msra.mxu0 %v421
      %535 = vmatprep.subr.bf16.mxu0 0
      %536 = vmatpush2.bf16.msra.mxu0 0
      %537 = vmatprep.subr.bf16.mxu0 0
      %538 = vmatpush2.bf16.msra.mxu0 0
      %539 = vmatprep.subr.bf16.mxu0 0
      %540 = vmatpush2.bf16.msra.mxu0 0
      %541 = vmatprep.subr.bf16.mxu0 0
      %542 = vmatpush2.bf16.msra.mxu0 0
      %543 = vmatprep.subr.bf16.mxu0 0
      %544 = vmatpush2.bf16.msra.mxu0 0
      %545 = vmatprep.subr.bf16.mxu0 0
      %546 = vmatpush2.bf16.msra.mxu0 0
      %547 = vmatprep.subr.bf16.mxu0 0
      %548 = vmatpush2.bf16.msra.mxu0 0
      %549 = vmatprep.subr.bf16.mxu0 0
      %550 = vmatpush2.bf16.msra.mxu0 0
      %551 = vmatprep.mubr.bf16.mxu0 0
      %552 = vmatmul.mubr.bf16.gmra.mxu0 %v443
      %v553 = vpop.f32.mrf.mxu0
      %v554 = vadd.f32 %v489, %v553
      %v555 = vpop.f32.mrf.mxu0
      %v556 = vpop.f32.mrf.mxu0
      %v557 = vadd.f32 %v492, %v556
      %v558 = vpop.f32.mrf.mxu0
      %559 = vmatprep.mubr.bf16.mxu0 0
      %560 = vmatmul.mubr.bf16.gmra.mxu0 %v446
      %v561 = vpop.f32.mrf.mxu0
      %v562 = vadd.f32 %v497, %v561
      %v563 = vpop.f32.mrf.mxu0
      %v564 = vpop.f32.mrf.mxu0
      %v565 = vadd.f32 %v500, %v564
      %v566 = vpop.f32.mrf.mxu0
      %567 = vmatprep.mubr.bf16.mxu0 0
      %568 = vmatmul.mubr.bf16.gmra.mxu0 %v449
      %v569 = vpop.f32.mrf.mxu0
      %v570 = vadd.f32 %v505, %v569
      %v571 = vpop.f32.mrf.mxu0
      %v572 = vpop.f32.mrf.mxu0
      %v573 = vadd.f32 %v508, %v572
      %v574 = vpop.f32.mrf.mxu0
      %575 = vmatprep.mubr.bf16.mxu0 0
      %576 = vmatmul.mubr.bf16.gmra.mxu0 %v452
      %v577 = vpop.f32.mrf.mxu0
      %v578 = vadd.f32 %v513, %v577
      %v579 = vpop.f32.mrf.mxu0
      %v580 = vpop.f32.mrf.mxu0
      %v581 = vadd.f32 %v516, %v580
      %v582 = vpop.f32.mrf.mxu0
      %583 = vdwg.mxu0
      %v584 = vxor.u32 %v554, 2147483648
      %v585 = vxor.u32 %v557, 2147483648
      %v586 = vxor.u32 %v562, 2147483648
      %v587 = vxor.u32 %v565, 2147483648
      %v588 = vxor.u32 %v570, 2147483648
      %v589 = vxor.u32 %v573, 2147483648
      %v590 = vxor.u32 %v578, 2147483648
      %v591 = vxor.u32 %v581, 2147483648
      %v592 = vmul.f32 %v584, 1.442695
      %v593 = vpow.pop %v592
      %v594 = vmul.f32 %v585, 1.442695
      %v595 = vpow.pop %v594
      %v596 = vmul.f32 %v586, 1.442695
      %v597 = vpow.pop %v596
      %v598 = vmul.f32 %v587, 1.442695
      %v599 = vpow.pop %v598
      %v600 = vmul.f32 %v588, 1.442695
      %v601 = vpow.pop %v600
      %v602 = vmul.f32 %v589, 1.442695
      %v603 = vpow.pop %v602
      %v604 = vmul.f32 %v590, 1.442695
      %v605 = vpow.pop %v604
      %v606 = vmul.f32 %v591, 1.442695
      %v607 = vpow.pop %v606
      %v608 = vadd.f32 %v593, 1.0
      %v609 = vadd.f32 %v595, 1.0
      %v610 = vadd.f32 %v597, 1.0
      %v611 = vadd.f32 %v599, 1.0
      %v612 = vadd.f32 %v601, 1.0
      %v613 = vadd.f32 %v603, 1.0
      %v614 = vadd.f32 %v605, 1.0
      %v615 = vadd.f32 %v607, 1.0
      %v616 = vrcp.pop %v608
      %v617 = vmul.f32 1.0, %v616
      %v618 = vrcp.pop %v609
      %v619 = vmul.f32 1.0, %v618
      %v620 = vrcp.pop %v610
      %v621 = vmul.f32 1.0, %v620
      %v622 = vrcp.pop %v611
      %v623 = vmul.f32 1.0, %v622
      %v624 = vrcp.pop %v612
      %v625 = vmul.f32 1.0, %v624
      %v626 = vrcp.pop %v613
      %v627 = vmul.f32 1.0, %v626
      %v628 = vrcp.pop %v614
      %v629 = vmul.f32 1.0, %v628
      %v630 = vrcp.pop %v615
      %v631 = vmul.f32 1.0, %v630
      %v632 = vmul.f32 %v554, %v617
      %v633 = vmul.f32 %v557, %v619
      %v634 = vmul.f32 %v562, %v621
      %v635 = vmul.f32 %v565, %v623
      %v636 = vmul.f32 %v570, %v625
      %v637 = vmul.f32 %v573, %v627
      %v638 = vmul.f32 %v578, %v629
      %v639 = vmul.f32 %v581, %v631
      %v640 = vpack.c.bf16 %v633, %v632
      %v641 = vpack.c.bf16 %v635, %v634
      %v642 = vpack.c.bf16 %v637, %v636
      %v643 = vpack.c.bf16 %v639, %v638
      %v648 = vunpack.c.l.b16 %v640
      %v649 = vunpack.c.h.b16 %v640
      %v650 = vunpack.c.l.b16 %v641
      %v651 = vunpack.c.h.b16 %v641
      %v652 = vunpack.c.l.b16 %v642
      %v653 = vunpack.c.h.b16 %v642
      %v654 = vunpack.c.l.b16 %v643
      %v655 = vunpack.c.h.b16 %v643
      %v656 = vpack.c.b16 %v648, %v648
      %v657 = vpack.c.b16 %v649, %v649
      %v658 = vpack.c.b16 %v650, %v650
      %v659 = vpack.c.b16 %v651, %v651
      %v660 = vpack.c.b16 %v652, %v652
      %v661 = vpack.c.b16 %v653, %v653
      %v662 = vpack.c.b16 %v654, %v654
      %v663 = vpack.c.b16 %v655, %v655
      %vm672 = vcmask 781312
      %673 = vst.msk [vmem:[%s211] sm:$0xf] %vm672, %v656
      %674 = vst.msk [vmem:[%s211 + $0x4] sm:$0xf] %vm672, %v657
      %675 = vst.msk [vmem:[%s211 + $0x8] sm:$0xf] %vm672, %v658
      %676 = vst.msk [vmem:[%s211 + $0xc] sm:$0xf] %vm672, %v659
      %677 = vst.msk [vmem:[%s211 + $0x10] sm:$0xf] %vm672, %v660
      %678 = vst.msk [vmem:[%s211 + $0x14] sm:$0xf] %vm672, %v661
      %679 = vst.msk [vmem:[%s211 + $0x18] sm:$0xf] %vm672, %v662
      %680 = vst.msk [vmem:[%s211 + $0x1c] sm:$0xf] %vm672, %v663
      %s681 = smul.u32 8, %s19
      %p682 = scmp.lt.s32.totalorder %s18, 1
      %s683 = scalar_select %p682, %s18, 1
      %p684 = scmp.lt.s32.totalorder %s681, 7
      %s685 = scalar_select %p684, %s681, 7
      %s686 = smul.addr %s683, 8
      %s687 = sadd.s32 %s685, %s686
      %s688 = smul.addr %s687, 4
      %s689 = scalar_lea.vmem %s3, %s688
      // Predicated region
      $region33: #{_lambda_.12} parent=31 // pred_check
        %p690 = pneg %p116
      $region34: #{_lambda_.12} parent=31 // pred_check_branch
        %692 = sbr.rel (%p690) target = $region36
      $region35: #{_lambda_.12} parent=31 // pred_region
        %s693 = smul.u32 8, %s19
      $region36: #{_lambda_.12} parent=31 // pred_fallthru
        _
    $region32: #{_lambda_.12} parent=5 // pred_fallthru
      _
    %p694 = scmp.le.s32.totalorder 2, %s9
    // Predicated region
    $region37: #{_lambda_.12} parent=5 // pred_check
      %p695 = pneg %p694
    $region38: #{_lambda_.12} parent=5 // pred_check_branch
      %697 = sbr.rel (%p695) target = $region40
    $region39: #{_lambda_.12} parent=5 // pred_region
      %s698 = ssub.s32 %s9, 2
      // Predicated region
      $region41: #{_lambda_.12} parent=39 // pred_check
        %p699 = pneg %p122
      $region42: #{_lambda_.12} parent=39 // pred_check_branch
        %701 = sbr.rel (%p699) target = $region44
      $region43: #{_lambda_.12} parent=39 // pred_region
        %s702 = smul.u32 8, %s21
        %p703 = scmp.lt.s32.totalorder %s20, 1
        %s704 = scalar_select %p703, %s20, 1
        %p705 = scmp.lt.s32.totalorder %s702, 7
        %s706 = scalar_select %p705, %s702, 7
        %s707 = smul.addr %s704, 8
        %s708 = sadd.s32 %s706, %s707
        %s709 = smul.addr %s708, 4
        %s710 = scalar_lea.vmem %s3, %s709
      $region44: #{_lambda_.12} parent=39 // pred_fallthru
        _
    $region40: #{_lambda_.12} parent=5 // pred_fallthru
      _
  $region6: #{_lambda_.12} parent=0 // loop_footer
    %s13 = sadd.s32 1, %s9
  $region7: #{_lambda_.12} parent=0 // loop_footer_branch
    %8 = sbr.rel target = $region3
  $region8: #{_lambda_.12} parent=0 // loop_exit
    _

// kernel: _lambda_.13
$region0: #{_lambda_.13}
  #allocation0 [shape = 'u32[]', space=smem, size = 0x4, offset = 0x4, fixed_abs, tag = 'smem constant byte address 0x4 - core index']
  #allocation1 [shape = 'u32[144,128]{1,0:T(1,128)}', space=vmem, size = 0x12000, scoped, tag = 'internal scratch']
  %s0 = inlined_call_operand.vmem [shape: bf16[2,1,80,288], index: 0, kind: input, shape index: {}]
  %s1 = inlined_call_operand.vmem [shape: bf16[3,288,96], index: 1, kind: input, shape index: {}]
  %s2 = inlined_call_operand.vmem [shape: f32[1,96], index: 2, kind: input, shape index: {}]
  %s3 = inlined_call_operand.vmem [shape: bf16[2,64,96], index: 3, kind: output, shape index: {}]
  %s4 = sld [smem:[#allocation0]]
  $region45: #{_lambda_.13} parent=0
    _
  %s6 = ssub.s32 1, %s4
  %s7 = scalar_select 0, %s6, %s4
  loop: start=0, step=1, limit=4
  $region2: #{_lambda_.13} parent=0 // loop_pre_header
    _
  $region3: #{_lambda_.13} parent=0 // loop_header
    %s9 = sphi 0, %s13
    %p10 = scmp.ge.s32.totalorder %s9, 4
    %s19 = sphi 0, %s21
    %s22 = sphi 0, %s19
    %s23 = sphi 0, %s22
    %s39 = sphi 0, %s23
    %s43 = sphi 0, %s43
    %s45 = sphi 0, %s43
    %s46 = sphi 0, %s45
    %s60 = sphi 0, %s46
    %s64 = sphi 0, %s64
    %s66 = sphi 0, %s64
    %s67 = sphi 0, %s66
    %s81 = sphi 0, %s67
    %s87 = sphi 0, %s89
    %s90 = sphi 0, %s87
    %s91 = sphi 0, %s90
    %s107 = sphi 0, %s91
  $region4: #{_lambda_.13} parent=0 // loop_header_branch
    %12 = sbr.rel (%p10) target = $region8
  $region5: #{_lambda_.13} parent=0 // loop_body
    %s14 = ssub.s32 %s9, 1
    %s15 = ssub.s32 %s9, 2
    %s16 = sadd.s32 %s9, 1
    %s17 = ssub.s32 %s9, %s16
    %p18 = scmp.eq.s32.totalorder %s17, 0
    %s20 = sadd.s32 %s19, 1
    %s21 = scalar_select %p18, %s19, %s20
    %p24 = pneg %p18
    %p25 = scmp.eq.s32.totalorder %s9, 1
    %p26 = por %p24, %p25
    %p27 = scmp.ne.s32.totalorder %s19, %s22
    %p28 = scmp.eq.s32.totalorder %s9, 0
    %p29 = por %p27, %p28
    %p30 = scmp.ne.s32.totalorder %s19, %s22
    %p31 = scmp.eq.s32.totalorder %s14, 1
    %p32 = por %p30, %p31
    %p33 = scmp.ne.s32.totalorder %s22, %s23
    %p34 = scmp.eq.s32.totalorder %s14, 0
    %p35 = por %p33, %p34
    %p36 = scmp.ne.s32.totalorder %s22, %s23
    %p37 = scmp.eq.s32.totalorder %s15, 1
    %p38 = por %p36, %p37
    %p40 = scmp.ne.s32.totalorder %s23, %s39
    %p41 = scmp.eq.s32.totalorder %s15, 0
    %p42 = por %p40, %p41
    %s44 = sadd.s32 %s43, 1
    %p47 = scmp.eq.s32.totalorder %s9, 1
    %p48 = scmp.ne.s32.totalorder %s43, %s45
    %p49 = scmp.eq.s32.totalorder %s9, 0
    %p50 = por %p48, %p49
    %p51 = scmp.ne.s32.totalorder %s43, %s45
    %p52 = scmp.eq.s32.totalorder %s14, 1
    %p53 = por %p51, %p52
    %p54 = scmp.ne.s32.totalorder %s45, %s46
    %p55 = scmp.eq.s32.totalorder %s14, 0
    %p56 = por %p54, %p55
    %p57 = scmp.ne.s32.totalorder %s45, %s46
    %p58 = scmp.eq.s32.totalorder %s15, 1
    %p59 = por %p57, %p58
    %p61 = scmp.ne.s32.totalorder %s46, %s60
    %p62 = scmp.eq.s32.totalorder %s15, 0
    %p63 = por %p61, %p62
    %s65 = sadd.s32 %s64, 1
    %p68 = scmp.eq.s32.totalorder %s9, 1
    %p69 = scmp.ne.s32.totalorder %s64, %s66
    %p70 = scmp.eq.s32.totalorder %s9, 0
    %p71 = por %p69, %p70
    %p72 = scmp.ne.s32.totalorder %s64, %s66
    %p73 = scmp.eq.s32.totalorder %s14, 1
    %p74 = por %p72, %p73
    %p75 = scmp.ne.s32.totalorder %s66, %s67
    %p76 = scmp.eq.s32.totalorder %s14, 0
    %p77 = por %p75, %p76
    %p78 = scmp.ne.s32.totalorder %s66, %s67
    %p79 = scmp.eq.s32.totalorder %s15, 1
    %p80 = por %p78, %p79
    %p82 = scmp.ne.s32.totalorder %s67, %s81
    %p83 = scmp.eq.s32.totalorder %s15, 0
    %p84 = por %p82, %p83
    %s85 = ssub.s32 %s9, %s16
    %p86 = scmp.eq.s32.totalorder %s85, 0
    %s88 = sadd.s32 %s87, 1
    %s89 = scalar_select %p86, %s87, %s88
    %p92 = pneg %p86
    %p93 = scmp.eq.s32.totalorder %s9, 1
    %p94 = por %p92, %p93
    %p95 = scmp.ne.s32.totalorder %s87, %s90
    %p96 = scmp.eq.s32.totalorder %s9, 0
    %p97 = por %p95, %p96
    %p98 = scmp.ne.s32.totalorder %s87, %s90
    %p99 = scmp.eq.s32.totalorder %s14, 1
    %p100 = por %p98, %p99
    %p101 = scmp.ne.s32.totalorder %s90, %s91
    %p102 = scmp.eq.s32.totalorder %s14, 0
    %p103 = por %p101, %p102
    %p104 = scmp.ne.s32.totalorder %s90, %s91
    %p105 = scmp.eq.s32.totalorder %s15, 1
    %p106 = por %p104, %p105
    %p108 = scmp.ne.s32.totalorder %s91, %s107
    %p109 = scmp.eq.s32.totalorder %s15, 0
    %p110 = por %p108, %p109
    %p111 = scmp.le.s32.totalorder 1, %s9
    %p112 = scmp.lt.s32.totalorder %s9, 3
    %p113 = pnand %p111, %p112
    %p114 = pneg %p113
    // Predicated region
    $region9: #{_lambda_.13} parent=5 // pred_check
      _
    $region10: #{_lambda_.13} parent=5 // pred_check_branch
      %116 = sbr.rel (%p113) target = $region12
    $region11: #{_lambda_.13} parent=5 // pred_region
      %s117 = ssub.s32 %s9, 1
      // Predicated region
      $region13: #{_lambda_.13} parent=11 // pred_check
        %p118 = pneg %p56
      $region14: #{_lambda_.13} parent=11 // pred_check_branch
        %120 = sbr.rel (%p118) target = $region16
      $region15: #{_lambda_.13} parent=11 // pred_region
        _
      $region16: #{_lambda_.13} parent=11 // pred_fallthru
        _
      // Predicated region
      $region17: #{_lambda_.13} parent=11 // pred_check
        %p121 = pneg %p77
      $region18: #{_lambda_.13} parent=11 // pred_check_branch
        %123 = sbr.rel (%p121) target = $region20
      $region19: #{_lambda_.13} parent=11 // pred_region
        _
      $region20: #{_lambda_.13} parent=11 // pred_fallthru
        _
    $region12: #{_lambda_.13} parent=5 // pred_fallthru
      _
    %p124 = scmp.lt.s32.totalorder %s9, 2
    // Predicated region
    $region21: #{_lambda_.13} parent=5 // pred_check
      %p125 = pneg %p124
    $region22: #{_lambda_.13} parent=5 // pred_check_branch
      %127 = sbr.rel (%p125) target = $region24
    $region23: #{_lambda_.13} parent=5 // pred_region
      // Predicated region
      $region25: #{_lambda_.13} parent=23 // pred_check
        %p128 = pneg %p29
      $region26: #{_lambda_.13} parent=23 // pred_check_branch
        %130 = sbr.rel (%p128) target = $region28
      $region27: #{_lambda_.13} parent=23 // pred_region
        %p131 = scmp.lt.s32.totalorder %s9, 1
        %s132 = scalar_select %p131, %s9, 1
        %s133 = smul.addr %s132, 30
        %s134 = smul.addr %s133, 4
        %s135 = scalar_lea.vmem %s0, %s134
      $region28: #{_lambda_.13} parent=23 // pred_fallthru
        _
    $region24: #{_lambda_.13} parent=5 // pred_fallthru
      _
    %p136 = scmp.le.s32.totalorder 1, %s9
    %p137 = scmp.lt.s32.totalorder %s9, 3
    %p138 = pnand %p136, %p137
    %p139 = pneg %p138
    // Predicated region
    $region29: #{_lambda_.13} parent=5 // pred_check
      _
    $region30: #{_lambda_.13} parent=5 // pred_check_branch
      %141 = sbr.rel (%p138) target = $region32
    $region31: #{_lambda_.13} parent=5 // pred_region
      %s142 = ssub.s32 %s9, 1
      %p143 = scmp.lt.s32.totalorder %s14, 1
      %s144 = scalar_select %p143, %s14, 1
      %s145 = smul.addr %s144, 30
      %s146 = smul.addr %s145, 4
      %s147 = scalar_lea.vmem %s0, %s146
      %p148 = pneg %p35
      %p149 = pneg %p32
      %p150 = pneg %p56
      %p151 = pneg %p53
      %p152 = pneg %p77
      %p153 = pneg %p74
      %p154 = pneg %p103
      %p155 = pneg %p100
      %p156 = scmp.lt.s32.totalorder %s14, 1
      %s157 = scalar_select %p156, %s14, 1
      %s158 = smul.addr %s157, 8
      %s159 = smul.addr %s158, 4
      %s160 = scalar_lea.vmem %s3, %s159
      %p161 = scmp.lt.s32.totalorder %s14, 1
      %s162 = scalar_select %p161, %s14, 1
      %s163 = smul.addr %s162, 30
      %s164 = smul.addr %s163, 4
      %s165 = scalar_lea.vmem %s0, %s164
      %p166 = scmp.lt.s32.totalorder %s14, 1
      %s167 = scalar_select %p166, %s14, 1
      %s168 = smul.addr %s167, 8
      %s169 = smul.addr %s168, 4
      %s170 = scalar_lea.vmem %s3, %s169
      %v172 = vld [vmem:[%s165] sm:$0xff]
      %v173 = vld [vmem:[%s165 + $0x8] sm:$0xf]
      %v174 = vld [vmem:[%s165 + $0xc] sm:$0xff]
      %v175 = vld [vmem:[%s165 + $0x14] sm:$0xf]
      %v176 = vld [vmem:[%s165 + $0x18] sm:$0xff]
      %v177 = vld [vmem:[%s165 + $0x20] sm:$0xf]
      %v178 = vld [vmem:[%s165 + $0x24] sm:$0xff]
      %v179 = vld [vmem:[%s165 + $0x2c] sm:$0xf]
      %v180 = vld [vmem:[%s165 + $0x30] sm:$0xff]
      %v181 = vld [vmem:[%s165 + $0x38] sm:$0xf]
      %v182 = vld [vmem:[%s165 + $0x3c] sm:$0xff]
      %v183 = vld [vmem:[%s165 + $0x44] sm:$0xf]
      %v184 = vld [vmem:[%s165 + $0x48] sm:$0xff]
      %v185 = vld [vmem:[%s165 + $0x50] sm:$0xf]
      %v186 = vld [vmem:[%s165 + $0x54] sm:$0xff]
      %v187 = vld [vmem:[%s165 + $0x5c] sm:$0xf]
      %v188 = vld [vmem:[%s1] sm:$0xf]
      %v189 = vld [vmem:[%s1 + $0x4] sm:$0xf]
      %v190 = vld [vmem:[%s1 + $0x8] sm:$0xf]
      %v191 = vld [vmem:[%s1 + $0xc] sm:$0xf]
      %v192 = vld [vmem:[%s1 + $0x10] sm:$0xf]
      %v193 = vld [vmem:[%s1 + $0x14] sm:$0xf]
      %v194 = vld [vmem:[%s1 + $0x18] sm:$0xf]
      %v195 = vld [vmem:[%s1 + $0x1c] sm:$0xf]
      %v196 = vld [vmem:[%s1 + $0x20] sm:$0xf]
      %v197 = vld [vmem:[%s1 + $0x24] sm:$0xf]
      %v198 = vld [vmem:[%s1 + $0x28] sm:$0xf]
      %v199 = vld [vmem:[%s1 + $0x2c] sm:$0xf]
      %v200 = vld [vmem:[%s1 + $0x30] sm:$0xf]
      %v201 = vld [vmem:[%s1 + $0x34] sm:$0xf]
      %v202 = vld [vmem:[%s1 + $0x38] sm:$0xf]
      %v203 = vld [vmem:[%s1 + $0x3c] sm:$0xf]
      %v204 = vld [vmem:[%s1 + $0x40] sm:$0xf]
      %v205 = vld [vmem:[%s1 + $0x44] sm:$0xf]
      %v206 = vld [vmem:[%s1 + $0x48] sm:$0xf]
      %v207 = vld [vmem:[%s1 + $0x4c] sm:$0xf]
      %v208 = vld [vmem:[%s1 + $0x50] sm:$0xf]
      %v209 = vld [vmem:[%s1 + $0x54] sm:$0xf]
      %v210 = vld [vmem:[%s1 + $0x58] sm:$0xf]
      %v211 = vld [vmem:[%s1 + $0x5c] sm:$0xf]
      %v212 = vld [vmem:[%s1 + $0x60] sm:$0xf]
      %v213 = vld [vmem:[%s1 + $0x64] sm:$0xf]
      %v214 = vld [vmem:[%s1 + $0x68] sm:$0xf]
      %v215 = vld [vmem:[%s1 + $0x6c] sm:$0xf]
      %v216 = vld [vmem:[%s1 + $0x70] sm:$0xf]
      %v217 = vld [vmem:[%s1 + $0x74] sm:$0xf]
      %v218 = vld [vmem:[%s1 + $0x78] sm:$0xf]
      %v219 = vld [vmem:[%s1 + $0x7c] sm:$0xf]
      %v220 = vld [vmem:[%s1 + $0x80] sm:$0xf]
      %v221 = vld [vmem:[%s1 + $0x84] sm:$0xf]
      %v222 = vld [vmem:[%s1 + $0x88] sm:$0xf]
      %v223 = vld [vmem:[%s1 + $0x8c] sm:$0xf]
      %v224 = vld [vmem:[%s165 + $0x60] sm:$0xff]
      %v225 = vld [vmem:[%s165 + $0x68] sm:$0xf]
      %s226 = scalar_lea.vmem %s1, 144
      %v227 = vld [vmem:[%s226] sm:$0xf]
      %v228 = vld [vmem:[%s226 + $0x4] sm:$0xf]
      %v229 = vld [vmem:[%s226 + $0x8] sm:$0xf]
      %v230 = vld [vmem:[%s226 + $0xc] sm:$0xf]
      %v231 = vld [vmem:[%s226 + $0x10] sm:$0xf]
      %v232 = vld [vmem:[%s226 + $0x14] sm:$0xf]
      %v233 = vld [vmem:[%s226 + $0x18] sm:$0xf]
      %v234 = vld [vmem:[%s226 + $0x1c] sm:$0xf]
      %v235 = vld [vmem:[%s226 + $0x20] sm:$0xf]
      %v236 = vld [vmem:[%s226 + $0x24] sm:$0xf]
      %v237 = vld [vmem:[%s226 + $0x28] sm:$0xf]
      %v238 = vld [vmem:[%s226 + $0x2c] sm:$0xf]
      %v239 = vld [vmem:[%s226 + $0x30] sm:$0xf]
      %v240 = vld [vmem:[%s226 + $0x34] sm:$0xf]
      %v241 = vld [vmem:[%s226 + $0x38] sm:$0xf]
      %v242 = vld [vmem:[%s226 + $0x3c] sm:$0xf]
      %v243 = vld [vmem:[%s226 + $0x40] sm:$0xf]
      %v244 = vld [vmem:[%s226 + $0x44] sm:$0xf]
      %v245 = vld [vmem:[%s226 + $0x48] sm:$0xf]
      %v246 = vld [vmem:[%s226 + $0x4c] sm:$0xf]
      %v247 = vld [vmem:[%s226 + $0x50] sm:$0xf]
      %v248 = vld [vmem:[%s226 + $0x54] sm:$0xf]
      %v249 = vld [vmem:[%s226 + $0x58] sm:$0xf]
      %v250 = vld [vmem:[%s226 + $0x5c] sm:$0xf]
      %v251 = vld [vmem:[%s226 + $0x60] sm:$0xf]
      %v252 = vld [vmem:[%s226 + $0x64] sm:$0xf]
      %v253 = vld [vmem:[%s226 + $0x68] sm:$0xf]
      %v254 = vld [vmem:[%s226 + $0x6c] sm:$0xf]
      %v255 = vld [vmem:[%s226 + $0x70] sm:$0xf]
      %v256 = vld [vmem:[%s226 + $0x74] sm:$0xf]
      %v257 = vld [vmem:[%s226 + $0x78] sm:$0xf]
      %v258 = vld [vmem:[%s226 + $0x7c] sm:$0xf]
      %v259 = vld [vmem:[%s226 + $0x80] sm:$0xf]
      %v260 = vld [vmem:[%s226 + $0x84] sm:$0xf]
      %v261 = vld [vmem:[%s226 + $0x88] sm:$0xf]
      %v262 = vld [vmem:[%s226 + $0x8c] sm:$0xf]
      %v279 = vunpack.c.l.b16 %v174
      %v280 = vunpack.c.h.b16 %v174
      %v281 = vunpack.c.l.b16 %v175
      %v282 = vunpack.c.l.b16 %v176
      %v283 = vunpack.c.h.b16 %v176
      %v284 = vunpack.c.l.b16 %v177
      %v285 = vunpack.c.l.b16 %v178
      %v286 = vunpack.c.h.b16 %v178
      %v287 = vunpack.c.l.b16 %v179
      %v288 = vunpack.c.l.b16 %v180
      %v289 = vunpack.c.h.b16 %v180
      %v290 = vunpack.c.l.b16 %v181
      %v291 = vunpack.c.l.b16 %v182
      %v292 = vunpack.c.h.b16 %v182
      %v293 = vunpack.c.l.b16 %v183
      %v294 = vunpack.c.l.b16 %v184
      %v295 = vunpack.c.h.b16 %v184
      %v296 = vunpack.c.l.b16 %v185
      %v297 = vunpack.c.l.b16 %v186
      %v298 = vunpack.c.h.b16 %v186
      %v299 = vunpack.c.l.b16 %v187
      %v300 = vunpack.c.l.b16 %v224
      %v301 = vunpack.c.h.b16 %v224
      %v302 = vunpack.c.l.b16 %v225
      %v303 = vpack.c.b16 %v282, %v279
      %v304 = vpack.c.b16 %v283, %v280
      %v305 = vpack.c.b16 %v284, %v281
      %v306 = vpack.c.b16 %v288, %v285
      %v307 = vpack.c.b16 %v289, %v286
      %v308 = vpack.c.b16 %v290, %v287
      %v309 = vpack.c.b16 %v294, %v291
      %v310 = vpack.c.b16 %v295, %v292
      %v311 = vpack.c.b16 %v296, %v293
      %v312 = vpack.c.b16 %v300, %v297
      %v313 = vpack.c.b16 %v301, %v298
      %v314 = vpack.c.b16 %v302, %v299
      %v359 = vunpack.c.l.b16 %v227
      %v360 = vunpack.c.l.b16 %v228
      %v361 = vunpack.c.l.b16 %v229
      %v362 = vunpack.c.l.b16 %v230
      %v363 = vunpack.c.l.b16 %v231
      %v364 = vunpack.c.l.b16 %v232
      %v365 = vunpack.c.l.b16 %v233
      %v366 = vunpack.c.l.b16 %v234
      %v367 = vunpack.c.l.b16 %v235
      %v368 = vunpack.c.l.b16 %v236
      %v369 = vunpack.c.l.b16 %v237
      %v370 = vunpack.c.l.b16 %v238
      %v371 = vunpack.c.l.b16 %v239
      %v372 = vunpack.c.l.b16 %v240
      %v373 = vunpack.c.l.b16 %v241
      %v374 = vunpack.c.l.b16 %v242
      %v375 = vunpack.c.l.b16 %v243
      %v376 = vunpack.c.l.b16 %v244
      %v377 = vunpack.c.l.b16 %v245
      %v378 = vunpack.c.l.b16 %v246
      %v379 = vunpack.c.l.b16 %v247
      %v380 = vunpack.c.l.b16 %v248
      %v381 = vunpack.c.l.b16 %v249
      %v382 = vunpack.c.l.b16 %v250
      %v383 = vunpack.c.l.b16 %v251
      %v384 = vunpack.c.l.b16 %v252
      %v385 = vunpack.c.l.b16 %v253
      %v386 = vunpack.c.l.b16 %v254
      %v387 = vunpack.c.l.b16 %v255
      %v388 = vunpack.c.l.b16 %v256
      %v389 = vunpack.c.l.b16 %v257
      %v390 = vunpack.c.l.b16 %v258
      %v391 = vunpack.c.l.b16 %v259
      %v392 = vunpack.c.l.b16 %v260
      %v393 = vunpack.c.l.b16 %v261
      %v394 = vunpack.c.l.b16 %v262
      %v395 = vpack.c.b16 %v360, %v359
      %v396 = vpack.c.b16 %v362, %v361
      %v397 = vpack.c.b16 %v364, %v363
      %v398 = vpack.c.b16 %v366, %v365
      %v399 = vpack.c.b16 %v368, %v367
      %v400 = vpack.c.b16 %v370, %v369
      %v401 = vpack.c.b16 %v372, %v371
      %v402 = vpack.c.b16 %v374, %v373
      %v403 = vpack.c.b16 %v376, %v375
      %v404 = vpack.c.b16 %v378, %v377
      %v405 = vpack.c.b16 %v380, %v379
      %v406 = vpack.c.b16 %v382, %v381
      %v407 = vpack.c.b16 %v384, %v383
      %v408 = vpack.c.b16 %v386, %v385
      %v409 = vpack.c.b16 %v388, %v387
      %v410 = vpack.c.b16 %v390, %v389
      %v411 = vpack.c.b16 %v392, %v391
      %v412 = vpack.c.b16 %v394, %v393
      %vm431 = vcmask 261120
      %v433 = vsel %vm431, %v305, 0
      %v436 = vsel %vm431, %v308, 0
      %v439 = vsel %vm431, %v311, 0
      %v442 = vsel %vm431, %v314, 0
      %444 = vmatprep.subr.bf16.mxu0 0
      %445 = vmatpush1.bf16.msra.mxu0 %v402
      %446 = vmatprep.subr.bf16.mxu0 0
      %447 = vmatpush1.bf16.msra.mxu0 %v401
      %448 = vmatprep.subr.bf16.mxu0 0
      %449 = vmatpush1.bf16.msra.mxu0 %v400
      %450 = vmatprep.subr.bf16.mxu0 0
      %451 = vmatpush1.bf16.msra.mxu0 %v399
      %452 = vmatprep.subr.bf16.mxu0 0
      %453 = vmatpush1.bf16.msra.mxu0 %v398
      %454 = vmatprep.subr.bf16.mxu0 0
      %455 = vmatpush1.bf16.msra.mxu0 %v397
      %456 = vmatprep.subr.bf16.mxu0 0
      %457 = vmatpush1.bf16.msra.mxu0 %v396
      %458 = vmatprep.subr.bf16.mxu0 0
      %459 = vmatpush1.bf16.msra.mxu0 %v395
      %460 = vmatprep.subr.bf16.mxu0 0
      %461 = vmatpush2.bf16.msra.mxu0 %v410
      %462 = vmatprep.subr.bf16.mxu0 0
      %463 = vmatpush2.bf16.msra.mxu0 %v409
      %464 = vmatprep.subr.bf16.mxu0 0
      %465 = vmatpush2.bf16.msra.mxu0 %v408
      %466 = vmatprep.subr.bf16.mxu0 0
      %467 = vmatpush2.bf16.msra.mxu0 %v407
      %468 = vmatprep.subr.bf16.mxu0 0
      %469 = vmatpush2.bf16.msra.mxu0 %v406
      %470 = vmatprep.subr.bf16.mxu0 0
      %471 = vmatpush2.bf16.msra.mxu0 %v405
      %472 = vmatprep.subr.bf16.mxu0 0
      %473 = vmatpush2.bf16.msra.mxu0 %v404
      %474 = vmatprep.subr.bf16.mxu0 0
      %475 = vmatpush2.bf16.msra.mxu0 %v403
      %476 = vmatprep.mubr.bf16.mxu0 %v304
      %477 = vmatmul.mubr.bf16.gmra.mxu0 %v303
      %v478 = vpop.f32.mrf.mxu0
      %v479 = vadd.f32 0.0, %v478
      %v480 = vpop.f32.mrf.mxu0
      %v481 = vpop.f32.mrf.mxu0
      %v482 = vadd.f32 0.0, %v481
      %v483 = vpop.f32.mrf.mxu0
      %484 = vmatprep.mubr.bf16.mxu0 %v307
      %485 = vmatmul.mubr.bf16.gmra.mxu0 %v306
      %v486 = vpop.f32.mrf.mxu0
      %v487 = vadd.f32 0.0, %v486
      %v488 = vpop.f32.mrf.mxu0
      %v489 = vpop.f32.mrf.mxu0
      %v490 = vadd.f32 0.0, %v489
      %v491 = vpop.f32.mrf.mxu0
      %492 = vmatprep.mubr.bf16.mxu0 %v310
      %493 = vmatmul.mubr.bf16.gmra.mxu0 %v309
      %v494 = vpop.f32.mrf.mxu0
      %v495 = vadd.f32 0.0, %v494
      %v496 = vpop.f32.mrf.mxu0
      %v497 = vpop.f32.mrf.mxu0
      %v498 = vadd.f32 0.0, %v497
      %v499 = vpop.f32.mrf.mxu0
      %500 = vmatprep.mubr.bf16.mxu0 %v313
      %501 = vmatmul.mubr.bf16.gmra.mxu0 %v312
      %v502 = vpop.f32.mrf.mxu0
      %v503 = vadd.f32 0.0, %v502
      %v504 = vpop.f32.mrf.mxu0
      %v505 = vpop.f32.mrf.mxu0
      %v506 = vadd.f32 0.0, %v505
      %v507 = vpop.f32.mrf.mxu0
      %508 = vdwg.mxu0
      %509 = vmatprep.subr.bf16.mxu0 0
      %510 = vmatpush1.bf16.msra.mxu0 0
      %511 = vmatprep.subr.bf16.mxu0 0
      %512 = vmatpush1.bf16.msra.mxu0 0
      %513 = vmatprep.subr.bf16.mxu0 0
      %514 = vmatpush1.bf16.msra.mxu0 0
      %515 = vmatprep.subr.bf16.mxu0 0
      %516 = vmatpush1.bf16.msra.mxu0 0
      %517 = vmatprep.subr.bf16.mxu0 0
      %518 = vmatpush1.bf16.msra.mxu0 0
      %519 = vmatprep.subr.bf16.mxu0 0
      %520 = vmatpush1.bf16.msra.mxu0 0
      %521 = vmatprep.subr.bf16.mxu0 0
      %522 = vmatpush1.bf16.msra.mxu0 %v412
      %523 = vmatprep.subr.bf16.mxu0 0
      %524 = vmatpush1.bf16.msra.mxu0 %v411
      %525 = vmatprep.subr.bf16.mxu0 0
      %526 = vmatpush2.bf16.msra.mxu0 0
      %527 = vmatprep.subr.bf16.mxu0 0
      %528 = vmatpush2.bf16.msra.mxu0 0
      %529 = vmatprep.subr.bf16.mxu0 0
      %530 = vmatpush2.bf16.msra.mxu0 0
      %531 = vmatprep.subr.bf16.mxu0 0
      %532 = vmatpush2.bf16.msra.mxu0 0
      %533 = vmatprep.subr.bf16.mxu0 0
      %534 = vmatpush2.bf16.msra.mxu0 0
      %535 = vmatprep.subr.bf16.mxu0 0
      %536 = vmatpush2.bf16.msra.mxu0 0
      %537 = vmatprep.subr.bf16.mxu0 0
      %538 = vmatpush2.bf16.msra.mxu0 0
      %539 = vmatprep.subr.bf16.mxu0 0
      %540 = vmatpush2.bf16.msra.mxu0 0
      %541 = vmatprep.mubr.bf16.mxu0 0
      %542 = vmatmul.mubr.bf16.gmra.mxu0 %v433
      %v543 = vpop.f32.mrf.mxu0
      %v544 = vadd.f32 %v479, %v543
      %v545 = vpop.f32.mrf.mxu0
      %v546 = vpop.f32.mrf.mxu0
      %v547 = vadd.f32 %v482, %v546
      %v548 = vpop.f32.mrf.mxu0
      %549 = vmatprep.mubr.bf16.mxu0 0
      %550 = vmatmul.mubr.bf16.gmra.mxu0 %v436
      %v551 = vpop.f32.mrf.mxu0
      %v552 = vadd.f32 %v487, %v551
      %v553 = vpop.f32.mrf.mxu0
      %v554 = vpop.f32.mrf.mxu0
      %v555 = vadd.f32 %v490, %v554
      %v556 = vpop.f32.mrf.mxu0
      %557 = vmatprep.mubr.bf16.mxu0 0
      %558 = vmatmul.mubr.bf16.gmra.mxu0 %v439
      %v559 = vpop.f32.mrf.mxu0
      %v560 = vadd.f32 %v495, %v559
      %v561 = vpop.f32.mrf.mxu0
      %v562 = vpop.f32.mrf.mxu0
      %v563 = vadd.f32 %v498, %v562
      %v564 = vpop.f32.mrf.mxu0
      %565 = vmatprep.mubr.bf16.mxu0 0
      %566 = vmatmul.mubr.bf16.gmra.mxu0 %v442
      %v567 = vpop.f32.mrf.mxu0
      %v568 = vadd.f32 %v503, %v567
      %v569 = vpop.f32.mrf.mxu0
      %v570 = vpop.f32.mrf.mxu0
      %v571 = vadd.f32 %v506, %v570
      %v572 = vpop.f32.mrf.mxu0
      %573 = vdwg.mxu0
      %v576 = vunpack.c.l.b16 %v172
      %v577 = vunpack.c.h.b16 %v172
      %v578 = vunpack.c.l.b16 %v173
      %v579 = vpack.c.b16 %v279, %v576
      %v580 = vpack.c.b16 %v280, %v577
      %v581 = vpack.c.b16 %v281, %v578
      %v582 = vpack.c.b16 %v285, %v282
      %v583 = vpack.c.b16 %v286, %v283
      %v584 = vpack.c.b16 %v287, %v284
      %v585 = vpack.c.b16 %v291, %v288
      %v586 = vpack.c.b16 %v292, %v289
      %v587 = vpack.c.b16 %v293, %v290
      %v588 = vpack.c.b16 %v297, %v294
      %v589 = vpack.c.b16 %v298, %v295
      %v590 = vpack.c.b16 %v299, %v296
      %v635 = vunpack.c.l.b16 %v188
      %v636 = vunpack.c.l.b16 %v189
      %v637 = vunpack.c.l.b16 %v190
      %v638 = vunpack.c.l.b16 %v191
      %v639 = vunpack.c.l.b16 %v192
      %v640 = vunpack.c.l.b16 %v193
      %v641 = vunpack.c.l.b16 %v194
      %v642 = vunpack.c.l.b16 %v195
      %v643 = vunpack.c.l.b16 %v196
      %v644 = vunpack.c.l.b16 %v197
      %v645 = vunpack.c.l.b16 %v198
      %v646 = vunpack.c.l.b16 %v199
      %v647 = vunpack.c.l.b16 %v200
      %v648 = vunpack.c.l.b16 %v201
      %v649 = vunpack.c.l.b16 %v202
      %v650 = vunpack.c.l.b16 %v203
      %v651 = vunpack.c.l.b16 %v204
      %v652 = vunpack.c.l.b16 %v205
      %v653 = vunpack.c.l.b16 %v206
      %v654 = vunpack.c.l.b16 %v207
      %v655 = vunpack.c.l.b16 %v208
      %v656 = vunpack.c.l.b16 %v209
      %v657 = vunpack.c.l.b16 %v210
      %v658 = vunpack.c.l.b16 %v211
      %v659 = vunpack.c.l.b16 %v212
      %v660 = vunpack.c.l.b16 %v213
      %v661 = vunpack.c.l.b16 %v214
      %v662 = vunpack.c.l.b16 %v215
      %v663 = vunpack.c.l.b16 %v216
      %v664 = vunpack.c.l.b16 %v217
      %v665 = vunpack.c.l.b16 %v218
      %v666 = vunpack.c.l.b16 %v219
      %v667 = vunpack.c.l.b16 %v220
      %v668 = vunpack.c.l.b16 %v221
      %v669 = vunpack.c.l.b16 %v222
      %v670 = vunpack.c.l.b16 %v223
      %v671 = vpack.c.b16 %v636, %v635
      %v672 = vpack.c.b16 %v638, %v637
      %v673 = vpack.c.b16 %v640, %v639
      %v674 = vpack.c.b16 %v642, %v641
      %v675 = vpack.c.b16 %v644, %v643
      %v676 = vpack.c.b16 %v646, %v645
      %v677 = vpack.c.b16 %v648, %v647
      %v678 = vpack.c.b16 %v650, %v649
      %v679 = vpack.c.b16 %v652, %v651
      %v680 = vpack.c.b16 %v654, %v653
      %v681 = vpack.c.b16 %v656, %v655
      %v682 = vpack.c.b16 %v658, %v657
      %v683 = vpack.c.b16 %v660, %v659
      %v684 = vpack.c.b16 %v662, %v661
      %v685 = vpack.c.b16 %v664, %v663
      %v686 = vpack.c.b16 %v666, %v665
      %v687 = vpack.c.b16 %v668, %v667
      %v688 = vpack.c.b16 %v670, %v669
      %v708 = vsel %vm431, %v581, 0
      %v711 = vsel %vm431, %v584, 0
      %v714 = vsel %vm431, %v587, 0
      %v717 = vsel %vm431, %v590, 0
      %719 = vmatprep.subr.bf16.mxu0 0
      %720 = vmatpush1.bf16.msra.mxu0 %v678
      %721 = vmatprep.subr.bf16.mxu0 0
      %722 = vmatpush1.bf16.msra.mxu0 %v677
      %723 = vmatprep.subr.bf16.mxu0 0
      %724 = vmatpush1.bf16.msra.mxu0 %v676
      %725 = vmatprep.subr.bf16.mxu0 0
      %726 = vmatpush1.bf16.msra.mxu0 %v675
      %727 = vmatprep.subr.bf16.mxu0 0
      %728 = vmatpush1.bf16.msra.mxu0 %v674
      %729 = vmatprep.subr.bf16.mxu0 0
      %730 = vmatpush1.bf16.msra.mxu0 %v673
      %731 = vmatprep.subr.bf16.mxu0 0
      %732 = vmatpush1.bf16.msra.mxu0 %v672
      %733 = vmatprep.subr.bf16.mxu0 0
      %734 = vmatpush1.bf16.msra.mxu0 %v671
      %735 = vmatprep.subr.bf16.mxu0 0
      %736 = vmatpush2.bf16.msra.mxu0 %v686
      %737 = vmatprep.subr.bf16.mxu0 0
      %738 = vmatpush2.bf16.msra.mxu0 %v685
      %739 = vmatprep.subr.bf16.mxu0 0
      %740 = vmatpush2.bf16.msra.mxu0 %v684
      %741 = vmatprep.subr.bf16.mxu0 0
      %742 = vmatpush2.bf16.msra.mxu0 %v683
      %743 = vmatprep.subr.bf16.mxu0 0
      %744 = vmatpush2.bf16.msra.mxu0 %v682
      %745 = vmatprep.subr.bf16.mxu0 0
      %746 = vmatpush2.bf16.msra.mxu0 %v681
      %747 = vmatprep.subr.bf16.mxu0 0
      %748 = vmatpush2.bf16.msra.mxu0 %v680
      %749 = vmatprep.subr.bf16.mxu0 0
      %750 = vmatpush2.bf16.msra.mxu0 %v679
      %751 = vmatprep.mubr.bf16.mxu0 %v580
      %752 = vmatmul.mubr.bf16.gmra.mxu0 %v579
      %v753 = vpop.f32.mrf.mxu0
      %v754 = vadd.f32 %v544, %v753
      %v755 = vpop.f32.mrf.mxu0
      %v756 = vpop.f32.mrf.mxu0
      %v757 = vadd.f32 %v547, %v756
      %v758 = vpop.f32.mrf.mxu0
      %759 = vmatprep.mubr.bf16.mxu0 %v583
      %760 = vmatmul.mubr.bf16.gmra.mxu0 %v582
      %v761 = vpop.f32.mrf.mxu0
      %v762 = vadd.f32 %v552, %v761
      %v763 = vpop.f32.mrf.mxu0
      %v764 = vpop.f32.mrf.mxu0
      %v765 = vadd.f32 %v555, %v764
      %v766 = vpop.f32.mrf.mxu0
      %767 = vmatprep.mubr.bf16.mxu0 %v586
      %768 = vmatmul.mubr.bf16.gmra.mxu0 %v585
      %v769 = vpop.f32.mrf.mxu0
      %v770 = vadd.f32 %v560, %v769
      %v771 = vpop.f32.mrf.mxu0
      %v772 = vpop.f32.mrf.mxu0
      %v773 = vadd.f32 %v563, %v772
      %v774 = vpop.f32.mrf.mxu0
      %775 = vmatprep.mubr.bf16.mxu0 %v589
      %776 = vmatmul.mubr.bf16.gmra.mxu0 %v588
      %v777 = vpop.f32.mrf.mxu0
      %v778 = vadd.f32 %v568, %v777
      %v779 = vpop.f32.mrf.mxu0
      %v780 = vpop.f32.mrf.mxu0
      %v781 = vadd.f32 %v571, %v780
      %v782 = vpop.f32.mrf.mxu0
      %783 = vdwg.mxu0
      %784 = vmatprep.subr.bf16.mxu0 0
      %785 = vmatpush1.bf16.msra.mxu0 0
      %786 = vmatprep.subr.bf16.mxu0 0
      %787 = vmatpush1.bf16.msra.mxu0 0
      %788 = vmatprep.subr.bf16.mxu0 0
      %789 = vmatpush1.bf16.msra.mxu0 0
      %790 = vmatprep.subr.bf16.mxu0 0
      %791 = vmatpush1.bf16.msra.mxu0 0
      %792 = vmatprep.subr.bf16.mxu0 0
      %793 = vmatpush1.bf16.msra.mxu0 0
      %794 = vmatprep.subr.bf16.mxu0 0
      %795 = vmatpush1.bf16.msra.mxu0 0
      %796 = vmatprep.subr.bf16.mxu0 0
      %797 = vmatpush1.bf16.msra.mxu0 %v688
      %798 = vmatprep.subr.bf16.mxu0 0
      %799 = vmatpush1.bf16.msra.mxu0 %v687
      %800 = vmatprep.subr.bf16.mxu0 0
      %801 = vmatpush2.bf16.msra.mxu0 0
      %802 = vmatprep.subr.bf16.mxu0 0
      %803 = vmatpush2.bf16.msra.mxu0 0
      %804 = vmatprep.subr.bf16.mxu0 0
      %805 = vmatpush2.bf16.msra.mxu0 0
      %806 = vmatprep.subr.bf16.mxu0 0
      %807 = vmatpush2.bf16.msra.mxu0 0
      %808 = vmatprep.subr.bf16.mxu0 0
      %809 = vmatpush2.bf16.msra.mxu0 0
      %810 = vmatprep.subr.bf16.mxu0 0
      %811 = vmatpush2.bf16.msra.mxu0 0
      %812 = vmatprep.subr.bf16.mxu0 0
      %813 = vmatpush2.bf16.msra.mxu0 0
      %814 = vmatprep.subr.bf16.mxu0 0
      %815 = vmatpush2.bf16.msra.mxu0 0
      %816 = vmatprep.mubr.bf16.mxu0 0
      %817 = vmatmul.mubr.bf16.gmra.mxu0 %v708
      %v818 = vpop.f32.mrf.mxu0
      %v819 = vadd.f32 %v754, %v818
      %v820 = vpop.f32.mrf.mxu0
      %v821 = vpop.f32.mrf.mxu0
      %v822 = vadd.f32 %v757, %v821
      %v823 = vpop.f32.mrf.mxu0
      %824 = vmatprep.mubr.bf16.mxu0 0
      %825 = vmatmul.mubr.bf16.gmra.mxu0 %v711
      %v826 = vpop.f32.mrf.mxu0
      %v827 = vadd.f32 %v762, %v826
      %v828 = vpop.f32.mrf.mxu0
      %v829 = vpop.f32.mrf.mxu0
      %v830 = vadd.f32 %v765, %v829
      %v831 = vpop.f32.mrf.mxu0
      %832 = vmatprep.mubr.bf16.mxu0 0
      %833 = vmatmul.mubr.bf16.gmra.mxu0 %v714
      %v834 = vpop.f32.mrf.mxu0
      %v835 = vadd.f32 %v770, %v834
      %v836 = vpop.f32.mrf.mxu0
      %v837 = vpop.f32.mrf.mxu0
      %v838 = vadd.f32 %v773, %v837
      %v839 = vpop.f32.mrf.mxu0
      %840 = vmatprep.mubr.bf16.mxu0 0
      %841 = vmatmul.mubr.bf16.gmra.mxu0 %v717
      %v842 = vpop.f32.mrf.mxu0
      %v843 = vadd.f32 %v778, %v842
      %v844 = vpop.f32.mrf.mxu0
      %v845 = vpop.f32.mrf.mxu0
      %v846 = vadd.f32 %v781, %v845
      %v847 = vpop.f32.mrf.mxu0
      %848 = vdwg.mxu0
      %v849 = vld [vmem:[%s165 + $0x18] sm:$0xff]
      %v850 = vld [vmem:[%s165 + $0x20] sm:$0xf]
      %v851 = vld [vmem:[%s165 + $0x24] sm:$0xff]
      %v852 = vld [vmem:[%s165 + $0x2c] sm:$0xf]
      %v853 = vld [vmem:[%s165 + $0x30] sm:$0xff]
      %v854 = vld [vmem:[%s165 + $0x38] sm:$0xf]
      %v855 = vld [vmem:[%s165 + $0x3c] sm:$0xff]
      %v856 = vld [vmem:[%s165 + $0x44] sm:$0xf]
      %v857 = vld [vmem:[%s165 + $0x48] sm:$0xff]
      %v858 = vld [vmem:[%s165 + $0x50] sm:$0xf]
      %v859 = vld [vmem:[%s165 + $0x54] sm:$0xff]
      %v860 = vld [vmem:[%s165 + $0x5c] sm:$0xf]
      %v861 = vld [vmem:[%s165 + $0x60] sm:$0xff]
      %v862 = vld [vmem:[%s165 + $0x68] sm:$0xf]
      %v863 = vld [vmem:[%s165 + $0x6c] sm:$0xff]
      %v864 = vld [vmem:[%s165 + $0x74] sm:$0xf]
      %s865 = scalar_lea.vmem %s1, 288
      %v866 = vld [vmem:[%s865] sm:$0xf]
      %v867 = vld [vmem:[%s865 + $0x4] sm:$0xf]
      %v868 = vld [vmem:[%s865 + $0x8] sm:$0xf]
      %v869 = vld [vmem:[%s865 + $0xc] sm:$0xf]
      %v870 = vld [vmem:[%s865 + $0x10] sm:$0xf]
      %v871 = vld [vmem:[%s865 + $0x14] sm:$0xf]
      %v872 = vld [vmem:[%s865 + $0x18] sm:$0xf]
      %v873 = vld [vmem:[%s865 + $0x1c] sm:$0xf]
      %v874 = vld [vmem:[%s865 + $0x20] sm:$0xf]
      %v875 = vld [vmem:[%s865 + $0x24] sm:$0xf]
      %v876 = vld [vmem:[%s865 + $0x28] sm:$0xf]
      %v877 = vld [vmem:[%s865 + $0x2c] sm:$0xf]
      %v878 = vld [vmem:[%s865 + $0x30] sm:$0xf]
      %v879 = vld [vmem:[%s865 + $0x34] sm:$0xf]
      %v880 = vld [vmem:[%s865 + $0x38] sm:$0xf]
      %v881 = vld [vmem:[%s865 + $0x3c] sm:$0xf]
      %v882 = vld [vmem:[%s865 + $0x40] sm:$0xf]
      %v883 = vld [vmem:[%s865 + $0x44] sm:$0xf]
      %v884 = vld [vmem:[%s865 + $0x48] sm:$0xf]
      %v885 = vld [vmem:[%s865 + $0x4c] sm:$0xf]
      %v886 = vld [vmem:[%s865 + $0x50] sm:$0xf]
      %v887 = vld [vmem:[%s865 + $0x54] sm:$0xf]
      %v888 = vld [vmem:[%s865 + $0x58] sm:$0xf]
      %v889 = vld [vmem:[%s865 + $0x5c] sm:$0xf]
      %v890 = vld [vmem:[%s865 + $0x60] sm:$0xf]
      %v891 = vld [vmem:[%s865 + $0x64] sm:$0xf]
      %v892 = vld [vmem:[%s865 + $0x68] sm:$0xf]
      %v893 = vld [vmem:[%s865 + $0x6c] sm:$0xf]
      %v894 = vld [vmem:[%s865 + $0x70] sm:$0xf]
      %v895 = vld [vmem:[%s865 + $0x74] sm:$0xf]
      %v896 = vld [vmem:[%s865 + $0x78] sm:$0xf]
      %v897 = vld [vmem:[%s865 + $0x7c] sm:$0xf]
      %v898 = vld [vmem:[%s865 + $0x80] sm:$0xf]
      %v899 = vld [vmem:[%s865 + $0x84] sm:$0xf]
      %v900 = vld [vmem:[%s865 + $0x88] sm:$0xf]
      %v901 = vld [vmem:[%s865 + $0x8c] sm:$0xf]
      %v918 = vunpack.c.l.b16 %v849
      %v919 = vunpack.c.h.b16 %v849
      %v920 = vunpack.c.l.b16 %v850
      %v921 = vunpack.c.l.b16 %v851
      %v922 = vunpack.c.h.b16 %v851
      %v923 = vunpack.c.l.b16 %v852
      %v924 = vunpack.c.l.b16 %v853
      %v925 = vunpack.c.h.b16 %v853
      %v926 = vunpack.c.l.b16 %v854
      %v927 = vunpack.c.l.b16 %v855
      %v928 = vunpack.c.h.b16 %v855
      %v929 = vunpack.c.l.b16 %v856
      %v930 = vunpack.c.l.b16 %v857
      %v931 = vunpack.c.h.b16 %v857
      %v932 = vunpack.c.l.b16 %v858
      %v933 = vunpack.c.l.b16 %v859
      %v934 = vunpack.c.h.b16 %v859
      %v935 = vunpack.c.l.b16 %v860
      %v936 = vunpack.c.l.b16 %v861
      %v937 = vunpack.c.h.b16 %v861
      %v938 = vunpack.c.l.b16 %v862
      %v939 = vunpack.c.l.b16 %v863
      %v940 = vunpack.c.h.b16 %v863
      %v941 = vunpack.c.l.b16 %v864
      %v942 = vpack.c.b16 %v921, %v918
      %v943 = vpack.c.b16 %v922, %v919
      %v944 = vpack.c.b16 %v923, %v920
      %v945 = vpack.c.b16 %v927, %v924
      %v946 = vpack.c.b16 %v928, %v925
      %v947 = vpack.c.b16 %v929, %v926
      %v948 = vpack.c.b16 %v933, %v930
      %v949 = vpack.c.b16 %v934, %v931
      %v950 = vpack.c.b16 %v935, %v932
      %v951 = vpack.c.b16 %v939, %v936
      %v952 = vpack.c.b16 %v940, %v937
      %v953 = vpack.c.b16 %v941, %v938
      %v998 = vunpack.c.l.b16 %v866
      %v999 = vunpack.c.l.b16 %v867
      %v1000 = vunpack.c.l.b16 %v868
      %v1001 = vunpack.c.l.b16 %v869
      %v1002 = vunpack.c.l.b16 %v870
      %v1003 = vunpack.c.l.b16 %v871
      %v1004 = vunpack.c.l.b16 %v872
      %v1005 = vunpack.c.l.b16 %v873
      %v1006 = vunpack.c.l.b16 %v874
      %v1007 = vunpack.c.l.b16 %v875
      %v1008 = vunpack.c.l.b16 %v876
      %v1009 = vunpack.c.l.b16 %v877
      %v1010 = vunpack.c.l.b16 %v878
      %v1011 = vunpack.c.l.b16 %v879
      %v1012 = vunpack.c.l.b16 %v880
      %v1013 = vunpack.c.l.b16 %v881
      %v1014 = vunpack.c.l.b16 %v882
      %v1015 = vunpack.c.l.b16 %v883
      %v1016 = vunpack.c.l.b16 %v884
      %v1017 = vunpack.c.l.b16 %v885
      %v1018 = vunpack.c.l.b16 %v886
      %v1019 = vunpack.c.l.b16 %v887
      %v1020 = vunpack.c.l.b16 %v888
      %v1021 = vunpack.c.l.b16 %v889
      %v1022 = vunpack.c.l.b16 %v890
      %v1023 = vunpack.c.l.b16 %v891
      %v1024 = vunpack.c.l.b16 %v892
      %v1025 = vunpack.c.l.b16 %v893
      %v1026 = vunpack.c.l.b16 %v894
      %v1027 = vunpack.c.l.b16 %v895
      %v1028 = vunpack.c.l.b16 %v896
      %v1029 = vunpack.c.l.b16 %v897
      %v1030 = vunpack.c.l.b16 %v898
      %v1031 = vunpack.c.l.b16 %v899
      %v1032 = vunpack.c.l.b16 %v900
      %v1033 = vunpack.c.l.b16 %v901
      %v1034 = vpack.c.b16 %v999, %v998
      %v1035 = vpack.c.b16 %v1001, %v1000
      %v1036 = vpack.c.b16 %v1003, %v1002
      %v1037 = vpack.c.b16 %v1005, %v1004
      %v1038 = vpack.c.b16 %v1007, %v1006
      %v1039 = vpack.c.b16 %v1009, %v1008
      %v1040 = vpack.c.b16 %v1011, %v1010
      %v1041 = vpack.c.b16 %v1013, %v1012
      %v1042 = vpack.c.b16 %v1015, %v1014
      %v1043 = vpack.c.b16 %v1017, %v1016
      %v1044 = vpack.c.b16 %v1019, %v1018
      %v1045 = vpack.c.b16 %v1021, %v1020
      %v1046 = vpack.c.b16 %v1023, %v1022
      %v1047 = vpack.c.b16 %v1025, %v1024
      %v1048 = vpack.c.b16 %v1027, %v1026
      %v1049 = vpack.c.b16 %v1029, %v1028
      %v1050 = vpack.c.b16 %v1031, %v1030
      %v1051 = vpack.c.b16 %v1033, %v1032
      %v1071 = vsel %vm431, %v944, 0
      %v1074 = vsel %vm431, %v947, 0
      %v1077 = vsel %vm431, %v950, 0
      %v1080 = vsel %vm431, %v953, 0
      %1082 = vmatprep.subr.bf16.mxu0 0
      %1083 = vmatpush1.bf16.msra.mxu0 %v1041
      %1084 = vmatprep.subr.bf16.mxu0 0
      %1085 = vmatpush1.bf16.msra.mxu0 %v1040
      %1086 = vmatprep.subr.bf16.mxu0 0
      %1087 = vmatpush1.bf16.msra.mxu0 %v1039
      %1088 = vmatprep.subr.bf16.mxu0 0
      %1089 = vmatpush1.bf16.msra.mxu0 %v1038
      %1090 = vmatprep.subr.bf16.mxu0 0
      %1091 = vmatpush1.bf16.msra.mxu0 %v1037
      %1092 = vmatprep.subr.bf16.mxu0 0
      %1093 = vmatpush1.bf16.msra.mxu0 %v1036
      %1094 = vmatprep.subr.bf16.mxu0 0
      %1095 = vmatpush1.bf16.msra.mxu0 %v1035
      %1096 = vmatprep.subr.bf16.mxu0 0
      %1097 = vmatpush1.bf16.msra.mxu0 %v1034
      %1098 = vmatprep.subr.bf16.mxu0 0
      %1099 = vmatpush2.bf16.msra.mxu0 %v1049
      %1100 = vmatprep.subr.bf16.mxu0 0
      %1101 = vmatpush2.bf16.msra.mxu0 %v1048
      %1102 = vmatprep.subr.bf16.mxu0 0
      %1103 = vmatpush2.bf16.msra.mxu0 %v1047
      %1104 = vmatprep.subr.bf16.mxu0 0
      %1105 = vmatpush2.bf16.msra.mxu0 %v1046
      %1106 = vmatprep.subr.bf16.mxu0 0
      %1107 = vmatpush2.bf16.msra.mxu0 %v1045
      %1108 = vmatprep.subr.bf16.mxu0 0
      %1109 = vmatpush2.bf16.msra.mxu0 %v1044
      %1110 = vmatprep.subr.bf16.mxu0 0
      %1111 = vmatpush2.bf16.msra.mxu0 %v1043
      %1112 = vmatprep.subr.bf16.mxu0 0
      %1113 = vmatpush2.bf16.msra.mxu0 %v1042
      %1114 = vmatprep.mubr.bf16.mxu0 %v943
      %1115 = vmatmul.mubr.bf16.gmra.mxu0 %v942
      %v1116 = vpop.f32.mrf.mxu0
      %v1117 = vadd.f32 0.0, %v1116
      %v1118 = vpop.f32.mrf.mxu0
      %v1119 = vpop.f32.mrf.mxu0
      %v1120 = vadd.f32 0.0, %v1119
      %v1121 = vpop.f32.mrf.mxu0
      %1122 = vmatprep.mubr.bf16.mxu0 %v946
      %1123 = vmatmul.mubr.bf16.gmra.mxu0 %v945
      %v1124 = vpop.f32.mrf.mxu0
      %v1125 = vadd.f32 0.0, %v1124
      %v1126 = vpop.f32.mrf.mxu0
      %v1127 = vpop.f32.mrf.mxu0
      %v1128 = vadd.f32 0.0, %v1127
      %v1129 = vpop.f32.mrf.mxu0
      %1130 = vmatprep.mubr.bf16.mxu0 %v949
      %1131 = vmatmul.mubr.bf16.gmra.mxu0 %v948
      %v1132 = vpop.f32.mrf.mxu0
      %v1133 = vadd.f32 0.0, %v1132
      %v1134 = vpop.f32.mrf.mxu0
      %v1135 = vpop.f32.mrf.mxu0
      %v1136 = vadd.f32 0.0, %v1135
      %v1137 = vpop.f32.mrf.mxu0
      %1138 = vmatprep.mubr.bf16.mxu0 %v952
      %1139 = vmatmul.mubr.bf16.gmra.mxu0 %v951
      %v1140 = vpop.f32.mrf.mxu0
      %v1141 = vadd.f32 0.0, %v1140
      %v1142 = vpop.f32.mrf.mxu0
      %v1143 = vpop.f32.mrf.mxu0
      %v1144 = vadd.f32 0.0, %v1143
      %v1145 = vpop.f32.mrf.mxu0
      %1146 = vdwg.mxu0
      %1147 = vmatprep.subr.bf16.mxu0 0
      %1148 = vmatpush1.bf16.msra.mxu0 0
      %1149 = vmatprep.subr.bf16.mxu0 0
      %1150 = vmatpush1.bf16.msra.mxu0 0
      %1151 = vmatprep.subr.bf16.mxu0 0
      %1152 = vmatpush1.bf16.msra.mxu0 0
      %1153 = vmatprep.subr.bf16.mxu0 0
      %1154 = vmatpush1.bf16.msra.mxu0 0
      %1155 = vmatprep.subr.bf16.mxu0 0
      %1156 = vmatpush1.bf16.msra.mxu0 0
      %1157 = vmatprep.subr.bf16.mxu0 0
      %1158 = vmatpush1.bf16.msra.mxu0 0
      %1159 = vmatprep.subr.bf16.mxu0 0
      %1160 = vmatpush1.bf16.msra.mxu0 %v1051
      %1161 = vmatprep.subr.bf16.mxu0 0
      %1162 = vmatpush1.bf16.msra.mxu0 %v1050
      %1163 = vmatprep.subr.bf16.mxu0 0
      %1164 = vmatpush2.bf16.msra.mxu0 0
      %1165 = vmatprep.subr.bf16.mxu0 0
      %1166 = vmatpush2.bf16.msra.mxu0 0
      %1167 = vmatprep.subr.bf16.mxu0 0
      %1168 = vmatpush2.bf16.msra.mxu0 0
      %1169 = vmatprep.subr.bf16.mxu0 0
      %1170 = vmatpush2.bf16.msra.mxu0 0
      %1171 = vmatprep.subr.bf16.mxu0 0
      %1172 = vmatpush2.bf16.msra.mxu0 0
      %1173 = vmatprep.subr.bf16.mxu0 0
      %1174 = vmatpush2.bf16.msra.mxu0 0
      %1175 = vmatprep.subr.bf16.mxu0 0
      %1176 = vmatpush2.bf16.msra.mxu0 0
      %1177 = vmatprep.subr.bf16.mxu0 0
      %1178 = vmatpush2.bf16.msra.mxu0 0
      %1179 = vmatprep.mubr.bf16.mxu0 0
      %1180 = vmatmul.mubr.bf16.gmra.mxu0 %v1071
      %v1181 = vpop.f32.mrf.mxu0
      %v1182 = vadd.f32 %v1117, %v1181
      %v1183 = vpop.f32.mrf.mxu0
      %v1184 = vpop.f32.mrf.mxu0
      %v1185 = vadd.f32 %v1120, %v1184
      %v1186 = vpop.f32.mrf.mxu0
      %1187 = vmatprep.mubr.bf16.mxu0 0
      %1188 = vmatmul.mubr.bf16.gmra.mxu0 %v1074
      %v1189 = vpop.f32.mrf.mxu0
      %v1190 = vadd.f32 %v1125, %v1189
      %v1191 = vpop.f32.mrf.mxu0
      %v1192 = vpop.f32.mrf.mxu0
      %v1193 = vadd.f32 %v1128, %v1192
      %v1194 = vpop.f32.mrf.mxu0
      %1195 = vmatprep.mubr.bf16.mxu0 0
      %1196 = vmatmul.mubr.bf16.gmra.mxu0 %v1077
      %v1197 = vpop.f32.mrf.mxu0
      %v1198 = vadd.f32 %v1133, %v1197
      %v1199 = vpop.f32.mrf.mxu0
      %v1200 = vpop.f32.mrf.mxu0
      %v1201 = vadd.f32 %v1136, %v1200
      %v1202 = vpop.f32.mrf.mxu0
      %1203 = vmatprep.mubr.bf16.mxu0 0
      %1204 = vmatmul.mubr.bf16.gmra.mxu0 %v1080
      %v1205 = vpop.f32.mrf.mxu0
      %v1206 = vadd.f32 %v1141, %v1205
      %v1207 = vpop.f32.mrf.mxu0
      %v1208 = vpop.f32.mrf.mxu0
      %v1209 = vadd.f32 %v1144, %v1208
      %v1210 = vpop.f32.mrf.mxu0
      %1211 = vdwg.mxu0
      %v1212 = vadd.f32 %v819, %v1182
      %v1213 = vadd.f32 %v822, %v1185
      %v1214 = vadd.f32 %v827, %v1190
      %v1215 = vadd.f32 %v830, %v1193
      %v1216 = vadd.f32 %v835, %v1198
      %v1217 = vadd.f32 %v838, %v1201
      %v1218 = vadd.f32 %v843, %v1206
      %v1219 = vadd.f32 %v846, %v1209
      %v1220 = vld [vmem:[%s2] sm:$0x1]
      %v1222 = vlaneseq
      %v1223 = vshrl.u32 %v1222, 7
      %v1224 = vsub.s32 0, %v1223
      %v1225 = vrot.slane %v1220, %v1224
      %v1227 = vadd.f32 %v1212, %v1225
      %v1228 = vadd.f32 %v1213, %v1225
      %v1229 = vadd.f32 %v1214, %v1225
      %v1230 = vadd.f32 %v1215, %v1225
      %v1231 = vadd.f32 %v1216, %v1225
      %v1232 = vadd.f32 %v1217, %v1225
      %v1233 = vadd.f32 %v1218, %v1225
      %v1234 = vadd.f32 %v1219, %v1225
      %v1235 = vxor.u32 %v1227, 2147483648
      %v1236 = vxor.u32 %v1228, 2147483648
      %v1237 = vxor.u32 %v1229, 2147483648
      %v1238 = vxor.u32 %v1230, 2147483648
      %v1239 = vxor.u32 %v1231, 2147483648
      %v1240 = vxor.u32 %v1232, 2147483648
      %v1241 = vxor.u32 %v1233, 2147483648
      %v1242 = vxor.u32 %v1234, 2147483648
      %v1243 = vmul.f32 %v1235, 1.442695
      %v1244 = vpow.pop %v1243
      %v1245 = vmul.f32 %v1236, 1.442695
      %v1246 = vpow.pop %v1245
      %v1247 = vmul.f32 %v1237, 1.442695
      %v1248 = vpow.pop %v1247
      %v1249 = vmul.f32 %v1238, 1.442695
      %v1250 = vpow.pop %v1249
      %v1251 = vmul.f32 %v1239, 1.442695
      %v1252 = vpow.pop %v1251
      %v1253 = vmul.f32 %v1240, 1.442695
      %v1254 = vpow.pop %v1253
      %v1255 = vmul.f32 %v1241, 1.442695
      %v1256 = vpow.pop %v1255
      %v1257 = vmul.f32 %v1242, 1.442695
      %v1258 = vpow.pop %v1257
      %v1259 = vadd.f32 %v1244, 1.0
      %v1260 = vadd.f32 %v1246, 1.0
      %v1261 = vadd.f32 %v1248, 1.0
      %v1262 = vadd.f32 %v1250, 1.0
      %v1263 = vadd.f32 %v1252, 1.0
      %v1264 = vadd.f32 %v1254, 1.0
      %v1265 = vadd.f32 %v1256, 1.0
      %v1266 = vadd.f32 %v1258, 1.0
      %v1267 = vrcp.pop %v1259
      %v1268 = vmul.f32 1.0, %v1267
      %v1269 = vrcp.pop %v1260
      %v1270 = vmul.f32 1.0, %v1269
      %v1271 = vrcp.pop %v1261
      %v1272 = vmul.f32 1.0, %v1271
      %v1273 = vrcp.pop %v1262
      %v1274 = vmul.f32 1.0, %v1273
      %v1275 = vrcp.pop %v1263
      %v1276 = vmul.f32 1.0, %v1275
      %v1277 = vrcp.pop %v1264
      %v1278 = vmul.f32 1.0, %v1277
      %v1279 = vrcp.pop %v1265
      %v1280 = vmul.f32 1.0, %v1279
      %v1281 = vrcp.pop %v1266
      %v1282 = vmul.f32 1.0, %v1281
      %v1283 = vmul.f32 %v1227, %v1268
      %v1284 = vmul.f32 %v1228, %v1270
      %v1285 = vmul.f32 %v1229, %v1272
      %v1286 = vmul.f32 %v1230, %v1274
      %v1287 = vmul.f32 %v1231, %v1276
      %v1288 = vmul.f32 %v1232, %v1278
      %v1289 = vmul.f32 %v1233, %v1280
      %v1290 = vmul.f32 %v1234, %v1282
      %v1291 = vpack.c.bf16 %v1284, %v1283
      %v1292 = vpack.c.bf16 %v1286, %v1285
      %v1293 = vpack.c.bf16 %v1288, %v1287
      %v1294 = vpack.c.bf16 %v1290, %v1289
      %v1299 = vunpack.c.l.b16 %v1291
      %v1300 = vunpack.c.h.b16 %v1291
      %v1301 = vunpack.c.l.b16 %v1292
      %v1302 = vunpack.c.h.b16 %v1292
      %v1303 = vunpack.c.l.b16 %v1293
      %v1304 = vunpack.c.h.b16 %v1293
      %v1305 = vunpack.c.l.b16 %v1294
      %v1306 = vunpack.c.h.b16 %v1294
      %v1307 = vpack.c.b16 %v1299, %v1299
      %v1308 = vpack.c.b16 %v1300, %v1300
      %v1309 = vpack.c.b16 %v1301, %v1301
      %v1310 = vpack.c.b16 %v1302, %v1302
      %v1311 = vpack.c.b16 %v1303, %v1303
      %v1312 = vpack.c.b16 %v1304, %v1304
      %v1313 = vpack.c.b16 %v1305, %v1305
      %v1314 = vpack.c.b16 %v1306, %v1306
      %vm1323 = vcmask 781312
      %1324 = vst.msk [vmem:[%s170] sm:$0xf] %vm1323, %v1307
      %1325 = vst.msk [vmem:[%s170 + $0x4] sm:$0xf] %vm1323, %v1308
      %1326 = vst.msk [vmem:[%s170 + $0x8] sm:$0xf] %vm1323, %v1309
      %1327 = vst.msk [vmem:[%s170 + $0xc] sm:$0xf] %vm1323, %v1310
      %1328 = vst.msk [vmem:[%s170 + $0x10] sm:$0xf] %vm1323, %v1311
      %1329 = vst.msk [vmem:[%s170 + $0x14] sm:$0xf] %vm1323, %v1312
      %1330 = vst.msk [vmem:[%s170 + $0x18] sm:$0xf] %vm1323, %v1313
      %1331 = vst.msk [vmem:[%s170 + $0x1c] sm:$0xf] %vm1323, %v1314
      %p1332 = scmp.lt.s32.totalorder %s14, 1
      %s1333 = scalar_select %p1332, %s14, 1
      %s1334 = smul.addr %s1333, 8
      %s1335 = smul.addr %s1334, 4
      %s1336 = scalar_lea.vmem %s3, %s1335
      // Predicated region
      $region33: #{_lambda_.13} parent=31 // pred_check
        %p1337 = pneg %p100
      $region34: #{_lambda_.13} parent=31 // pred_check_branch
        %1339 = sbr.rel (%p1337) target = $region36
      $region35: #{_lambda_.13} parent=31 // pred_region
        _
      $region36: #{_lambda_.13} parent=31 // pred_fallthru
        _
    $region32: #{_lambda_.13} parent=5 // pred_fallthru
      _
    %p1340 = scmp.le.s32.totalorder 2, %s9
    // Predicated region
    $region37: #{_lambda_.13} parent=5 // pred_check
      %p1341 = pneg %p1340
    $region38: #{_lambda_.13} parent=5 // pred_check_branch
      %1343 = sbr.rel (%p1341) target = $region40
    $region39: #{_lambda_.13} parent=5 // pred_region
      %s1344 = ssub.s32 %s9, 2
      // Predicated region
      $region41: #{_lambda_.13} parent=39 // pred_check
        %p1345 = pneg %p106
      $region42: #{_lambda_.13} parent=39 // pred_check_branch
        %1347 = sbr.rel (%p1345) target = $region44
      $region43: #{_lambda_.13} parent=39 // pred_region
        %p1348 = scmp.lt.s32.totalorder %s15, 1
        %s1349 = scalar_select %p1348, %s15, 1
        %s1350 = smul.addr %s1349, 8
        %s1351 = smul.addr %s1350, 4
        %s1352 = scalar_lea.vmem %s3, %s1351
      $region44: #{_lambda_.13} parent=39 // pred_fallthru
        _
    $region40: #{_lambda_.13} parent=5 // pred_fallthru
      _
  $region6: #{_lambda_.13} parent=0 // loop_footer
    %s13 = sadd.s32 1, %s9
  $region7: #{_lambda_.13} parent=0 // loop_footer_branch
    %8 = sbr.rel target = $region3
  $region8: #{_lambda_.13} parent=0 // loop_exit
    _

// kernel: _lambda_.14
$region0: #{_lambda_.14}
  #allocation0 [shape = 'u32[]', space=smem, size = 0x4, offset = 0x4, fixed_abs, tag = 'smem constant byte address 0x4 - core index']
  #allocation1 [shape = 'u32[144,128]{1,0:T(1,128)}', space=vmem, size = 0x12000, scoped, tag = 'internal scratch']
  %s0 = inlined_call_operand.vmem [shape: bf16[2,16,864], index: 0, kind: input, shape index: {}]
  %s1 = inlined_call_operand.vmem [shape: bf16[864,256], index: 1, kind: input, shape index: {}]
  %s2 = inlined_call_operand.vmem [shape: f32[1,256], index: 2, kind: input, shape index: {}]
  %s3 = inlined_call_operand.vmem [shape: bf16[2,16,256], index: 3, kind: output, shape index: {}]
  %s4 = sld [smem:[#allocation0]]
  $region45: #{_lambda_.14} parent=0
    _
  %s6 = ssub.s32 1, %s4
  %s7 = scalar_select 0, %s6, %s4
  loop: start=0, step=1, limit=4
  $region2: #{_lambda_.14} parent=0 // loop_pre_header
    _
  $region3: #{_lambda_.14} parent=0 // loop_header
    %s9 = sphi 0, %s13
    %p10 = scmp.ge.s32.totalorder %s9, 4
    %s16 = sphi 0, %s28
    %s17 = sphi 0, %s24
    %s18 = sphi 0, %s16
    %s19 = sphi 0, %s17
    %s20 = sphi 0, %s18
    %s21 = sphi 0, %s19
    %s33 = sphi 0, %s35
    %s36 = sphi 0, %s33
    %s37 = sphi 0, %s36
    %s53 = sphi 0, %s37
    %s57 = sphi 0, %s57
    %s59 = sphi 0, %s57
    %s60 = sphi 0, %s59
    %s74 = sphi 0, %s60
    %s78 = sphi 0, %s78
    %s80 = sphi 0, %s78
    %s81 = sphi 0, %s80
    %s95 = sphi 0, %s81
    %s103 = sphi 0, %s105
    %s106 = sphi 0, %s103
    %s107 = sphi 0, %s106
    %s123 = sphi 0, %s107
  $region4: #{_lambda_.14} parent=0 // loop_header_branch
    %12 = sbr.rel (%p10) target = $region8
  $region5: #{_lambda_.14} parent=0 // loop_body
    %s14 = ssub.s32 %s9, 1
    %s15 = ssub.s32 %s9, 2
    %s22 = sadd.s32 1, %s17
    %p23 = scmp.ge.s32.totalorder %s22, 1
    %s24 = scalar_select %p23, 0, %s22
    %s25 = sadd.s32 1, %s16
    %s26 = scalar_select %p23, %s25, %s16
    %p27 = scmp.ge.s32.totalorder %s26, 2
    %s28 = scalar_select %p27, 0, %s26
    %s29 = ssub.s32 %s16, %s28
    %s30 = ssub.s32 %s17, %s24
    %s31 = sor.u32 %s29, %s30
    %p32 = scmp.eq.s32.totalorder %s31, 0
    %s34 = sadd.s32 %s33, 1
    %s35 = scalar_select %p32, %s33, %s34
    %p38 = pneg %p32
    %p39 = scmp.eq.s32.totalorder %s9, 1
    %p40 = por %p38, %p39
    %p41 = scmp.ne.s32.totalorder %s33, %s36
    %p42 = scmp.eq.s32.totalorder %s9, 0
    %p43 = por %p41, %p42
    %p44 = scmp.ne.s32.totalorder %s33, %s36
    %p45 = scmp.eq.s32.totalorder %s14, 1
    %p46 = por %p44, %p45
    %p47 = scmp.ne.s32.totalorder %s36, %s37
    %p48 = scmp.eq.s32.totalorder %s14, 0
    %p49 = por %p47, %p48
    %p50 = scmp.ne.s32.totalorder %s36, %s37
    %p51 = scmp.eq.s32.totalorder %s15, 1
    %p52 = por %p50, %p51
    %p54 = scmp.ne.s32.totalorder %s37, %s53
    %p55 = scmp.eq.s32.totalorder %s15, 0
    %p56 = por %p54, %p55
    %s58 = sadd.s32 %s57, 1
    %p61 = scmp.eq.s32.totalorder %s9, 1
    %p62 = scmp.ne.s32.totalorder %s57, %s59
    %p63 = scmp.eq.s32.totalorder %s9, 0
    %p64 = por %p62, %p63
    %p65 = scmp.ne.s32.totalorder %s57, %s59
    %p66 = scmp.eq.s32.totalorder %s14, 1
    %p67 = por %p65, %p66
    %p68 = scmp.ne.s32.totalorder %s59, %s60
    %p69 = scmp.eq.s32.totalorder %s14, 0
    %p70 = por %p68, %p69
    %p71 = scmp.ne.s32.totalorder %s59, %s60
    %p72 = scmp.eq.s32.totalorder %s15, 1
    %p73 = por %p71, %p72
    %p75 = scmp.ne.s32.totalorder %s60, %s74
    %p76 = scmp.eq.s32.totalorder %s15, 0
    %p77 = por %p75, %p76
    %s79 = sadd.s32 %s78, 1
    %p82 = scmp.eq.s32.totalorder %s9, 1
    %p83 = scmp.ne.s32.totalorder %s78, %s80
    %p84 = scmp.eq.s32.totalorder %s9, 0
    %p85 = por %p83, %p84
    %p86 = scmp.ne.s32.totalorder %s78, %s80
    %p87 = scmp.eq.s32.totalorder %s14, 1
    %p88 = por %p86, %p87
    %p89 = scmp.ne.s32.totalorder %s80, %s81
    %p90 = scmp.eq.s32.totalorder %s14, 0
    %p91 = por %p89, %p90
    %p92 = scmp.ne.s32.totalorder %s80, %s81
    %p93 = scmp.eq.s32.totalorder %s15, 1
    %p94 = por %p92, %p93
    %p96 = scmp.ne.s32.totalorder %s81, %s95
    %p97 = scmp.eq.s32.totalorder %s15, 0
    %p98 = por %p96, %p97
    %s99 = ssub.s32 %s16, %s28
    %s100 = ssub.s32 %s17, %s24
    %s101 = sor.u32 %s99, %s100
    %p102 = scmp.eq.s32.totalorder %s101, 0
    %s104 = sadd.s32 %s103, 1
    %s105 = scalar_select %p102, %s103, %s104
    %p108 = pneg %p102
    %p109 = scmp.eq.s32.totalorder %s9, 1
    %p110 = por %p108, %p109
    %p111 = scmp.ne.s32.totalorder %s103, %s106
    %p112 = scmp.eq.s32.totalorder %s9, 0
    %p113 = por %p111, %p112
    %p114 = scmp.ne.s32.totalorder %s103, %s106
    %p115 = scmp.eq.s32.totalorder %s14, 1
    %p116 = por %p114, %p115
    %p117 = scmp.ne.s32.totalorder %s106, %s107
    %p118 = scmp.eq.s32.totalorder %s14, 0
    %p119 = por %p117, %p118
    %p120 = scmp.ne.s32.totalorder %s106, %s107
    %p121 = scmp.eq.s32.totalorder %s15, 1
    %p122 = por %p120, %p121
    %p124 = scmp.ne.s32.totalorder %s107, %s123
    %p125 = scmp.eq.s32.totalorder %s15, 0
    %p126 = por %p124, %p125
    %p127 = scmp.le.s32.totalorder 1, %s9
    %p128 = scmp.lt.s32.totalorder %s9, 3
    %p129 = pnand %p127, %p128
    %p130 = pneg %p129
    // Predicated region
    $region9: #{_lambda_.14} parent=5 // pred_check
      _
    $region10: #{_lambda_.14} parent=5 // pred_check_branch
      %132 = sbr.rel (%p129) target = $region12
    $region11: #{_lambda_.14} parent=5 // pred_region
      %s133 = ssub.s32 %s9, 1
      // Predicated region
      $region13: #{_lambda_.14} parent=11 // pred_check
        %p134 = pneg %p70
      $region14: #{_lambda_.14} parent=11 // pred_check_branch
        %136 = sbr.rel (%p134) target = $region16
      $region15: #{_lambda_.14} parent=11 // pred_region
        _
      $region16: #{_lambda_.14} parent=11 // pred_fallthru
        _
      // Predicated region
      $region17: #{_lambda_.14} parent=11 // pred_check
        %p137 = pneg %p91
      $region18: #{_lambda_.14} parent=11 // pred_check_branch
        %139 = sbr.rel (%p137) target = $region20
      $region19: #{_lambda_.14} parent=11 // pred_region
        _
      $region20: #{_lambda_.14} parent=11 // pred_fallthru
        _
    $region12: #{_lambda_.14} parent=5 // pred_fallthru
      _
    %p140 = scmp.lt.s32.totalorder %s9, 2
    // Predicated region
    $region21: #{_lambda_.14} parent=5 // pred_check
      %p141 = pneg %p140
    $region22: #{_lambda_.14} parent=5 // pred_check_branch
      %143 = sbr.rel (%p141) target = $region24
    $region23: #{_lambda_.14} parent=5 // pred_region
      // Predicated region
      $region25: #{_lambda_.14} parent=23 // pred_check
        %p144 = pneg %p43
      $region26: #{_lambda_.14} parent=23 // pred_check_branch
        %146 = sbr.rel (%p144) target = $region28
      $region27: #{_lambda_.14} parent=23 // pred_region
        %s147 = smul.u32 2, %s17
        %p148 = scmp.lt.s32.totalorder %s16, 1
        %s149 = scalar_select %p148, %s16, 1
        %p150 = scmp.lt.s32.totalorder %s147, 1
        %s151 = scalar_select %p150, %s147, 1
        %s152 = smul.addr %s151, 7
        %s153 = smul.addr %s149, 14
        %s154 = sadd.s32 %s152, %s153
        %s155 = smul.addr %s154, 4
        %s156 = scalar_lea.vmem %s0, %s155
        %s157 = smul.u32 2, %s17
      $region28: #{_lambda_.14} parent=23 // pred_fallthru
        _
    $region24: #{_lambda_.14} parent=5 // pred_fallthru
      _
    %p158 = scmp.le.s32.totalorder 1, %s9
    %p159 = scmp.lt.s32.totalorder %s9, 3
    %p160 = pnand %p158, %p159
    %p161 = pneg %p160
    // Predicated region
    $region29: #{_lambda_.14} parent=5 // pred_check
      _
    $region30: #{_lambda_.14} parent=5 // pred_check_branch
      %163 = sbr.rel (%p160) target = $region32
    $region31: #{_lambda_.14} parent=5 // pred_region
      %s164 = ssub.s32 %s9, 1
      %s165 = smul.u32 2, %s19
      %p166 = scmp.lt.s32.totalorder %s18, 1
      %s167 = scalar_select %p166, %s18, 1
      %p168 = scmp.lt.s32.totalorder %s165, 1
      %s169 = scalar_select %p168, %s165, 1
      %s170 = smul.addr %s169, 7
      %s171 = smul.addr %s167, 14
      %s172 = sadd.s32 %s170, %s171
      %s173 = smul.addr %s172, 4
      %s174 = scalar_lea.vmem %s0, %s173
      %p175 = pneg %p49
      %p176 = pneg %p46
      %p177 = pneg %p70
      %p178 = pneg %p67
      %p179 = pneg %p91
      %p180 = pneg %p88
      %p181 = pneg %p119
      %p182 = pneg %p116
      %s183 = smul.u32 2, %s19
      %p184 = scmp.lt.s32.totalorder %s18, 1
      %s185 = scalar_select %p184, %s18, 1
      %p186 = scmp.lt.s32.totalorder %s183, 1
      %s187 = scalar_select %p186, %s183, 1
      %s188 = smul.addr %s187, 2
      %s189 = smul.addr %s185, 4
      %s190 = sadd.s32 %s188, %s189
      %s191 = smul.addr %s190, 4
      %s192 = scalar_lea.vmem %s3, %s191
      %s193 = smul.u32 2, %s19
      %p194 = scmp.lt.s32.totalorder %s18, 1
      %s195 = scalar_select %p194, %s18, 1
      %p196 = scmp.lt.s32.totalorder %s193, 1
      %s197 = scalar_select %p196, %s193, 1
      %s198 = smul.addr %s197, 7
      %s199 = smul.addr %s195, 14
      %s200 = sadd.s32 %s198, %s199
      %s201 = smul.addr %s200, 4
      %s202 = scalar_lea.vmem %s0, %s201
      %s203 = smul.u32 2, %s19
      %s204 = smul.u32 2, %s19
      %p205 = scmp.lt.s32.totalorder %s18, 1
      %s206 = scalar_select %p205, %s18, 1
      %p207 = scmp.lt.s32.totalorder %s204, 1
      %s208 = scalar_select %p207, %s204, 1
      %s209 = smul.addr %s208, 2
      %s210 = smul.addr %s206, 4
      %s211 = sadd.s32 %s209, %s210
      %s212 = smul.addr %s211, 4
      %s213 = scalar_lea.vmem %s3, %s212
      %s214 = smul.u32 2, %s19
      %v216 = vld [vmem:[%s202] sm:$0xff]
      %v217 = vld [vmem:[%s202 + $0x8] sm:$0xff]
      %v218 = vld [vmem:[%s202 + $0x10] sm:$0xff]
      %v219 = vld [vmem:[%s202 + $0x18] sm:$0xf]
      %v220 = vld [vmem:[%s202 + $0x1c] sm:$0xff]
      %v221 = vld [vmem:[%s202 + $0x24] sm:$0xff]
      %v222 = vld [vmem:[%s202 + $0x2c] sm:$0xff]
      %v223 = vld [vmem:[%s202 + $0x34] sm:$0xf]
      %v224 = vld [vmem:[%s1] sm:$0xff]
      %v225 = vld [vmem:[%s1 + $0x8] sm:$0xff]
      %v226 = vld [vmem:[%s1 + $0x10] sm:$0xff]
      %v227 = vld [vmem:[%s1 + $0x18] sm:$0xff]
      %v228 = vld [vmem:[%s1 + $0x20] sm:$0xff]
      %v229 = vld [vmem:[%s1 + $0x28] sm:$0xff]
      %v230 = vld [vmem:[%s1 + $0x30] sm:$0xff]
      %v231 = vld [vmem:[%s1 + $0x38] sm:$0xff]
      %v232 = vld [vmem:[%s1 + $0x40] sm:$0xff]
      %v233 = vld [vmem:[%s1 + $0x48] sm:$0xff]
      %v234 = vld [vmem:[%s1 + $0x50] sm:$0xff]
      %v235 = vld [vmem:[%s1 + $0x58] sm:$0xff]
      %v236 = vld [vmem:[%s1 + $0x60] sm:$0xff]
      %v237 = vld [vmem:[%s1 + $0x68] sm:$0xff]
      %v238 = vld [vmem:[%s1 + $0x70] sm:$0xff]
      %v239 = vld [vmem:[%s1 + $0x78] sm:$0xff]
      %v240 = vld [vmem:[%s1 + $0x80] sm:$0xff]
      %v241 = vld [vmem:[%s1 + $0x88] sm:$0xff]
      %v242 = vld [vmem:[%s1 + $0x90] sm:$0xff]
      %v243 = vld [vmem:[%s1 + $0x98] sm:$0xff]
      %v244 = vld [vmem:[%s1 + $0xa0] sm:$0xff]
      %v245 = vld [vmem:[%s1 + $0xa8] sm:$0xff]
      %v246 = vld [vmem:[%s1 + $0xb0] sm:$0xff]
      %v247 = vld [vmem:[%s1 + $0xb8] sm:$0xff]
      %v248 = vld [vmem:[%s1 + $0xc0] sm:$0xff]
      %v249 = vld [vmem:[%s1 + $0xc8] sm:$0xff]
      %v250 = vld [vmem:[%s1 + $0xd0] sm:$0xff]
      %v251 = vld [vmem:[%s1 + $0xd8] sm:$0xff]
      %v252 = vld [vmem:[%s1 + $0xe0] sm:$0xff]
      %v253 = vld [vmem:[%s1 + $0xe8] sm:$0xff]
      %v254 = vld [vmem:[%s1 + $0xf0] sm:$0xff]
      %v255 = vld [vmem:[%s1 + $0xf8] sm:$0xff]
      %v256 = vld [vmem:[%s1 + $0x100] sm:$0xff]
      %v257 = vld [vmem:[%s1 + $0x108] sm:$0xff]
      %v258 = vld [vmem:[%s1 + $0x110] sm:$0xff]
      %v259 = vld [vmem:[%s1 + $0x118] sm:$0xff]
      %v260 = vld [vmem:[%s1 + $0x120] sm:$0xff]
      %v261 = vld [vmem:[%s1 + $0x128] sm:$0xff]
      %v262 = vld [vmem:[%s1 + $0x130] sm:$0xff]
      %v263 = vld [vmem:[%s1 + $0x138] sm:$0xff]
      %v264 = vld [vmem:[%s1 + $0x140] sm:$0xff]
      %v265 = vld [vmem:[%s1 + $0x148] sm:$0xff]
      %v266 = vld [vmem:[%s1 + $0x150] sm:$0xff]
      %v267 = vld [vmem:[%s1 + $0x158] sm:$0xff]
      %v268 = vld [vmem:[%s1 + $0x160] sm:$0xff]
      %v269 = vld [vmem:[%s1 + $0x168] sm:$0xff]
      %v270 = vld [vmem:[%s1 + $0x170] sm:$0xff]
      %v271 = vld [vmem:[%s1 + $0x178] sm:$0xff]
      %v272 = vld [vmem:[%s1 + $0x180] sm:$0xff]
      %v273 = vld [vmem:[%s1 + $0x188] sm:$0xff]
      %v274 = vld [vmem:[%s1 + $0x190] sm:$0xff]
      %v275 = vld [vmem:[%s1 + $0x198] sm:$0xff]
      %v276 = vld [vmem:[%s1 + $0x1a0] sm:$0xff]
      %v277 = vld [vmem:[%s1 + $0x1a8] sm:$0xff]
      %v278 = vld [vmem:[%s1 + $0x1b0] sm:$0xff]
      %v279 = vld [vmem:[%s1 + $0x1b8] sm:$0xff]
      %v280 = vld [vmem:[%s1 + $0x1c0] sm:$0xff]
      %v281 = vld [vmem:[%s1 + $0x1c8] sm:$0xff]
      %v282 = vld [vmem:[%s1 + $0x1d0] sm:$0xff]
      %v283 = vld [vmem:[%s1 + $0x1d8] sm:$0xff]
      %v284 = vld [vmem:[%s1 + $0x1e0] sm:$0xff]
      %v285 = vld [vmem:[%s1 + $0x1e8] sm:$0xff]
      %v286 = vld [vmem:[%s1 + $0x1f0] sm:$0xff]
      %v287 = vld [vmem:[%s1 + $0x1f8] sm:$0xff]
      %v288 = vld [vmem:[%s1 + $0x200] sm:$0xff]
      %v289 = vld [vmem:[%s1 + $0x208] sm:$0xff]
      %v290 = vld [vmem:[%s1 + $0x210] sm:$0xff]
      %v291 = vld [vmem:[%s1 + $0x218] sm:$0xff]
      %v292 = vld [vmem:[%s1 + $0x220] sm:$0xff]
      %v293 = vld [vmem:[%s1 + $0x228] sm:$0xff]
      %v294 = vld [vmem:[%s1 + $0x230] sm:$0xff]
      %v295 = vld [vmem:[%s1 + $0x238] sm:$0xff]
      %v296 = vld [vmem:[%s1 + $0x240] sm:$0xff]
      %v297 = vld [vmem:[%s1 + $0x248] sm:$0xff]
      %v298 = vld [vmem:[%s1 + $0x250] sm:$0xff]
      %v299 = vld [vmem:[%s1 + $0x258] sm:$0xff]
      %v300 = vld [vmem:[%s1 + $0x260] sm:$0xff]
      %v301 = vld [vmem:[%s1 + $0x268] sm:$0xff]
      %v302 = vld [vmem:[%s1 + $0x270] sm:$0xff]
      %v303 = vld [vmem:[%s1 + $0x278] sm:$0xff]
      %v304 = vld [vmem:[%s1 + $0x280] sm:$0xff]
      %v305 = vld [vmem:[%s1 + $0x288] sm:$0xff]
      %v306 = vld [vmem:[%s1 + $0x290] sm:$0xff]
      %v307 = vld [vmem:[%s1 + $0x298] sm:$0xff]
      %v308 = vld [vmem:[%s1 + $0x2a0] sm:$0xff]
      %v309 = vld [vmem:[%s1 + $0x2a8] sm:$0xff]
      %v310 = vld [vmem:[%s1 + $0x2b0] sm:$0xff]
      %v311 = vld [vmem:[%s1 + $0x2b8] sm:$0xff]
      %v312 = vld [vmem:[%s1 + $0x2c0] sm:$0xff]
      %v313 = vld [vmem:[%s1 + $0x2c8] sm:$0xff]
      %v314 = vld [vmem:[%s1 + $0x2d0] sm:$0xff]
      %v315 = vld [vmem:[%s1 + $0x2d8] sm:$0xff]
      %v316 = vld [vmem:[%s1 + $0x2e0] sm:$0xff]
      %v317 = vld [vmem:[%s1 + $0x2e8] sm:$0xff]
      %v318 = vld [vmem:[%s1 + $0x2f0] sm:$0xff]
      %v319 = vld [vmem:[%s1 + $0x2f8] sm:$0xff]
      %v320 = vld [vmem:[%s1 + $0x300] sm:$0xff]
      %v321 = vld [vmem:[%s1 + $0x308] sm:$0xff]
      %v322 = vld [vmem:[%s1 + $0x310] sm:$0xff]
      %v323 = vld [vmem:[%s1 + $0x318] sm:$0xff]
      %v324 = vld [vmem:[%s1 + $0x320] sm:$0xff]
      %v325 = vld [vmem:[%s1 + $0x328] sm:$0xff]
      %v326 = vld [vmem:[%s1 + $0x330] sm:$0xff]
      %v327 = vld [vmem:[%s1 + $0x338] sm:$0xff]
      %v328 = vld [vmem:[%s1 + $0x340] sm:$0xff]
      %v329 = vld [vmem:[%s1 + $0x348] sm:$0xff]
      %v330 = vld [vmem:[%s1 + $0x350] sm:$0xff]
      %v331 = vld [vmem:[%s1 + $0x358] sm:$0xff]
      %v332 = vld [vmem:[%s2] sm:$0x3]
      %v334 = vlaneseq
      %v335 = vshrl.u32 %v334, 7
      %v336 = vsub.s32 0, %v335
      %v337 = vrot.slane %v332, %v336
      %v338 = vlaneseq
      %v339 = vshrl.u32 %v338, 7
      %v340 = vsub.s32 1, %v339
      %v341 = vrot.slane %v332, %v340
      %v352 = vunpack.c.l.b16 %v216
      %v353 = vunpack.c.h.b16 %v216
      %v354 = vunpack.c.l.b16 %v217
      %v355 = vunpack.c.h.b16 %v217
      %v356 = vunpack.c.l.b16 %v218
      %v357 = vunpack.c.h.b16 %v218
      %v358 = vunpack.c.l.b16 %v219
      %v359 = vunpack.c.l.b16 %v220
      %v360 = vunpack.c.h.b16 %v220
      %v361 = vunpack.c.l.b16 %v221
      %v362 = vunpack.c.h.b16 %v221
      %v363 = vunpack.c.l.b16 %v222
      %v364 = vunpack.c.h.b16 %v222
      %v365 = vunpack.c.l.b16 %v223
      %v366 = vpack.c.b16 %v359, %v352
      %v367 = vpack.c.b16 %v360, %v353
      %v368 = vpack.c.b16 %v361, %v354
      %v369 = vpack.c.b16 %v362, %v355
      %v370 = vpack.c.b16 %v363, %v356
      %v371 = vpack.c.b16 %v364, %v357
      %v372 = vpack.c.b16 %v365, %v358
      %v487 = vunpack.c.l.b16 %v224
      %v488 = vunpack.c.h.b16 %v224
      %v489 = vunpack.c.l.b16 %v225
      %v490 = vunpack.c.h.b16 %v225
      %v491 = vunpack.c.l.b16 %v226
      %v492 = vunpack.c.h.b16 %v226
      %v493 = vunpack.c.l.b16 %v227
      %v494 = vunpack.c.h.b16 %v227
      %v495 = vunpack.c.l.b16 %v228
      %v496 = vunpack.c.h.b16 %v228
      %v497 = vunpack.c.l.b16 %v229
      %v498 = vunpack.c.h.b16 %v229
      %v499 = vunpack.c.l.b16 %v230
      %v500 = vunpack.c.h.b16 %v230
      %v501 = vunpack.c.l.b16 %v231
      %v502 = vunpack.c.h.b16 %v231
      %v503 = vunpack.c.l.b16 %v232
      %v504 = vunpack.c.h.b16 %v232
      %v505 = vunpack.c.l.b16 %v233
      %v506 = vunpack.c.h.b16 %v233
      %v507 = vunpack.c.l.b16 %v234
      %v508 = vunpack.c.h.b16 %v234
      %v509 = vunpack.c.l.b16 %v235
      %v510 = vunpack.c.h.b16 %v235
      %v511 = vunpack.c.l.b16 %v236
      %v512 = vunpack.c.h.b16 %v236
      %v513 = vunpack.c.l.b16 %v237
      %v514 = vunpack.c.h.b16 %v237
      %v515 = vunpack.c.l.b16 %v238
      %v516 = vunpack.c.h.b16 %v238
      %v517 = vunpack.c.l.b16 %v239
      %v518 = vunpack.c.h.b16 %v239
      %v519 = vunpack.c.l.b16 %v240
      %v520 = vunpack.c.h.b16 %v240
      %v521 = vunpack.c.l.b16 %v241
      %v522 = vunpack.c.h.b16 %v241
      %v523 = vunpack.c.l.b16 %v242
      %v524 = vunpack.c.h.b16 %v242
      %v525 = vunpack.c.l.b16 %v243
      %v526 = vunpack.c.h.b16 %v243
      %v527 = vunpack.c.l.b16 %v244
      %v528 = vunpack.c.h.b16 %v244
      %v529 = vunpack.c.l.b16 %v245
      %v530 = vunpack.c.h.b16 %v245
      %v531 = vunpack.c.l.b16 %v246
      %v532 = vunpack.c.h.b16 %v246
      %v533 = vunpack.c.l.b16 %v247
      %v534 = vunpack.c.h.b16 %v247
      %v535 = vunpack.c.l.b16 %v248
      %v536 = vunpack.c.h.b16 %v248
      %v537 = vunpack.c.l.b16 %v249
      %v538 = vunpack.c.h.b16 %v249
      %v539 = vunpack.c.l.b16 %v250
      %v540 = vunpack.c.h.b16 %v250
      %v541 = vunpack.c.l.b16 %v251
      %v542 = vunpack.c.h.b16 %v251
      %v543 = vunpack.c.l.b16 %v252
      %v544 = vunpack.c.h.b16 %v252
      %v545 = vunpack.c.l.b16 %v253
      %v546 = vunpack.c.h.b16 %v253
      %v547 = vunpack.c.l.b16 %v254
      %v548 = vunpack.c.h.b16 %v254
      %v549 = vunpack.c.l.b16 %v255
      %v550 = vunpack.c.h.b16 %v255
      %v551 = vunpack.c.l.b16 %v256
      %v552 = vunpack.c.h.b16 %v256
      %v553 = vunpack.c.l.b16 %v257
      %v554 = vunpack.c.h.b16 %v257
      %v555 = vunpack.c.l.b16 %v258
      %v556 = vunpack.c.h.b16 %v258
      %v557 = vunpack.c.l.b16 %v259
      %v558 = vunpack.c.h.b16 %v259
      %v559 = vunpack.c.l.b16 %v260
      %v560 = vunpack.c.h.b16 %v260
      %v561 = vunpack.c.l.b16 %v261
      %v562 = vunpack.c.h.b16 %v261
      %v563 = vunpack.c.l.b16 %v262
      %v564 = vunpack.c.h.b16 %v262
      %v565 = vunpack.c.l.b16 %v263
      %v566 = vunpack.c.h.b16 %v263
      %v567 = vunpack.c.l.b16 %v264
      %v568 = vunpack.c.h.b16 %v264
      %v569 = vunpack.c.l.b16 %v265
      %v570 = vunpack.c.h.b16 %v265
      %v571 = vunpack.c.l.b16 %v266
      %v572 = vunpack.c.h.b16 %v266
      %v573 = vunpack.c.l.b16 %v267
      %v574 = vunpack.c.h.b16 %v267
      %v575 = vunpack.c.l.b16 %v268
      %v576 = vunpack.c.h.b16 %v268
      %v577 = vunpack.c.l.b16 %v269
      %v578 = vunpack.c.h.b16 %v269
      %v579 = vunpack.c.l.b16 %v270
      %v580 = vunpack.c.h.b16 %v270
      %v581 = vunpack.c.l.b16 %v271
      %v582 = vunpack.c.h.b16 %v271
      %v583 = vunpack.c.l.b16 %v272
      %v584 = vunpack.c.h.b16 %v272
      %v585 = vunpack.c.l.b16 %v273
      %v586 = vunpack.c.h.b16 %v273
      %v587 = vunpack.c.l.b16 %v274
      %v588 = vunpack.c.h.b16 %v274
      %v589 = vunpack.c.l.b16 %v275
      %v590 = vunpack.c.h.b16 %v275
      %v591 = vunpack.c.l.b16 %v276
      %v592 = vunpack.c.h.b16 %v276
      %v593 = vunpack.c.l.b16 %v277
      %v594 = vunpack.c.h.b16 %v277
      %v595 = vunpack.c.l.b16 %v278
      %v596 = vunpack.c.h.b16 %v278
      %v597 = vunpack.c.l.b16 %v279
      %v598 = vunpack.c.h.b16 %v279
      %v599 = vunpack.c.l.b16 %v280
      %v600 = vunpack.c.h.b16 %v280
      %v601 = vunpack.c.l.b16 %v281
      %v602 = vunpack.c.h.b16 %v281
      %v603 = vunpack.c.l.b16 %v282
      %v604 = vunpack.c.h.b16 %v282
      %v605 = vunpack.c.l.b16 %v283
      %v606 = vunpack.c.h.b16 %v283
      %v607 = vunpack.c.l.b16 %v284
      %v608 = vunpack.c.h.b16 %v284
      %v609 = vunpack.c.l.b16 %v285
      %v610 = vunpack.c.h.b16 %v285
      %v611 = vunpack.c.l.b16 %v286
      %v612 = vunpack.c.h.b16 %v286
      %v613 = vunpack.c.l.b16 %v287
      %v614 = vunpack.c.h.b16 %v287
      %v615 = vunpack.c.l.b16 %v288
      %v616 = vunpack.c.h.b16 %v288
      %v617 = vunpack.c.l.b16 %v289
      %v618 = vunpack.c.h.b16 %v289
      %v619 = vunpack.c.l.b16 %v290
      %v620 = vunpack.c.h.b16 %v290
      %v621 = vunpack.c.l.b16 %v291
      %v622 = vunpack.c.h.b16 %v291
      %v623 = vunpack.c.l.b16 %v292
      %v624 = vunpack.c.h.b16 %v292
      %v625 = vunpack.c.l.b16 %v293
      %v626 = vunpack.c.h.b16 %v293
      %v627 = vunpack.c.l.b16 %v294
      %v628 = vunpack.c.h.b16 %v294
      %v629 = vunpack.c.l.b16 %v295
      %v630 = vunpack.c.h.b16 %v295
      %v631 = vunpack.c.l.b16 %v296
      %v632 = vunpack.c.h.b16 %v296
      %v633 = vunpack.c.l.b16 %v297
      %v634 = vunpack.c.h.b16 %v297
      %v635 = vunpack.c.l.b16 %v298
      %v636 = vunpack.c.h.b16 %v298
      %v637 = vunpack.c.l.b16 %v299
      %v638 = vunpack.c.h.b16 %v299
      %v639 = vunpack.c.l.b16 %v300
      %v640 = vunpack.c.h.b16 %v300
      %v641 = vunpack.c.l.b16 %v301
      %v642 = vunpack.c.h.b16 %v301
      %v643 = vunpack.c.l.b16 %v302
      %v644 = vunpack.c.h.b16 %v302
      %v645 = vunpack.c.l.b16 %v303
      %v646 = vunpack.c.h.b16 %v303
      %v647 = vunpack.c.l.b16 %v304
      %v648 = vunpack.c.h.b16 %v304
      %v649 = vunpack.c.l.b16 %v305
      %v650 = vunpack.c.h.b16 %v305
      %v651 = vunpack.c.l.b16 %v306
      %v652 = vunpack.c.h.b16 %v306
      %v653 = vunpack.c.l.b16 %v307
      %v654 = vunpack.c.h.b16 %v307
      %v655 = vunpack.c.l.b16 %v308
      %v656 = vunpack.c.h.b16 %v308
      %v657 = vunpack.c.l.b16 %v309
      %v658 = vunpack.c.h.b16 %v309
      %v659 = vunpack.c.l.b16 %v310
      %v660 = vunpack.c.h.b16 %v310
      %v661 = vunpack.c.l.b16 %v311
      %v662 = vunpack.c.h.b16 %v311
      %v663 = vunpack.c.l.b16 %v312
      %v664 = vunpack.c.h.b16 %v312
      %v665 = vunpack.c.l.b16 %v313
      %v666 = vunpack.c.h.b16 %v313
      %v667 = vunpack.c.l.b16 %v314
      %v668 = vunpack.c.h.b16 %v314
      %v669 = vunpack.c.l.b16 %v315
      %v670 = vunpack.c.h.b16 %v315
      %v671 = vunpack.c.l.b16 %v316
      %v672 = vunpack.c.h.b16 %v316
      %v673 = vunpack.c.l.b16 %v317
      %v674 = vunpack.c.h.b16 %v317
      %v675 = vunpack.c.l.b16 %v318
      %v676 = vunpack.c.h.b16 %v318
      %v677 = vunpack.c.l.b16 %v319
      %v678 = vunpack.c.h.b16 %v319
      %v679 = vunpack.c.l.b16 %v320
      %v680 = vunpack.c.h.b16 %v320
      %v681 = vunpack.c.l.b16 %v321
      %v682 = vunpack.c.h.b16 %v321
      %v683 = vunpack.c.l.b16 %v322
      %v684 = vunpack.c.h.b16 %v322
      %v685 = vunpack.c.l.b16 %v323
      %v686 = vunpack.c.h.b16 %v323
      %v687 = vunpack.c.l.b16 %v324
      %v688 = vunpack.c.h.b16 %v324
      %v689 = vunpack.c.l.b16 %v325
      %v690 = vunpack.c.h.b16 %v325
      %v691 = vunpack.c.l.b16 %v326
      %v692 = vunpack.c.h.b16 %v326
      %v693 = vunpack.c.l.b16 %v327
      %v694 = vunpack.c.h.b16 %v327
      %v695 = vunpack.c.l.b16 %v328
      %v696 = vunpack.c.h.b16 %v328
      %v697 = vunpack.c.l.b16 %v329
      %v698 = vunpack.c.h.b16 %v329
      %v699 = vunpack.c.l.b16 %v330
      %v700 = vunpack.c.h.b16 %v330
      %v701 = vunpack.c.l.b16 %v331
      %v702 = vunpack.c.h.b16 %v331
      %v703 = vpack.c.b16 %v489, %v487
      %v704 = vpack.c.b16 %v490, %v488
      %v705 = vpack.c.b16 %v493, %v491
      %v706 = vpack.c.b16 %v494, %v492
      %v707 = vpack.c.b16 %v497, %v495
      %v708 = vpack.c.b16 %v498, %v496
      %v709 = vpack.c.b16 %v501, %v499
      %v710 = vpack.c.b16 %v502, %v500
      %v711 = vpack.c.b16 %v505, %v503
      %v712 = vpack.c.b16 %v506, %v504
      %v713 = vpack.c.b16 %v509, %v507
      %v714 = vpack.c.b16 %v510, %v508
      %v715 = vpack.c.b16 %v513, %v511
      %v716 = vpack.c.b16 %v514, %v512
      %v717 = vpack.c.b16 %v517, %v515
      %v718 = vpack.c.b16 %v518, %v516
      %v719 = vpack.c.b16 %v521, %v519
      %v720 = vpack.c.b16 %v522, %v520
      %v721 = vpack.c.b16 %v525, %v523
      %v722 = vpack.c.b16 %v526, %v524
      %v723 = vpack.c.b16 %v529, %v527
      %v724 = vpack.c.b16 %v530, %v528
      %v725 = vpack.c.b16 %v533, %v531
      %v726 = vpack.c.b16 %v534, %v532
      %v727 = vpack.c.b16 %v537, %v535
      %v728 = vpack.c.b16 %v538, %v536
      %v729 = vpack.c.b16 %v541, %v539
      %v730 = vpack.c.b16 %v542, %v540
      %v731 = vpack.c.b16 %v545, %v543
      %v732 = vpack.c.b16 %v546, %v544
      %v733 = vpack.c.b16 %v549, %v547
      %v734 = vpack.c.b16 %v550, %v548
      %v735 = vpack.c.b16 %v553, %v551
      %v736 = vpack.c.b16 %v554, %v552
      %v737 = vpack.c.b16 %v557, %v555
      %v738 = vpack.c.b16 %v558, %v556
      %v739 = vpack.c.b16 %v561, %v559
      %v740 = vpack.c.b16 %v562, %v560
      %v741 = vpack.c.b16 %v565, %v563
      %v742 = vpack.c.b16 %v566, %v564
      %v743 = vpack.c.b16 %v569, %v567
      %v744 = vpack.c.b16 %v570, %v568
      %v745 = vpack.c.b16 %v573, %v571
      %v746 = vpack.c.b16 %v574, %v572
      %v747 = vpack.c.b16 %v577, %v575
      %v748 = vpack.c.b16 %v578, %v576
      %v749 = vpack.c.b16 %v581, %v579
      %v750 = vpack.c.b16 %v582, %v580
      %v751 = vpack.c.b16 %v585, %v583
      %v752 = vpack.c.b16 %v586, %v584
      %v753 = vpack.c.b16 %v589, %v587
      %v754 = vpack.c.b16 %v590, %v588
      %v755 = vpack.c.b16 %v593, %v591
      %v756 = vpack.c.b16 %v594, %v592
      %v757 = vpack.c.b16 %v597, %v595
      %v758 = vpack.c.b16 %v598, %v596
      %v759 = vpack.c.b16 %v601, %v599
      %v760 = vpack.c.b16 %v602, %v600
      %v761 = vpack.c.b16 %v605, %v603
      %v762 = vpack.c.b16 %v606, %v604
      %v763 = vpack.c.b16 %v609, %v607
      %v764 = vpack.c.b16 %v610, %v608
      %v765 = vpack.c.b16 %v613, %v611
      %v766 = vpack.c.b16 %v614, %v612
      %v767 = vpack.c.b16 %v617, %v615
      %v768 = vpack.c.b16 %v618, %v616
      %v769 = vpack.c.b16 %v621, %v619
      %v770 = vpack.c.b16 %v622, %v620
      %v771 = vpack.c.b16 %v625, %v623
      %v772 = vpack.c.b16 %v626, %v624
      %v773 = vpack.c.b16 %v629, %v627
      %v774 = vpack.c.b16 %v630, %v628
      %v775 = vpack.c.b16 %v633, %v631
      %v776 = vpack.c.b16 %v634, %v632
      %v777 = vpack.c.b16 %v637, %v635
      %v778 = vpack.c.b16 %v638, %v636
      %v779 = vpack.c.b16 %v641, %v639
      %v780 = vpack.c.b16 %v642, %v640
      %v781 = vpack.c.b16 %v645, %v643
      %v782 = vpack.c.b16 %v646, %v644
      %v783 = vpack.c.b16 %v649, %v647
      %v784 = vpack.c.b16 %v650, %v648
      %v785 = vpack.c.b16 %v653, %v651
      %v786 = vpack.c.b16 %v654, %v652
      %v787 = vpack.c.b16 %v657, %v655
      %v788 = vpack.c.b16 %v658, %v656
      %v789 = vpack.c.b16 %v661, %v659
      %v790 = vpack.c.b16 %v662, %v660
      %v791 = vpack.c.b16 %v665, %v663
      %v792 = vpack.c.b16 %v666, %v664
      %v793 = vpack.c.b16 %v669, %v667
      %v794 = vpack.c.b16 %v670, %v668
      %v795 = vpack.c.b16 %v673, %v671
      %v796 = vpack.c.b16 %v674, %v672
      %v797 = vpack.c.b16 %v677, %v675
      %v798 = vpack.c.b16 %v678, %v676
      %v799 = vpack.c.b16 %v681, %v679
      %v800 = vpack.c.b16 %v682, %v680
      %v801 = vpack.c.b16 %v685, %v683
      %v802 = vpack.c.b16 %v686, %v684
      %v803 = vpack.c.b16 %v689, %v687
      %v804 = vpack.c.b16 %v690, %v688
      %v805 = vpack.c.b16 %v693, %v691
      %v806 = vpack.c.b16 %v694, %v692
      %v807 = vpack.c.b16 %v697, %v695
      %v808 = vpack.c.b16 %v698, %v696
      %v809 = vpack.c.b16 %v701, %v699
      %v810 = vpack.c.b16 %v702, %v700
      %vm919 = vcmask 785408
      %v921 = vsel %vm919, %v372, 0
      %923 = vmatprep.subr.bf16.mxu0 %v718
      %924 = vmatpush1.bf16.msra.mxu0 %v717
      %925 = vmatprep.subr.bf16.mxu0 %v716
      %926 = vmatpush1.bf16.msra.mxu0 %v715
      %927 = vmatprep.subr.bf16.mxu0 %v714
      %928 = vmatpush1.bf16.msra.mxu0 %v713
      %929 = vmatprep.subr.bf16.mxu0 %v712
      %930 = vmatpush1.bf16.msra.mxu0 %v711
      %931 = vmatprep.subr.bf16.mxu0 %v710
      %932 = vmatpush1.bf16.msra.mxu0 %v709
      %933 = vmatprep.subr.bf16.mxu0 %v708
      %934 = vmatpush1.bf16.msra.mxu0 %v707
      %935 = vmatprep.subr.bf16.mxu0 %v706
      %936 = vmatpush1.bf16.msra.mxu0 %v705
      %937 = vmatprep.subr.bf16.mxu0 %v704
      %938 = vmatpush1.bf16.msra.mxu0 %v703
      %939 = vmatprep.subr.bf16.mxu0 %v734
      %940 = vmatpush2.bf16.msra.mxu0 %v733
      %941 = vmatprep.subr.bf16.mxu0 %v732
      %942 = vmatpush2.bf16.msra.mxu0 %v731
      %943 = vmatprep.subr.bf16.mxu0 %v730
      %944 = vmatpush2.bf16.msra.mxu0 %v729
      %945 = vmatprep.subr.bf16.mxu0 %v728
      %946 = vmatpush2.bf16.msra.mxu0 %v727
      %947 = vmatprep.subr.bf16.mxu0 %v726
      %948 = vmatpush2.bf16.msra.mxu0 %v725
      %949 = vmatprep.subr.bf16.mxu0 %v724
      %950 = vmatpush2.bf16.msra.mxu0 %v723
      %951 = vmatprep.subr.bf16.mxu0 %v722
      %952 = vmatpush2.bf16.msra.mxu0 %v721
      %953 = vmatprep.subr.bf16.mxu0 %v720
      %954 = vmatpush2.bf16.msra.mxu0 %v719
      %955 = vmatprep.mubr.bf16.mxu0 %v367
      %956 = vmatmul.mubr.bf16.gmra.mxu0 %v366
      %v957 = vpop.f32.mrf.mxu0
      %v958 = vadd.f32 %v337, %v957
      %v959 = vpop.f32.mrf.mxu0
      %v960 = vadd.f32 %v341, %v959
      %v961 = vpop.f32.mrf.mxu0
      %v962 = vadd.f32 %v337, %v961
      %v963 = vpop.f32.mrf.mxu0
      %v964 = vadd.f32 %v341, %v963
      %965 = vdwg.mxu0
      %966 = vmatprep.subr.bf16.mxu0 %v750
      %967 = vmatpush1.bf16.msra.mxu0 %v749
      %968 = vmatprep.subr.bf16.mxu0 %v748
      %969 = vmatpush1.bf16.msra.mxu0 %v747
      %970 = vmatprep.subr.bf16.mxu0 %v746
      %971 = vmatpush1.bf16.msra.mxu0 %v745
      %972 = vmatprep.subr.bf16.mxu0 %v744
      %973 = vmatpush1.bf16.msra.mxu0 %v743
      %974 = vmatprep.subr.bf16.mxu0 %v742
      %975 = vmatpush1.bf16.msra.mxu0 %v741
      %976 = vmatprep.subr.bf16.mxu0 %v740
      %977 = vmatpush1.bf16.msra.mxu0 %v739
      %978 = vmatprep.subr.bf16.mxu0 %v738
      %979 = vmatpush1.bf16.msra.mxu0 %v737
      %980 = vmatprep.subr.bf16.mxu0 %v736
      %981 = vmatpush1.bf16.msra.mxu0 %v735
      %982 = vmatprep.subr.bf16.mxu0 %v766
      %983 = vmatpush2.bf16.msra.mxu0 %v765
      %984 = vmatprep.subr.bf16.mxu0 %v764
      %985 = vmatpush2.bf16.msra.mxu0 %v763
      %986 = vmatprep.subr.bf16.mxu0 %v762
      %987 = vmatpush2.bf16.msra.mxu0 %v761
      %988 = vmatprep.subr.bf16.mxu0 %v760
      %989 = vmatpush2.bf16.msra.mxu0 %v759
      %990 = vmatprep.subr.bf16.mxu0 %v758
      %991 = vmatpush2.bf16.msra.mxu0 %v757
      %992 = vmatprep.subr.bf16.mxu0 %v756
      %993 = vmatpush2.bf16.msra.mxu0 %v755
      %994 = vmatprep.subr.bf16.mxu0 %v754
      %995 = vmatpush2.bf16.msra.mxu0 %v753
      %996 = vmatprep.subr.bf16.mxu0 %v752
      %997 = vmatpush2.bf16.msra.mxu0 %v751
      %998 = vmatprep.mubr.bf16.mxu0 %v369
      %999 = vmatmul.mubr.bf16.gmra.mxu0 %v368
      %v1000 = vpop.f32.mrf.mxu0
      %v1001 = vadd.f32 %v958, %v1000
      %v1002 = vpop.f32.mrf.mxu0
      %v1003 = vadd.f32 %v960, %v1002
      %v1004 = vpop.f32.mrf.mxu0
      %v1005 = vadd.f32 %v962, %v1004
      %v1006 = vpop.f32.mrf.mxu0
      %v1007 = vadd.f32 %v964, %v1006
      %1008 = vdwg.mxu0
      %1009 = vmatprep.subr.bf16.mxu0 %v782
      %1010 = vmatpush1.bf16.msra.mxu0 %v781
      %1011 = vmatprep.subr.bf16.mxu0 %v780
      %1012 = vmatpush1.bf16.msra.mxu0 %v779
      %1013 = vmatprep.subr.bf16.mxu0 %v778
      %1014 = vmatpush1.bf16.msra.mxu0 %v777
      %1015 = vmatprep.subr.bf16.mxu0 %v776
      %1016 = vmatpush1.bf16.msra.mxu0 %v775
      %1017 = vmatprep.subr.bf16.mxu0 %v774
      %1018 = vmatpush1.bf16.msra.mxu0 %v773
      %1019 = vmatprep.subr.bf16.mxu0 %v772
      %1020 = vmatpush1.bf16.msra.mxu0 %v771
      %1021 = vmatprep.subr.bf16.mxu0 %v770
      %1022 = vmatpush1.bf16.msra.mxu0 %v769
      %1023 = vmatprep.subr.bf16.mxu0 %v768
      %1024 = vmatpush1.bf16.msra.mxu0 %v767
      %1025 = vmatprep.subr.bf16.mxu0 %v798
      %1026 = vmatpush2.bf16.msra.mxu0 %v797
      %1027 = vmatprep.subr.bf16.mxu0 %v796
      %1028 = vmatpush2.bf16.msra.mxu0 %v795
      %1029 = vmatprep.subr.bf16.mxu0 %v794
      %1030 = vmatpush2.bf16.msra.mxu0 %v793
      %1031 = vmatprep.subr.bf16.mxu0 %v792
      %1032 = vmatpush2.bf16.msra.mxu0 %v791
      %1033 = vmatprep.subr.bf16.mxu0 %v790
      %1034 = vmatpush2.bf16.msra.mxu0 %v789
      %1035 = vmatprep.subr.bf16.mxu0 %v788
      %1036 = vmatpush2.bf16.msra.mxu0 %v787
      %1037 = vmatprep.subr.bf16.mxu0 %v786
      %1038 = vmatpush2.bf16.msra.mxu0 %v785
      %1039 = vmatprep.subr.bf16.mxu0 %v784
      %1040 = vmatpush2.bf16.msra.mxu0 %v783
      %1041 = vmatprep.mubr.bf16.mxu0 %v371
      %1042 = vmatmul.mubr.bf16.gmra.mxu0 %v370
      %v1043 = vpop.f32.mrf.mxu0
      %v1044 = vadd.f32 %v1001, %v1043
      %v1045 = vpop.f32.mrf.mxu0
      %v1046 = vadd.f32 %v1003, %v1045
      %v1047 = vpop.f32.mrf.mxu0
      %v1048 = vadd.f32 %v1005, %v1047
      %v1049 = vpop.f32.mrf.mxu0
      %v1050 = vadd.f32 %v1007, %v1049
      %1051 = vdwg.mxu0
      %1052 = vmatprep.subr.bf16.mxu0 0
      %1053 = vmatpush1.bf16.msra.mxu0 0
      %1054 = vmatprep.subr.bf16.mxu0 0
      %1055 = vmatpush1.bf16.msra.mxu0 0
      %1056 = vmatprep.subr.bf16.mxu0 %v810
      %1057 = vmatpush1.bf16.msra.mxu0 %v809
      %1058 = vmatprep.subr.bf16.mxu0 %v808
      %1059 = vmatpush1.bf16.msra.mxu0 %v807
      %1060 = vmatprep.subr.bf16.mxu0 %v806
      %1061 = vmatpush1.bf16.msra.mxu0 %v805
      %1062 = vmatprep.subr.bf16.mxu0 %v804
      %1063 = vmatpush1.bf16.msra.mxu0 %v803
      %1064 = vmatprep.subr.bf16.mxu0 %v802
      %1065 = vmatpush1.bf16.msra.mxu0 %v801
      %1066 = vmatprep.subr.bf16.mxu0 %v800
      %1067 = vmatpush1.bf16.msra.mxu0 %v799
      %1068 = vmatprep.subr.bf16.mxu0 0
      %1069 = vmatpush2.bf16.msra.mxu0 0
      %1070 = vmatprep.subr.bf16.mxu0 0
      %1071 = vmatpush2.bf16.msra.mxu0 0
      %1072 = vmatprep.subr.bf16.mxu0 0
      %1073 = vmatpush2.bf16.msra.mxu0 0
      %1074 = vmatprep.subr.bf16.mxu0 0
      %1075 = vmatpush2.bf16.msra.mxu0 0
      %1076 = vmatprep.subr.bf16.mxu0 0
      %1077 = vmatpush2.bf16.msra.mxu0 0
      %1078 = vmatprep.subr.bf16.mxu0 0
      %1079 = vmatpush2.bf16.msra.mxu0 0
      %1080 = vmatprep.subr.bf16.mxu0 0
      %1081 = vmatpush2.bf16.msra.mxu0 0
      %1082 = vmatprep.subr.bf16.mxu0 0
      %1083 = vmatpush2.bf16.msra.mxu0 0
      %1084 = vmatprep.mubr.bf16.mxu0 0
      %1085 = vmatmul.mubr.bf16.gmra.mxu0 %v921
      %v1086 = vpop.f32.mrf.mxu0
      %v1087 = vadd.f32 %v1044, %v1086
      %v1088 = vpop.f32.mrf.mxu0
      %v1089 = vadd.f32 %v1046, %v1088
      %v1090 = vpop.f32.mrf.mxu0
      %v1091 = vadd.f32 %v1048, %v1090
      %v1092 = vpop.f32.mrf.mxu0
      %v1093 = vadd.f32 %v1050, %v1092
      %1094 = vdwg.mxu0
      %v1095 = vxor.u32 %v1087, 2147483648
      %v1096 = vxor.u32 %v1089, 2147483648
      %v1097 = vxor.u32 %v1091, 2147483648
      %v1098 = vxor.u32 %v1093, 2147483648
      %v1099 = vmul.f32 %v1095, 1.442695
      %v1100 = vpow.pop %v1099
      %v1101 = vmul.f32 %v1096, 1.442695
      %v1102 = vpow.pop %v1101
      %v1103 = vmul.f32 %v1097, 1.442695
      %v1104 = vpow.pop %v1103
      %v1105 = vmul.f32 %v1098, 1.442695
      %v1106 = vpow.pop %v1105
      %v1107 = vadd.f32 %v1100, 1.0
      %v1108 = vadd.f32 %v1102, 1.0
      %v1109 = vadd.f32 %v1104, 1.0
      %v1110 = vadd.f32 %v1106, 1.0
      %v1111 = vrcp.pop %v1107
      %v1112 = vmul.f32 1.0, %v1111
      %v1113 = vrcp.pop %v1108
      %v1114 = vmul.f32 1.0, %v1113
      %v1115 = vrcp.pop %v1109
      %v1116 = vmul.f32 1.0, %v1115
      %v1117 = vrcp.pop %v1110
      %v1118 = vmul.f32 1.0, %v1117
      %v1119 = vmul.f32 %v1087, %v1112
      %v1120 = vmul.f32 %v1089, %v1114
      %v1121 = vmul.f32 %v1091, %v1116
      %v1122 = vmul.f32 %v1093, %v1118
      %v1123 = vpack.c.bf16 %v1121, %v1119
      %v1124 = vpack.c.bf16 %v1122, %v1120
      %v1127 = vunpack.c.l.b16 %v1123
      %v1128 = vunpack.c.l.b16 %v1124
      %v1129 = vunpack.c.h.b16 %v1123
      %v1130 = vunpack.c.h.b16 %v1124
      %v1131 = vpack.c.b16 %v1128, %v1127
      %v1132 = vpack.c.b16 %v1130, %v1129
      %1135 = vst [vmem:[%s213] sm:$0xff] %v1131
      %1136 = vst [vmem:[%s213 + $0x8] sm:$0xff] %v1132
      %s1137 = smul.u32 2, %s19
      %p1138 = scmp.lt.s32.totalorder %s18, 1
      %s1139 = scalar_select %p1138, %s18, 1
      %p1140 = scmp.lt.s32.totalorder %s1137, 1
      %s1141 = scalar_select %p1140, %s1137, 1
      %s1142 = smul.addr %s1141, 2
      %s1143 = smul.addr %s1139, 4
      %s1144 = sadd.s32 %s1142, %s1143
      %s1145 = smul.addr %s1144, 4
      %s1146 = scalar_lea.vmem %s3, %s1145
      // Predicated region
      $region33: #{_lambda_.14} parent=31 // pred_check
        %p1147 = pneg %p116
      $region34: #{_lambda_.14} parent=31 // pred_check_branch
        %1149 = sbr.rel (%p1147) target = $region36
      $region35: #{_lambda_.14} parent=31 // pred_region
        %s1150 = smul.u32 2, %s19
      $region36: #{_lambda_.14} parent=31 // pred_fallthru
        _
    $region32: #{_lambda_.14} parent=5 // pred_fallthru
      _
    %p1151 = scmp.le.s32.totalorder 2, %s9
    // Predicated region
    $region37: #{_lambda_.14} parent=5 // pred_check
      %p1152 = pneg %p1151
    $region38: #{_lambda_.14} parent=5 // pred_check_branch
      %1154 = sbr.rel (%p1152) target = $region40
    $region39: #{_lambda_.14} parent=5 // pred_region
      %s1155 = ssub.s32 %s9, 2
      // Predicated region
      $region41: #{_lambda_.14} parent=39 // pred_check
        %p1156 = pneg %p122
      $region42: #{_lambda_.14} parent=39 // pred_check_branch
        %1158 = sbr.rel (%p1156) target = $region44
      $region43: #{_lambda_.14} parent=39 // pred_region
        %s1159 = smul.u32 2, %s21
        %p1160 = scmp.lt.s32.totalorder %s20, 1
        %s1161 = scalar_select %p1160, %s20, 1
        %p1162 = scmp.lt.s32.totalorder %s1159, 1
        %s1163 = scalar_select %p1162, %s1159, 1
        %s1164 = smul.addr %s1163, 2
        %s1165 = smul.addr %s1161, 4
        %s1166 = sadd.s32 %s1164, %s1165
        %s1167 = smul.addr %s1166, 4
        %s1168 = scalar_lea.vmem %s3, %s1167
      $region44: #{_lambda_.14} parent=39 // pred_fallthru
        _
    $region40: #{_lambda_.14} parent=5 // pred_fallthru
      _
  $region6: #{_lambda_.14} parent=0 // loop_footer
    %s13 = sadd.s32 1, %s9
  $region7: #{_lambda_.14} parent=0 // loop_footer_branch
    %8 = sbr.rel target = $region3
  $region8: #{_lambda_.14} parent=0 // loop_exit
    _

// kernel: _lambda_.15
$region0: #{_lambda_.15}
  #allocation0 [shape = 'u32[]', space=smem, size = 0x4, offset = 0x4, fixed_abs, tag = 'smem constant byte address 0x4 - core index']
  #allocation1 [shape = 'u32[144,128]{1,0:T(1,128)}', space=vmem, size = 0x12000, scoped, tag = 'internal scratch']
  %s0 = inlined_call_operand.vmem [shape: bf16[2,16,2304], index: 0, kind: input, shape index: {}]
  %s1 = inlined_call_operand.vmem [shape: bf16[2304,32], index: 1, kind: input, shape index: {}]
  %s2 = inlined_call_operand.vmem [shape: f32[1,32], index: 2, kind: input, shape index: {}]
  %s3 = inlined_call_operand.hbm [shape: f32[2,16,32], index: 3, kind: output, shape index: {}]
  %s4 = sld [smem:[#allocation0]]
  $region45: #{_lambda_.15} parent=0
    _
  %s6 = ssub.s32 1, %s4
  %s7 = scalar_select 0, %s6, %s4
  $region1: #{_lambda_.15} parent=0
    #allocation2 [shape = 'u8[16384]{0}', space=vmem, size = 0x4000, scoped, tag = 'output window, operand 0']
    #allocation3 [shape = 's32[2]{0}', space=sflag, size = 0x8, scoped, tag = 'scoped memory for _lambda_.15']
    %8 = vsyncpa [#allocation3], 0
    %s9 = scalar_lea.sflag [#allocation3], 1
    %10 = vsyncpa %s9, 0
    loop: start=0, step=1, limit=4
    $region2: #{_lambda_.15} parent=1 // loop_pre_header
      _
    $region3: #{_lambda_.15} parent=1 // loop_header
      %s12 = sphi 0, %s16
      %p13 = scmp.ge.s32.totalorder %s12, 4
      %s19 = sphi 0, %s31
      %s20 = sphi 0, %s27
      %s21 = sphi 0, %s19
      %s22 = sphi 0, %s20
      %s23 = sphi 0, %s21
      %s24 = sphi 0, %s22
      %s36 = sphi 0, %s38
      %s39 = sphi 0, %s36
      %s40 = sphi 0, %s39
      %s56 = sphi 0, %s40
      %s60 = sphi 0, %s60
      %s62 = sphi 0, %s60
      %s63 = sphi 0, %s62
      %s77 = sphi 0, %s63
      %s81 = sphi 0, %s81
      %s83 = sphi 0, %s81
      %s84 = sphi 0, %s83
      %s98 = sphi 0, %s84
      %s106 = sphi 0, %s108
      %s109 = sphi 0, %s106
      %s110 = sphi 0, %s109
      %s126 = sphi 0, %s110
    $region4: #{_lambda_.15} parent=1 // loop_header_branch
      %15 = sbr.rel (%p13) target = $region8
    $region5: #{_lambda_.15} parent=1 // loop_body
      %s17 = ssub.s32 %s12, 1
      %s18 = ssub.s32 %s12, 2
      %s25 = sadd.s32 1, %s20
      %p26 = scmp.ge.s32.totalorder %s25, 1
      %s27 = scalar_select %p26, 0, %s25
      %s28 = sadd.s32 1, %s19
      %s29 = scalar_select %p26, %s28, %s19
      %p30 = scmp.ge.s32.totalorder %s29, 2
      %s31 = scalar_select %p30, 0, %s29
      %s32 = ssub.s32 %s19, %s31
      %s33 = ssub.s32 %s20, %s27
      %s34 = sor.u32 %s32, %s33
      %p35 = scmp.eq.s32.totalorder %s34, 0
      %s37 = sadd.s32 %s36, 1
      %s38 = scalar_select %p35, %s36, %s37
      %p41 = pneg %p35
      %p42 = scmp.eq.s32.totalorder %s12, 1
      %p43 = por %p41, %p42
      %p44 = scmp.ne.s32.totalorder %s36, %s39
      %p45 = scmp.eq.s32.totalorder %s12, 0
      %p46 = por %p44, %p45
      %p47 = scmp.ne.s32.totalorder %s36, %s39
      %p48 = scmp.eq.s32.totalorder %s17, 1
      %p49 = por %p47, %p48
      %p50 = scmp.ne.s32.totalorder %s39, %s40
      %p51 = scmp.eq.s32.totalorder %s17, 0
      %p52 = por %p50, %p51
      %p53 = scmp.ne.s32.totalorder %s39, %s40
      %p54 = scmp.eq.s32.totalorder %s18, 1
      %p55 = por %p53, %p54
      %p57 = scmp.ne.s32.totalorder %s40, %s56
      %p58 = scmp.eq.s32.totalorder %s18, 0
      %p59 = por %p57, %p58
      %s61 = sadd.s32 %s60, 1
      %p64 = scmp.eq.s32.totalorder %s12, 1
      %p65 = scmp.ne.s32.totalorder %s60, %s62
      %p66 = scmp.eq.s32.totalorder %s12, 0
      %p67 = por %p65, %p66
      %p68 = scmp.ne.s32.totalorder %s60, %s62
      %p69 = scmp.eq.s32.totalorder %s17, 1
      %p70 = por %p68, %p69
      %p71 = scmp.ne.s32.totalorder %s62, %s63
      %p72 = scmp.eq.s32.totalorder %s17, 0
      %p73 = por %p71, %p72
      %p74 = scmp.ne.s32.totalorder %s62, %s63
      %p75 = scmp.eq.s32.totalorder %s18, 1
      %p76 = por %p74, %p75
      %p78 = scmp.ne.s32.totalorder %s63, %s77
      %p79 = scmp.eq.s32.totalorder %s18, 0
      %p80 = por %p78, %p79
      %s82 = sadd.s32 %s81, 1
      %p85 = scmp.eq.s32.totalorder %s12, 1
      %p86 = scmp.ne.s32.totalorder %s81, %s83
      %p87 = scmp.eq.s32.totalorder %s12, 0
      %p88 = por %p86, %p87
      %p89 = scmp.ne.s32.totalorder %s81, %s83
      %p90 = scmp.eq.s32.totalorder %s17, 1
      %p91 = por %p89, %p90
      %p92 = scmp.ne.s32.totalorder %s83, %s84
      %p93 = scmp.eq.s32.totalorder %s17, 0
      %p94 = por %p92, %p93
      %p95 = scmp.ne.s32.totalorder %s83, %s84
      %p96 = scmp.eq.s32.totalorder %s18, 1
      %p97 = por %p95, %p96
      %p99 = scmp.ne.s32.totalorder %s84, %s98
      %p100 = scmp.eq.s32.totalorder %s18, 0
      %p101 = por %p99, %p100
      %s102 = ssub.s32 %s19, %s31
      %s103 = ssub.s32 %s20, %s27
      %s104 = sor.u32 %s102, %s103
      %p105 = scmp.eq.s32.totalorder %s104, 0
      %s107 = sadd.s32 %s106, 1
      %s108 = scalar_select %p105, %s106, %s107
      %p111 = pneg %p105
      %p112 = scmp.eq.s32.totalorder %s12, 1
      %p113 = por %p111, %p112
      %p114 = scmp.ne.s32.totalorder %s106, %s109
      %p115 = scmp.eq.s32.totalorder %s12, 0
      %p116 = por %p114, %p115
      %p117 = scmp.ne.s32.totalorder %s106, %s109
      %p118 = scmp.eq.s32.totalorder %s17, 1
      %p119 = por %p117, %p118
      %p120 = scmp.ne.s32.totalorder %s109, %s110
      %p121 = scmp.eq.s32.totalorder %s17, 0
      %p122 = por %p120, %p121
      %p123 = scmp.ne.s32.totalorder %s109, %s110
      %p124 = scmp.eq.s32.totalorder %s18, 1
      %p125 = por %p123, %p124
      %p127 = scmp.ne.s32.totalorder %s110, %s126
      %p128 = scmp.eq.s32.totalorder %s18, 0
      %p129 = por %p127, %p128
      %p130 = scmp.le.s32.totalorder 1, %s12
      %p131 = scmp.lt.s32.totalorder %s12, 3
      %p132 = pnand %p130, %p131
      %p133 = pneg %p132
      // Predicated region
      $region9: #{_lambda_.15} parent=5 // pred_check
        _
      $region10: #{_lambda_.15} parent=5 // pred_check_branch
        %135 = sbr.rel (%p132) target = $region12
      $region11: #{_lambda_.15} parent=5 // pred_region
        %s136 = ssub.s32 %s12, 1
        // Predicated region
        $region13: #{_lambda_.15} parent=11 // pred_check
          %p137 = pneg %p73
        $region14: #{_lambda_.15} parent=11 // pred_check_branch
          %139 = sbr.rel (%p137) target = $region16
        $region15: #{_lambda_.15} parent=11 // pred_region
          _
        $region16: #{_lambda_.15} parent=11 // pred_fallthru
          _
        // Predicated region
        $region17: #{_lambda_.15} parent=11 // pred_check
          %p140 = pneg %p94
        $region18: #{_lambda_.15} parent=11 // pred_check_branch
          %142 = sbr.rel (%p140) target = $region20
        $region19: #{_lambda_.15} parent=11 // pred_region
          _
        $region20: #{_lambda_.15} parent=11 // pred_fallthru
          _
      $region12: #{_lambda_.15} parent=5 // pred_fallthru
        _
      %p143 = scmp.lt.s32.totalorder %s12, 2
      // Predicated region
      $region21: #{_lambda_.15} parent=5 // pred_check
        %p144 = pneg %p143
      $region22: #{_lambda_.15} parent=5 // pred_check_branch
        %146 = sbr.rel (%p144) target = $region24
      $region23: #{_lambda_.15} parent=5 // pred_region
        // Predicated region
        $region25: #{_lambda_.15} parent=23 // pred_check
          %p147 = pneg %p46
        $region26: #{_lambda_.15} parent=23 // pred_check_branch
          %149 = sbr.rel (%p147) target = $region28
        $region27: #{_lambda_.15} parent=23 // pred_region
          %s150 = smul.u32 2, %s20
          %p151 = scmp.lt.s32.totalorder %s19, 1
          %s152 = scalar_select %p151, %s19, 1
          %p153 = scmp.lt.s32.totalorder %s150, 1
          %s154 = scalar_select %p153, %s150, 1
          %s155 = smul.addr %s154, 18
          %s156 = smul.addr %s152, 36
          %s157 = sadd.s32 %s155, %s156
          %s158 = smul.addr %s157, 4
          %s159 = scalar_lea.vmem %s0, %s158
          %s160 = smul.u32 2, %s20
        $region28: #{_lambda_.15} parent=23 // pred_fallthru
          _
      $region24: #{_lambda_.15} parent=5 // pred_fallthru
        _
      %p161 = scmp.le.s32.totalorder 1, %s12
      %p162 = scmp.lt.s32.totalorder %s12, 3
      %p163 = pnand %p161, %p162
      %p164 = pneg %p163
      // Predicated region
      $region29: #{_lambda_.15} parent=5 // pred_check
        _
      $region30: #{_lambda_.15} parent=5 // pred_check_branch
        %166 = sbr.rel (%p163) target = $region32
      $region31: #{_lambda_.15} parent=5 // pred_region
        %s167 = ssub.s32 %s12, 1
        %s168 = smul.u32 2, %s22
        %p169 = scmp.lt.s32.totalorder %s21, 1
        %s170 = scalar_select %p169, %s21, 1
        %p171 = scmp.lt.s32.totalorder %s168, 1
        %s172 = scalar_select %p171, %s168, 1
        %s173 = smul.addr %s172, 18
        %s174 = smul.addr %s170, 36
        %s175 = sadd.s32 %s173, %s174
        %s176 = smul.addr %s175, 4
        %s177 = scalar_lea.vmem %s0, %s176
        %p178 = pneg %p52
        %p179 = pneg %p49
        %p180 = pneg %p73
        %p181 = pneg %p70
        %p182 = pneg %p94
        %p183 = pneg %p91
        %p184 = pneg %p122
        %p185 = pneg %p119
        %s186 = sand.u32 %s109, 1
        %s187 = scalar_lea.sflag [#allocation3], %s186
        %s188 = sand.u32 %s109, 1
        %s189 = smul.addr %s188, 16
        %s190 = scalar_lea.vmem [#allocation2], %s189
        %s191 = smul.u32 2, %s22
        %p192 = scmp.lt.s32.totalorder %s21, 1
        %s193 = scalar_select %p192, %s21, 1
        %p194 = scmp.lt.s32.totalorder %s191, 1
        %s195 = scalar_select %p194, %s191, 1
        %s196 = smul.addr %s195, 18
        %s197 = smul.addr %s193, 36
        %s198 = sadd.s32 %s196, %s197
        %s199 = smul.addr %s198, 4
        %s200 = scalar_lea.vmem %s0, %s199
        %s201 = smul.u32 2, %s22
        %s202 = smul.u32 2, %s22
        %v204 = vld [vmem:[%s200] sm:$0xff]
        %v205 = vld [vmem:[%s200 + $0x8] sm:$0xff]
        %v206 = vld [vmem:[%s200 + $0x10] sm:$0xff]
        %v207 = vld [vmem:[%s200 + $0x18] sm:$0xff]
        %v208 = vld [vmem:[%s200 + $0x20] sm:$0xff]
        %v209 = vld [vmem:[%s200 + $0x28] sm:$0xff]
        %v210 = vld [vmem:[%s200 + $0x30] sm:$0xff]
        %v211 = vld [vmem:[%s200 + $0x38] sm:$0xff]
        %v212 = vld [vmem:[%s200 + $0x40] sm:$0xff]
        %v213 = vld [vmem:[%s200 + $0x48] sm:$0xff]
        %v214 = vld [vmem:[%s200 + $0x50] sm:$0xff]
        %v215 = vld [vmem:[%s200 + $0x58] sm:$0xff]
        %v216 = vld [vmem:[%s200 + $0x60] sm:$0xff]
        %v217 = vld [vmem:[%s200 + $0x68] sm:$0xff]
        %v218 = vld [vmem:[%s200 + $0x70] sm:$0xff]
        %v219 = vld [vmem:[%s200 + $0x78] sm:$0xff]
        %v220 = vld [vmem:[%s200 + $0x80] sm:$0xff]
        %v221 = vld [vmem:[%s200 + $0x88] sm:$0xff]
        %v222 = vld [vmem:[%s1] sm:$0xf]
        %v223 = vld [vmem:[%s1 + $0x4] sm:$0xf]
        %v224 = vld [vmem:[%s1 + $0x8] sm:$0xf]
        %v225 = vld [vmem:[%s1 + $0xc] sm:$0xf]
        %v226 = vld [vmem:[%s1 + $0x10] sm:$0xf]
        %v227 = vld [vmem:[%s1 + $0x14] sm:$0xf]
        %v228 = vld [vmem:[%s1 + $0x18] sm:$0xf]
        %v229 = vld [vmem:[%s1 + $0x1c] sm:$0xf]
        %v230 = vld [vmem:[%s1 + $0x20] sm:$0xf]
        %v231 = vld [vmem:[%s1 + $0x24] sm:$0xf]
        %v232 = vld [vmem:[%s1 + $0x28] sm:$0xf]
        %v233 = vld [vmem:[%s1 + $0x2c] sm:$0xf]
        %v234 = vld [vmem:[%s1 + $0x30] sm:$0xf]
        %v235 = vld [vmem:[%s1 + $0x34] sm:$0xf]
        %v236 = vld [vmem:[%s1 + $0x38] sm:$0xf]
        %v237 = vld [vmem:[%s1 + $0x3c] sm:$0xf]
        %v238 = vld [vmem:[%s1 + $0x40] sm:$0xf]
        %v239 = vld [vmem:[%s1 + $0x44] sm:$0xf]
        %v240 = vld [vmem:[%s1 + $0x48] sm:$0xf]
        %v241 = vld [vmem:[%s1 + $0x4c] sm:$0xf]
        %v242 = vld [vmem:[%s1 + $0x50] sm:$0xf]
        %v243 = vld [vmem:[%s1 + $0x54] sm:$0xf]
        %v244 = vld [vmem:[%s1 + $0x58] sm:$0xf]
        %v245 = vld [vmem:[%s1 + $0x5c] sm:$0xf]
        %v246 = vld [vmem:[%s1 + $0x60] sm:$0xf]
        %v247 = vld [vmem:[%s1 + $0x64] sm:$0xf]
        %v248 = vld [vmem:[%s1 + $0x68] sm:$0xf]
        %v249 = vld [vmem:[%s1 + $0x6c] sm:$0xf]
        %v250 = vld [vmem:[%s1 + $0x70] sm:$0xf]
        %v251 = vld [vmem:[%s1 + $0x74] sm:$0xf]
        %v252 = vld [vmem:[%s1 + $0x78] sm:$0xf]
        %v253 = vld [vmem:[%s1 + $0x7c] sm:$0xf]
        %v254 = vld [vmem:[%s1 + $0x80] sm:$0xf]
        %v255 = vld [vmem:[%s1 + $0x84] sm:$0xf]
        %v256 = vld [vmem:[%s1 + $0x88] sm:$0xf]
        %v257 = vld [vmem:[%s1 + $0x8c] sm:$0xf]
        %v258 = vld [vmem:[%s1 + $0x90] sm:$0xf]
        %v259 = vld [vmem:[%s1 + $0x94] sm:$0xf]
        %v260 = vld [vmem:[%s1 + $0x98] sm:$0xf]
        %v261 = vld [vmem:[%s1 + $0x9c] sm:$0xf]
        %v262 = vld [vmem:[%s1 + $0xa0] sm:$0xf]
        %v263 = vld [vmem:[%s1 + $0xa4] sm:$0xf]
        %v264 = vld [vmem:[%s1 + $0xa8] sm:$0xf]
        %v265 = vld [vmem:[%s1 + $0xac] sm:$0xf]
        %v266 = vld [vmem:[%s1 + $0xb0] sm:$0xf]
        %v267 = vld [vmem:[%s1 + $0xb4] sm:$0xf]
        %v268 = vld [vmem:[%s1 + $0xb8] sm:$0xf]
        %v269 = vld [vmem:[%s1 + $0xbc] sm:$0xf]
        %v270 = vld [vmem:[%s1 + $0xc0] sm:$0xf]
        %v271 = vld [vmem:[%s1 + $0xc4] sm:$0xf]
        %v272 = vld [vmem:[%s1 + $0xc8] sm:$0xf]
        %v273 = vld [vmem:[%s1 + $0xcc] sm:$0xf]
        %v274 = vld [vmem:[%s1 + $0xd0] sm:$0xf]
        %v275 = vld [vmem:[%s1 + $0xd4] sm:$0xf]
        %v276 = vld [vmem:[%s1 + $0xd8] sm:$0xf]
        %v277 = vld [vmem:[%s1 + $0xdc] sm:$0xf]
        %v278 = vld [vmem:[%s1 + $0xe0] sm:$0xf]
        %v279 = vld [vmem:[%s1 + $0xe4] sm:$0xf]
        %v280 = vld [vmem:[%s1 + $0xe8] sm:$0xf]
        %v281 = vld [vmem:[%s1 + $0xec] sm:$0xf]
        %v282 = vld [vmem:[%s1 + $0xf0] sm:$0xf]
        %v283 = vld [vmem:[%s1 + $0xf4] sm:$0xf]
        %v284 = vld [vmem:[%s1 + $0xf8] sm:$0xf]
        %v285 = vld [vmem:[%s1 + $0xfc] sm:$0xf]
        %v286 = vld [vmem:[%s1 + $0x100] sm:$0xf]
        %v287 = vld [vmem:[%s1 + $0x104] sm:$0xf]
        %v288 = vld [vmem:[%s1 + $0x108] sm:$0xf]
        %v289 = vld [vmem:[%s1 + $0x10c] sm:$0xf]
        %v290 = vld [vmem:[%s1 + $0x110] sm:$0xf]
        %v291 = vld [vmem:[%s1 + $0x114] sm:$0xf]
        %v292 = vld [vmem:[%s1 + $0x118] sm:$0xf]
        %v293 = vld [vmem:[%s1 + $0x11c] sm:$0xf]
        %v294 = vld [vmem:[%s1 + $0x120] sm:$0xf]
        %v295 = vld [vmem:[%s1 + $0x124] sm:$0xf]
        %v296 = vld [vmem:[%s1 + $0x128] sm:$0xf]
        %v297 = vld [vmem:[%s1 + $0x12c] sm:$0xf]
        %v298 = vld [vmem:[%s1 + $0x130] sm:$0xf]
        %v299 = vld [vmem:[%s1 + $0x134] sm:$0xf]
        %v300 = vld [vmem:[%s1 + $0x138] sm:$0xf]
        %v301 = vld [vmem:[%s1 + $0x13c] sm:$0xf]
        %v302 = vld [vmem:[%s1 + $0x140] sm:$0xf]
        %v303 = vld [vmem:[%s1 + $0x144] sm:$0xf]
        %v304 = vld [vmem:[%s1 + $0x148] sm:$0xf]
        %v305 = vld [vmem:[%s1 + $0x14c] sm:$0xf]
        %v306 = vld [vmem:[%s1 + $0x150] sm:$0xf]
        %v307 = vld [vmem:[%s1 + $0x154] sm:$0xf]
        %v308 = vld [vmem:[%s1 + $0x158] sm:$0xf]
        %v309 = vld [vmem:[%s1 + $0x15c] sm:$0xf]
        %v310 = vld [vmem:[%s1 + $0x160] sm:$0xf]
        %v311 = vld [vmem:[%s1 + $0x164] sm:$0xf]
        %v312 = vld [vmem:[%s1 + $0x168] sm:$0xf]
        %v313 = vld [vmem:[%s1 + $0x16c] sm:$0xf]
        %v314 = vld [vmem:[%s1 + $0x170] sm:$0xf]
        %v315 = vld [vmem:[%s1 + $0x174] sm:$0xf]
        %v316 = vld [vmem:[%s1 + $0x178] sm:$0xf]
        %v317 = vld [vmem:[%s1 + $0x17c] sm:$0xf]
        %v318 = vld [vmem:[%s1 + $0x180] sm:$0xf]
        %v319 = vld [vmem:[%s1 + $0x184] sm:$0xf]
        %v320 = vld [vmem:[%s1 + $0x188] sm:$0xf]
        %v321 = vld [vmem:[%s1 + $0x18c] sm:$0xf]
        %v322 = vld [vmem:[%s1 + $0x190] sm:$0xf]
        %v323 = vld [vmem:[%s1 + $0x194] sm:$0xf]
        %v324 = vld [vmem:[%s1 + $0x198] sm:$0xf]
        %v325 = vld [vmem:[%s1 + $0x19c] sm:$0xf]
        %v326 = vld [vmem:[%s1 + $0x1a0] sm:$0xf]
        %v327 = vld [vmem:[%s1 + $0x1a4] sm:$0xf]
        %v328 = vld [vmem:[%s1 + $0x1a8] sm:$0xf]
        %v329 = vld [vmem:[%s1 + $0x1ac] sm:$0xf]
        %v330 = vld [vmem:[%s1 + $0x1b0] sm:$0xf]
        %v331 = vld [vmem:[%s1 + $0x1b4] sm:$0xf]
        %v332 = vld [vmem:[%s1 + $0x1b8] sm:$0xf]
        %v333 = vld [vmem:[%s1 + $0x1bc] sm:$0xf]
        %v334 = vld [vmem:[%s1 + $0x1c0] sm:$0xf]
        %v335 = vld [vmem:[%s1 + $0x1c4] sm:$0xf]
        %v336 = vld [vmem:[%s1 + $0x1c8] sm:$0xf]
        %v337 = vld [vmem:[%s1 + $0x1cc] sm:$0xf]
        %v338 = vld [vmem:[%s1 + $0x1d0] sm:$0xf]
        %v339 = vld [vmem:[%s1 + $0x1d4] sm:$0xf]
        %v340 = vld [vmem:[%s1 + $0x1d8] sm:$0xf]
        %v341 = vld [vmem:[%s1 + $0x1dc] sm:$0xf]
        %v342 = vld [vmem:[%s1 + $0x1e0] sm:$0xf]
        %v343 = vld [vmem:[%s1 + $0x1e4] sm:$0xf]
        %v344 = vld [vmem:[%s1 + $0x1e8] sm:$0xf]
        %v345 = vld [vmem:[%s1 + $0x1ec] sm:$0xf]
        %v346 = vld [vmem:[%s1 + $0x1f0] sm:$0xf]
        %v347 = vld [vmem:[%s1 + $0x1f4] sm:$0xf]
        %v348 = vld [vmem:[%s1 + $0x1f8] sm:$0xf]
        %v349 = vld [vmem:[%s1 + $0x1fc] sm:$0xf]
        %v350 = vld [vmem:[%s1 + $0x200] sm:$0xf]
        %v351 = vld [vmem:[%s1 + $0x204] sm:$0xf]
        %v352 = vld [vmem:[%s1 + $0x208] sm:$0xf]
        %v353 = vld [vmem:[%s1 + $0x20c] sm:$0xf]
        %v354 = vld [vmem:[%s1 + $0x210] sm:$0xf]
        %v355 = vld [vmem:[%s1 + $0x214] sm:$0xf]
        %v356 = vld [vmem:[%s1 + $0x218] sm:$0xf]
        %v357 = vld [vmem:[%s1 + $0x21c] sm:$0xf]
        %v358 = vld [vmem:[%s1 + $0x220] sm:$0xf]
        %v359 = vld [vmem:[%s1 + $0x224] sm:$0xf]
        %v360 = vld [vmem:[%s1 + $0x228] sm:$0xf]
        %v361 = vld [vmem:[%s1 + $0x22c] sm:$0xf]
        %v362 = vld [vmem:[%s1 + $0x230] sm:$0xf]
        %v363 = vld [vmem:[%s1 + $0x234] sm:$0xf]
        %v364 = vld [vmem:[%s1 + $0x238] sm:$0xf]
        %v365 = vld [vmem:[%s1 + $0x23c] sm:$0xf]
        %v366 = vld [vmem:[%s1 + $0x240] sm:$0xf]
        %v367 = vld [vmem:[%s1 + $0x244] sm:$0xf]
        %v368 = vld [vmem:[%s1 + $0x248] sm:$0xf]
        %v369 = vld [vmem:[%s1 + $0x24c] sm:$0xf]
        %v370 = vld [vmem:[%s1 + $0x250] sm:$0xf]
        %v371 = vld [vmem:[%s1 + $0x254] sm:$0xf]
        %v372 = vld [vmem:[%s1 + $0x258] sm:$0xf]
        %v373 = vld [vmem:[%s1 + $0x25c] sm:$0xf]
        %v374 = vld [vmem:[%s1 + $0x260] sm:$0xf]
        %v375 = vld [vmem:[%s1 + $0x264] sm:$0xf]
        %v376 = vld [vmem:[%s1 + $0x268] sm:$0xf]
        %v377 = vld [vmem:[%s1 + $0x26c] sm:$0xf]
        %v378 = vld [vmem:[%s1 + $0x270] sm:$0xf]
        %v379 = vld [vmem:[%s1 + $0x274] sm:$0xf]
        %v380 = vld [vmem:[%s1 + $0x278] sm:$0xf]
        %v381 = vld [vmem:[%s1 + $0x27c] sm:$0xf]
        %v382 = vld [vmem:[%s1 + $0x280] sm:$0xf]
        %v383 = vld [vmem:[%s1 + $0x284] sm:$0xf]
        %v384 = vld [vmem:[%s1 + $0x288] sm:$0xf]
        %v385 = vld [vmem:[%s1 + $0x28c] sm:$0xf]
        %v386 = vld [vmem:[%s1 + $0x290] sm:$0xf]
        %v387 = vld [vmem:[%s1 + $0x294] sm:$0xf]
        %v388 = vld [vmem:[%s1 + $0x298] sm:$0xf]
        %v389 = vld [vmem:[%s1 + $0x29c] sm:$0xf]
        %v390 = vld [vmem:[%s1 + $0x2a0] sm:$0xf]
        %v391 = vld [vmem:[%s1 + $0x2a4] sm:$0xf]
        %v392 = vld [vmem:[%s1 + $0x2a8] sm:$0xf]
        %v393 = vld [vmem:[%s1 + $0x2ac] sm:$0xf]
        %v394 = vld [vmem:[%s1 + $0x2b0] sm:$0xf]
        %v395 = vld [vmem:[%s1 + $0x2b4] sm:$0xf]
        %v396 = vld [vmem:[%s1 + $0x2b8] sm:$0xf]
        %v397 = vld [vmem:[%s1 + $0x2bc] sm:$0xf]
        %v398 = vld [vmem:[%s1 + $0x2c0] sm:$0xf]
        %v399 = vld [vmem:[%s1 + $0x2c4] sm:$0xf]
        %v400 = vld [vmem:[%s1 + $0x2c8] sm:$0xf]
        %v401 = vld [vmem:[%s1 + $0x2cc] sm:$0xf]
        %v402 = vld [vmem:[%s1 + $0x2d0] sm:$0xf]
        %v403 = vld [vmem:[%s1 + $0x2d4] sm:$0xf]
        %v404 = vld [vmem:[%s1 + $0x2d8] sm:$0xf]
        %v405 = vld [vmem:[%s1 + $0x2dc] sm:$0xf]
        %v406 = vld [vmem:[%s1 + $0x2e0] sm:$0xf]
        %v407 = vld [vmem:[%s1 + $0x2e4] sm:$0xf]
        %v408 = vld [vmem:[%s1 + $0x2e8] sm:$0xf]
        %v409 = vld [vmem:[%s1 + $0x2ec] sm:$0xf]
        %v410 = vld [vmem:[%s1 + $0x2f0] sm:$0xf]
        %v411 = vld [vmem:[%s1 + $0x2f4] sm:$0xf]
        %v412 = vld [vmem:[%s1 + $0x2f8] sm:$0xf]
        %v413 = vld [vmem:[%s1 + $0x2fc] sm:$0xf]
        %v414 = vld [vmem:[%s1 + $0x300] sm:$0xf]
        %v415 = vld [vmem:[%s1 + $0x304] sm:$0xf]
        %v416 = vld [vmem:[%s1 + $0x308] sm:$0xf]
        %v417 = vld [vmem:[%s1 + $0x30c] sm:$0xf]
        %v418 = vld [vmem:[%s1 + $0x310] sm:$0xf]
        %v419 = vld [vmem:[%s1 + $0x314] sm:$0xf]
        %v420 = vld [vmem:[%s1 + $0x318] sm:$0xf]
        %v421 = vld [vmem:[%s1 + $0x31c] sm:$0xf]
        %v422 = vld [vmem:[%s1 + $0x320] sm:$0xf]
        %v423 = vld [vmem:[%s1 + $0x324] sm:$0xf]
        %v424 = vld [vmem:[%s1 + $0x328] sm:$0xf]
        %v425 = vld [vmem:[%s1 + $0x32c] sm:$0xf]
        %v426 = vld [vmem:[%s1 + $0x330] sm:$0xf]
        %v427 = vld [vmem:[%s1 + $0x334] sm:$0xf]
        %v428 = vld [vmem:[%s1 + $0x338] sm:$0xf]
        %v429 = vld [vmem:[%s1 + $0x33c] sm:$0xf]
        %v430 = vld [vmem:[%s1 + $0x340] sm:$0xf]
        %v431 = vld [vmem:[%s1 + $0x344] sm:$0xf]
        %v432 = vld [vmem:[%s1 + $0x348] sm:$0xf]
        %v433 = vld [vmem:[%s1 + $0x34c] sm:$0xf]
        %v434 = vld [vmem:[%s1 + $0x350] sm:$0xf]
        %v435 = vld [vmem:[%s1 + $0x354] sm:$0xf]
        %v436 = vld [vmem:[%s1 + $0x358] sm:$0xf]
        %v437 = vld [vmem:[%s1 + $0x35c] sm:$0xf]
        %v438 = vld [vmem:[%s1 + $0x360] sm:$0xf]
        %v439 = vld [vmem:[%s1 + $0x364] sm:$0xf]
        %v440 = vld [vmem:[%s1 + $0x368] sm:$0xf]
        %v441 = vld [vmem:[%s1 + $0x36c] sm:$0xf]
        %v442 = vld [vmem:[%s1 + $0x370] sm:$0xf]
        %v443 = vld [vmem:[%s1 + $0x374] sm:$0xf]
        %v444 = vld [vmem:[%s1 + $0x378] sm:$0xf]
        %v445 = vld [vmem:[%s1 + $0x37c] sm:$0xf]
        %v446 = vld [vmem:[%s1 + $0x380] sm:$0xf]
        %v447 = vld [vmem:[%s1 + $0x384] sm:$0xf]
        %v448 = vld [vmem:[%s1 + $0x388] sm:$0xf]
        %v449 = vld [vmem:[%s1 + $0x38c] sm:$0xf]
        %v450 = vld [vmem:[%s1 + $0x390] sm:$0xf]
        %v451 = vld [vmem:[%s1 + $0x394] sm:$0xf]
        %v452 = vld [vmem:[%s1 + $0x398] sm:$0xf]
        %v453 = vld [vmem:[%s1 + $0x39c] sm:$0xf]
        %v454 = vld [vmem:[%s1 + $0x3a0] sm:$0xf]
        %v455 = vld [vmem:[%s1 + $0x3a4] sm:$0xf]
        %v456 = vld [vmem:[%s1 + $0x3a8] sm:$0xf]
        %v457 = vld [vmem:[%s1 + $0x3ac] sm:$0xf]
        %v458 = vld [vmem:[%s1 + $0x3b0] sm:$0xf]
        %v459 = vld [vmem:[%s1 + $0x3b4] sm:$0xf]
        %v460 = vld [vmem:[%s1 + $0x3b8] sm:$0xf]
        %v461 = vld [vmem:[%s1 + $0x3bc] sm:$0xf]
        %v462 = vld [vmem:[%s1 + $0x3c0] sm:$0xf]
        %v463 = vld [vmem:[%s1 + $0x3c4] sm:$0xf]
        %v464 = vld [vmem:[%s1 + $0x3c8] sm:$0xf]
        %v465 = vld [vmem:[%s1 + $0x3cc] sm:$0xf]
        %v466 = vld [vmem:[%s1 + $0x3d0] sm:$0xf]
        %v467 = vld [vmem:[%s1 + $0x3d4] sm:$0xf]
        %v468 = vld [vmem:[%s1 + $0x3d8] sm:$0xf]
        %v469 = vld [vmem:[%s1 + $0x3dc] sm:$0xf]
        %v470 = vld [vmem:[%s1 + $0x3e0] sm:$0xf]
        %v471 = vld [vmem:[%s1 + $0x3e4] sm:$0xf]
        %v472 = vld [vmem:[%s1 + $0x3e8] sm:$0xf]
        %v473 = vld [vmem:[%s1 + $0x3ec] sm:$0xf]
        %v474 = vld [vmem:[%s1 + $0x3f0] sm:$0xf]
        %v475 = vld [vmem:[%s1 + $0x3f4] sm:$0xf]
        %v476 = vld [vmem:[%s1 + $0x3f8] sm:$0xf]
        %v477 = vld [vmem:[%s1 + $0x3fc] sm:$0xf]
        %v478 = vld [vmem:[%s1 + $0x400] sm:$0xf]
        %v479 = vld [vmem:[%s1 + $0x404] sm:$0xf]
        %v480 = vld [vmem:[%s1 + $0x408] sm:$0xf]
        %v481 = vld [vmem:[%s1 + $0x40c] sm:$0xf]
        %v482 = vld [vmem:[%s1 + $0x410] sm:$0xf]
        %v483 = vld [vmem:[%s1 + $0x414] sm:$0xf]
        %v484 = vld [vmem:[%s1 + $0x418] sm:$0xf]
        %v485 = vld [vmem:[%s1 + $0x41c] sm:$0xf]
        %v486 = vld [vmem:[%s1 + $0x420] sm:$0xf]
        %v487 = vld [vmem:[%s1 + $0x424] sm:$0xf]
        %v488 = vld [vmem:[%s1 + $0x428] sm:$0xf]
        %v489 = vld [vmem:[%s1 + $0x42c] sm:$0xf]
        %v490 = vld [vmem:[%s1 + $0x430] sm:$0xf]
        %v491 = vld [vmem:[%s1 + $0x434] sm:$0xf]
        %v492 = vld [vmem:[%s1 + $0x438] sm:$0xf]
        %v493 = vld [vmem:[%s1 + $0x43c] sm:$0xf]
        %v494 = vld [vmem:[%s1 + $0x440] sm:$0xf]
        %v495 = vld [vmem:[%s1 + $0x444] sm:$0xf]
        %v496 = vld [vmem:[%s1 + $0x448] sm:$0xf]
        %v497 = vld [vmem:[%s1 + $0x44c] sm:$0xf]
        %v498 = vld [vmem:[%s1 + $0x450] sm:$0xf]
        %v499 = vld [vmem:[%s1 + $0x454] sm:$0xf]
        %v500 = vld [vmem:[%s1 + $0x458] sm:$0xf]
        %v501 = vld [vmem:[%s1 + $0x45c] sm:$0xf]
        %v502 = vld [vmem:[%s1 + $0x460] sm:$0xf]
        %v503 = vld [vmem:[%s1 + $0x464] sm:$0xf]
        %v504 = vld [vmem:[%s1 + $0x468] sm:$0xf]
        %v505 = vld [vmem:[%s1 + $0x46c] sm:$0xf]
        %v506 = vld [vmem:[%s1 + $0x470] sm:$0xf]
        %v507 = vld [vmem:[%s1 + $0x474] sm:$0xf]
        %v508 = vld [vmem:[%s1 + $0x478] sm:$0xf]
        %v509 = vld [vmem:[%s1 + $0x47c] sm:$0xf]
        %v510 = vld [vmem:[%s2] sm:$0x1]
        %v512 = vlaneseq
        %v513 = vshrl.u32 %v512, 7
        %v514 = vsub.s32 0, %v513
        %v515 = vrot.slane %v510, %v514
        %v535 = vunpack.c.l.b16 %v204
        %v536 = vunpack.c.h.b16 %v204
        %v537 = vunpack.c.l.b16 %v205
        %v538 = vunpack.c.h.b16 %v205
        %v539 = vunpack.c.l.b16 %v206
        %v540 = vunpack.c.h.b16 %v206
        %v541 = vunpack.c.l.b16 %v207
        %v542 = vunpack.c.h.b16 %v207
        %v543 = vunpack.c.l.b16 %v208
        %v544 = vunpack.c.h.b16 %v208
        %v545 = vunpack.c.l.b16 %v209
        %v546 = vunpack.c.h.b16 %v209
        %v547 = vunpack.c.l.b16 %v210
        %v548 = vunpack.c.h.b16 %v210
        %v549 = vunpack.c.l.b16 %v211
        %v550 = vunpack.c.h.b16 %v211
        %v551 = vunpack.c.l.b16 %v212
        %v552 = vunpack.c.h.b16 %v212
        %v553 = vunpack.c.l.b16 %v213
        %v554 = vunpack.c.h.b16 %v213
        %v555 = vunpack.c.l.b16 %v214
        %v556 = vunpack.c.h.b16 %v214
        %v557 = vunpack.c.l.b16 %v215
        %v558 = vunpack.c.h.b16 %v215
        %v559 = vunpack.c.l.b16 %v216
        %v560 = vunpack.c.h.b16 %v216
        %v561 = vunpack.c.l.b16 %v217
        %v562 = vunpack.c.h.b16 %v217
        %v563 = vunpack.c.l.b16 %v218
        %v564 = vunpack.c.h.b16 %v218
        %v565 = vunpack.c.l.b16 %v219
        %v566 = vunpack.c.h.b16 %v219
        %v567 = vunpack.c.l.b16 %v220
        %v568 = vunpack.c.h.b16 %v220
        %v569 = vunpack.c.l.b16 %v221
        %v570 = vunpack.c.h.b16 %v221
        %v571 = vpack.c.b16 %v553, %v535
        %v572 = vpack.c.b16 %v554, %v536
        %v573 = vpack.c.b16 %v555, %v537
        %v574 = vpack.c.b16 %v556, %v538
        %v575 = vpack.c.b16 %v557, %v539
        %v576 = vpack.c.b16 %v558, %v540
        %v577 = vpack.c.b16 %v559, %v541
        %v578 = vpack.c.b16 %v560, %v542
        %v579 = vpack.c.b16 %v561, %v543
        %v580 = vpack.c.b16 %v562, %v544
        %v581 = vpack.c.b16 %v563, %v545
        %v582 = vpack.c.b16 %v564, %v546
        %v583 = vpack.c.b16 %v565, %v547
        %v584 = vpack.c.b16 %v566, %v548
        %v585 = vpack.c.b16 %v567, %v549
        %v586 = vpack.c.b16 %v568, %v550
        %v587 = vpack.c.b16 %v569, %v551
        %v588 = vpack.c.b16 %v570, %v552
        %v895 = vunpack.c.l.b16 %v222
        %v896 = vunpack.c.l.b16 %v223
        %v897 = vunpack.c.l.b16 %v224
        %v898 = vunpack.c.l.b16 %v225
        %v899 = vunpack.c.l.b16 %v226
        %v900 = vunpack.c.l.b16 %v227
        %v901 = vunpack.c.l.b16 %v228
        %v902 = vunpack.c.l.b16 %v229
        %v903 = vunpack.c.l.b16 %v230
        %v904 = vunpack.c.l.b16 %v231
        %v905 = vunpack.c.l.b16 %v232
        %v906 = vunpack.c.l.b16 %v233
        %v907 = vunpack.c.l.b16 %v234
        %v908 = vunpack.c.l.b16 %v235
        %v909 = vunpack.c.l.b16 %v236
        %v910 = vunpack.c.l.b16 %v237
        %v911 = vunpack.c.l.b16 %v238
        %v912 = vunpack.c.l.b16 %v239
        %v913 = vunpack.c.l.b16 %v240
        %v914 = vunpack.c.l.b16 %v241
        %v915 = vunpack.c.l.b16 %v242
        %v916 = vunpack.c.l.b16 %v243
        %v917 = vunpack.c.l.b16 %v244
        %v918 = vunpack.c.l.b16 %v245
        %v919 = vunpack.c.l.b16 %v246
        %v920 = vunpack.c.l.b16 %v247
        %v921 = vunpack.c.l.b16 %v248
        %v922 = vunpack.c.l.b16 %v249
        %v923 = vunpack.c.l.b16 %v250
        %v924 = vunpack.c.l.b16 %v251
        %v925 = vunpack.c.l.b16 %v252
        %v926 = vunpack.c.l.b16 %v253
        %v927 = vunpack.c.l.b16 %v254
        %v928 = vunpack.c.l.b16 %v255
        %v929 = vunpack.c.l.b16 %v256
        %v930 = vunpack.c.l.b16 %v257
        %v931 = vunpack.c.l.b16 %v258
        %v932 = vunpack.c.l.b16 %v259
        %v933 = vunpack.c.l.b16 %v260
        %v934 = vunpack.c.l.b16 %v261
        %v935 = vunpack.c.l.b16 %v262
        %v936 = vunpack.c.l.b16 %v263
        %v937 = vunpack.c.l.b16 %v264
        %v938 = vunpack.c.l.b16 %v265
        %v939 = vunpack.c.l.b16 %v266
        %v940 = vunpack.c.l.b16 %v267
        %v941 = vunpack.c.l.b16 %v268
        %v942 = vunpack.c.l.b16 %v269
        %v943 = vunpack.c.l.b16 %v270
        %v944 = vunpack.c.l.b16 %v271
        %v945 = vunpack.c.l.b16 %v272
        %v946 = vunpack.c.l.b16 %v273
        %v947 = vunpack.c.l.b16 %v274
        %v948 = vunpack.c.l.b16 %v275
        %v949 = vunpack.c.l.b16 %v276
        %v950 = vunpack.c.l.b16 %v277
        %v951 = vunpack.c.l.b16 %v278
        %v952 = vunpack.c.l.b16 %v279
        %v953 = vunpack.c.l.b16 %v280
        %v954 = vunpack.c.l.b16 %v281
        %v955 = vunpack.c.l.b16 %v282
        %v956 = vunpack.c.l.b16 %v283
        %v957 = vunpack.c.l.b16 %v284
        %v958 = vunpack.c.l.b16 %v285
        %v959 = vunpack.c.l.b16 %v286
        %v960 = vunpack.c.l.b16 %v287
        %v961 = vunpack.c.l.b16 %v288
        %v962 = vunpack.c.l.b16 %v289
        %v963 = vunpack.c.l.b16 %v290
        %v964 = vunpack.c.l.b16 %v291
        %v965 = vunpack.c.l.b16 %v292
        %v966 = vunpack.c.l.b16 %v293
        %v967 = vunpack.c.l.b16 %v294
        %v968 = vunpack.c.l.b16 %v295
        %v969 = vunpack.c.l.b16 %v296
        %v970 = vunpack.c.l.b16 %v297
        %v971 = vunpack.c.l.b16 %v298
        %v972 = vunpack.c.l.b16 %v299
        %v973 = vunpack.c.l.b16 %v300
        %v974 = vunpack.c.l.b16 %v301
        %v975 = vunpack.c.l.b16 %v302
        %v976 = vunpack.c.l.b16 %v303
        %v977 = vunpack.c.l.b16 %v304
        %v978 = vunpack.c.l.b16 %v305
        %v979 = vunpack.c.l.b16 %v306
        %v980 = vunpack.c.l.b16 %v307
        %v981 = vunpack.c.l.b16 %v308
        %v982 = vunpack.c.l.b16 %v309
        %v983 = vunpack.c.l.b16 %v310
        %v984 = vunpack.c.l.b16 %v311
        %v985 = vunpack.c.l.b16 %v312
        %v986 = vunpack.c.l.b16 %v313
        %v987 = vunpack.c.l.b16 %v314
        %v988 = vunpack.c.l.b16 %v315
        %v989 = vunpack.c.l.b16 %v316
        %v990 = vunpack.c.l.b16 %v317
        %v991 = vunpack.c.l.b16 %v318
        %v992 = vunpack.c.l.b16 %v319
        %v993 = vunpack.c.l.b16 %v320
        %v994 = vunpack.c.l.b16 %v321
        %v995 = vunpack.c.l.b16 %v322
        %v996 = vunpack.c.l.b16 %v323
        %v997 = vunpack.c.l.b16 %v324
        %v998 = vunpack.c.l.b16 %v325
        %v999 = vunpack.c.l.b16 %v326
        %v1000 = vunpack.c.l.b16 %v327
        %v1001 = vunpack.c.l.b16 %v328
        %v1002 = vunpack.c.l.b16 %v329
        %v1003 = vunpack.c.l.b16 %v330
        %v1004 = vunpack.c.l.b16 %v331
        %v1005 = vunpack.c.l.b16 %v332
        %v1006 = vunpack.c.l.b16 %v333
        %v1007 = vunpack.c.l.b16 %v334
        %v1008 = vunpack.c.l.b16 %v335
        %v1009 = vunpack.c.l.b16 %v336
        %v1010 = vunpack.c.l.b16 %v337
        %v1011 = vunpack.c.l.b16 %v338
        %v1012 = vunpack.c.l.b16 %v339
        %v1013 = vunpack.c.l.b16 %v340
        %v1014 = vunpack.c.l.b16 %v341
        %v1015 = vunpack.c.l.b16 %v342
        %v1016 = vunpack.c.l.b16 %v343
        %v1017 = vunpack.c.l.b16 %v344
        %v1018 = vunpack.c.l.b16 %v345
        %v1019 = vunpack.c.l.b16 %v346
        %v1020 = vunpack.c.l.b16 %v347
        %v1021 = vunpack.c.l.b16 %v348
        %v1022 = vunpack.c.l.b16 %v349
        %v1023 = vunpack.c.l.b16 %v350
        %v1024 = vunpack.c.l.b16 %v351
        %v1025 = vunpack.c.l.b16 %v352
        %v1026 = vunpack.c.l.b16 %v353
        %v1027 = vunpack.c.l.b16 %v354
        %v1028 = vunpack.c.l.b16 %v355
        %v1029 = vunpack.c.l.b16 %v356
        %v1030 = vunpack.c.l.b16 %v357
        %v1031 = vunpack.c.l.b16 %v358
        %v1032 = vunpack.c.l.b16 %v359
        %v1033 = vunpack.c.l.b16 %v360
        %v1034 = vunpack.c.l.b16 %v361
        %v1035 = vunpack.c.l.b16 %v362
        %v1036 = vunpack.c.l.b16 %v363
        %v1037 = vunpack.c.l.b16 %v364
        %v1038 = vunpack.c.l.b16 %v365
        %v1039 = vunpack.c.l.b16 %v366
        %v1040 = vunpack.c.l.b16 %v367
        %v1041 = vunpack.c.l.b16 %v368
        %v1042 = vunpack.c.l.b16 %v369
        %v1043 = vunpack.c.l.b16 %v370
        %v1044 = vunpack.c.l.b16 %v371
        %v1045 = vunpack.c.l.b16 %v372
        %v1046 = vunpack.c.l.b16 %v373
        %v1047 = vunpack.c.l.b16 %v374
        %v1048 = vunpack.c.l.b16 %v375
        %v1049 = vunpack.c.l.b16 %v376
        %v1050 = vunpack.c.l.b16 %v377
        %v1051 = vunpack.c.l.b16 %v378
        %v1052 = vunpack.c.l.b16 %v379
        %v1053 = vunpack.c.l.b16 %v380
        %v1054 = vunpack.c.l.b16 %v381
        %v1055 = vunpack.c.l.b16 %v382
        %v1056 = vunpack.c.l.b16 %v383
        %v1057 = vunpack.c.l.b16 %v384
        %v1058 = vunpack.c.l.b16 %v385
        %v1059 = vunpack.c.l.b16 %v386
        %v1060 = vunpack.c.l.b16 %v387
        %v1061 = vunpack.c.l.b16 %v388
        %v1062 = vunpack.c.l.b16 %v389
        %v1063 = vunpack.c.l.b16 %v390
        %v1064 = vunpack.c.l.b16 %v391
        %v1065 = vunpack.c.l.b16 %v392
        %v1066 = vunpack.c.l.b16 %v393
        %v1067 = vunpack.c.l.b16 %v394
        %v1068 = vunpack.c.l.b16 %v395
        %v1069 = vunpack.c.l.b16 %v396
        %v1070 = vunpack.c.l.b16 %v397
        %v1071 = vunpack.c.l.b16 %v398
        %v1072 = vunpack.c.l.b16 %v399
        %v1073 = vunpack.c.l.b16 %v400
        %v1074 = vunpack.c.l.b16 %v401
        %v1075 = vunpack.c.l.b16 %v402
        %v1076 = vunpack.c.l.b16 %v403
        %v1077 = vunpack.c.l.b16 %v404
        %v1078 = vunpack.c.l.b16 %v405
        %v1079 = vunpack.c.l.b16 %v406
        %v1080 = vunpack.c.l.b16 %v407
        %v1081 = vunpack.c.l.b16 %v408
        %v1082 = vunpack.c.l.b16 %v409
        %v1083 = vunpack.c.l.b16 %v410
        %v1084 = vunpack.c.l.b16 %v411
        %v1085 = vunpack.c.l.b16 %v412
        %v1086 = vunpack.c.l.b16 %v413
        %v1087 = vunpack.c.l.b16 %v414
        %v1088 = vunpack.c.l.b16 %v415
        %v1089 = vunpack.c.l.b16 %v416
        %v1090 = vunpack.c.l.b16 %v417
        %v1091 = vunpack.c.l.b16 %v418
        %v1092 = vunpack.c.l.b16 %v419
        %v1093 = vunpack.c.l.b16 %v420
        %v1094 = vunpack.c.l.b16 %v421
        %v1095 = vunpack.c.l.b16 %v422
        %v1096 = vunpack.c.l.b16 %v423
        %v1097 = vunpack.c.l.b16 %v424
        %v1098 = vunpack.c.l.b16 %v425
        %v1099 = vunpack.c.l.b16 %v426
        %v1100 = vunpack.c.l.b16 %v427
        %v1101 = vunpack.c.l.b16 %v428
        %v1102 = vunpack.c.l.b16 %v429
        %v1103 = vunpack.c.l.b16 %v430
        %v1104 = vunpack.c.l.b16 %v431
        %v1105 = vunpack.c.l.b16 %v432
        %v1106 = vunpack.c.l.b16 %v433
        %v1107 = vunpack.c.l.b16 %v434
        %v1108 = vunpack.c.l.b16 %v435
        %v1109 = vunpack.c.l.b16 %v436
        %v1110 = vunpack.c.l.b16 %v437
        %v1111 = vunpack.c.l.b16 %v438
        %v1112 = vunpack.c.l.b16 %v439
        %v1113 = vunpack.c.l.b16 %v440
        %v1114 = vunpack.c.l.b16 %v441
        %v1115 = vunpack.c.l.b16 %v442
        %v1116 = vunpack.c.l.b16 %v443
        %v1117 = vunpack.c.l.b16 %v444
        %v1118 = vunpack.c.l.b16 %v445
        %v1119 = vunpack.c.l.b16 %v446
        %v1120 = vunpack.c.l.b16 %v447
        %v1121 = vunpack.c.l.b16 %v448
        %v1122 = vunpack.c.l.b16 %v449
        %v1123 = vunpack.c.l.b16 %v450
        %v1124 = vunpack.c.l.b16 %v451
        %v1125 = vunpack.c.l.b16 %v452
        %v1126 = vunpack.c.l.b16 %v453
        %v1127 = vunpack.c.l.b16 %v454
        %v1128 = vunpack.c.l.b16 %v455
        %v1129 = vunpack.c.l.b16 %v456
        %v1130 = vunpack.c.l.b16 %v457
        %v1131 = vunpack.c.l.b16 %v458
        %v1132 = vunpack.c.l.b16 %v459
        %v1133 = vunpack.c.l.b16 %v460
        %v1134 = vunpack.c.l.b16 %v461
        %v1135 = vunpack.c.l.b16 %v462
        %v1136 = vunpack.c.l.b16 %v463
        %v1137 = vunpack.c.l.b16 %v464
        %v1138 = vunpack.c.l.b16 %v465
        %v1139 = vunpack.c.l.b16 %v466
        %v1140 = vunpack.c.l.b16 %v467
        %v1141 = vunpack.c.l.b16 %v468
        %v1142 = vunpack.c.l.b16 %v469
        %v1143 = vunpack.c.l.b16 %v470
        %v1144 = vunpack.c.l.b16 %v471
        %v1145 = vunpack.c.l.b16 %v472
        %v1146 = vunpack.c.l.b16 %v473
        %v1147 = vunpack.c.l.b16 %v474
        %v1148 = vunpack.c.l.b16 %v475
        %v1149 = vunpack.c.l.b16 %v476
        %v1150 = vunpack.c.l.b16 %v477
        %v1151 = vunpack.c.l.b16 %v478
        %v1152 = vunpack.c.l.b16 %v479
        %v1153 = vunpack.c.l.b16 %v480
        %v1154 = vunpack.c.l.b16 %v481
        %v1155 = vunpack.c.l.b16 %v482
        %v1156 = vunpack.c.l.b16 %v483
        %v1157 = vunpack.c.l.b16 %v484
        %v1158 = vunpack.c.l.b16 %v485
        %v1159 = vunpack.c.l.b16 %v486
        %v1160 = vunpack.c.l.b16 %v487
        %v1161 = vunpack.c.l.b16 %v488
        %v1162 = vunpack.c.l.b16 %v489
        %v1163 = vunpack.c.l.b16 %v490
        %v1164 = vunpack.c.l.b16 %v491
        %v1165 = vunpack.c.l.b16 %v492
        %v1166 = vunpack.c.l.b16 %v493
        %v1167 = vunpack.c.l.b16 %v494
        %v1168 = vunpack.c.l.b16 %v495
        %v1169 = vunpack.c.l.b16 %v496
        %v1170 = vunpack.c.l.b16 %v497
        %v1171 = vunpack.c.l.b16 %v498
        %v1172 = vunpack.c.l.b16 %v499
        %v1173 = vunpack.c.l.b16 %v500
        %v1174 = vunpack.c.l.b16 %v501
        %v1175 = vunpack.c.l.b16 %v502
        %v1176 = vunpack.c.l.b16 %v503
        %v1177 = vunpack.c.l.b16 %v504
        %v1178 = vunpack.c.l.b16 %v505
        %v1179 = vunpack.c.l.b16 %v506
        %v1180 = vunpack.c.l.b16 %v507
        %v1181 = vunpack.c.l.b16 %v508
        %v1182 = vunpack.c.l.b16 %v509
        %v1183 = vpack.c.b16 %v896, %v895
        %v1184 = vpack.c.b16 %v898, %v897
        %v1185 = vpack.c.b16 %v900, %v899
        %v1186 = vpack.c.b16 %v902, %v901
        %v1187 = vpack.c.b16 %v904, %v903
        %v1188 = vpack.c.b16 %v906, %v905
        %v1189 = vpack.c.b16 %v908, %v907
        %v1190 = vpack.c.b16 %v910, %v909
        %v1191 = vpack.c.b16 %v912, %v911
        %v1192 = vpack.c.b16 %v914, %v913
        %v1193 = vpack.c.b16 %v916, %v915
        %v1194 = vpack.c.b16 %v918, %v917
        %v1195 = vpack.c.b16 %v920, %v919
        %v1196 = vpack.c.b16 %v922, %v921
        %v1197 = vpack.c.b16 %v924, %v923
        %v1198 = vpack.c.b16 %v926, %v925
        %v1199 = vpack.c.b16 %v928, %v927
        %v1200 = vpack.c.b16 %v930, %v929
        %v1201 = vpack.c.b16 %v932, %v931
        %v1202 = vpack.c.b16 %v934, %v933
        %v1203 = vpack.c.b16 %v936, %v935
        %v1204 = vpack.c.b16 %v938, %v937
        %v1205 = vpack.c.b16 %v940, %v939
        %v1206 = vpack.c.b16 %v942, %v941
        %v1207 = vpack.c.b16 %v944, %v943
        %v1208 = vpack.c.b16 %v946, %v945
        %v1209 = vpack.c.b16 %v948, %v947
        %v1210 = vpack.c.b16 %v950, %v949
        %v1211 = vpack.c.b16 %v952, %v951
        %v1212 = vpack.c.b16 %v954, %v953
        %v1213 = vpack.c.b16 %v956, %v955
        %v1214 = vpack.c.b16 %v958, %v957
        %v1215 = vpack.c.b16 %v960, %v959
        %v1216 = vpack.c.b16 %v962, %v961
        %v1217 = vpack.c.b16 %v964, %v963
        %v1218 = vpack.c.b16 %v966, %v965
        %v1219 = vpack.c.b16 %v968, %v967
        %v1220 = vpack.c.b16 %v970, %v969
        %v1221 = vpack.c.b16 %v972, %v971
        %v1222 = vpack.c.b16 %v974, %v973
        %v1223 = vpack.c.b16 %v976, %v975
        %v1224 = vpack.c.b16 %v978, %v977
        %v1225 = vpack.c.b16 %v980, %v979
        %v1226 = vpack.c.b16 %v982, %v981
        %v1227 = vpack.c.b16 %v984, %v983
        %v1228 = vpack.c.b16 %v986, %v985
        %v1229 = vpack.c.b16 %v988, %v987
        %v1230 = vpack.c.b16 %v990, %v989
        %v1231 = vpack.c.b16 %v992, %v991
        %v1232 = vpack.c.b16 %v994, %v993
        %v1233 = vpack.c.b16 %v996, %v995
        %v1234 = vpack.c.b16 %v998, %v997
        %v1235 = vpack.c.b16 %v1000, %v999
        %v1236 = vpack.c.b16 %v1002, %v1001
        %v1237 = vpack.c.b16 %v1004, %v1003
        %v1238 = vpack.c.b16 %v1006, %v1005
        %v1239 = vpack.c.b16 %v1008, %v1007
        %v1240 = vpack.c.b16 %v1010, %v1009
        %v1241 = vpack.c.b16 %v1012, %v1011
        %v1242 = vpack.c.b16 %v1014, %v1013
        %v1243 = vpack.c.b16 %v1016, %v1015
        %v1244 = vpack.c.b16 %v1018, %v1017
        %v1245 = vpack.c.b16 %v1020, %v1019
        %v1246 = vpack.c.b16 %v1022, %v1021
        %v1247 = vpack.c.b16 %v1024, %v1023
        %v1248 = vpack.c.b16 %v1026, %v1025
        %v1249 = vpack.c.b16 %v1028, %v1027
        %v1250 = vpack.c.b16 %v1030, %v1029
        %v1251 = vpack.c.b16 %v1032, %v1031
        %v1252 = vpack.c.b16 %v1034, %v1033
        %v1253 = vpack.c.b16 %v1036, %v1035
        %v1254 = vpack.c.b16 %v1038, %v1037
        %v1255 = vpack.c.b16 %v1040, %v1039
        %v1256 = vpack.c.b16 %v1042, %v1041
        %v1257 = vpack.c.b16 %v1044, %v1043
        %v1258 = vpack.c.b16 %v1046, %v1045
        %v1259 = vpack.c.b16 %v1048, %v1047
        %v1260 = vpack.c.b16 %v1050, %v1049
        %v1261 = vpack.c.b16 %v1052, %v1051
        %v1262 = vpack.c.b16 %v1054, %v1053
        %v1263 = vpack.c.b16 %v1056, %v1055
        %v1264 = vpack.c.b16 %v1058, %v1057
        %v1265 = vpack.c.b16 %v1060, %v1059
        %v1266 = vpack.c.b16 %v1062, %v1061
        %v1267 = vpack.c.b16 %v1064, %v1063
        %v1268 = vpack.c.b16 %v1066, %v1065
        %v1269 = vpack.c.b16 %v1068, %v1067
        %v1270 = vpack.c.b16 %v1070, %v1069
        %v1271 = vpack.c.b16 %v1072, %v1071
        %v1272 = vpack.c.b16 %v1074, %v1073
        %v1273 = vpack.c.b16 %v1076, %v1075
        %v1274 = vpack.c.b16 %v1078, %v1077
        %v1275 = vpack.c.b16 %v1080, %v1079
        %v1276 = vpack.c.b16 %v1082, %v1081
        %v1277 = vpack.c.b16 %v1084, %v1083
        %v1278 = vpack.c.b16 %v1086, %v1085
        %v1279 = vpack.c.b16 %v1088, %v1087
        %v1280 = vpack.c.b16 %v1090, %v1089
        %v1281 = vpack.c.b16 %v1092, %v1091
        %v1282 = vpack.c.b16 %v1094, %v1093
        %v1283 = vpack.c.b16 %v1096, %v1095
        %v1284 = vpack.c.b16 %v1098, %v1097
        %v1285 = vpack.c.b16 %v1100, %v1099
        %v1286 = vpack.c.b16 %v1102, %v1101
        %v1287 = vpack.c.b16 %v1104, %v1103
        %v1288 = vpack.c.b16 %v1106, %v1105
        %v1289 = vpack.c.b16 %v1108, %v1107
        %v1290 = vpack.c.b16 %v1110, %v1109
        %v1291 = vpack.c.b16 %v1112, %v1111
        %v1292 = vpack.c.b16 %v1114, %v1113
        %v1293 = vpack.c.b16 %v1116, %v1115
        %v1294 = vpack.c.b16 %v1118, %v1117
        %v1295 = vpack.c.b16 %v1120, %v1119
        %v1296 = vpack.c.b16 %v1122, %v1121
        %v1297 = vpack.c.b16 %v1124, %v1123
        %v1298 = vpack.c.b16 %v1126, %v1125
        %v1299 = vpack.c.b16 %v1128, %v1127
        %v1300 = vpack.c.b16 %v1130, %v1129
        %v1301 = vpack.c.b16 %v1132, %v1131
        %v1302 = vpack.c.b16 %v1134, %v1133
        %v1303 = vpack.c.b16 %v1136, %v1135
        %v1304 = vpack.c.b16 %v1138, %v1137
        %v1305 = vpack.c.b16 %v1140, %v1139
        %v1306 = vpack.c.b16 %v1142, %v1141
        %v1307 = vpack.c.b16 %v1144, %v1143
        %v1308 = vpack.c.b16 %v1146, %v1145
        %v1309 = vpack.c.b16 %v1148, %v1147
        %v1310 = vpack.c.b16 %v1150, %v1149
        %v1311 = vpack.c.b16 %v1152, %v1151
        %v1312 = vpack.c.b16 %v1154, %v1153
        %v1313 = vpack.c.b16 %v1156, %v1155
        %v1314 = vpack.c.b16 %v1158, %v1157
        %v1315 = vpack.c.b16 %v1160, %v1159
        %v1316 = vpack.c.b16 %v1162, %v1161
        %v1317 = vpack.c.b16 %v1164, %v1163
        %v1318 = vpack.c.b16 %v1166, %v1165
        %v1319 = vpack.c.b16 %v1168, %v1167
        %v1320 = vpack.c.b16 %v1170, %v1169
        %v1321 = vpack.c.b16 %v1172, %v1171
        %v1322 = vpack.c.b16 %v1174, %v1173
        %v1323 = vpack.c.b16 %v1176, %v1175
        %v1324 = vpack.c.b16 %v1178, %v1177
        %v1325 = vpack.c.b16 %v1180, %v1179
        %v1326 = vpack.c.b16 %v1182, %v1181
        %1471 = vmatprep.subr.bf16.mxu0 0
        %1472 = vmatpush1.bf16.msra.mxu0 %v1190
        %1473 = vmatprep.subr.bf16.mxu0 0
        %1474 = vmatpush1.bf16.msra.mxu0 %v1189
        %1475 = vmatprep.subr.bf16.mxu0 0
        %1476 = vmatpush1.bf16.msra.mxu0 %v1188
        %1477 = vmatprep.subr.bf16.mxu0 0
        %1478 = vmatpush1.bf16.msra.mxu0 %v1187
        %1479 = vmatprep.subr.bf16.mxu0 0
        %1480 = vmatpush1.bf16.msra.mxu0 %v1186
        %1481 = vmatprep.subr.bf16.mxu0 0
        %1482 = vmatpush1.bf16.msra.mxu0 %v1185
        %1483 = vmatprep.subr.bf16.mxu0 0
        %1484 = vmatpush1.bf16.msra.mxu0 %v1184
        %1485 = vmatprep.subr.bf16.mxu0 0
        %1486 = vmatpush1.bf16.msra.mxu0 %v1183
        %1487 = vmatprep.subr.bf16.mxu0 0
        %1488 = vmatpush2.bf16.msra.mxu0 %v1198
        %1489 = vmatprep.subr.bf16.mxu0 0
        %1490 = vmatpush2.bf16.msra.mxu0 %v1197
        %1491 = vmatprep.subr.bf16.mxu0 0
        %1492 = vmatpush2.bf16.msra.mxu0 %v1196
        %1493 = vmatprep.subr.bf16.mxu0 0
        %1494 = vmatpush2.bf16.msra.mxu0 %v1195
        %1495 = vmatprep.subr.bf16.mxu0 0
        %1496 = vmatpush2.bf16.msra.mxu0 %v1194
        %1497 = vmatprep.subr.bf16.mxu0 0
        %1498 = vmatpush2.bf16.msra.mxu0 %v1193
        %1499 = vmatprep.subr.bf16.mxu0 0
        %1500 = vmatpush2.bf16.msra.mxu0 %v1192
        %1501 = vmatprep.subr.bf16.mxu0 0
        %1502 = vmatpush2.bf16.msra.mxu0 %v1191
        %1503 = vmatprep.mubr.bf16.mxu0 %v572
        %1504 = vmatmul.mubr.bf16.gmra.mxu0 %v571
        %v1505 = vpop.f32.mrf.mxu0
        %v1506 = vadd.f32 %v515, %v1505
        %v1507 = vpop.f32.mrf.mxu0
        %v1508 = vpop.f32.mrf.mxu0
        %v1509 = vadd.f32 %v515, %v1508
        %v1510 = vpop.f32.mrf.mxu0
        %1511 = vdwg.mxu0
        %1512 = vmatprep.subr.bf16.mxu0 0
        %1513 = vmatpush1.bf16.msra.mxu0 %v1206
        %1514 = vmatprep.subr.bf16.mxu0 0
        %1515 = vmatpush1.bf16.msra.mxu0 %v1205
        %1516 = vmatprep.subr.bf16.mxu0 0
        %1517 = vmatpush1.bf16.msra.mxu0 %v1204
        %1518 = vmatprep.subr.bf16.mxu0 0
        %1519 = vmatpush1.bf16.msra.mxu0 %v1203
        %1520 = vmatprep.subr.bf16.mxu0 0
        %1521 = vmatpush1.bf16.msra.mxu0 %v1202
        %1522 = vmatprep.subr.bf16.mxu0 0
        %1523 = vmatpush1.bf16.msra.mxu0 %v1201
        %1524 = vmatprep.subr.bf16.mxu0 0
        %1525 = vmatpush1.bf16.msra.mxu0 %v1200
        %1526 = vmatprep.subr.bf16.mxu0 0
        %1527 = vmatpush1.bf16.msra.mxu0 %v1199
        %1528 = vmatprep.subr.bf16.mxu0 0
        %1529 = vmatpush2.bf16.msra.mxu0 %v1214
        %1530 = vmatprep.subr.bf16.mxu0 0
        %1531 = vmatpush2.bf16.msra.mxu0 %v1213
        %1532 = vmatprep.subr.bf16.mxu0 0
        %1533 = vmatpush2.bf16.msra.mxu0 %v1212
        %1534 = vmatprep.subr.bf16.mxu0 0
        %1535 = vmatpush2.bf16.msra.mxu0 %v1211
        %1536 = vmatprep.subr.bf16.mxu0 0
        %1537 = vmatpush2.bf16.msra.mxu0 %v1210
        %1538 = vmatprep.subr.bf16.mxu0 0
        %1539 = vmatpush2.bf16.msra.mxu0 %v1209
        %1540 = vmatprep.subr.bf16.mxu0 0
        %1541 = vmatpush2.bf16.msra.mxu0 %v1208
        %1542 = vmatprep.subr.bf16.mxu0 0
        %1543 = vmatpush2.bf16.msra.mxu0 %v1207
        %1544 = vmatprep.mubr.bf16.mxu0 %v574
        %1545 = vmatmul.mubr.bf16.gmra.mxu0 %v573
        %v1546 = vpop.f32.mrf.mxu0
        %v1547 = vadd.f32 %v1506, %v1546
        %v1548 = vpop.f32.mrf.mxu0
        %v1549 = vpop.f32.mrf.mxu0
        %v1550 = vadd.f32 %v1509, %v1549
        %v1551 = vpop.f32.mrf.mxu0
        %1552 = vdwg.mxu0
        %1553 = vmatprep.subr.bf16.mxu0 0
        %1554 = vmatpush1.bf16.msra.mxu0 %v1222
        %1555 = vmatprep.subr.bf16.mxu0 0
        %1556 = vmatpush1.bf16.msra.mxu0 %v1221
        %1557 = vmatprep.subr.bf16.mxu0 0
        %1558 = vmatpush1.bf16.msra.mxu0 %v1220
        %1559 = vmatprep.subr.bf16.mxu0 0
        %1560 = vmatpush1.bf16.msra.mxu0 %v1219
        %1561 = vmatprep.subr.bf16.mxu0 0
        %1562 = vmatpush1.bf16.msra.mxu0 %v1218
        %1563 = vmatprep.subr.bf16.mxu0 0
        %1564 = vmatpush1.bf16.msra.mxu0 %v1217
        %1565 = vmatprep.subr.bf16.mxu0 0
        %1566 = vmatpush1.bf16.msra.mxu0 %v1216
        %1567 = vmatprep.subr.bf16.mxu0 0
        %1568 = vmatpush1.bf16.msra.mxu0 %v1215
        %1569 = vmatprep.subr.bf16.mxu0 0
        %1570 = vmatpush2.bf16.msra.mxu0 %v1230
        %1571 = vmatprep.subr.bf16.mxu0 0
        %1572 = vmatpush2.bf16.msra.mxu0 %v1229
        %1573 = vmatprep.subr.bf16.mxu0 0
        %1574 = vmatpush2.bf16.msra.mxu0 %v1228
        %1575 = vmatprep.subr.bf16.mxu0 0
        %1576 = vmatpush2.bf16.msra.mxu0 %v1227
        %1577 = vmatprep.subr.bf16.mxu0 0
        %1578 = vmatpush2.bf16.msra.mxu0 %v1226
        %1579 = vmatprep.subr.bf16.mxu0 0
        %1580 = vmatpush2.bf16.msra.mxu0 %v1225
        %1581 = vmatprep.subr.bf16.mxu0 0
        %1582 = vmatpush2.bf16.msra.mxu0 %v1224
        %1583 = vmatprep.subr.bf16.mxu0 0
        %1584 = vmatpush2.bf16.msra.mxu0 %v1223
        %1585 = vmatprep.mubr.bf16.mxu0 %v576
        %1586 = vmatmul.mubr.bf16.gmra.mxu0 %v575
        %v1587 = vpop.f32.mrf.mxu0
        %v1588 = vadd.f32 %v1547, %v1587
        %v1589 = vpop.f32.mrf.mxu0
        %v1590 = vpop.f32.mrf.mxu0
        %v1591 = vadd.f32 %v1550, %v1590
        %v1592 = vpop.f32.mrf.mxu0
        %1593 = vdwg.mxu0
        %1594 = vmatprep.subr.bf16.mxu0 0
        %1595 = vmatpush1.bf16.msra.mxu0 %v1238
        %1596 = vmatprep.subr.bf16.mxu0 0
        %1597 = vmatpush1.bf16.msra.mxu0 %v1237
        %1598 = vmatprep.subr.bf16.mxu0 0
        %1599 = vmatpush1.bf16.msra.mxu0 %v1236
        %1600 = vmatprep.subr.bf16.mxu0 0
        %1601 = vmatpush1.bf16.msra.mxu0 %v1235
        %1602 = vmatprep.subr.bf16.mxu0 0
        %1603 = vmatpush1.bf16.msra.mxu0 %v1234
        %1604 = vmatprep.subr.bf16.mxu0 0
        %1605 = vmatpush1.bf16.msra.mxu0 %v1233
        %1606 = vmatprep.subr.bf16.mxu0 0
        %1607 = vmatpush1.bf16.msra.mxu0 %v1232
        %1608 = vmatprep.subr.bf16.mxu0 0
        %1609 = vmatpush1.bf16.msra.mxu0 %v1231
        %1610 = vmatprep.subr.bf16.mxu0 0
        %1611 = vmatpush2.bf16.msra.mxu0 %v1246
        %1612 = vmatprep.subr.bf16.mxu0 0
        %1613 = vmatpush2.bf16.msra.mxu0 %v1245
        %1614 = vmatprep.subr.bf16.mxu0 0
        %1615 = vmatpush2.bf16.msra.mxu0 %v1244
        %1616 = vmatprep.subr.bf16.mxu0 0
        %1617 = vmatpush2.bf16.msra.mxu0 %v1243
        %1618 = vmatprep.subr.bf16.mxu0 0
        %1619 = vmatpush2.bf16.msra.mxu0 %v1242
        %1620 = vmatprep.subr.bf16.mxu0 0
        %1621 = vmatpush2.bf16.msra.mxu0 %v1241
        %1622 = vmatprep.subr.bf16.mxu0 0
        %1623 = vmatpush2.bf16.msra.mxu0 %v1240
        %1624 = vmatprep.subr.bf16.mxu0 0
        %1625 = vmatpush2.bf16.msra.mxu0 %v1239
        %1626 = vmatprep.mubr.bf16.mxu0 %v578
        %1627 = vmatmul.mubr.bf16.gmra.mxu0 %v577
        %v1628 = vpop.f32.mrf.mxu0
        %v1629 = vadd.f32 %v1588, %v1628
        %v1630 = vpop.f32.mrf.mxu0
        %v1631 = vpop.f32.mrf.mxu0
        %v1632 = vadd.f32 %v1591, %v1631
        %v1633 = vpop.f32.mrf.mxu0
        %1634 = vdwg.mxu0
        %1635 = vmatprep.subr.bf16.mxu0 0
        %1636 = vmatpush1.bf16.msra.mxu0 %v1254
        %1637 = vmatprep.subr.bf16.mxu0 0
        %1638 = vmatpush1.bf16.msra.mxu0 %v1253
        %1639 = vmatprep.subr.bf16.mxu0 0
        %1640 = vmatpush1.bf16.msra.mxu0 %v1252
        %1641 = vmatprep.subr.bf16.mxu0 0
        %1642 = vmatpush1.bf16.msra.mxu0 %v1251
        %1643 = vmatprep.subr.bf16.mxu0 0
        %1644 = vmatpush1.bf16.msra.mxu0 %v1250
        %1645 = vmatprep.subr.bf16.mxu0 0
        %1646 = vmatpush1.bf16.msra.mxu0 %v1249
        %1647 = vmatprep.subr.bf16.mxu0 0
        %1648 = vmatpush1.bf16.msra.mxu0 %v1248
        %1649 = vmatprep.subr.bf16.mxu0 0
        %1650 = vmatpush1.bf16.msra.mxu0 %v1247
        %1651 = vmatprep.subr.bf16.mxu0 0
        %1652 = vmatpush2.bf16.msra.mxu0 %v1262
        %1653 = vmatprep.subr.bf16.mxu0 0
        %1654 = vmatpush2.bf16.msra.mxu0 %v1261
        %1655 = vmatprep.subr.bf16.mxu0 0
        %1656 = vmatpush2.bf16.msra.mxu0 %v1260
        %1657 = vmatprep.subr.bf16.mxu0 0
        %1658 = vmatpush2.bf16.msra.mxu0 %v1259
        %1659 = vmatprep.subr.bf16.mxu0 0
        %1660 = vmatpush2.bf16.msra.mxu0 %v1258
        %1661 = vmatprep.subr.bf16.mxu0 0
        %1662 = vmatpush2.bf16.msra.mxu0 %v1257
        %1663 = vmatprep.subr.bf16.mxu0 0
        %1664 = vmatpush2.bf16.msra.mxu0 %v1256
        %1665 = vmatprep.subr.bf16.mxu0 0
        %1666 = vmatpush2.bf16.msra.mxu0 %v1255
        %1667 = vmatprep.mubr.bf16.mxu0 %v580
        %1668 = vmatmul.mubr.bf16.gmra.mxu0 %v579
        %v1669 = vpop.f32.mrf.mxu0
        %v1670 = vadd.f32 %v1629, %v1669
        %v1671 = vpop.f32.mrf.mxu0
        %v1672 = vpop.f32.mrf.mxu0
        %v1673 = vadd.f32 %v1632, %v1672
        %v1674 = vpop.f32.mrf.mxu0
        %1675 = vdwg.mxu0
        %1676 = vmatprep.subr.bf16.mxu0 0
        %1677 = vmatpush1.bf16.msra.mxu0 %v1270
        %1678 = vmatprep.subr.bf16.mxu0 0
        %1679 = vmatpush1.bf16.msra.mxu0 %v1269
        %1680 = vmatprep.subr.bf16.mxu0 0
        %1681 = vmatpush1.bf16.msra.mxu0 %v1268
        %1682 = vmatprep.subr.bf16.mxu0 0
        %1683 = vmatpush1.bf16.msra.mxu0 %v1267
        %1684 = vmatprep.subr.bf16.mxu0 0
        %1685 = vmatpush1.bf16.msra.mxu0 %v1266
        %1686 = vmatprep.subr.bf16.mxu0 0
        %1687 = vmatpush1.bf16.msra.mxu0 %v1265
        %1688 = vmatprep.subr.bf16.mxu0 0
        %1689 = vmatpush1.bf16.msra.mxu0 %v1264
        %1690 = vmatprep.subr.bf16.mxu0 0
        %1691 = vmatpush1.bf16.msra.mxu0 %v1263
        %1692 = vmatprep.subr.bf16.mxu0 0
        %1693 = vmatpush2.bf16.msra.mxu0 %v1278
        %1694 = vmatprep.subr.bf16.mxu0 0
        %1695 = vmatpush2.bf16.msra.mxu0 %v1277
        %1696 = vmatprep.subr.bf16.mxu0 0
        %1697 = vmatpush2.bf16.msra.mxu0 %v1276
        %1698 = vmatprep.subr.bf16.mxu0 0
        %1699 = vmatpush2.bf16.msra.mxu0 %v1275
        %1700 = vmatprep.subr.bf16.mxu0 0
        %1701 = vmatpush2.bf16.msra.mxu0 %v1274
        %1702 = vmatprep.subr.bf16.mxu0 0
        %1703 = vmatpush2.bf16.msra.mxu0 %v1273
        %1704 = vmatprep.subr.bf16.mxu0 0
        %1705 = vmatpush2.bf16.msra.mxu0 %v1272
        %1706 = vmatprep.subr.bf16.mxu0 0
        %1707 = vmatpush2.bf16.msra.mxu0 %v1271
        %1708 = vmatprep.mubr.bf16.mxu0 %v582
        %1709 = vmatmul.mubr.bf16.gmra.mxu0 %v581
        %v1710 = vpop.f32.mrf.mxu0
        %v1711 = vadd.f32 %v1670, %v1710
        %v1712 = vpop.f32.mrf.mxu0
        %v1713 = vpop.f32.mrf.mxu0
        %v1714 = vadd.f32 %v1673, %v1713
        %v1715 = vpop.f32.mrf.mxu0
        %1716 = vdwg.mxu0
        %1717 = vmatprep.subr.bf16.mxu0 0
        %1718 = vmatpush1.bf16.msra.mxu0 %v1286
        %1719 = vmatprep.subr.bf16.mxu0 0
        %1720 = vmatpush1.bf16.msra.mxu0 %v1285
        %1721 = vmatprep.subr.bf16.mxu0 0
        %1722 = vmatpush1.bf16.msra.mxu0 %v1284
        %1723 = vmatprep.subr.bf16.mxu0 0
        %1724 = vmatpush1.bf16.msra.mxu0 %v1283
        %1725 = vmatprep.subr.bf16.mxu0 0
        %1726 = vmatpush1.bf16.msra.mxu0 %v1282
        %1727 = vmatprep.subr.bf16.mxu0 0
        %1728 = vmatpush1.bf16.msra.mxu0 %v1281
        %1729 = vmatprep.subr.bf16.mxu0 0
        %1730 = vmatpush1.bf16.msra.mxu0 %v1280
        %1731 = vmatprep.subr.bf16.mxu0 0
        %1732 = vmatpush1.bf16.msra.mxu0 %v1279
        %1733 = vmatprep.subr.bf16.mxu0 0
        %1734 = vmatpush2.bf16.msra.mxu0 %v1294
        %1735 = vmatprep.subr.bf16.mxu0 0
        %1736 = vmatpush2.bf16.msra.mxu0 %v1293
        %1737 = vmatprep.subr.bf16.mxu0 0
        %1738 = vmatpush2.bf16.msra.mxu0 %v1292
        %1739 = vmatprep.subr.bf16.mxu0 0
        %1740 = vmatpush2.bf16.msra.mxu0 %v1291
        %1741 = vmatprep.subr.bf16.mxu0 0
        %1742 = vmatpush2.bf16.msra.mxu0 %v1290
        %1743 = vmatprep.subr.bf16.mxu0 0
        %1744 = vmatpush2.bf16.msra.mxu0 %v1289
        %1745 = vmatprep.subr.bf16.mxu0 0
        %1746 = vmatpush2.bf16.msra.mxu0 %v1288
        %1747 = vmatprep.subr.bf16.mxu0 0
        %1748 = vmatpush2.bf16.msra.mxu0 %v1287
        %1749 = vmatprep.mubr.bf16.mxu0 %v584
        %1750 = vmatmul.mubr.bf16.gmra.mxu0 %v583
        %v1751 = vpop.f32.mrf.mxu0
        %v1752 = vadd.f32 %v1711, %v1751
        %v1753 = vpop.f32.mrf.mxu0
        %v1754 = vpop.f32.mrf.mxu0
        %v1755 = vadd.f32 %v1714, %v1754
        %v1756 = vpop.f32.mrf.mxu0
        %1757 = vdwg.mxu0
        %1758 = vmatprep.subr.bf16.mxu0 0
        %1759 = vmatpush1.bf16.msra.mxu0 %v1302
        %1760 = vmatprep.subr.bf16.mxu0 0
        %1761 = vmatpush1.bf16.msra.mxu0 %v1301
        %1762 = vmatprep.subr.bf16.mxu0 0
        %1763 = vmatpush1.bf16.msra.mxu0 %v1300
        %1764 = vmatprep.subr.bf16.mxu0 0
        %1765 = vmatpush1.bf16.msra.mxu0 %v1299
        %1766 = vmatprep.subr.bf16.mxu0 0
        %1767 = vmatpush1.bf16.msra.mxu0 %v1298
        %1768 = vmatprep.subr.bf16.mxu0 0
        %1769 = vmatpush1.bf16.msra.mxu0 %v1297
        %1770 = vmatprep.subr.bf16.mxu0 0
        %1771 = vmatpush1.bf16.msra.mxu0 %v1296
        %1772 = vmatprep.subr.bf16.mxu0 0
        %1773 = vmatpush1.bf16.msra.mxu0 %v1295
        %1774 = vmatprep.subr.bf16.mxu0 0
        %1775 = vmatpush2.bf16.msra.mxu0 %v1310
        %1776 = vmatprep.subr.bf16.mxu0 0
        %1777 = vmatpush2.bf16.msra.mxu0 %v1309
        %1778 = vmatprep.subr.bf16.mxu0 0
        %1779 = vmatpush2.bf16.msra.mxu0 %v1308
        %1780 = vmatprep.subr.bf16.mxu0 0
        %1781 = vmatpush2.bf16.msra.mxu0 %v1307
        %1782 = vmatprep.subr.bf16.mxu0 0
        %1783 = vmatpush2.bf16.msra.mxu0 %v1306
        %1784 = vmatprep.subr.bf16.mxu0 0
        %1785 = vmatpush2.bf16.msra.mxu0 %v1305
        %1786 = vmatprep.subr.bf16.mxu0 0
        %1787 = vmatpush2.bf16.msra.mxu0 %v1304
        %1788 = vmatprep.subr.bf16.mxu0 0
        %1789 = vmatpush2.bf16.msra.mxu0 %v1303
        %1790 = vmatprep.mubr.bf16.mxu0 %v586
        %1791 = vmatmul.mubr.bf16.gmra.mxu0 %v585
        %v1792 = vpop.f32.mrf.mxu0
        %v1793 = vadd.f32 %v1752, %v1792
        %v1794 = vpop.f32.mrf.mxu0
        %v1795 = vpop.f32.mrf.mxu0
        %v1796 = vadd.f32 %v1755, %v1795
        %v1797 = vpop.f32.mrf.mxu0
        %1798 = vdwg.mxu0
        %1799 = vmatprep.subr.bf16.mxu0 0
        %1800 = vmatpush1.bf16.msra.mxu0 %v1318
        %1801 = vmatprep.subr.bf16.mxu0 0
        %1802 = vmatpush1.bf16.msra.mxu0 %v1317
        %1803 = vmatprep.subr.bf16.mxu0 0
        %1804 = vmatpush1.bf16.msra.mxu0 %v1316
        %1805 = vmatprep.subr.bf16.mxu0 0
        %1806 = vmatpush1.bf16.msra.mxu0 %v1315
        %1807 = vmatprep.subr.bf16.mxu0 0
        %1808 = vmatpush1.bf16.msra.mxu0 %v1314
        %1809 = vmatprep.subr.bf16.mxu0 0
        %1810 = vmatpush1.bf16.msra.mxu0 %v1313
        %1811 = vmatprep.subr.bf16.mxu0 0
        %1812 = vmatpush1.bf16.msra.mxu0 %v1312
        %1813 = vmatprep.subr.bf16.mxu0 0
        %1814 = vmatpush1.bf16.msra.mxu0 %v1311
        %1815 = vmatprep.subr.bf16.mxu0 0
        %1816 = vmatpush2.bf16.msra.mxu0 %v1326
        %1817 = vmatprep.subr.bf16.mxu0 0
        %1818 = vmatpush2.bf16.msra.mxu0 %v1325
        %1819 = vmatprep.subr.bf16.mxu0 0
        %1820 = vmatpush2.bf16.msra.mxu0 %v1324
        %1821 = vmatprep.subr.bf16.mxu0 0
        %1822 = vmatpush2.bf16.msra.mxu0 %v1323
        %1823 = vmatprep.subr.bf16.mxu0 0
        %1824 = vmatpush2.bf16.msra.mxu0 %v1322
        %1825 = vmatprep.subr.bf16.mxu0 0
        %1826 = vmatpush2.bf16.msra.mxu0 %v1321
        %1827 = vmatprep.subr.bf16.mxu0 0
        %1828 = vmatpush2.bf16.msra.mxu0 %v1320
        %1829 = vmatprep.subr.bf16.mxu0 0
        %1830 = vmatpush2.bf16.msra.mxu0 %v1319
        %1831 = vmatprep.mubr.bf16.mxu0 %v588
        %1832 = vmatmul.mubr.bf16.gmra.mxu0 %v587
        %v1833 = vpop.f32.mrf.mxu0
        %v1834 = vadd.f32 %v1793, %v1833
        %v1835 = vpop.f32.mrf.mxu0
        %v1836 = vpop.f32.mrf.mxu0
        %v1837 = vadd.f32 %v1796, %v1836
        %v1838 = vpop.f32.mrf.mxu0
        %1839 = vdwg.mxu0
        %vm1840 = vcmask 261120
        %1841 = vst.msk [vmem:[%s190] sm:$0xff] %vm1840, %v1834
        %1842 = vst.msk [vmem:[%s190 + $0x8] sm:$0xff] %vm1840, %v1837
        %s1843 = sand.u32 %s109, 1
        %s1844 = scalar_lea.sflag [#allocation3], %s1843
        %s1845 = sand.u32 %s109, 1
        %s1846 = smul.addr %s1845, 16
        %s1847 = scalar_lea.vmem [#allocation2], %s1846
        // Predicated region
        $region33: #{_lambda_.15} parent=31 // pred_check
          %p1848 = pneg %p119
        $region34: #{_lambda_.15} parent=31 // pred_check_branch
          %1850 = sbr.rel (%p1848) target = $region36
        $region35: #{_lambda_.15} parent=31 // pred_region
          %s1851 = smul.u32 2, %s22
          %s1853 = ssub.s32 256, 256
          %1854 = vsyncadd %s1844, %s1853
          %s1855 = smul.addr %s21, 2
          %s1856 = sadd.s32 %s1851, %s1855
          %s1857 = smul.addr %s1856, 128
          %s1858 = scalar_lea.hbm %s3, %s1857
          %s1859 = sshll.u32 %s1847, 4
          %s1860 = int_to_ptr.vmem [resolvable:$true] %s1859
          %1865 = dma.vmem_to_hbm [thread:$0]  %s1860, 256, %s1858, %s1844, 128, 128, 8
        $region36: #{_lambda_.15} parent=31 // pred_fallthru
          _
      $region32: #{_lambda_.15} parent=5 // pred_fallthru
        _
      %p1866 = scmp.le.s32.totalorder 2, %s12
      // Predicated region
      $region37: #{_lambda_.15} parent=5 // pred_check
        %p1867 = pneg %p1866
      $region38: #{_lambda_.15} parent=5 // pred_check_branch
        %1869 = sbr.rel (%p1867) target = $region40
      $region39: #{_lambda_.15} parent=5 // pred_region
        %s1870 = ssub.s32 %s12, 2
        // Predicated region
        $region41: #{_lambda_.15} parent=39 // pred_check
          %p1871 = pneg %p125
        $region42: #{_lambda_.15} parent=39 // pred_check_branch
          %1873 = sbr.rel (%p1871) target = $region44
        $region43: #{_lambda_.15} parent=39 // pred_region
          %s1874 = sand.u32 %s110, 1
          %s1875 = scalar_lea.sflag [#allocation3], %s1874
          %s1876 = sand.u32 %s110, 1
          %s1877 = smul.addr %s1876, 16
          %s1878 = scalar_lea.vmem [#allocation2], %s1877
          %1879 = dma.done %s1875, 256
        $region44: #{_lambda_.15} parent=39 // pred_fallthru
          _
      $region40: #{_lambda_.15} parent=5 // pred_fallthru
        _
    $region6: #{_lambda_.15} parent=1 // loop_footer
      %s16 = sadd.s32 1, %s12
    $region7: #{_lambda_.15} parent=1 // loop_footer_branch
      %11 = sbr.rel target = $region3
    $region8: #{_lambda_.15} parent=1 // loop_exit
      _
    %1880 = vsyncpa [#allocation3], 1
    %s1881 = scalar_lea.sflag [#allocation3], 1
    %1882 = vsyncpa %s1881, 1

</llo_original>
